<compile_context>
chip_gen: v7x
topology: tpu7x:2x2x1
jax: 0.10.0
libtpu: 0.0.40
codegen_flags: <defaults>
</compile_context>

<pallas_src>
import functools
import math

import jax
import jax.numpy as jnp
from jax.experimental import pallas as pl
from jax.experimental.pallas import tpu as pltpu

_EPS = 1e-5
_INV_SQRT2 = 1.0 / math.sqrt(2.0)
_INV_1414 = 1.0 / 1.414            # residual scale as a multiply, not a divide
_LANE = 128                        # raise to 256 for real C_out on v6e/v7x (2x256x256 MXU)
_DEFAULT_TILE_ROWS = 1024          # sweep 512-1024; 1024 ~ 86% of HBM roofline on v6e


def _round_up(x, m):
    return ((x + m - 1) // m) * m


@functools.lru_cache(maxsize=None)
def _vmem_limit_bytes():
    """Per-generation scoped-VMEM limit: ~half of physical VMEM, 32 MiB fallback."""
    default = 32 * 1024 * 1024
    try:
        cap = getattr(pltpu.get_tpu_info(), "vmem_capacity_bytes", None)
    except Exception:  # pragma: no cover - interpret mode / exotic backends
        cap = None
    if not cap:
        return default
    # v5e/v6e: 128 MiB physical -> 64 MiB scoped; v7x: 64 MiB physical -> 32 MiB.
    return int(min(64 * 1024 * 1024, max(default, cap // 2)))


# ----------------------------------------------------------------------------
# In-kernel math helpers
# ----------------------------------------------------------------------------
def _erf(z):
    # Abramowitz & Stegun 7.1.26 rational approximation (|err| ~ 1.5e-7), built
    # from ops guaranteed to lower in Mosaic.  approx=False on the reciprocal
    # keeps the erf within ~1e-7 of exact (pass 2 is HBM-bound, so the extra
    # EUP/VPU work is hidden anyway).
    a1, a2, a3, a4, a5 = 0.254829592, -0.284496736, 1.421413741, -1.453152027, 1.061405429
    p = 0.3275911
    sign = jnp.where(z >= 0.0, 1.0, -1.0)
    za = jnp.abs(z)
    t = pl.reciprocal(1.0 + p * za, approx=False)
    poly = ((((a5 * t + a4) * t + a3) * t + a2) * t + a1) * t
    return sign * (1.0 - poly * jnp.exp(-za * za))


def _gelu_exact(y):
    # Matches PyTorch's default (erf-based) nn.GELU up to the erf approximation.
    return 0.5 * y * (1.0 + _erf(y * _INV_SQRT2))


# ----------------------------------------------------------------------------
# Pass 1: conv (im2col matmul, bf16 in / f32 acc) + per-tile sum / sum-of-squares
# ----------------------------------------------------------------------------
def conv_stats_kernel(cols_ref, w_ref, y_ref, sum_ref, sumsq_ref, acc_ref):
    # f32 MXU accumulation into a VMEM scratch tile.  Re-reading the scratch for
    # the store and each reduction (instead of keeping one big SSA value live)
    # keeps vreg pressure low at 1024-row tiles; stats use the *f32* values, not
    # the rounded bf16 HBM copy, so BN statistics pick up no quantization bias.
    acc_ref[...] = jnp.dot(cols_ref[...], w_ref[...], preferred_element_type=jnp.float32)

    y_ref[...] = acc_ref[...].astype(y_ref.dtype)          # bf16 intermediate to HBM

    row = jax.lax.broadcasted_iota(jnp.int32, sum_ref.shape, 0)   # (8, C) block
    s = jnp.sum(acc_ref[...], axis=0, keepdims=True)              # (1, C) f32 partial
    sum_ref[...] = jnp.where(row == 0, s, 0.0)

    yv = acc_ref[...]
    ss = jnp.sum(yv * yv, axis=0, keepdims=True)
    sumsq_ref[...] = jnp.where(row == 0, ss, 0.0)


def _conv_stats(cols_bf16, w_bf16, tile_rows):
    rows_p, k = cols_bf16.shape
    cp = w_bf16.shape[1]
    num_tiles = rows_p // tile_rows
    flops = 2 * rows_p * k * cp
    bytes_accessed = (cols_bf16.size * 2 + w_bf16.size * 2
                      + rows_p * cp * 2 + 2 * num_tiles * 8 * cp * 4)
    return pl.pallas_call(
        conv_stats_kernel,
        out_shape=(jax.ShapeDtypeStruct((rows_p, cp), jnp.bfloat16),        # conv output (pre-BN)
                   jax.ShapeDtypeStruct((num_tiles * 8, cp), jnp.float32),  # per-tile sum(y)
                   jax.ShapeDtypeStruct((num_tiles * 8, cp), jnp.float32)), # per-tile sum(y*y)
        grid=(num_tiles,),
        in_specs=[pl.BlockSpec((tile_rows, k), lambda i: (i, 0)),
                  pl.BlockSpec((k, cp), lambda i: (0, 0))],
        out_specs=(pl.BlockSpec((tile_rows, cp), lambda i: (i, 0)),
                   pl.BlockSpec((8, cp), lambda i: (i, 0)),
                   pl.BlockSpec((8, cp), lambda i: (i, 0))),
        scratch_shapes=[pltpu.VMEM((tile_rows, cp), jnp.float32)],
        compiler_params=pltpu.CompilerParams(
            # Per-tile partial stats -> row tiles are independent, so the axis
            # is 'parallel' (v7x gets both TensorCores on the matmul stream).
            dimension_semantics=("parallel",),
            vmem_limit_bytes=_vmem_limit_bytes()),
        cost_estimate=pl.CostEstimate(flops=flops, transcendentals=0,
                                      bytes_accessed=bytes_accessed),
    )(cols_bf16, w_bf16)


# ----------------------------------------------------------------------------
# Pass 2: BatchNorm (folded scale/shift) + GELU (+ residual * 1/1.414), all bf16 I/O
# ----------------------------------------------------------------------------
def bn_gelu_kernel(y_ref, scale_ref, shift_ref, out_ref):
    yn = y_ref[...].astype(jnp.float32) * scale_ref[...] + shift_ref[...]
    out_ref[...] = _gelu_exact(yn).astype(out_ref.dtype)


def bn_gelu_res_kernel(y_ref, scale_ref, shift_ref, res_ref, out_ref):
    yn = y_ref[...].astype(jnp.float32) * scale_ref[...] + shift_ref[...]
    out = (_gelu_exact(yn) + res_ref[...].astype(jnp.float32)) * _INV_1414
    out_ref[...] = out.astype(out_ref.dtype)


def _bn_gelu(y_bf16, scale, shift, tile_rows, residual=None):
    rows_p, cp = y_bf16.shape
    grid = (rows_p // tile_rows,)
    if residual is None:
        kernel = bn_gelu_kernel
        args = (y_bf16, scale, shift)
    else:
        kernel = bn_gelu_res_kernel
        args = (y_bf16, scale, shift, residual)
    in_specs = [pl.BlockSpec((tile_rows, cp), lambda i: (i, 0)),
                pl.BlockSpec((1, cp), lambda i: (0, 0)),
                pl.BlockSpec((1, cp), lambda i: (0, 0))]
    if residual is not None:
        in_specs.append(pl.BlockSpec((tile_rows, cp), lambda i: (i, 0)))
    bytes_accessed = sum(int(a.size) * a.dtype.itemsize for a in args) + rows_p * cp * 2
    return pl.pallas_call(
        kernel,
        out_shape=jax.ShapeDtypeStruct((rows_p, cp), jnp.bfloat16),
        grid=grid,
        in_specs=in_specs,
        out_specs=pl.BlockSpec((tile_rows, cp), lambda i: (i, 0)),
        compiler_params=pltpu.CompilerParams(
            dimension_semantics=("parallel",),      # row tiles independent -> megacore / 2 TCs
            vmem_limit_bytes=_vmem_limit_bytes()),
        cost_estimate=pl.CostEstimate(flops=30 * rows_p * cp,
                                      transcendentals=rows_p * cp,
                                      bytes_accessed=bytes_accessed),
    )(*args)


# ----------------------------------------------------------------------------
# Plain-JAX glue: im2col (bf16), per-channel scale/shift derivation, layout plumbing
# ----------------------------------------------------------------------------
def _im2col_3x3(x_nhwc):
    # 3x3, stride 1, padding 1 patch extraction (column order matches the
    # HWIO-flattened conv weight).  Runs in whatever dtype x arrives in (bf16
    # here, so the 9x-inflated slab is half-width in HBM).
    n, h, w, c = x_nhwc.shape
    xp = jnp.pad(x_nhwc, ((0, 0), (1, 1), (1, 1), (0, 0)))
    patches = [xp[:, dy:dy + h, dx:dx + w, :] for dy in range(3) for dx in range(3)]
    cols = jnp.concatenate(patches, axis=-1)            # (N, H, W, 9*C)
    return cols.reshape(n * h * w, 9 * c)


def _conv_bn_gelu_block(x_nhwc_bf16, w_flat_bf16, gamma, beta, n_rows, tile_rows,
                        residual=None):
    """One (conv3x3 -> BatchNorm2d(batch stats) -> GELU) block on a bf16 NHWC input.

    Returns a bf16 (rows_padded, C_out_padded) slab; padded channels are exactly
    0, padded rows are garbage (sliced off by the caller) and do not pollute the
    BN statistics (their conv output is exactly 0 and the per-tile partial sums
    are divided by the true row count).
    """
    cols = _im2col_3x3(x_nhwc_bf16)                      # (rows, 9*C_in) bf16
    rows = cols.shape[0]
    rows_p = _round_up(rows, tile_rows)
    if rows_p != rows:
        cols = jnp.pad(cols, ((0, rows_p - rows), (0, 0)))

    y, s_part, ss_part = _conv_stats(cols, w_flat_bf16, tile_rows)

    # Fold training-mode BatchNorm + affine into one per-channel scale/shift.
    # Per-tile partial sums are reduced here in f32 (tiny glue), which is more
    # cancellation-robust than one running accumulator across millions of rows.
    s = jnp.sum(s_part, axis=0, keepdims=True)           # (1, C_out_p) f32
    ss = jnp.sum(ss_part, axis=0, keepdims=True)
    mean = s / n_rows
    var = jnp.maximum(ss / n_rows - mean * mean, 0.0)    # clamp fp cancellation
    scale = gamma * jax.lax.rsqrt(var + _EPS)
    shift = beta - mean * scale

    return _bn_gelu(y, scale, shift, tile_rows, residual=residual)


def init_params(key, in_channels, out_channels):
    """Deterministic synthetic parameters (shapes follow the PyTorch module).

    Conv weights are HWIO, flattened to (9*C_in, C_out_padded) and stored in
    bf16 (the matmul dtype), with C_out lane-padded to a multiple of 128 so
    every kernel store is an unmasked, lane-dense vst.  Padded channels get
    gamma=beta=0 so they stay exactly 0.  Conv biases are intentionally not
    created: BatchNorm's mean subtraction cancels a per-channel bias exactly.
    """
    cout_p = _round_up(out_channels, _LANE)
    ks = jax.random.split(key, 8)

    def conv_w(kk, cin, cout):
        w = 0.1 * jax.random.normal(kk, (3, 3, cin, cout), jnp.float32)   # HWIO
        w = jnp.pad(w.reshape(9 * cin, cout), ((0, 0), (0, cout_p - cout)))
        return w.astype(jnp.bfloat16)

    def chan_vec(kk, cout, base):
        v = base + 0.1 * jax.random.normal(kk, (1, cout), jnp.float32)
        return jnp.pad(v, ((0, 0), (0, cout_p - cout)))

    return {
        "w1": conv_w(ks[0], in_channels, out_channels),
        "gamma1": chan_vec(ks[2], out_channels, 1.0),
        "beta1": chan_vec(ks[3], out_channels, 0.0),
        "w2": conv_w(ks[4], out_channels, out_channels),
        "gamma2": chan_vec(ks[6], out_channels, 1.0),
        "beta2": chan_vec(ks[7], out_channels, 0.0),
    }


def residual_conv_block(x_nchw, params, in_channels, out_channels, is_res=False,
                        tile_rows=_DEFAULT_TILE_ROWS):
    """Forward pass matching ResidualConvBlock.forward (PyTorch NCHW in/out)."""
    n, _, h, w = x_nchw.shape
    rows = n * h * w
    same_channels = in_channels == out_channels
    cout_p = params["w1"].shape[1]                                     # lane-padded C_out

    tile_rows = min(tile_rows, _round_up(rows, 8))
    rows_p = _round_up(rows, tile_rows)

    # bf16 before the layout pass: the transpose and the 9x im2col slab are all
    # built/streamed at 2 B/elem with no separate cast pass.
    x = jnp.transpose(x_nchw.astype(jnp.bfloat16), (0, 2, 3, 1))       # NCHW -> NHWC, bf16

    # ---- conv1 block ------------------------------------------------------
    out1_p = _conv_bn_gelu_block(x, params["w1"], params["gamma1"], params["beta1"],
                                 rows, tile_rows)                       # bf16 (rows_p, cout_p)
    x1 = out1_p[:rows, :out_channels].reshape(n, h, w, out_channels)    # bf16, feeds conv2

    # ---- conv2 block (+ residual, carried in bf16) --------------------------
    residual = None
    if is_res:
        if same_channels:
            res = x.reshape(rows, in_channels)                          # bf16
            residual = jnp.pad(res, ((0, rows_p - rows), (0, cout_p - out_channels)))
        else:
            residual = out1_p        # already bf16 (rows_p, cout_p); padded lanes exactly 0
    out2_p = _conv_bn_gelu_block(x1, params["w2"], params["gamma2"], params["beta2"],
                                 rows, tile_rows, residual=residual)

    out = out2_p[:rows, :out_channels].reshape(n, h, w, out_channels)
    return jnp.transpose(out, (0, 3, 1, 2)).astype(jnp.float32)         # NHWC -> NCHW, f32


if __name__ == "__main__":
    # NOTE: these are toy shapes (K=36/72, rows=512 -> a 1-step grid, MXU depth
    # barely filled); tune tile_rows / lane padding with realistic diffusion
    # block shapes (C>=64, rows>=32k) before drawing performance conclusions.
    key = jax.random.PRNGKey(0)
    kx, kp = jax.random.split(key)

    in_channels, out_channels = 4, 8          # not same_channels -> residual is x1
    x = jax.random.normal(kx, (2, in_channels, 16, 16), jnp.float32)   # NCHW, like PyTorch
    params = init_params(kp, in_channels, out_channels)

    fwd = jax.jit(functools.partial(residual_conv_block,
                                    in_channels=in_channels,
                                    out_channels=out_channels,
                                    is_res=True))
    out = jax.block_until_ready(fwd(x, params))
    assert out.shape == (2, out_channels, 16, 16)
    assert bool(jnp.all(jnp.isfinite(out)))
    print("KERNEL_OK")
</pallas_src>

<mosaic_0001>
module attributes {stable_mosaic.version = 11 : i64} {
  func.func @conv_stats_kernel(%arg0: i32, %arg1: memref<512x36xbf16, #tpu.memory_space<vmem>>, %arg2: memref<36x128xbf16, #tpu.memory_space<vmem>>, %arg3: memref<512x128xbf16, #tpu.memory_space<vmem>>, %arg4: memref<8x128xf32, #tpu.memory_space<vmem>>, %arg5: memref<8x128xf32, #tpu.memory_space<vmem>>, %arg6: memref<512x128xf32, #tpu.memory_space<vmem>>) attributes {dimension_semantics = [#tpu.dimension_semantics<parallel>], iteration_bounds = array<i64: 1>, scalar_prefetch = 0 : i64, scratch_operands = 1 : i64, tpu.core_type = #tpu.core_type<tc>, window_params = [{transform_indices = @transform_0, window_bounds = array<i64: 512, 36>}, {pipeline_mode = #tpu.pipeline_mode<synchronous>, transform_indices = @transform_1, window_bounds = array<i64: 36, 128>}, {transform_indices = @transform_2, window_bounds = array<i64: 512, 128>}, {transform_indices = @transform_3, window_bounds = array<i64: 8, 128>}, {transform_indices = @transform_4, window_bounds = array<i64: 8, 128>}]} {
    %c0 = arith.constant 0 : index
    %c0_0 = arith.constant 0 : index
    %0 = vector.load %arg1[%c0, %c0_0] : memref<512x36xbf16, #tpu.memory_space<vmem>>, vector<512x36xbf16>
    %c0_1 = arith.constant 0 : index
    %c0_2 = arith.constant 0 : index
    %1 = vector.load %arg2[%c0_1, %c0_2] : memref<36x128xbf16, #tpu.memory_space<vmem>>, vector<36x128xbf16>
    %cst = arith.constant dense<0.000000e+00> : vector<512x128xf32>
    %2 = tpu.matmul %0, %1, %cst {dimension_numbers = #tpu.dot_dimension_numbers<[1], [0], [0], [1], [0, 0, 1, 1], [], []>} : vector<512x36xbf16>, vector<36x128xbf16>, vector<512x128xf32> -> vector<512x128xf32>
    %c0_3 = arith.constant 0 : index
    %c0_4 = arith.constant 0 : index
    %3 = vector.load %arg6[%c0_3, %c0_4] : memref<512x128xf32, #tpu.memory_space<vmem>>, vector<512x128xf32>
    tpu.vector_store %arg6[%c0_3, %c0_4], %2 {strides = array<i32>} : memref<512x128xf32, #tpu.memory_space<vmem>>, vector<512x128xf32>,
    %c0_5 = arith.constant 0 : index
    %c0_6 = arith.constant 0 : index
    %4 = vector.load %arg6[%c0_5, %c0_6] : memref<512x128xf32, #tpu.memory_space<vmem>>, vector<512x128xf32>
    %5 = arith.truncf %4 : vector<512x128xf32> to vector<512x128xbf16>
    %c0_7 = arith.constant 0 : index
    %c0_8 = arith.constant 0 : index
    %6 = vector.load %arg3[%c0_7, %c0_8] : memref<512x128xbf16, #tpu.memory_space<vmem>>, vector<512x128xbf16>
    tpu.vector_store %arg3[%c0_7, %c0_8], %5 {strides = array<i32>} : memref<512x128xbf16, #tpu.memory_space<vmem>>, vector<512x128xbf16>,
    %7 = tpu.iota {dimensions = array<i32: 0>} : vector<8x128xi32>
    %c0_9 = arith.constant 0 : index
    %c0_10 = arith.constant 0 : index
    %8 = vector.load %arg6[%c0_9, %c0_10] : memref<512x128xf32, #tpu.memory_space<vmem>>, vector<512x128xf32>
    %cst_11 = arith.constant dense<0.000000e+00> : vector<128xf32>
    %9 = vector.multi_reduction <add>, %8, %cst_11 [0] : vector<512x128xf32> to vector<128xf32>
    %10 = vector.shape_cast %9 : vector<128xf32> to vector<1x128xf32>
    %c0_i32 = arith.constant 0 : i32
    %11 = vector.broadcast %c0_i32 : i32 to vector<8x128xi32>
    %12 = arith.cmpi eq, %7, %11 : vector<8x128xi32>
    %cst_12 = arith.constant 0.000000e+00 : f32
    %13 = vector.shape_cast %10 : vector<1x128xf32> to vector<1x128xf32>
    %14 = vector.broadcast %13 : vector<1x128xf32> to vector<8x128xf32>
    %15 = vector.broadcast %cst_12 : f32 to vector<8x128xf32>
    %16 = arith.select %12, %14, %15 : vector<8x128xi1>, vector<8x128xf32>
    %c0_13 = arith.constant 0 : index
    %c0_14 = arith.constant 0 : index
    %17 = vector.load %arg4[%c0_13, %c0_14] : memref<8x128xf32, #tpu.memory_space<vmem>>, vector<8x128xf32>
    tpu.vector_store %arg4[%c0_13, %c0_14], %16 {strides = array<i32>} : memref<8x128xf32, #tpu.memory_space<vmem>>, vector<8x128xf32>,
    %c0_15 = arith.constant 0 : index
    %c0_16 = arith.constant 0 : index
    %18 = vector.load %arg6[%c0_15, %c0_16] : memref<512x128xf32, #tpu.memory_space<vmem>>, vector<512x128xf32>
    %19 = arith.mulf %18, %18 : vector<512x128xf32>
    %cst_17 = arith.constant dense<0.000000e+00> : vector<128xf32>
    %20 = vector.multi_reduction <add>, %19, %cst_17 [0] : vector<512x128xf32> to vector<128xf32>
    %21 = vector.shape_cast %20 : vector<128xf32> to vector<1x128xf32>
    %c0_i32_18 = arith.constant 0 : i32
    %22 = vector.broadcast %c0_i32_18 : i32 to vector<8x128xi32>
    %23 = arith.cmpi eq, %7, %22 : vector<8x128xi32>
    %cst_19 = arith.constant 0.000000e+00 : f32
    %24 = vector.shape_cast %21 : vector<1x128xf32> to vector<1x128xf32>
    %25 = vector.broadcast %24 : vector<1x128xf32> to vector<8x128xf32>
    %26 = vector.broadcast %cst_19 : f32 to vector<8x128xf32>
    %27 = arith.select %23, %25, %26 : vector<8x128xi1>, vector<8x128xf32>
    %c0_20 = arith.constant 0 : index
    %c0_21 = arith.constant 0 : index
    %28 = vector.load %arg5[%c0_20, %c0_21] : memref<8x128xf32, #tpu.memory_space<vmem>>, vector<8x128xf32>
    tpu.vector_store %arg5[%c0_20, %c0_21], %27 {strides = array<i32>} : memref<8x128xf32, #tpu.memory_space<vmem>>, vector<8x128xf32>,
    return
  }
  func.func @transform_0(%arg0: i32) -> (i32, i32) {
    %c0_i32 = arith.constant 0 : i32
    %c0_i32_0 = arith.constant 0 : i32
    return %arg0, %c0_i32 : i32, i32
  }
  func.func @transform_1(%arg0: i32) -> (i32, i32) {
    %c0_i32 = arith.constant 0 : i32
    %c0_i32_0 = arith.constant 0 : i32
    %c0_i32_1 = arith.constant 0 : i32
    return %c0_i32, %c0_i32_0 : i32, i32
  }
  func.func @transform_2(%arg0: i32) -> (i32, i32) {
    %c0_i32 = arith.constant 0 : i32
    %c0_i32_0 = arith.constant 0 : i32
    return %arg0, %c0_i32 : i32, i32
  }
  func.func @transform_3(%arg0: i32) -> (i32, i32) {
    %c0_i32 = arith.constant 0 : i32
    %c0_i32_0 = arith.constant 0 : i32
    return %arg0, %c0_i32 : i32, i32
  }
  func.func @transform_4(%arg0: i32) -> (i32, i32) {
    %c0_i32 = arith.constant 0 : i32
    %c0_i32_0 = arith.constant 0 : i32
    return %arg0, %c0_i32 : i32, i32
  }
}

module attributes {stable_mosaic.version = 11 : i64} {
  func.func @bn_gelu_kernel(%arg0: i32, %arg1: memref<512x128xbf16, #tpu.memory_space<vmem>>, %arg2: memref<1x128xf32, #tpu.memory_space<vmem>>, %arg3: memref<1x128xf32, #tpu.memory_space<vmem>>, %arg4: memref<512x128xbf16, #tpu.memory_space<vmem>>) attributes {dimension_semantics = [#tpu.dimension_semantics<parallel>], iteration_bounds = array<i64: 1>, scalar_prefetch = 0 : i64, scratch_operands = 0 : i64, tpu.core_type = #tpu.core_type<tc>, window_params = [{transform_indices = @transform_0, window_bounds = array<i64: 512, 128>}, {pipeline_mode = #tpu.pipeline_mode<synchronous>, transform_indices = @transform_1, window_bounds = array<i64: 1, 128>}, {pipeline_mode = #tpu.pipeline_mode<synchronous>, transform_indices = @transform_2, window_bounds = array<i64: 1, 128>}, {transform_indices = @transform_3, window_bounds = array<i64: 512, 128>}]} {
    %c0 = arith.constant 0 : index
    %c0_0 = arith.constant 0 : index
    %0 = vector.load %arg1[%c0, %c0_0] : memref<512x128xbf16, #tpu.memory_space<vmem>>, vector<512x128xbf16>
    %1 = arith.extf %0 : vector<512x128xbf16> to vector<512x128xf32>
    %c0_1 = arith.constant 0 : index
    %c0_2 = arith.constant 0 : index
    %2 = vector.load %arg2[%c0_1, %c0_2] : memref<1x128xf32, #tpu.memory_space<vmem>>, vector<1x128xf32>
    %3 = vector.broadcast %2 : vector<1x128xf32> to vector<512x128xf32>
    %4 = arith.mulf %1, %3 : vector<512x128xf32>
    %c0_3 = arith.constant 0 : index
    %c0_4 = arith.constant 0 : index
    %5 = vector.load %arg3[%c0_3, %c0_4] : memref<1x128xf32, #tpu.memory_space<vmem>>, vector<1x128xf32>
    %6 = vector.broadcast %5 : vector<1x128xf32> to vector<512x128xf32>
    %7 = arith.addf %4, %6 : vector<512x128xf32>
    %cst = arith.constant 5.000000e-01 : f32
    %8 = vector.broadcast %cst : f32 to vector<512x128xf32>
    %9 = arith.mulf %8, %7 : vector<512x128xf32>
    %cst_5 = arith.constant 0.707106769 : f32
    %10 = vector.broadcast %cst_5 : f32 to vector<512x128xf32>
    %11 = arith.mulf %7, %10 : vector<512x128xf32>
    %cst_6 = arith.constant 0.000000e+00 : f32
    %12 = vector.broadcast %cst_6 : f32 to vector<512x128xf32>
    %13 = arith.cmpf oge, %11, %12 : vector<512x128xf32>
    %cst_7 = arith.constant 1.000000e+00 : f32
    %cst_8 = arith.constant -1.000000e+00 : f32
    %14 = vector.broadcast %cst_7 : f32 to vector<512x128xf32>
    %15 = vector.broadcast %cst_8 : f32 to vector<512x128xf32>
    %16 = arith.select %13, %14, %15 : vector<512x128xi1>, vector<512x128xf32>
    %17 = math.absf %11 : vector<512x128xf32>
    %cst_9 = arith.constant 0.327591091 : f32
    %18 = vector.broadcast %cst_9 : f32 to vector<512x128xf32>
    %19 = arith.mulf %18, %17 : vector<512x128xf32>
    %cst_10 = arith.constant 1.000000e+00 : f32
    %20 = vector.broadcast %cst_10 : f32 to vector<512x128xf32>
    %21 = arith.addf %20, %19 : vector<512x128xf32>
    %22 = tpu.reciprocal %21 : vector<512x128xf32> -> vector<512x128xf32>
    %cst_11 = arith.constant 1.06140542 : f32
    %23 = vector.broadcast %cst_11 : f32 to vector<512x128xf32>
    %24 = arith.mulf %23, %22 : vector<512x128xf32>
    %cst_12 = arith.constant -1.45315206 : f32
    %25 = vector.broadcast %cst_12 : f32 to vector<512x128xf32>
    %26 = arith.addf %24, %25 : vector<512x128xf32>
    %27 = arith.mulf %26, %22 : vector<512x128xf32>
    %cst_13 = arith.constant 1.42141378 : f32
    %28 = vector.broadcast %cst_13 : f32 to vector<512x128xf32>
    %29 = arith.addf %27, %28 : vector<512x128xf32>
    %30 = arith.mulf %29, %22 : vector<512x128xf32>
    %cst_14 = arith.constant -0.284496725 : f32
    %31 = vector.broadcast %cst_14 : f32 to vector<512x128xf32>
    %32 = arith.addf %30, %31 : vector<512x128xf32>
    %33 = arith.mulf %32, %22 : vector<512x128xf32>
    %cst_15 = arith.constant 0.254829586 : f32
    %34 = vector.broadcast %cst_15 : f32 to vector<512x128xf32>
    %35 = arith.addf %33, %34 : vector<512x128xf32>
    %36 = arith.mulf %35, %22 : vector<512x128xf32>
    %cst_16 = arith.constant 0.000000e+00 : f32
    %37 = vector.broadcast %cst_16 : f32 to vector<512x128xf32>
    %38 = arith.subf %37, %17 : vector<512x128xf32>
    %39 = arith.mulf %38, %17 : vector<512x128xf32>
    %40 = math.exp %39 : vector<512x128xf32>
    %41 = arith.mulf %36, %40 : vector<512x128xf32>
    %cst_17 = arith.constant 1.000000e+00 : f32
    %42 = vector.broadcast %cst_17 : f32 to vector<512x128xf32>
    %43 = arith.subf %42, %41 : vector<512x128xf32>
    %44 = arith.mulf %16, %43 : vector<512x128xf32>
    %cst_18 = arith.constant 1.000000e+00 : f32
    %45 = vector.broadcast %cst_18 : f32 to vector<512x128xf32>
    %46 = arith.addf %45, %44 : vector<512x128xf32>
    %47 = arith.mulf %9, %46 : vector<512x128xf32>
    %48 = arith.truncf %47 : vector<512x128xf32> to vector<512x128xbf16>
    %c0_19 = arith.constant 0 : index
    %c0_20 = arith.constant 0 : index
    %49 = vector.load %arg4[%c0_19, %c0_20] : memref<512x128xbf16, #tpu.memory_space<vmem>>, vector<512x128xbf16>
    tpu.vector_store %arg4[%c0_19, %c0_20], %48 {strides = array<i32>} : memref<512x128xbf16, #tpu.memory_space<vmem>>, vector<512x128xbf16>,
    return
  }
  func.func @transform_0(%arg0: i32) -> (i32, i32) {
    %c0_i32 = arith.constant 0 : i32
    %c0_i32_0 = arith.constant 0 : i32
    return %arg0, %c0_i32 : i32, i32
  }
  func.func @transform_1(%arg0: i32) -> (i32, i32) {
    %c0_i32 = arith.constant 0 : i32
    %c0_i32_0 = arith.constant 0 : i32
    %c0_i32_1 = arith.constant 0 : i32
    return %c0_i32, %c0_i32_0 : i32, i32
  }
  func.func @transform_2(%arg0: i32) -> (i32, i32) {
    %c0_i32 = arith.constant 0 : i32
    %c0_i32_0 = arith.constant 0 : i32
    %c0_i32_1 = arith.constant 0 : i32
    return %c0_i32, %c0_i32_0 : i32, i32
  }
  func.func @transform_3(%arg0: i32) -> (i32, i32) {
    %c0_i32 = arith.constant 0 : i32
    %c0_i32_0 = arith.constant 0 : i32
    return %arg0, %c0_i32 : i32, i32
  }
}

module attributes {stable_mosaic.version = 11 : i64} {
  func.func @conv_stats_kernel(%arg0: i32, %arg1: memref<512x72xbf16, #tpu.memory_space<vmem>>, %arg2: memref<72x128xbf16, #tpu.memory_space<vmem>>, %arg3: memref<512x128xbf16, #tpu.memory_space<vmem>>, %arg4: memref<8x128xf32, #tpu.memory_space<vmem>>, %arg5: memref<8x128xf32, #tpu.memory_space<vmem>>, %arg6: memref<512x128xf32, #tpu.memory_space<vmem>>) attributes {dimension_semantics = [#tpu.dimension_semantics<parallel>], iteration_bounds = array<i64: 1>, scalar_prefetch = 0 : i64, scratch_operands = 1 : i64, tpu.core_type = #tpu.core_type<tc>, window_params = [{transform_indices = @transform_0, window_bounds = array<i64: 512, 72>}, {pipeline_mode = #tpu.pipeline_mode<synchronous>, transform_indices = @transform_1, window_bounds = array<i64: 72, 128>}, {transform_indices = @transform_2, window_bounds = array<i64: 512, 128>}, {transform_indices = @transform_3, window_bounds = array<i64: 8, 128>}, {transform_indices = @transform_4, window_bounds = array<i64: 8, 128>}]} {
    %c0 = arith.constant 0 : index
    %c0_0 = arith.constant 0 : index
    %0 = vector.load %arg1[%c0, %c0_0] : memref<512x72xbf16, #tpu.memory_space<vmem>>, vector<512x72xbf16>
    %c0_1 = arith.constant 0 : index
    %c0_2 = arith.constant 0 : index
    %1 = vector.load %arg2[%c0_1, %c0_2] : memref<72x128xbf16, #tpu.memory_space<vmem>>, vector<72x128xbf16>
    %cst = arith.constant dense<0.000000e+00> : vector<512x128xf32>
    %2 = tpu.matmul %0, %1, %cst {dimension_numbers = #tpu.dot_dimension_numbers<[1], [0], [0], [1], [0, 0, 1, 1], [], []>} : vector<512x72xbf16>, vector<72x128xbf16>, vector<512x128xf32> -> vector<512x128xf32>
    %c0_3 = arith.constant 0 : index
    %c0_4 = arith.constant 0 : index
    %3 = vector.load %arg6[%c0_3, %c0_4] : memref<512x128xf32, #tpu.memory_space<vmem>>, vector<512x128xf32>
    tpu.vector_store %arg6[%c0_3, %c0_4], %2 {strides = array<i32>} : memref<512x128xf32, #tpu.memory_space<vmem>>, vector<512x128xf32>,
    %c0_5 = arith.constant 0 : index
    %c0_6 = arith.constant 0 : index
    %4 = vector.load %arg6[%c0_5, %c0_6] : memref<512x128xf32, #tpu.memory_space<vmem>>, vector<512x128xf32>
    %5 = arith.truncf %4 : vector<512x128xf32> to vector<512x128xbf16>
    %c0_7 = arith.constant 0 : index
    %c0_8 = arith.constant 0 : index
    %6 = vector.load %arg3[%c0_7, %c0_8] : memref<512x128xbf16, #tpu.memory_space<vmem>>, vector<512x128xbf16>
    tpu.vector_store %arg3[%c0_7, %c0_8], %5 {strides = array<i32>} : memref<512x128xbf16, #tpu.memory_space<vmem>>, vector<512x128xbf16>,
    %7 = tpu.iota {dimensions = array<i32: 0>} : vector<8x128xi32>
    %c0_9 = arith.constant 0 : index
    %c0_10 = arith.constant 0 : index
    %8 = vector.load %arg6[%c0_9, %c0_10] : memref<512x128xf32, #tpu.memory_space<vmem>>, vector<512x128xf32>
    %cst_11 = arith.constant dense<0.000000e+00> : vector<128xf32>
    %9 = vector.multi_reduction <add>, %8, %cst_11 [0] : vector<512x128xf32> to vector<128xf32>
    %10 = vector.shape_cast %9 : vector<128xf32> to vector<1x128xf32>
    %c0_i32 = arith.constant 0 : i32
    %11 = vector.broadcast %c0_i32 : i32 to vector<8x128xi32>
    %12 = arith.cmpi eq, %7, %11 : vector<8x128xi32>
    %cst_12 = arith.constant 0.000000e+00 : f32
    %13 = vector.shape_cast %10 : vector<1x128xf32> to vector<1x128xf32>
    %14 = vector.broadcast %13 : vector<1x128xf32> to vector<8x128xf32>
    %15 = vector.broadcast %cst_12 : f32 to vector<8x128xf32>
    %16 = arith.select %12, %14, %15 : vector<8x128xi1>, vector<8x128xf32>
    %c0_13 = arith.constant 0 : index
    %c0_14 = arith.constant 0 : index
    %17 = vector.load %arg4[%c0_13, %c0_14] : memref<8x128xf32, #tpu.memory_space<vmem>>, vector<8x128xf32>
    tpu.vector_store %arg4[%c0_13, %c0_14], %16 {strides = array<i32>} : memref<8x128xf32, #tpu.memory_space<vmem>>, vector<8x128xf32>,
    %c0_15 = arith.constant 0 : index
    %c0_16 = arith.constant 0 : index
    %18 = vector.load %arg6[%c0_15, %c0_16] : memref<512x128xf32, #tpu.memory_space<vmem>>, vector<512x128xf32>
    %19 = arith.mulf %18, %18 : vector<512x128xf32>
    %cst_17 = arith.constant dense<0.000000e+00> : vector<128xf32>
    %20 = vector.multi_reduction <add>, %19, %cst_17 [0] : vector<512x128xf32> to vector<128xf32>
    %21 = vector.shape_cast %20 : vector<128xf32> to vector<1x128xf32>
    %c0_i32_18 = arith.constant 0 : i32
    %22 = vector.broadcast %c0_i32_18 : i32 to vector<8x128xi32>
    %23 = arith.cmpi eq, %7, %22 : vector<8x128xi32>
    %cst_19 = arith.constant 0.000000e+00 : f32
    %24 = vector.shape_cast %21 : vector<1x128xf32> to vector<1x128xf32>
    %25 = vector.broadcast %24 : vector<1x128xf32> to vector<8x128xf32>
    %26 = vector.broadcast %cst_19 : f32 to vector<8x128xf32>
    %27 = arith.select %23, %25, %26 : vector<8x128xi1>, vector<8x128xf32>
    %c0_20 = arith.constant 0 : index
    %c0_21 = arith.constant 0 : index
    %28 = vector.load %arg5[%c0_20, %c0_21] : memref<8x128xf32, #tpu.memory_space<vmem>>, vector<8x128xf32>
    tpu.vector_store %arg5[%c0_20, %c0_21], %27 {strides = array<i32>} : memref<8x128xf32, #tpu.memory_space<vmem>>, vector<8x128xf32>,
    return
  }
  func.func @transform_0(%arg0: i32) -> (i32, i32) {
    %c0_i32 = arith.constant 0 : i32
    %c0_i32_0 = arith.constant 0 : i32
    return %arg0, %c0_i32 : i32, i32
  }
  func.func @transform_1(%arg0: i32) -> (i32, i32) {
    %c0_i32 = arith.constant 0 : i32
    %c0_i32_0 = arith.constant 0 : i32
    %c0_i32_1 = arith.constant 0 : i32
    return %c0_i32, %c0_i32_0 : i32, i32
  }
  func.func @transform_2(%arg0: i32) -> (i32, i32) {
    %c0_i32 = arith.constant 0 : i32
    %c0_i32_0 = arith.constant 0 : i32
    return %arg0, %c0_i32 : i32, i32
  }
  func.func @transform_3(%arg0: i32) -> (i32, i32) {
    %c0_i32 = arith.constant 0 : i32
    %c0_i32_0 = arith.constant 0 : i32
    return %arg0, %c0_i32 : i32, i32
  }
  func.func @transform_4(%arg0: i32) -> (i32, i32) {
    %c0_i32 = arith.constant 0 : i32
    %c0_i32_0 = arith.constant 0 : i32
    return %arg0, %c0_i32 : i32, i32
  }
}

module attributes {stable_mosaic.version = 11 : i64} {
  func.func @bn_gelu_res_kernel(%arg0: i32, %arg1: memref<512x128xbf16, #tpu.memory_space<vmem>>, %arg2: memref<1x128xf32, #tpu.memory_space<vmem>>, %arg3: memref<1x128xf32, #tpu.memory_space<vmem>>, %arg4: memref<512x128xbf16, #tpu.memory_space<vmem>>, %arg5: memref<512x128xbf16, #tpu.memory_space<vmem>>) attributes {dimension_semantics = [#tpu.dimension_semantics<parallel>], iteration_bounds = array<i64: 1>, scalar_prefetch = 0 : i64, scratch_operands = 0 : i64, tpu.core_type = #tpu.core_type<tc>, window_params = [{transform_indices = @transform_0, window_bounds = array<i64: 512, 128>}, {pipeline_mode = #tpu.pipeline_mode<synchronous>, transform_indices = @transform_1, window_bounds = array<i64: 1, 128>}, {pipeline_mode = #tpu.pipeline_mode<synchronous>, transform_indices = @transform_2, window_bounds = array<i64: 1, 128>}, {transform_indices = @transform_3, window_bounds = array<i64: 512, 128>}, {transform_indices = @transform_4, window_bounds = array<i64: 512, 128>}]} {
    %c0 = arith.constant 0 : index
    %c0_0 = arith.constant 0 : index
    %0 = vector.load %arg1[%c0, %c0_0] : memref<512x128xbf16, #tpu.memory_space<vmem>>, vector<512x128xbf16>
    %1 = arith.extf %0 : vector<512x128xbf16> to vector<512x128xf32>
    %c0_1 = arith.constant 0 : index
    %c0_2 = arith.constant 0 : index
    %2 = vector.load %arg2[%c0_1, %c0_2] : memref<1x128xf32, #tpu.memory_space<vmem>>, vector<1x128xf32>
    %3 = vector.broadcast %2 : vector<1x128xf32> to vector<512x128xf32>
    %4 = arith.mulf %1, %3 : vector<512x128xf32>
    %c0_3 = arith.constant 0 : index
    %c0_4 = arith.constant 0 : index
    %5 = vector.load %arg3[%c0_3, %c0_4] : memref<1x128xf32, #tpu.memory_space<vmem>>, vector<1x128xf32>
    %6 = vector.broadcast %5 : vector<1x128xf32> to vector<512x128xf32>
    %7 = arith.addf %4, %6 : vector<512x128xf32>
    %cst = arith.constant 5.000000e-01 : f32
    %8 = vector.broadcast %cst : f32 to vector<512x128xf32>
    %9 = arith.mulf %8, %7 : vector<512x128xf32>
    %cst_5 = arith.constant 0.707106769 : f32
    %10 = vector.broadcast %cst_5 : f32 to vector<512x128xf32>
    %11 = arith.mulf %7, %10 : vector<512x128xf32>
    %cst_6 = arith.constant 0.000000e+00 : f32
    %12 = vector.broadcast %cst_6 : f32 to vector<512x128xf32>
    %13 = arith.cmpf oge, %11, %12 : vector<512x128xf32>
    %cst_7 = arith.constant 1.000000e+00 : f32
    %cst_8 = arith.constant -1.000000e+00 : f32
    %14 = vector.broadcast %cst_7 : f32 to vector<512x128xf32>
    %15 = vector.broadcast %cst_8 : f32 to vector<512x128xf32>
    %16 = arith.select %13, %14, %15 : vector<512x128xi1>, vector<512x128xf32>
    %17 = math.absf %11 : vector<512x128xf32>
    %cst_9 = arith.constant 0.327591091 : f32
    %18 = vector.broadcast %cst_9 : f32 to vector<512x128xf32>
    %19 = arith.mulf %18, %17 : vector<512x128xf32>
    %cst_10 = arith.constant 1.000000e+00 : f32
    %20 = vector.broadcast %cst_10 : f32 to vector<512x128xf32>
    %21 = arith.addf %20, %19 : vector<512x128xf32>
    %22 = tpu.reciprocal %21 : vector<512x128xf32> -> vector<512x128xf32>
    %cst_11 = arith.constant 1.06140542 : f32
    %23 = vector.broadcast %cst_11 : f32 to vector<512x128xf32>
    %24 = arith.mulf %23, %22 : vector<512x128xf32>
    %cst_12 = arith.constant -1.45315206 : f32
    %25 = vector.broadcast %cst_12 : f32 to vector<512x128xf32>
    %26 = arith.addf %24, %25 : vector<512x128xf32>
    %27 = arith.mulf %26, %22 : vector<512x128xf32>
    %cst_13 = arith.constant 1.42141378 : f32
    %28 = vector.broadcast %cst_13 : f32 to vector<512x128xf32>
    %29 = arith.addf %27, %28 : vector<512x128xf32>
    %30 = arith.mulf %29, %22 : vector<512x128xf32>
    %cst_14 = arith.constant -0.284496725 : f32
    %31 = vector.broadcast %cst_14 : f32 to vector<512x128xf32>
    %32 = arith.addf %30, %31 : vector<512x128xf32>
    %33 = arith.mulf %32, %22 : vector<512x128xf32>
    %cst_15 = arith.constant 0.254829586 : f32
    %34 = vector.broadcast %cst_15 : f32 to vector<512x128xf32>
    %35 = arith.addf %33, %34 : vector<512x128xf32>
    %36 = arith.mulf %35, %22 : vector<512x128xf32>
    %cst_16 = arith.constant 0.000000e+00 : f32
    %37 = vector.broadcast %cst_16 : f32 to vector<512x128xf32>
    %38 = arith.subf %37, %17 : vector<512x128xf32>
    %39 = arith.mulf %38, %17 : vector<512x128xf32>
    %40 = math.exp %39 : vector<512x128xf32>
    %41 = arith.mulf %36, %40 : vector<512x128xf32>
    %cst_17 = arith.constant 1.000000e+00 : f32
    %42 = vector.broadcast %cst_17 : f32 to vector<512x128xf32>
    %43 = arith.subf %42, %41 : vector<512x128xf32>
    %44 = arith.mulf %16, %43 : vector<512x128xf32>
    %cst_18 = arith.constant 1.000000e+00 : f32
    %45 = vector.broadcast %cst_18 : f32 to vector<512x128xf32>
    %46 = arith.addf %45, %44 : vector<512x128xf32>
    %47 = arith.mulf %9, %46 : vector<512x128xf32>
    %c0_19 = arith.constant 0 : index
    %c0_20 = arith.constant 0 : index
    %48 = vector.load %arg4[%c0_19, %c0_20] : memref<512x128xbf16, #tpu.memory_space<vmem>>, vector<512x128xbf16>
    %49 = arith.extf %48 : vector<512x128xbf16> to vector<512x128xf32>
    %50 = arith.addf %47, %49 : vector<512x128xf32>
    %cst_21 = arith.constant 0.70721358 : f32
    %51 = vector.broadcast %cst_21 : f32 to vector<512x128xf32>
    %52 = arith.mulf %50, %51 : vector<512x128xf32>
    %53 = arith.truncf %52 : vector<512x128xf32> to vector<512x128xbf16>
    %c0_22 = arith.constant 0 : index
    %c0_23 = arith.constant 0 : index
    %54 = vector.load %arg5[%c0_22, %c0_23] : memref<512x128xbf16, #tpu.memory_space<vmem>>, vector<512x128xbf16>
    tpu.vector_store %arg5[%c0_22, %c0_23], %53 {strides = array<i32>} : memref<512x128xbf16, #tpu.memory_space<vmem>>, vector<512x128xbf16>,
    return
  }
  func.func @transform_0(%arg0: i32) -> (i32, i32) {
    %c0_i32 = arith.constant 0 : i32
    %c0_i32_0 = arith.constant 0 : i32
    return %arg0, %c0_i32 : i32, i32
  }
  func.func @transform_1(%arg0: i32) -> (i32, i32) {
    %c0_i32 = arith.constant 0 : i32
    %c0_i32_0 = arith.constant 0 : i32
    %c0_i32_1 = arith.constant 0 : i32
    return %c0_i32, %c0_i32_0 : i32, i32
  }
  func.func @transform_2(%arg0: i32) -> (i32, i32) {
    %c0_i32 = arith.constant 0 : i32
    %c0_i32_0 = arith.constant 0 : i32
    %c0_i32_1 = arith.constant 0 : i32
    return %c0_i32, %c0_i32_0 : i32, i32
  }
  func.func @transform_3(%arg0: i32) -> (i32, i32) {
    %c0_i32 = arith.constant 0 : i32
    %c0_i32_0 = arith.constant 0 : i32
    return %arg0, %c0_i32 : i32, i32
  }
  func.func @transform_4(%arg0: i32) -> (i32, i32) {
    %c0_i32 = arith.constant 0 : i32
    %c0_i32_0 = arith.constant 0 : i32
    return %arg0, %c0_i32 : i32, i32
  }
}

</mosaic_0001>

<llo_original>
// kernel: residual_conv_block.4
$region0: #{residual_conv_block.4}
  #allocation0 [shape = 'u32[]', space=smem, size = 0x4, offset = 0x4, fixed_abs, tag = 'smem constant byte address 0x4 - core index']
  #allocation1 [shape = 'u32[144,128]{1,0:T(1,128)}', space=vmem, size = 0x12000, scoped, tag = 'internal scratch']
  #allocation2 [shape = 'f32[512,128]{1,0:T(8,128)}', space=vmem, size = 0x40000, scoped, tag = 'scratch operand']
  %s0 = inlined_call_operand.vmem [shape: bf16[512,36], index: 0, kind: input, shape index: {}]
  %s1 = inlined_call_operand.vmem [shape: bf16[36,128], index: 1, kind: input, shape index: {}]
  %s2 = inlined_call_operand.vmem [shape: bf16[512,128], index: 2, kind: output, shape index: {0}]
  %s3 = inlined_call_operand.vmem [shape: f32[8,128], index: 3, kind: output, shape index: {1}]
  %s4 = inlined_call_operand.vmem [shape: f32[8,128], index: 4, kind: output, shape index: {2}]
  %5 = xla_tuple %s2, %s3, %s4
  %s6 = sld [smem:[#allocation0]]
  $region34: #{residual_conv_block.4} parent=0
    _
  %s8 = ssub.s32 1, %s6
  %s9 = scalar_select 0, %s8, %s6
  // Predicated region
  $region2: #{residual_conv_block.4} parent=0 // pred_check
    _
  $region3: #{residual_conv_block.4} parent=0 // pred_check_branch
    %11 = sbr.rel (0) target = $region5
  $region4: #{residual_conv_block.4} parent=0 // pred_region
    _
  $region5: #{residual_conv_block.4} parent=0 // pred_fallthru
    _
  // Predicated region
  $region6: #{residual_conv_block.4} parent=0 // pred_check
    _
  $region7: #{residual_conv_block.4} parent=0 // pred_check_branch
    %13 = sbr.rel (0) target = $region9
  $region8: #{residual_conv_block.4} parent=0 // pred_region
    _
  $region9: #{residual_conv_block.4} parent=0 // pred_fallthru
    _
  %v15 = vld [vmem:[%s0] sm:$0xf]
  %v16 = vld [vmem:[%s0 + $0x4] sm:$0xf]
  %v17 = vld [vmem:[%s0 + $0x8] sm:$0xf]
  %v18 = vld [vmem:[%s0 + $0xc] sm:$0xf]
  %v19 = vld [vmem:[%s0 + $0x10] sm:$0xf]
  %v20 = vld [vmem:[%s0 + $0x14] sm:$0xf]
  %v21 = vld [vmem:[%s0 + $0x18] sm:$0xf]
  %v22 = vld [vmem:[%s0 + $0x1c] sm:$0xf]
  %v23 = vld [vmem:[%s0 + $0x20] sm:$0xf]
  %v24 = vld [vmem:[%s0 + $0x24] sm:$0xf]
  %v25 = vld [vmem:[%s0 + $0x28] sm:$0xf]
  %v26 = vld [vmem:[%s0 + $0x2c] sm:$0xf]
  %v27 = vld [vmem:[%s0 + $0x30] sm:$0xf]
  %v28 = vld [vmem:[%s0 + $0x34] sm:$0xf]
  %v29 = vld [vmem:[%s0 + $0x38] sm:$0xf]
  %v30 = vld [vmem:[%s0 + $0x3c] sm:$0xf]
  %v31 = vld [vmem:[%s0 + $0x40] sm:$0xf]
  %v32 = vld [vmem:[%s0 + $0x44] sm:$0xf]
  %v33 = vld [vmem:[%s0 + $0x48] sm:$0xf]
  %v34 = vld [vmem:[%s0 + $0x4c] sm:$0xf]
  %v35 = vld [vmem:[%s0 + $0x50] sm:$0xf]
  %v36 = vld [vmem:[%s0 + $0x54] sm:$0xf]
  %v37 = vld [vmem:[%s0 + $0x58] sm:$0xf]
  %v38 = vld [vmem:[%s0 + $0x5c] sm:$0xf]
  %v39 = vld [vmem:[%s0 + $0x60] sm:$0xf]
  %v40 = vld [vmem:[%s0 + $0x64] sm:$0xf]
  %v41 = vld [vmem:[%s0 + $0x68] sm:$0xf]
  %v42 = vld [vmem:[%s0 + $0x6c] sm:$0xf]
  %v43 = vld [vmem:[%s0 + $0x70] sm:$0xf]
  %v44 = vld [vmem:[%s0 + $0x74] sm:$0xf]
  %v45 = vld [vmem:[%s0 + $0x78] sm:$0xf]
  %v46 = vld [vmem:[%s0 + $0x7c] sm:$0xf]
  %v47 = vld [vmem:[%s0 + $0x80] sm:$0xf]
  %v48 = vld [vmem:[%s0 + $0x84] sm:$0xf]
  %v49 = vld [vmem:[%s0 + $0x88] sm:$0xf]
  %v50 = vld [vmem:[%s0 + $0x8c] sm:$0xf]
  %v51 = vld [vmem:[%s0 + $0x90] sm:$0xf]
  %v52 = vld [vmem:[%s0 + $0x94] sm:$0xf]
  %v53 = vld [vmem:[%s0 + $0x98] sm:$0xf]
  %v54 = vld [vmem:[%s0 + $0x9c] sm:$0xf]
  %v55 = vld [vmem:[%s0 + $0xa0] sm:$0xf]
  %v56 = vld [vmem:[%s0 + $0xa4] sm:$0xf]
  %v57 = vld [vmem:[%s0 + $0xa8] sm:$0xf]
  %v58 = vld [vmem:[%s0 + $0xac] sm:$0xf]
  %v59 = vld [vmem:[%s0 + $0xb0] sm:$0xf]
  %v60 = vld [vmem:[%s0 + $0xb4] sm:$0xf]
  %v61 = vld [vmem:[%s0 + $0xb8] sm:$0xf]
  %v62 = vld [vmem:[%s0 + $0xbc] sm:$0xf]
  %v63 = vld [vmem:[%s0 + $0xc0] sm:$0xf]
  %v64 = vld [vmem:[%s0 + $0xc4] sm:$0xf]
  %v65 = vld [vmem:[%s0 + $0xc8] sm:$0xf]
  %v66 = vld [vmem:[%s0 + $0xcc] sm:$0xf]
  %v67 = vld [vmem:[%s0 + $0xd0] sm:$0xf]
  %v68 = vld [vmem:[%s0 + $0xd4] sm:$0xf]
  %v69 = vld [vmem:[%s0 + $0xd8] sm:$0xf]
  %v70 = vld [vmem:[%s0 + $0xdc] sm:$0xf]
  %v71 = vld [vmem:[%s0 + $0xe0] sm:$0xf]
  %v72 = vld [vmem:[%s0 + $0xe4] sm:$0xf]
  %v73 = vld [vmem:[%s0 + $0xe8] sm:$0xf]
  %v74 = vld [vmem:[%s0 + $0xec] sm:$0xf]
  %v75 = vld [vmem:[%s0 + $0xf0] sm:$0xf]
  %v76 = vld [vmem:[%s0 + $0xf4] sm:$0xf]
  %v77 = vld [vmem:[%s0 + $0xf8] sm:$0xf]
  %v78 = vld [vmem:[%s0 + $0xfc] sm:$0xf]
  %v79 = vld [vmem:[%s1] sm:$0xf]
  %v80 = vld [vmem:[%s1 + $0x4] sm:$0xf]
  %v81 = vld [vmem:[%s1 + $0x8] sm:$0xf]
  %v82 = vld [vmem:[%s1 + $0xc] sm:$0xf]
  %v83 = vld [vmem:[%s1 + $0x10] sm:$0x3]
  %v148 = vunpack.c.l.b16 %v15
  %v149 = vunpack.c.l.b16 %v16
  %v150 = vunpack.c.l.b16 %v17
  %v151 = vunpack.c.l.b16 %v18
  %v152 = vunpack.c.l.b16 %v19
  %v153 = vunpack.c.l.b16 %v20
  %v154 = vunpack.c.l.b16 %v21
  %v155 = vunpack.c.l.b16 %v22
  %v156 = vunpack.c.l.b16 %v23
  %v157 = vunpack.c.l.b16 %v24
  %v158 = vunpack.c.l.b16 %v25
  %v159 = vunpack.c.l.b16 %v26
  %v160 = vunpack.c.l.b16 %v27
  %v161 = vunpack.c.l.b16 %v28
  %v162 = vunpack.c.l.b16 %v29
  %v163 = vunpack.c.l.b16 %v30
  %v164 = vunpack.c.l.b16 %v31
  %v165 = vunpack.c.l.b16 %v32
  %v166 = vunpack.c.l.b16 %v33
  %v167 = vunpack.c.l.b16 %v34
  %v168 = vunpack.c.l.b16 %v35
  %v169 = vunpack.c.l.b16 %v36
  %v170 = vunpack.c.l.b16 %v37
  %v171 = vunpack.c.l.b16 %v38
  %v172 = vunpack.c.l.b16 %v39
  %v173 = vunpack.c.l.b16 %v40
  %v174 = vunpack.c.l.b16 %v41
  %v175 = vunpack.c.l.b16 %v42
  %v176 = vunpack.c.l.b16 %v43
  %v177 = vunpack.c.l.b16 %v44
  %v178 = vunpack.c.l.b16 %v45
  %v179 = vunpack.c.l.b16 %v46
  %v180 = vunpack.c.l.b16 %v47
  %v181 = vunpack.c.l.b16 %v48
  %v182 = vunpack.c.l.b16 %v49
  %v183 = vunpack.c.l.b16 %v50
  %v184 = vunpack.c.l.b16 %v51
  %v185 = vunpack.c.l.b16 %v52
  %v186 = vunpack.c.l.b16 %v53
  %v187 = vunpack.c.l.b16 %v54
  %v188 = vunpack.c.l.b16 %v55
  %v189 = vunpack.c.l.b16 %v56
  %v190 = vunpack.c.l.b16 %v57
  %v191 = vunpack.c.l.b16 %v58
  %v192 = vunpack.c.l.b16 %v59
  %v193 = vunpack.c.l.b16 %v60
  %v194 = vunpack.c.l.b16 %v61
  %v195 = vunpack.c.l.b16 %v62
  %v196 = vunpack.c.l.b16 %v63
  %v197 = vunpack.c.l.b16 %v64
  %v198 = vunpack.c.l.b16 %v65
  %v199 = vunpack.c.l.b16 %v66
  %v200 = vunpack.c.l.b16 %v67
  %v201 = vunpack.c.l.b16 %v68
  %v202 = vunpack.c.l.b16 %v69
  %v203 = vunpack.c.l.b16 %v70
  %v204 = vunpack.c.l.b16 %v71
  %v205 = vunpack.c.l.b16 %v72
  %v206 = vunpack.c.l.b16 %v73
  %v207 = vunpack.c.l.b16 %v74
  %v208 = vunpack.c.l.b16 %v75
  %v209 = vunpack.c.l.b16 %v76
  %v210 = vunpack.c.l.b16 %v77
  %v211 = vunpack.c.l.b16 %v78
  %v212 = vpack.c.b16 %v149, %v148
  %v213 = vpack.c.b16 %v151, %v150
  %v214 = vpack.c.b16 %v153, %v152
  %v215 = vpack.c.b16 %v155, %v154
  %v216 = vpack.c.b16 %v157, %v156
  %v217 = vpack.c.b16 %v159, %v158
  %v218 = vpack.c.b16 %v161, %v160
  %v219 = vpack.c.b16 %v163, %v162
  %v220 = vpack.c.b16 %v165, %v164
  %v221 = vpack.c.b16 %v167, %v166
  %v222 = vpack.c.b16 %v169, %v168
  %v223 = vpack.c.b16 %v171, %v170
  %v224 = vpack.c.b16 %v173, %v172
  %v225 = vpack.c.b16 %v175, %v174
  %v226 = vpack.c.b16 %v177, %v176
  %v227 = vpack.c.b16 %v179, %v178
  %v228 = vpack.c.b16 %v181, %v180
  %v229 = vpack.c.b16 %v183, %v182
  %v230 = vpack.c.b16 %v185, %v184
  %v231 = vpack.c.b16 %v187, %v186
  %v232 = vpack.c.b16 %v189, %v188
  %v233 = vpack.c.b16 %v191, %v190
  %v234 = vpack.c.b16 %v193, %v192
  %v235 = vpack.c.b16 %v195, %v194
  %v236 = vpack.c.b16 %v197, %v196
  %v237 = vpack.c.b16 %v199, %v198
  %v238 = vpack.c.b16 %v201, %v200
  %v239 = vpack.c.b16 %v203, %v202
  %v240 = vpack.c.b16 %v205, %v204
  %v241 = vpack.c.b16 %v207, %v206
  %v242 = vpack.c.b16 %v209, %v208
  %v243 = vpack.c.b16 %v211, %v210
  %v249 = vunpack.c.l.b16 %v79
  %v250 = vunpack.c.l.b16 %v80
  %v251 = vunpack.c.l.b16 %v81
  %v252 = vunpack.c.l.b16 %v82
  %v253 = vunpack.c.l.b16 %v83
  %v254 = vpack.c.b16 %v250, %v249
  %v255 = vpack.c.b16 %v252, %v251
  %v256 = vpack.c.b16 %v253, %v253
  %vm259 = vcmask 293888
  %v261 = vsel %vm259, %v212, 0
  %v264 = vsel %vm259, %v213, 0
  %v267 = vsel %vm259, %v214, 0
  %v270 = vsel %vm259, %v215, 0
  %v273 = vsel %vm259, %v216, 0
  %v276 = vsel %vm259, %v217, 0
  %v279 = vsel %vm259, %v218, 0
  %v282 = vsel %vm259, %v219, 0
  %v285 = vsel %vm259, %v220, 0
  %v288 = vsel %vm259, %v221, 0
  %v291 = vsel %vm259, %v222, 0
  %v294 = vsel %vm259, %v223, 0
  %v297 = vsel %vm259, %v224, 0
  %v300 = vsel %vm259, %v225, 0
  %v303 = vsel %vm259, %v226, 0
  %v306 = vsel %vm259, %v227, 0
  %v309 = vsel %vm259, %v228, 0
  %v312 = vsel %vm259, %v229, 0
  %v315 = vsel %vm259, %v230, 0
  %v318 = vsel %vm259, %v231, 0
  %v321 = vsel %vm259, %v232, 0
  %v324 = vsel %vm259, %v233, 0
  %v327 = vsel %vm259, %v234, 0
  %v330 = vsel %vm259, %v235, 0
  %v333 = vsel %vm259, %v236, 0
  %v336 = vsel %vm259, %v237, 0
  %v339 = vsel %vm259, %v238, 0
  %v342 = vsel %vm259, %v239, 0
  %v345 = vsel %vm259, %v240, 0
  %v348 = vsel %vm259, %v241, 0
  %v351 = vsel %vm259, %v242, 0
  %v354 = vsel %vm259, %v243, 0
  %vm356 = vcmask 1041408
  %v358 = vsel %vm356, %v256, 0
  %360 = vmatprep.subr.bf16.mxu0 0
  %361 = vmatpush1.bf16.msra.mxu0 %v254
  %362 = vmatprep.subr.bf16.mxu0 0
  %363 = vmatpush1.bf16.msra.mxu0 %v255
  %364 = vmatprep.subr.bf16.mxu0 0
  %365 = vmatpush1.bf16.msra.mxu0 %v358
  %366 = vmatprep.subr.bf16.mxu0 0
  %367 = vmatpush1.bf16.msra.mxu0 0
  %368 = vmatprep.subr.bf16.mxu0 0
  %369 = vmatpush1.bf16.msra.mxu0 0
  %370 = vmatprep.subr.bf16.mxu0 0
  %371 = vmatpush1.bf16.msra.mxu0 0
  %372 = vmatprep.subr.bf16.mxu0 0
  %373 = vmatpush1.bf16.msra.mxu0 0
  %374 = vmatprep.subr.bf16.mxu0 0
  %375 = vmatpush1.bf16.msra.mxu0 0
  %376 = vmatprep.subr.bf16.mxu0 0
  %377 = vmatpush1.bf16.msra.mxu0 0
  %378 = vmatprep.subr.bf16.mxu0 0
  %379 = vmatpush1.bf16.msra.mxu0 0
  %380 = vmatprep.subr.bf16.mxu0 0
  %381 = vmatpush1.bf16.msra.mxu0 0
  %382 = vmatprep.subr.bf16.mxu0 0
  %383 = vmatpush1.bf16.msra.mxu0 0
  %384 = vmatprep.subr.bf16.mxu0 0
  %385 = vmatpush1.bf16.msra.mxu0 0
  %386 = vmatprep.subr.bf16.mxu0 0
  %387 = vmatpush1.bf16.msra.mxu0 0
  %388 = vmatprep.subr.bf16.mxu0 0
  %389 = vmatpush1.bf16.msra.mxu0 0
  %390 = vmatprep.subr.bf16.mxu0 0
  %391 = vmatpush1.bf16.msra.mxu0 0
  %392 = vmatprep.mubr.bf16.mxu0 0
  %393 = vmatmul.mubr.bf16.gmra.mrb[0].mxu0 %v261
  %v394 = vpop.f32.mrb[0].mxu0
  %v395 = vadd.f32 0.0, %v394
  %v396 = vpop.f32.mrb[0].mxu0
  %v397 = vpop.f32.mrb[0].mxu0
  %v398 = vadd.f32 0.0, %v397
  %v399 = vpop.f32.mrb[0].mxu0
  %400 = vmatprep.mubr.bf16.mxu0 0
  %401 = vmatmul.mubr.bf16.gmra.mrb[0].mxu0 %v264
  %v402 = vpop.f32.mrb[0].mxu0
  %v403 = vadd.f32 0.0, %v402
  %v404 = vpop.f32.mrb[0].mxu0
  %v405 = vpop.f32.mrb[0].mxu0
  %v406 = vadd.f32 0.0, %v405
  %v407 = vpop.f32.mrb[0].mxu0
  %408 = vmatprep.mubr.bf16.mxu0 0
  %409 = vmatmul.mubr.bf16.gmra.mrb[0].mxu0 %v267
  %v410 = vpop.f32.mrb[0].mxu0
  %v411 = vadd.f32 0.0, %v410
  %v412 = vpop.f32.mrb[0].mxu0
  %v413 = vpop.f32.mrb[0].mxu0
  %v414 = vadd.f32 0.0, %v413
  %v415 = vpop.f32.mrb[0].mxu0
  %416 = vmatprep.mubr.bf16.mxu0 0
  %417 = vmatmul.mubr.bf16.gmra.mrb[0].mxu0 %v270
  %v418 = vpop.f32.mrb[0].mxu0
  %v419 = vadd.f32 0.0, %v418
  %v420 = vpop.f32.mrb[0].mxu0
  %v421 = vpop.f32.mrb[0].mxu0
  %v422 = vadd.f32 0.0, %v421
  %v423 = vpop.f32.mrb[0].mxu0
  %424 = vmatprep.mubr.bf16.mxu0 0
  %425 = vmatmul.mubr.bf16.gmra.mrb[0].mxu0 %v273
  %v426 = vpop.f32.mrb[0].mxu0
  %v427 = vadd.f32 0.0, %v426
  %v428 = vpop.f32.mrb[0].mxu0
  %v429 = vpop.f32.mrb[0].mxu0
  %v430 = vadd.f32 0.0, %v429
  %v431 = vpop.f32.mrb[0].mxu0
  %432 = vmatprep.mubr.bf16.mxu0 0
  %433 = vmatmul.mubr.bf16.gmra.mrb[0].mxu0 %v276
  %v434 = vpop.f32.mrb[0].mxu0
  %v435 = vadd.f32 0.0, %v434
  %v436 = vpop.f32.mrb[0].mxu0
  %v437 = vpop.f32.mrb[0].mxu0
  %v438 = vadd.f32 0.0, %v437
  %v439 = vpop.f32.mrb[0].mxu0
  %440 = vmatprep.mubr.bf16.mxu0 0
  %441 = vmatmul.mubr.bf16.gmra.mrb[0].mxu0 %v279
  %v442 = vpop.f32.mrb[0].mxu0
  %v443 = vadd.f32 0.0, %v442
  %v444 = vpop.f32.mrb[0].mxu0
  %v445 = vpop.f32.mrb[0].mxu0
  %v446 = vadd.f32 0.0, %v445
  %v447 = vpop.f32.mrb[0].mxu0
  %448 = vmatprep.mubr.bf16.mxu0 0
  %449 = vmatmul.mubr.bf16.gmra.mrb[0].mxu0 %v282
  %v450 = vpop.f32.mrb[0].mxu0
  %v451 = vadd.f32 0.0, %v450
  %v452 = vpop.f32.mrb[0].mxu0
  %v453 = vpop.f32.mrb[0].mxu0
  %v454 = vadd.f32 0.0, %v453
  %v455 = vpop.f32.mrb[0].mxu0
  %456 = vmatprep.mubr.bf16.mxu0 0
  %457 = vmatmul.mubr.bf16.gmra.mrb[0].mxu0 %v285
  %v458 = vpop.f32.mrb[0].mxu0
  %v459 = vadd.f32 0.0, %v458
  %v460 = vpop.f32.mrb[0].mxu0
  %v461 = vpop.f32.mrb[0].mxu0
  %v462 = vadd.f32 0.0, %v461
  %v463 = vpop.f32.mrb[0].mxu0
  %464 = vmatprep.mubr.bf16.mxu0 0
  %465 = vmatmul.mubr.bf16.gmra.mrb[0].mxu0 %v288
  %v466 = vpop.f32.mrb[0].mxu0
  %v467 = vadd.f32 0.0, %v466
  %v468 = vpop.f32.mrb[0].mxu0
  %v469 = vpop.f32.mrb[0].mxu0
  %v470 = vadd.f32 0.0, %v469
  %v471 = vpop.f32.mrb[0].mxu0
  %472 = vmatprep.mubr.bf16.mxu0 0
  %473 = vmatmul.mubr.bf16.gmra.mrb[0].mxu0 %v291
  %v474 = vpop.f32.mrb[0].mxu0
  %v475 = vadd.f32 0.0, %v474
  %v476 = vpop.f32.mrb[0].mxu0
  %v477 = vpop.f32.mrb[0].mxu0
  %v478 = vadd.f32 0.0, %v477
  %v479 = vpop.f32.mrb[0].mxu0
  %480 = vmatprep.mubr.bf16.mxu0 0
  %481 = vmatmul.mubr.bf16.gmra.mrb[0].mxu0 %v294
  %v482 = vpop.f32.mrb[0].mxu0
  %v483 = vadd.f32 0.0, %v482
  %v484 = vpop.f32.mrb[0].mxu0
  %v485 = vpop.f32.mrb[0].mxu0
  %v486 = vadd.f32 0.0, %v485
  %v487 = vpop.f32.mrb[0].mxu0
  %488 = vmatprep.mubr.bf16.mxu0 0
  %489 = vmatmul.mubr.bf16.gmra.mrb[0].mxu0 %v297
  %v490 = vpop.f32.mrb[0].mxu0
  %v491 = vadd.f32 0.0, %v490
  %v492 = vpop.f32.mrb[0].mxu0
  %v493 = vpop.f32.mrb[0].mxu0
  %v494 = vadd.f32 0.0, %v493
  %v495 = vpop.f32.mrb[0].mxu0
  %496 = vmatprep.mubr.bf16.mxu0 0
  %497 = vmatmul.mubr.bf16.gmra.mrb[0].mxu0 %v300
  %v498 = vpop.f32.mrb[0].mxu0
  %v499 = vadd.f32 0.0, %v498
  %v500 = vpop.f32.mrb[0].mxu0
  %v501 = vpop.f32.mrb[0].mxu0
  %v502 = vadd.f32 0.0, %v501
  %v503 = vpop.f32.mrb[0].mxu0
  %504 = vmatprep.mubr.bf16.mxu0 0
  %505 = vmatmul.mubr.bf16.gmra.mrb[0].mxu0 %v303
  %v506 = vpop.f32.mrb[0].mxu0
  %v507 = vadd.f32 0.0, %v506
  %v508 = vpop.f32.mrb[0].mxu0
  %v509 = vpop.f32.mrb[0].mxu0
  %v510 = vadd.f32 0.0, %v509
  %v511 = vpop.f32.mrb[0].mxu0
  %512 = vmatprep.mubr.bf16.mxu0 0
  %513 = vmatmul.mubr.bf16.gmra.mrb[0].mxu0 %v306
  %v514 = vpop.f32.mrb[0].mxu0
  %v515 = vadd.f32 0.0, %v514
  %v516 = vpop.f32.mrb[0].mxu0
  %v517 = vpop.f32.mrb[0].mxu0
  %v518 = vadd.f32 0.0, %v517
  %v519 = vpop.f32.mrb[0].mxu0
  %520 = vmatprep.mubr.bf16.mxu0 0
  %521 = vmatmul.mubr.bf16.gmra.mrb[0].mxu0 %v309
  %v522 = vpop.f32.mrb[0].mxu0
  %v523 = vadd.f32 0.0, %v522
  %v524 = vpop.f32.mrb[0].mxu0
  %v525 = vpop.f32.mrb[0].mxu0
  %v526 = vadd.f32 0.0, %v525
  %v527 = vpop.f32.mrb[0].mxu0
  %528 = vmatprep.mubr.bf16.mxu0 0
  %529 = vmatmul.mubr.bf16.gmra.mrb[0].mxu0 %v312
  %v530 = vpop.f32.mrb[0].mxu0
  %v531 = vadd.f32 0.0, %v530
  %v532 = vpop.f32.mrb[0].mxu0
  %v533 = vpop.f32.mrb[0].mxu0
  %v534 = vadd.f32 0.0, %v533
  %v535 = vpop.f32.mrb[0].mxu0
  %536 = vmatprep.mubr.bf16.mxu0 0
  %537 = vmatmul.mubr.bf16.gmra.mrb[0].mxu0 %v315
  %v538 = vpop.f32.mrb[0].mxu0
  %v539 = vadd.f32 0.0, %v538
  %v540 = vpop.f32.mrb[0].mxu0
  %v541 = vpop.f32.mrb[0].mxu0
  %v542 = vadd.f32 0.0, %v541
  %v543 = vpop.f32.mrb[0].mxu0
  %544 = vmatprep.mubr.bf16.mxu0 0
  %545 = vmatmul.mubr.bf16.gmra.mrb[0].mxu0 %v318
  %v546 = vpop.f32.mrb[0].mxu0
  %v547 = vadd.f32 0.0, %v546
  %v548 = vpop.f32.mrb[0].mxu0
  %v549 = vpop.f32.mrb[0].mxu0
  %v550 = vadd.f32 0.0, %v549
  %v551 = vpop.f32.mrb[0].mxu0
  %552 = vmatprep.mubr.bf16.mxu0 0
  %553 = vmatmul.mubr.bf16.gmra.mrb[0].mxu0 %v321
  %v554 = vpop.f32.mrb[0].mxu0
  %v555 = vadd.f32 0.0, %v554
  %v556 = vpop.f32.mrb[0].mxu0
  %v557 = vpop.f32.mrb[0].mxu0
  %v558 = vadd.f32 0.0, %v557
  %v559 = vpop.f32.mrb[0].mxu0
  %560 = vmatprep.mubr.bf16.mxu0 0
  %561 = vmatmul.mubr.bf16.gmra.mrb[0].mxu0 %v324
  %v562 = vpop.f32.mrb[0].mxu0
  %v563 = vadd.f32 0.0, %v562
  %v564 = vpop.f32.mrb[0].mxu0
  %v565 = vpop.f32.mrb[0].mxu0
  %v566 = vadd.f32 0.0, %v565
  %v567 = vpop.f32.mrb[0].mxu0
  %568 = vmatprep.mubr.bf16.mxu0 0
  %569 = vmatmul.mubr.bf16.gmra.mrb[0].mxu0 %v327
  %v570 = vpop.f32.mrb[0].mxu0
  %v571 = vadd.f32 0.0, %v570
  %v572 = vpop.f32.mrb[0].mxu0
  %v573 = vpop.f32.mrb[0].mxu0
  %v574 = vadd.f32 0.0, %v573
  %v575 = vpop.f32.mrb[0].mxu0
  %576 = vmatprep.mubr.bf16.mxu0 0
  %577 = vmatmul.mubr.bf16.gmra.mrb[0].mxu0 %v330
  %v578 = vpop.f32.mrb[0].mxu0
  %v579 = vadd.f32 0.0, %v578
  %v580 = vpop.f32.mrb[0].mxu0
  %v581 = vpop.f32.mrb[0].mxu0
  %v582 = vadd.f32 0.0, %v581
  %v583 = vpop.f32.mrb[0].mxu0
  %584 = vmatprep.mubr.bf16.mxu0 0
  %585 = vmatmul.mubr.bf16.gmra.mrb[0].mxu0 %v333
  %v586 = vpop.f32.mrb[0].mxu0
  %v587 = vadd.f32 0.0, %v586
  %v588 = vpop.f32.mrb[0].mxu0
  %v589 = vpop.f32.mrb[0].mxu0
  %v590 = vadd.f32 0.0, %v589
  %v591 = vpop.f32.mrb[0].mxu0
  %592 = vmatprep.mubr.bf16.mxu0 0
  %593 = vmatmul.mubr.bf16.gmra.mrb[0].mxu0 %v336
  %v594 = vpop.f32.mrb[0].mxu0
  %v595 = vadd.f32 0.0, %v594
  %v596 = vpop.f32.mrb[0].mxu0
  %v597 = vpop.f32.mrb[0].mxu0
  %v598 = vadd.f32 0.0, %v597
  %v599 = vpop.f32.mrb[0].mxu0
  %600 = vmatprep.mubr.bf16.mxu0 0
  %601 = vmatmul.mubr.bf16.gmra.mrb[0].mxu0 %v339
  %v602 = vpop.f32.mrb[0].mxu0
  %v603 = vadd.f32 0.0, %v602
  %v604 = vpop.f32.mrb[0].mxu0
  %v605 = vpop.f32.mrb[0].mxu0
  %v606 = vadd.f32 0.0, %v605
  %v607 = vpop.f32.mrb[0].mxu0
  %608 = vmatprep.mubr.bf16.mxu0 0
  %609 = vmatmul.mubr.bf16.gmra.mrb[0].mxu0 %v342
  %v610 = vpop.f32.mrb[0].mxu0
  %v611 = vadd.f32 0.0, %v610
  %v612 = vpop.f32.mrb[0].mxu0
  %v613 = vpop.f32.mrb[0].mxu0
  %v614 = vadd.f32 0.0, %v613
  %v615 = vpop.f32.mrb[0].mxu0
  %616 = vmatprep.mubr.bf16.mxu0 0
  %617 = vmatmul.mubr.bf16.gmra.mrb[0].mxu0 %v345
  %v618 = vpop.f32.mrb[0].mxu0
  %v619 = vadd.f32 0.0, %v618
  %v620 = vpop.f32.mrb[0].mxu0
  %v621 = vpop.f32.mrb[0].mxu0
  %v622 = vadd.f32 0.0, %v621
  %v623 = vpop.f32.mrb[0].mxu0
  %624 = vmatprep.mubr.bf16.mxu0 0
  %625 = vmatmul.mubr.bf16.gmra.mrb[0].mxu0 %v348
  %v626 = vpop.f32.mrb[0].mxu0
  %v627 = vadd.f32 0.0, %v626
  %v628 = vpop.f32.mrb[0].mxu0
  %v629 = vpop.f32.mrb[0].mxu0
  %v630 = vadd.f32 0.0, %v629
  %v631 = vpop.f32.mrb[0].mxu0
  %632 = vmatprep.mubr.bf16.mxu0 0
  %633 = vmatmul.mubr.bf16.gmra.mrb[0].mxu0 %v351
  %v634 = vpop.f32.mrb[0].mxu0
  %v635 = vadd.f32 0.0, %v634
  %v636 = vpop.f32.mrb[0].mxu0
  %v637 = vpop.f32.mrb[0].mxu0
  %v638 = vadd.f32 0.0, %v637
  %v639 = vpop.f32.mrb[0].mxu0
  %640 = vmatprep.mubr.bf16.mxu0 0
  %641 = vmatmul.mubr.bf16.gmra.mrb[0].mxu0 %v354
  %v642 = vpop.f32.mrb[0].mxu0
  %v643 = vadd.f32 0.0, %v642
  %v644 = vpop.f32.mrb[0].mxu0
  %v645 = vpop.f32.mrb[0].mxu0
  %v646 = vadd.f32 0.0, %v645
  %v647 = vpop.f32.mrb[0].mxu0
  %648 = vdwg.mxu0
  %649 = vst [vmem:[#allocation2] sm:$0xff] %v395
  %650 = vst [vmem:[#allocation2 + $0x8] sm:$0xff] %v398
  %651 = vst [vmem:[#allocation2 + $0x10] sm:$0xff] %v403
  %652 = vst [vmem:[#allocation2 + $0x18] sm:$0xff] %v406
  %653 = vst [vmem:[#allocation2 + $0x20] sm:$0xff] %v411
  %654 = vst [vmem:[#allocation2 + $0x28] sm:$0xff] %v414
  %655 = vst [vmem:[#allocation2 + $0x30] sm:$0xff] %v419
  %656 = vst [vmem:[#allocation2 + $0x38] sm:$0xff] %v422
  %657 = vst [vmem:[#allocation2 + $0x40] sm:$0xff] %v427
  %658 = vst [vmem:[#allocation2 + $0x48] sm:$0xff] %v430
  %659 = vst [vmem:[#allocation2 + $0x50] sm:$0xff] %v435
  %660 = vst [vmem:[#allocation2 + $0x58] sm:$0xff] %v438
  %661 = vst [vmem:[#allocation2 + $0x60] sm:$0xff] %v443
  %662 = vst [vmem:[#allocation2 + $0x68] sm:$0xff] %v446
  %663 = vst [vmem:[#allocation2 + $0x70] sm:$0xff] %v451
  %664 = vst [vmem:[#allocation2 + $0x78] sm:$0xff] %v454
  %665 = vst [vmem:[#allocation2 + $0x80] sm:$0xff] %v459
  %666 = vst [vmem:[#allocation2 + $0x88] sm:$0xff] %v462
  %667 = vst [vmem:[#allocation2 + $0x90] sm:$0xff] %v467
  %668 = vst [vmem:[#allocation2 + $0x98] sm:$0xff] %v470
  %669 = vst [vmem:[#allocation2 + $0xa0] sm:$0xff] %v475
  %670 = vst [vmem:[#allocation2 + $0xa8] sm:$0xff] %v478
  %671 = vst [vmem:[#allocation2 + $0xb0] sm:$0xff] %v483
  %672 = vst [vmem:[#allocation2 + $0xb8] sm:$0xff] %v486
  %673 = vst [vmem:[#allocation2 + $0xc0] sm:$0xff] %v491
  %674 = vst [vmem:[#allocation2 + $0xc8] sm:$0xff] %v494
  %675 = vst [vmem:[#allocation2 + $0xd0] sm:$0xff] %v499
  %676 = vst [vmem:[#allocation2 + $0xd8] sm:$0xff] %v502
  %677 = vst [vmem:[#allocation2 + $0xe0] sm:$0xff] %v507
  %678 = vst [vmem:[#allocation2 + $0xe8] sm:$0xff] %v510
  %679 = vst [vmem:[#allocation2 + $0xf0] sm:$0xff] %v515
  %680 = vst [vmem:[#allocation2 + $0xf8] sm:$0xff] %v518
  %681 = vst [vmem:[#allocation2 + $0x100] sm:$0xff] %v523
  %682 = vst [vmem:[#allocation2 + $0x108] sm:$0xff] %v526
  %683 = vst [vmem:[#allocation2 + $0x110] sm:$0xff] %v531
  %684 = vst [vmem:[#allocation2 + $0x118] sm:$0xff] %v534
  %685 = vst [vmem:[#allocation2 + $0x120] sm:$0xff] %v539
  %686 = vst [vmem:[#allocation2 + $0x128] sm:$0xff] %v542
  %687 = vst [vmem:[#allocation2 + $0x130] sm:$0xff] %v547
  %688 = vst [vmem:[#allocation2 + $0x138] sm:$0xff] %v550
  %689 = vst [vmem:[#allocation2 + $0x140] sm:$0xff] %v555
  %690 = vst [vmem:[#allocation2 + $0x148] sm:$0xff] %v558
  %691 = vst [vmem:[#allocation2 + $0x150] sm:$0xff] %v563
  %692 = vst [vmem:[#allocation2 + $0x158] sm:$0xff] %v566
  %693 = vst [vmem:[#allocation2 + $0x160] sm:$0xff] %v571
  %694 = vst [vmem:[#allocation2 + $0x168] sm:$0xff] %v574
  %695 = vst [vmem:[#allocation2 + $0x170] sm:$0xff] %v579
  %696 = vst [vmem:[#allocation2 + $0x178] sm:$0xff] %v582
  %697 = vst [vmem:[#allocation2 + $0x180] sm:$0xff] %v587
  %698 = vst [vmem:[#allocation2 + $0x188] sm:$0xff] %v590
  %699 = vst [vmem:[#allocation2 + $0x190] sm:$0xff] %v595
  %700 = vst [vmem:[#allocation2 + $0x198] sm:$0xff] %v598
  %701 = vst [vmem:[#allocation2 + $0x1a0] sm:$0xff] %v603
  %702 = vst [vmem:[#allocation2 + $0x1a8] sm:$0xff] %v606
  %703 = vst [vmem:[#allocation2 + $0x1b0] sm:$0xff] %v611
  %704 = vst [vmem:[#allocation2 + $0x1b8] sm:$0xff] %v614
  %705 = vst [vmem:[#allocation2 + $0x1c0] sm:$0xff] %v619
  %706 = vst [vmem:[#allocation2 + $0x1c8] sm:$0xff] %v622
  %707 = vst [vmem:[#allocation2 + $0x1d0] sm:$0xff] %v627
  %708 = vst [vmem:[#allocation2 + $0x1d8] sm:$0xff] %v630
  %709 = vst [vmem:[#allocation2 + $0x1e0] sm:$0xff] %v635
  %710 = vst [vmem:[#allocation2 + $0x1e8] sm:$0xff] %v638
  %711 = vst [vmem:[#allocation2 + $0x1f0] sm:$0xff] %v643
  %712 = vst [vmem:[#allocation2 + $0x1f8] sm:$0xff] %v646
  %v713 = vld [vmem:[#allocation2] sm:$0xff]
  %v714 = vld [vmem:[#allocation2 + $0x8] sm:$0xff]
  %v715 = vld [vmem:[#allocation2 + $0x10] sm:$0xff]
  %v716 = vld [vmem:[#allocation2 + $0x18] sm:$0xff]
  %v717 = vld [vmem:[#allocation2 + $0x20] sm:$0xff]
  %v718 = vld [vmem:[#allocation2 + $0x28] sm:$0xff]
  %v719 = vld [vmem:[#allocation2 + $0x30] sm:$0xff]
  %v720 = vld [vmem:[#allocation2 + $0x38] sm:$0xff]
  %v721 = vld [vmem:[#allocation2 + $0x40] sm:$0xff]
  %v722 = vld [vmem:[#allocation2 + $0x48] sm:$0xff]
  %v723 = vld [vmem:[#allocation2 + $0x50] sm:$0xff]
  %v724 = vld [vmem:[#allocation2 + $0x58] sm:$0xff]
  %v725 = vld [vmem:[#allocation2 + $0x60] sm:$0xff]
  %v726 = vld [vmem:[#allocation2 + $0x68] sm:$0xff]
  %v727 = vld [vmem:[#allocation2 + $0x70] sm:$0xff]
  %v728 = vld [vmem:[#allocation2 + $0x78] sm:$0xff]
  %v729 = vld [vmem:[#allocation2 + $0x80] sm:$0xff]
  %v730 = vld [vmem:[#allocation2 + $0x88] sm:$0xff]
  %v731 = vld [vmem:[#allocation2 + $0x90] sm:$0xff]
  %v732 = vld [vmem:[#allocation2 + $0x98] sm:$0xff]
  %v733 = vld [vmem:[#allocation2 + $0xa0] sm:$0xff]
  %v734 = vld [vmem:[#allocation2 + $0xa8] sm:$0xff]
  %v735 = vld [vmem:[#allocation2 + $0xb0] sm:$0xff]
  %v736 = vld [vmem:[#allocation2 + $0xb8] sm:$0xff]
  %v737 = vld [vmem:[#allocation2 + $0xc0] sm:$0xff]
  %v738 = vld [vmem:[#allocation2 + $0xc8] sm:$0xff]
  %v739 = vld [vmem:[#allocation2 + $0xd0] sm:$0xff]
  %v740 = vld [vmem:[#allocation2 + $0xd8] sm:$0xff]
  %v741 = vld [vmem:[#allocation2 + $0xe0] sm:$0xff]
  %v742 = vld [vmem:[#allocation2 + $0xe8] sm:$0xff]
  %v743 = vld [vmem:[#allocation2 + $0xf0] sm:$0xff]
  %v744 = vld [vmem:[#allocation2 + $0xf8] sm:$0xff]
  %v745 = vld [vmem:[#allocation2 + $0x100] sm:$0xff]
  %v746 = vld [vmem:[#allocation2 + $0x108] sm:$0xff]
  %v747 = vld [vmem:[#allocation2 + $0x110] sm:$0xff]
  %v748 = vld [vmem:[#allocation2 + $0x118] sm:$0xff]
  %v749 = vld [vmem:[#allocation2 + $0x120] sm:$0xff]
  %v750 = vld [vmem:[#allocation2 + $0x128] sm:$0xff]
  %v751 = vld [vmem:[#allocation2 + $0x130] sm:$0xff]
  %v752 = vld [vmem:[#allocation2 + $0x138] sm:$0xff]
  %v753 = vld [vmem:[#allocation2 + $0x140] sm:$0xff]
  %v754 = vld [vmem:[#allocation2 + $0x148] sm:$0xff]
  %v755 = vld [vmem:[#allocation2 + $0x150] sm:$0xff]
  %v756 = vld [vmem:[#allocation2 + $0x158] sm:$0xff]
  %v757 = vld [vmem:[#allocation2 + $0x160] sm:$0xff]
  %v758 = vld [vmem:[#allocation2 + $0x168] sm:$0xff]
  %v759 = vld [vmem:[#allocation2 + $0x170] sm:$0xff]
  %v760 = vld [vmem:[#allocation2 + $0x178] sm:$0xff]
  %v761 = vld [vmem:[#allocation2 + $0x180] sm:$0xff]
  %v762 = vld [vmem:[#allocation2 + $0x188] sm:$0xff]
  %v763 = vld [vmem:[#allocation2 + $0x190] sm:$0xff]
  %v764 = vld [vmem:[#allocation2 + $0x198] sm:$0xff]
  %v765 = vld [vmem:[#allocation2 + $0x1a0] sm:$0xff]
  %v766 = vld [vmem:[#allocation2 + $0x1a8] sm:$0xff]
  %v767 = vld [vmem:[#allocation2 + $0x1b0] sm:$0xff]
  %v768 = vld [vmem:[#allocation2 + $0x1b8] sm:$0xff]
  %v769 = vld [vmem:[#allocation2 + $0x1c0] sm:$0xff]
  %v770 = vld [vmem:[#allocation2 + $0x1c8] sm:$0xff]
  %v771 = vld [vmem:[#allocation2 + $0x1d0] sm:$0xff]
  %v772 = vld [vmem:[#allocation2 + $0x1d8] sm:$0xff]
  %v773 = vld [vmem:[#allocation2 + $0x1e0] sm:$0xff]
  %v774 = vld [vmem:[#allocation2 + $0x1e8] sm:$0xff]
  %v775 = vld [vmem:[#allocation2 + $0x1f0] sm:$0xff]
  %v776 = vld [vmem:[#allocation2 + $0x1f8] sm:$0xff]
  %v777 = vpack.c.bf16 %v714, %v713
  %v778 = vpack.c.bf16 %v716, %v715
  %v779 = vpack.c.bf16 %v718, %v717
  %v780 = vpack.c.bf16 %v720, %v719
  %v781 = vpack.c.bf16 %v722, %v721
  %v782 = vpack.c.bf16 %v724, %v723
  %v783 = vpack.c.bf16 %v726, %v725
  %v784 = vpack.c.bf16 %v728, %v727
  %v785 = vpack.c.bf16 %v730, %v729
  %v786 = vpack.c.bf16 %v732, %v731
  %v787 = vpack.c.bf16 %v734, %v733
  %v788 = vpack.c.bf16 %v736, %v735
  %v789 = vpack.c.bf16 %v738, %v737
  %v790 = vpack.c.bf16 %v740, %v739
  %v791 = vpack.c.bf16 %v742, %v741
  %v792 = vpack.c.bf16 %v744, %v743
  %v793 = vpack.c.bf16 %v746, %v745
  %v794 = vpack.c.bf16 %v748, %v747
  %v795 = vpack.c.bf16 %v750, %v749
  %v796 = vpack.c.bf16 %v752, %v751
  %v797 = vpack.c.bf16 %v754, %v753
  %v798 = vpack.c.bf16 %v756, %v755
  %v799 = vpack.c.bf16 %v758, %v757
  %v800 = vpack.c.bf16 %v760, %v759
  %v801 = vpack.c.bf16 %v762, %v761
  %v802 = vpack.c.bf16 %v764, %v763
  %v803 = vpack.c.bf16 %v766, %v765
  %v804 = vpack.c.bf16 %v768, %v767
  %v805 = vpack.c.bf16 %v770, %v769
  %v806 = vpack.c.bf16 %v772, %v771
  %v807 = vpack.c.bf16 %v774, %v773
  %v808 = vpack.c.bf16 %v776, %v775
  %v841 = vunpack.c.l.b16 %v777
  %v842 = vunpack.c.h.b16 %v777
  %v843 = vunpack.c.l.b16 %v778
  %v844 = vunpack.c.h.b16 %v778
  %v845 = vunpack.c.l.b16 %v779
  %v846 = vunpack.c.h.b16 %v779
  %v847 = vunpack.c.l.b16 %v780
  %v848 = vunpack.c.h.b16 %v780
  %v849 = vunpack.c.l.b16 %v781
  %v850 = vunpack.c.h.b16 %v781
  %v851 = vunpack.c.l.b16 %v782
  %v852 = vunpack.c.h.b16 %v782
  %v853 = vunpack.c.l.b16 %v783
  %v854 = vunpack.c.h.b16 %v783
  %v855 = vunpack.c.l.b16 %v784
  %v856 = vunpack.c.h.b16 %v784
  %v857 = vunpack.c.l.b16 %v785
  %v858 = vunpack.c.h.b16 %v785
  %v859 = vunpack.c.l.b16 %v786
  %v860 = vunpack.c.h.b16 %v786
  %v861 = vunpack.c.l.b16 %v787
  %v862 = vunpack.c.h.b16 %v787
  %v863 = vunpack.c.l.b16 %v788
  %v864 = vunpack.c.h.b16 %v788
  %v865 = vunpack.c.l.b16 %v789
  %v866 = vunpack.c.h.b16 %v789
  %v867 = vunpack.c.l.b16 %v790
  %v868 = vunpack.c.h.b16 %v790
  %v869 = vunpack.c.l.b16 %v791
  %v870 = vunpack.c.h.b16 %v791
  %v871 = vunpack.c.l.b16 %v792
  %v872 = vunpack.c.h.b16 %v792
  %v873 = vunpack.c.l.b16 %v793
  %v874 = vunpack.c.h.b16 %v793
  %v875 = vunpack.c.l.b16 %v794
  %v876 = vunpack.c.h.b16 %v794
  %v877 = vunpack.c.l.b16 %v795
  %v878 = vunpack.c.h.b16 %v795
  %v879 = vunpack.c.l.b16 %v796
  %v880 = vunpack.c.h.b16 %v796
  %v881 = vunpack.c.l.b16 %v797
  %v882 = vunpack.c.h.b16 %v797
  %v883 = vunpack.c.l.b16 %v798
  %v884 = vunpack.c.h.b16 %v798
  %v885 = vunpack.c.l.b16 %v799
  %v886 = vunpack.c.h.b16 %v799
  %v887 = vunpack.c.l.b16 %v800
  %v888 = vunpack.c.h.b16 %v800
  %v889 = vunpack.c.l.b16 %v801
  %v890 = vunpack.c.h.b16 %v801
  %v891 = vunpack.c.l.b16 %v802
  %v892 = vunpack.c.h.b16 %v802
  %v893 = vunpack.c.l.b16 %v803
  %v894 = vunpack.c.h.b16 %v803
  %v895 = vunpack.c.l.b16 %v804
  %v896 = vunpack.c.h.b16 %v804
  %v897 = vunpack.c.l.b16 %v805
  %v898 = vunpack.c.h.b16 %v805
  %v899 = vunpack.c.l.b16 %v806
  %v900 = vunpack.c.h.b16 %v806
  %v901 = vunpack.c.l.b16 %v807
  %v902 = vunpack.c.h.b16 %v807
  %v903 = vunpack.c.l.b16 %v808
  %v904 = vunpack.c.h.b16 %v808
  %v905 = vpack.c.b16 %v841, %v841
  %v906 = vpack.c.b16 %v842, %v842
  %v907 = vpack.c.b16 %v843, %v843
  %v908 = vpack.c.b16 %v844, %v844
  %v909 = vpack.c.b16 %v845, %v845
  %v910 = vpack.c.b16 %v846, %v846
  %v911 = vpack.c.b16 %v847, %v847
  %v912 = vpack.c.b16 %v848, %v848
  %v913 = vpack.c.b16 %v849, %v849
  %v914 = vpack.c.b16 %v850, %v850
  %v915 = vpack.c.b16 %v851, %v851
  %v916 = vpack.c.b16 %v852, %v852
  %v917 = vpack.c.b16 %v853, %v853
  %v918 = vpack.c.b16 %v854, %v854
  %v919 = vpack.c.b16 %v855, %v855
  %v920 = vpack.c.b16 %v856, %v856
  %v921 = vpack.c.b16 %v857, %v857
  %v922 = vpack.c.b16 %v858, %v858
  %v923 = vpack.c.b16 %v859, %v859
  %v924 = vpack.c.b16 %v860, %v860
  %v925 = vpack.c.b16 %v861, %v861
  %v926 = vpack.c.b16 %v862, %v862
  %v927 = vpack.c.b16 %v863, %v863
  %v928 = vpack.c.b16 %v864, %v864
  %v929 = vpack.c.b16 %v865, %v865
  %v930 = vpack.c.b16 %v866, %v866
  %v931 = vpack.c.b16 %v867, %v867
  %v932 = vpack.c.b16 %v868, %v868
  %v933 = vpack.c.b16 %v869, %v869
  %v934 = vpack.c.b16 %v870, %v870
  %v935 = vpack.c.b16 %v871, %v871
  %v936 = vpack.c.b16 %v872, %v872
  %v937 = vpack.c.b16 %v873, %v873
  %v938 = vpack.c.b16 %v874, %v874
  %v939 = vpack.c.b16 %v875, %v875
  %v940 = vpack.c.b16 %v876, %v876
  %v941 = vpack.c.b16 %v877, %v877
  %v942 = vpack.c.b16 %v878, %v878
  %v943 = vpack.c.b16 %v879, %v879
  %v944 = vpack.c.b16 %v880, %v880
  %v945 = vpack.c.b16 %v881, %v881
  %v946 = vpack.c.b16 %v882, %v882
  %v947 = vpack.c.b16 %v883, %v883
  %v948 = vpack.c.b16 %v884, %v884
  %v949 = vpack.c.b16 %v885, %v885
  %v950 = vpack.c.b16 %v886, %v886
  %v951 = vpack.c.b16 %v887, %v887
  %v952 = vpack.c.b16 %v888, %v888
  %v953 = vpack.c.b16 %v889, %v889
  %v954 = vpack.c.b16 %v890, %v890
  %v955 = vpack.c.b16 %v891, %v891
  %v956 = vpack.c.b16 %v892, %v892
  %v957 = vpack.c.b16 %v893, %v893
  %v958 = vpack.c.b16 %v894, %v894
  %v959 = vpack.c.b16 %v895, %v895
  %v960 = vpack.c.b16 %v896, %v896
  %v961 = vpack.c.b16 %v897, %v897
  %v962 = vpack.c.b16 %v898, %v898
  %v963 = vpack.c.b16 %v899, %v899
  %v964 = vpack.c.b16 %v900, %v900
  %v965 = vpack.c.b16 %v901, %v901
  %v966 = vpack.c.b16 %v902, %v902
  %v967 = vpack.c.b16 %v903, %v903
  %v968 = vpack.c.b16 %v904, %v904
  %1033 = vst [vmem:[%s2] sm:$0xf] %v905
  %1034 = vst [vmem:[%s2 + $0x4] sm:$0xf] %v906
  %1035 = vst [vmem:[%s2 + $0x8] sm:$0xf] %v907
  %1036 = vst [vmem:[%s2 + $0xc] sm:$0xf] %v908
  %1037 = vst [vmem:[%s2 + $0x10] sm:$0xf] %v909
  %1038 = vst [vmem:[%s2 + $0x14] sm:$0xf] %v910
  %1039 = vst [vmem:[%s2 + $0x18] sm:$0xf] %v911
  %1040 = vst [vmem:[%s2 + $0x1c] sm:$0xf] %v912
  %1041 = vst [vmem:[%s2 + $0x20] sm:$0xf] %v913
  %1042 = vst [vmem:[%s2 + $0x24] sm:$0xf] %v914
  %1043 = vst [vmem:[%s2 + $0x28] sm:$0xf] %v915
  %1044 = vst [vmem:[%s2 + $0x2c] sm:$0xf] %v916
  %1045 = vst [vmem:[%s2 + $0x30] sm:$0xf] %v917
  %1046 = vst [vmem:[%s2 + $0x34] sm:$0xf] %v918
  %1047 = vst [vmem:[%s2 + $0x38] sm:$0xf] %v919
  %1048 = vst [vmem:[%s2 + $0x3c] sm:$0xf] %v920
  %1049 = vst [vmem:[%s2 + $0x40] sm:$0xf] %v921
  %1050 = vst [vmem:[%s2 + $0x44] sm:$0xf] %v922
  %1051 = vst [vmem:[%s2 + $0x48] sm:$0xf] %v923
  %1052 = vst [vmem:[%s2 + $0x4c] sm:$0xf] %v924
  %1053 = vst [vmem:[%s2 + $0x50] sm:$0xf] %v925
  %1054 = vst [vmem:[%s2 + $0x54] sm:$0xf] %v926
  %1055 = vst [vmem:[%s2 + $0x58] sm:$0xf] %v927
  %1056 = vst [vmem:[%s2 + $0x5c] sm:$0xf] %v928
  %1057 = vst [vmem:[%s2 + $0x60] sm:$0xf] %v929
  %1058 = vst [vmem:[%s2 + $0x64] sm:$0xf] %v930
  %1059 = vst [vmem:[%s2 + $0x68] sm:$0xf] %v931
  %1060 = vst [vmem:[%s2 + $0x6c] sm:$0xf] %v932
  %1061 = vst [vmem:[%s2 + $0x70] sm:$0xf] %v933
  %1062 = vst [vmem:[%s2 + $0x74] sm:$0xf] %v934
  %1063 = vst [vmem:[%s2 + $0x78] sm:$0xf] %v935
  %1064 = vst [vmem:[%s2 + $0x7c] sm:$0xf] %v936
  %1065 = vst [vmem:[%s2 + $0x80] sm:$0xf] %v937
  %1066 = vst [vmem:[%s2 + $0x84] sm:$0xf] %v938
  %1067 = vst [vmem:[%s2 + $0x88] sm:$0xf] %v939
  %1068 = vst [vmem:[%s2 + $0x8c] sm:$0xf] %v940
  %1069 = vst [vmem:[%s2 + $0x90] sm:$0xf] %v941
  %1070 = vst [vmem:[%s2 + $0x94] sm:$0xf] %v942
  %1071 = vst [vmem:[%s2 + $0x98] sm:$0xf] %v943
  %1072 = vst [vmem:[%s2 + $0x9c] sm:$0xf] %v944
  %1073 = vst [vmem:[%s2 + $0xa0] sm:$0xf] %v945
  %1074 = vst [vmem:[%s2 + $0xa4] sm:$0xf] %v946
  %1075 = vst [vmem:[%s2 + $0xa8] sm:$0xf] %v947
  %1076 = vst [vmem:[%s2 + $0xac] sm:$0xf] %v948
  %1077 = vst [vmem:[%s2 + $0xb0] sm:$0xf] %v949
  %1078 = vst [vmem:[%s2 + $0xb4] sm:$0xf] %v950
  %1079 = vst [vmem:[%s2 + $0xb8] sm:$0xf] %v951
  %1080 = vst [vmem:[%s2 + $0xbc] sm:$0xf] %v952
  %1081 = vst [vmem:[%s2 + $0xc0] sm:$0xf] %v953
  %1082 = vst [vmem:[%s2 + $0xc4] sm:$0xf] %v954
  %1083 = vst [vmem:[%s2 + $0xc8] sm:$0xf] %v955
  %1084 = vst [vmem:[%s2 + $0xcc] sm:$0xf] %v956
  %1085 = vst [vmem:[%s2 + $0xd0] sm:$0xf] %v957
  %1086 = vst [vmem:[%s2 + $0xd4] sm:$0xf] %v958
  %1087 = vst [vmem:[%s2 + $0xd8] sm:$0xf] %v959
  %1088 = vst [vmem:[%s2 + $0xdc] sm:$0xf] %v960
  %1089 = vst [vmem:[%s2 + $0xe0] sm:$0xf] %v961
  %1090 = vst [vmem:[%s2 + $0xe4] sm:$0xf] %v962
  %1091 = vst [vmem:[%s2 + $0xe8] sm:$0xf] %v963
  %1092 = vst [vmem:[%s2 + $0xec] sm:$0xf] %v964
  %1093 = vst [vmem:[%s2 + $0xf0] sm:$0xf] %v965
  %1094 = vst [vmem:[%s2 + $0xf4] sm:$0xf] %v966
  %1095 = vst [vmem:[%s2 + $0xf8] sm:$0xf] %v967
  %1096 = vst [vmem:[%s2 + $0xfc] sm:$0xf] %v968
  %v1097 = vlaneseq
  %v1098 = vshrl.u32 %v1097, 7
  %v1099 = vld [vmem:[#allocation2] sm:$0xff]
  %v1100 = vld [vmem:[#allocation2 + $0x8] sm:$0xff]
  %v1101 = vld [vmem:[#allocation2 + $0x10] sm:$0xff]
  %v1102 = vld [vmem:[#allocation2 + $0x18] sm:$0xff]
  %v1103 = vld [vmem:[#allocation2 + $0x20] sm:$0xff]
  %v1104 = vld [vmem:[#allocation2 + $0x28] sm:$0xff]
  %v1105 = vld [vmem:[#allocation2 + $0x30] sm:$0xff]
  %v1106 = vld [vmem:[#allocation2 + $0x38] sm:$0xff]
  %v1107 = vld [vmem:[#allocation2 + $0x40] sm:$0xff]
  %v1108 = vld [vmem:[#allocation2 + $0x48] sm:$0xff]
  %v1109 = vld [vmem:[#allocation2 + $0x50] sm:$0xff]
  %v1110 = vld [vmem:[#allocation2 + $0x58] sm:$0xff]
  %v1111 = vld [vmem:[#allocation2 + $0x60] sm:$0xff]
  %v1112 = vld [vmem:[#allocation2 + $0x68] sm:$0xff]
  %v1113 = vld [vmem:[#allocation2 + $0x70] sm:$0xff]
  %v1114 = vld [vmem:[#allocation2 + $0x78] sm:$0xff]
  %v1115 = vld [vmem:[#allocation2 + $0x80] sm:$0xff]
  %v1116 = vld [vmem:[#allocation2 + $0x88] sm:$0xff]
  %v1117 = vld [vmem:[#allocation2 + $0x90] sm:$0xff]
  %v1118 = vld [vmem:[#allocation2 + $0x98] sm:$0xff]
  %v1119 = vld [vmem:[#allocation2 + $0xa0] sm:$0xff]
  %v1120 = vld [vmem:[#allocation2 + $0xa8] sm:$0xff]
  %v1121 = vld [vmem:[#allocation2 + $0xb0] sm:$0xff]
  %v1122 = vld [vmem:[#allocation2 + $0xb8] sm:$0xff]
  %v1123 = vld [vmem:[#allocation2 + $0xc0] sm:$0xff]
  %v1124 = vld [vmem:[#allocation2 + $0xc8] sm:$0xff]
  %v1125 = vld [vmem:[#allocation2 + $0xd0] sm:$0xff]
  %v1126 = vld [vmem:[#allocation2 + $0xd8] sm:$0xff]
  %v1127 = vld [vmem:[#allocation2 + $0xe0] sm:$0xff]
  %v1128 = vld [vmem:[#allocation2 + $0xe8] sm:$0xff]
  %v1129 = vld [vmem:[#allocation2 + $0xf0] sm:$0xff]
  %v1130 = vld [vmem:[#allocation2 + $0xf8] sm:$0xff]
  %v1131 = vld [vmem:[#allocation2 + $0x100] sm:$0xff]
  %v1132 = vld [vmem:[#allocation2 + $0x108] sm:$0xff]
  %v1133 = vld [vmem:[#allocation2 + $0x110] sm:$0xff]
  %v1134 = vld [vmem:[#allocation2 + $0x118] sm:$0xff]
  %v1135 = vld [vmem:[#allocation2 + $0x120] sm:$0xff]
  %v1136 = vld [vmem:[#allocation2 + $0x128] sm:$0xff]
  %v1137 = vld [vmem:[#allocation2 + $0x130] sm:$0xff]
  %v1138 = vld [vmem:[#allocation2 + $0x138] sm:$0xff]
  %v1139 = vld [vmem:[#allocation2 + $0x140] sm:$0xff]
  %v1140 = vld [vmem:[#allocation2 + $0x148] sm:$0xff]
  %v1141 = vld [vmem:[#allocation2 + $0x150] sm:$0xff]
  %v1142 = vld [vmem:[#allocation2 + $0x158] sm:$0xff]
  %v1143 = vld [vmem:[#allocation2 + $0x160] sm:$0xff]
  %v1144 = vld [vmem:[#allocation2 + $0x168] sm:$0xff]
  %v1145 = vld [vmem:[#allocation2 + $0x170] sm:$0xff]
  %v1146 = vld [vmem:[#allocation2 + $0x178] sm:$0xff]
  %v1147 = vld [vmem:[#allocation2 + $0x180] sm:$0xff]
  %v1148 = vld [vmem:[#allocation2 + $0x188] sm:$0xff]
  %v1149 = vld [vmem:[#allocation2 + $0x190] sm:$0xff]
  %v1150 = vld [vmem:[#allocation2 + $0x198] sm:$0xff]
  %v1151 = vld [vmem:[#allocation2 + $0x1a0] sm:$0xff]
  %v1152 = vld [vmem:[#allocation2 + $0x1a8] sm:$0xff]
  %v1153 = vld [vmem:[#allocation2 + $0x1b0] sm:$0xff]
  %v1154 = vld [vmem:[#allocation2 + $0x1b8] sm:$0xff]
  %v1155 = vld [vmem:[#allocation2 + $0x1c0] sm:$0xff]
  %v1156 = vld [vmem:[#allocation2 + $0x1c8] sm:$0xff]
  %v1157 = vld [vmem:[#allocation2 + $0x1d0] sm:$0xff]
  %v1158 = vld [vmem:[#allocation2 + $0x1d8] sm:$0xff]
  %v1159 = vld [vmem:[#allocation2 + $0x1e0] sm:$0xff]
  %v1160 = vld [vmem:[#allocation2 + $0x1e8] sm:$0xff]
  %v1161 = vld [vmem:[#allocation2 + $0x1f0] sm:$0xff]
  %v1162 = vld [vmem:[#allocation2 + $0x1f8] sm:$0xff]
  %v1163 = vadd.f32 %v1099, %v1100
  %v1164 = vadd.f32 %v1163, %v1101
  %v1165 = vadd.f32 %v1164, %v1102
  %v1166 = vadd.f32 %v1165, %v1103
  %v1167 = vadd.f32 %v1166, %v1104
  %v1168 = vadd.f32 %v1167, %v1105
  %v1169 = vadd.f32 %v1168, %v1106
  %v1170 = vadd.f32 %v1169, %v1107
  %v1171 = vadd.f32 %v1170, %v1108
  %v1172 = vadd.f32 %v1171, %v1109
  %v1173 = vadd.f32 %v1172, %v1110
  %v1174 = vadd.f32 %v1173, %v1111
  %v1175 = vadd.f32 %v1174, %v1112
  %v1176 = vadd.f32 %v1175, %v1113
  %v1177 = vadd.f32 %v1176, %v1114
  %v1178 = vadd.f32 %v1177, %v1115
  %v1179 = vadd.f32 %v1178, %v1116
  %v1180 = vadd.f32 %v1179, %v1117
  %v1181 = vadd.f32 %v1180, %v1118
  %v1182 = vadd.f32 %v1181, %v1119
  %v1183 = vadd.f32 %v1182, %v1120
  %v1184 = vadd.f32 %v1183, %v1121
  %v1185 = vadd.f32 %v1184, %v1122
  %v1186 = vadd.f32 %v1185, %v1123
  %v1187 = vadd.f32 %v1186, %v1124
  %v1188 = vadd.f32 %v1187, %v1125
  %v1189 = vadd.f32 %v1188, %v1126
  %v1190 = vadd.f32 %v1189, %v1127
  %v1191 = vadd.f32 %v1190, %v1128
  %v1192 = vadd.f32 %v1191, %v1129
  %v1193 = vadd.f32 %v1192, %v1130
  %v1194 = vadd.f32 %v1193, %v1131
  %v1195 = vadd.f32 %v1194, %v1132
  %v1196 = vadd.f32 %v1195, %v1133
  %v1197 = vadd.f32 %v1196, %v1134
  %v1198 = vadd.f32 %v1197, %v1135
  %v1199 = vadd.f32 %v1198, %v1136
  %v1200 = vadd.f32 %v1199, %v1137
  %v1201 = vadd.f32 %v1200, %v1138
  %v1202 = vadd.f32 %v1201, %v1139
  %v1203 = vadd.f32 %v1202, %v1140
  %v1204 = vadd.f32 %v1203, %v1141
  %v1205 = vadd.f32 %v1204, %v1142
  %v1206 = vadd.f32 %v1205, %v1143
  %v1207 = vadd.f32 %v1206, %v1144
  %v1208 = vadd.f32 %v1207, %v1145
  %v1209 = vadd.f32 %v1208, %v1146
  %v1210 = vadd.f32 %v1209, %v1147
  %v1211 = vadd.f32 %v1210, %v1148
  %v1212 = vadd.f32 %v1211, %v1149
  %v1213 = vadd.f32 %v1212, %v1150
  %v1214 = vadd.f32 %v1213, %v1151
  %v1215 = vadd.f32 %v1214, %v1152
  %v1216 = vadd.f32 %v1215, %v1153
  %v1217 = vadd.f32 %v1216, %v1154
  %v1218 = vadd.f32 %v1217, %v1155
  %v1219 = vadd.f32 %v1218, %v1156
  %v1220 = vadd.f32 %v1219, %v1157
  %v1221 = vadd.f32 %v1220, %v1158
  %v1222 = vadd.f32 %v1221, %v1159
  %v1223 = vadd.f32 %v1222, %v1160
  %v1224 = vadd.f32 %v1223, %v1161
  %v1225 = vadd.f32 %v1224, %v1162
  %v1226 = vrot.slane %v1225, 4
  %v1227 = vadd.f32 %v1225, %v1226
  %v1228 = vrot.slane %v1227, 2
  %v1229 = vadd.f32 %v1227, %v1228
  %v1230 = vrot.slane %v1229, 1
  %v1231 = vadd.f32 %v1229, %v1230
  %vm1232 = vcmp.eq.s32.totalorder %v1098, 0
  %v1233 = vsel %vm1232, %v1231, 0.0
  %1234 = vst [vmem:[%s3] sm:$0xff] %v1233
  %v1235 = vld [vmem:[#allocation2] sm:$0xff]
  %v1236 = vld [vmem:[#allocation2 + $0x8] sm:$0xff]
  %v1237 = vld [vmem:[#allocation2 + $0x10] sm:$0xff]
  %v1238 = vld [vmem:[#allocation2 + $0x18] sm:$0xff]
  %v1239 = vld [vmem:[#allocation2 + $0x20] sm:$0xff]
  %v1240 = vld [vmem:[#allocation2 + $0x28] sm:$0xff]
  %v1241 = vld [vmem:[#allocation2 + $0x30] sm:$0xff]
  %v1242 = vld [vmem:[#allocation2 + $0x38] sm:$0xff]
  %v1243 = vld [vmem:[#allocation2 + $0x40] sm:$0xff]
  %v1244 = vld [vmem:[#allocation2 + $0x48] sm:$0xff]
  %v1245 = vld [vmem:[#allocation2 + $0x50] sm:$0xff]
  %v1246 = vld [vmem:[#allocation2 + $0x58] sm:$0xff]
  %v1247 = vld [vmem:[#allocation2 + $0x60] sm:$0xff]
  %v1248 = vld [vmem:[#allocation2 + $0x68] sm:$0xff]
  %v1249 = vld [vmem:[#allocation2 + $0x70] sm:$0xff]
  %v1250 = vld [vmem:[#allocation2 + $0x78] sm:$0xff]
  %v1251 = vld [vmem:[#allocation2 + $0x80] sm:$0xff]
  %v1252 = vld [vmem:[#allocation2 + $0x88] sm:$0xff]
  %v1253 = vld [vmem:[#allocation2 + $0x90] sm:$0xff]
  %v1254 = vld [vmem:[#allocation2 + $0x98] sm:$0xff]
  %v1255 = vld [vmem:[#allocation2 + $0xa0] sm:$0xff]
  %v1256 = vld [vmem:[#allocation2 + $0xa8] sm:$0xff]
  %v1257 = vld [vmem:[#allocation2 + $0xb0] sm:$0xff]
  %v1258 = vld [vmem:[#allocation2 + $0xb8] sm:$0xff]
  %v1259 = vld [vmem:[#allocation2 + $0xc0] sm:$0xff]
  %v1260 = vld [vmem:[#allocation2 + $0xc8] sm:$0xff]
  %v1261 = vld [vmem:[#allocation2 + $0xd0] sm:$0xff]
  %v1262 = vld [vmem:[#allocation2 + $0xd8] sm:$0xff]
  %v1263 = vld [vmem:[#allocation2 + $0xe0] sm:$0xff]
  %v1264 = vld [vmem:[#allocation2 + $0xe8] sm:$0xff]
  %v1265 = vld [vmem:[#allocation2 + $0xf0] sm:$0xff]
  %v1266 = vld [vmem:[#allocation2 + $0xf8] sm:$0xff]
  %v1267 = vld [vmem:[#allocation2 + $0x100] sm:$0xff]
  %v1268 = vld [vmem:[#allocation2 + $0x108] sm:$0xff]
  %v1269 = vld [vmem:[#allocation2 + $0x110] sm:$0xff]
  %v1270 = vld [vmem:[#allocation2 + $0x118] sm:$0xff]
  %v1271 = vld [vmem:[#allocation2 + $0x120] sm:$0xff]
  %v1272 = vld [vmem:[#allocation2 + $0x128] sm:$0xff]
  %v1273 = vld [vmem:[#allocation2 + $0x130] sm:$0xff]
  %v1274 = vld [vmem:[#allocation2 + $0x138] sm:$0xff]
  %v1275 = vld [vmem:[#allocation2 + $0x140] sm:$0xff]
  %v1276 = vld [vmem:[#allocation2 + $0x148] sm:$0xff]
  %v1277 = vld [vmem:[#allocation2 + $0x150] sm:$0xff]
  %v1278 = vld [vmem:[#allocation2 + $0x158] sm:$0xff]
  %v1279 = vld [vmem:[#allocation2 + $0x160] sm:$0xff]
  %v1280 = vld [vmem:[#allocation2 + $0x168] sm:$0xff]
  %v1281 = vld [vmem:[#allocation2 + $0x170] sm:$0xff]
  %v1282 = vld [vmem:[#allocation2 + $0x178] sm:$0xff]
  %v1283 = vld [vmem:[#allocation2 + $0x180] sm:$0xff]
  %v1284 = vld [vmem:[#allocation2 + $0x188] sm:$0xff]
  %v1285 = vld [vmem:[#allocation2 + $0x190] sm:$0xff]
  %v1286 = vld [vmem:[#allocation2 + $0x198] sm:$0xff]
  %v1287 = vld [vmem:[#allocation2 + $0x1a0] sm:$0xff]
  %v1288 = vld [vmem:[#allocation2 + $0x1a8] sm:$0xff]
  %v1289 = vld [vmem:[#allocation2 + $0x1b0] sm:$0xff]
  %v1290 = vld [vmem:[#allocation2 + $0x1b8] sm:$0xff]
  %v1291 = vld [vmem:[#allocation2 + $0x1c0] sm:$0xff]
  %v1292 = vld [vmem:[#allocation2 + $0x1c8] sm:$0xff]
  %v1293 = vld [vmem:[#allocation2 + $0x1d0] sm:$0xff]
  %v1294 = vld [vmem:[#allocation2 + $0x1d8] sm:$0xff]
  %v1295 = vld [vmem:[#allocation2 + $0x1e0] sm:$0xff]
  %v1296 = vld [vmem:[#allocation2 + $0x1e8] sm:$0xff]
  %v1297 = vld [vmem:[#allocation2 + $0x1f0] sm:$0xff]
  %v1298 = vld [vmem:[#allocation2 + $0x1f8] sm:$0xff]
  %v1299 = vmul.f32 %v1235, %v1235
  %v1300 = vmul.f32 %v1236, %v1236
  %v1301 = vmul.f32 %v1237, %v1237
  %v1302 = vmul.f32 %v1238, %v1238
  %v1303 = vmul.f32 %v1239, %v1239
  %v1304 = vmul.f32 %v1240, %v1240
  %v1305 = vmul.f32 %v1241, %v1241
  %v1306 = vmul.f32 %v1242, %v1242
  %v1307 = vmul.f32 %v1243, %v1243
  %v1308 = vmul.f32 %v1244, %v1244
  %v1309 = vmul.f32 %v1245, %v1245
  %v1310 = vmul.f32 %v1246, %v1246
  %v1311 = vmul.f32 %v1247, %v1247
  %v1312 = vmul.f32 %v1248, %v1248
  %v1313 = vmul.f32 %v1249, %v1249
  %v1314 = vmul.f32 %v1250, %v1250
  %v1315 = vmul.f32 %v1251, %v1251
  %v1316 = vmul.f32 %v1252, %v1252
  %v1317 = vmul.f32 %v1253, %v1253
  %v1318 = vmul.f32 %v1254, %v1254
  %v1319 = vmul.f32 %v1255, %v1255
  %v1320 = vmul.f32 %v1256, %v1256
  %v1321 = vmul.f32 %v1257, %v1257
  %v1322 = vmul.f32 %v1258, %v1258
  %v1323 = vmul.f32 %v1259, %v1259
  %v1324 = vmul.f32 %v1260, %v1260
  %v1325 = vmul.f32 %v1261, %v1261
  %v1326 = vmul.f32 %v1262, %v1262
  %v1327 = vmul.f32 %v1263, %v1263
  %v1328 = vmul.f32 %v1264, %v1264
  %v1329 = vmul.f32 %v1265, %v1265
  %v1330 = vmul.f32 %v1266, %v1266
  %v1331 = vmul.f32 %v1267, %v1267
  %v1332 = vmul.f32 %v1268, %v1268
  %v1333 = vmul.f32 %v1269, %v1269
  %v1334 = vmul.f32 %v1270, %v1270
  %v1335 = vmul.f32 %v1271, %v1271
  %v1336 = vmul.f32 %v1272, %v1272
  %v1337 = vmul.f32 %v1273, %v1273
  %v1338 = vmul.f32 %v1274, %v1274
  %v1339 = vmul.f32 %v1275, %v1275
  %v1340 = vmul.f32 %v1276, %v1276
  %v1341 = vmul.f32 %v1277, %v1277
  %v1342 = vmul.f32 %v1278, %v1278
  %v1343 = vmul.f32 %v1279, %v1279
  %v1344 = vmul.f32 %v1280, %v1280
  %v1345 = vmul.f32 %v1281, %v1281
  %v1346 = vmul.f32 %v1282, %v1282
  %v1347 = vmul.f32 %v1283, %v1283
  %v1348 = vmul.f32 %v1284, %v1284
  %v1349 = vmul.f32 %v1285, %v1285
  %v1350 = vmul.f32 %v1286, %v1286
  %v1351 = vmul.f32 %v1287, %v1287
  %v1352 = vmul.f32 %v1288, %v1288
  %v1353 = vmul.f32 %v1289, %v1289
  %v1354 = vmul.f32 %v1290, %v1290
  %v1355 = vmul.f32 %v1291, %v1291
  %v1356 = vmul.f32 %v1292, %v1292
  %v1357 = vmul.f32 %v1293, %v1293
  %v1358 = vmul.f32 %v1294, %v1294
  %v1359 = vmul.f32 %v1295, %v1295
  %v1360 = vmul.f32 %v1296, %v1296
  %v1361 = vmul.f32 %v1297, %v1297
  %v1362 = vmul.f32 %v1298, %v1298
  %v1363 = vadd.f32 %v1299, %v1300
  %v1364 = vadd.f32 %v1363, %v1301
  %v1365 = vadd.f32 %v1364, %v1302
  %v1366 = vadd.f32 %v1365, %v1303
  %v1367 = vadd.f32 %v1366, %v1304
  %v1368 = vadd.f32 %v1367, %v1305
  %v1369 = vadd.f32 %v1368, %v1306
  %v1370 = vadd.f32 %v1369, %v1307
  %v1371 = vadd.f32 %v1370, %v1308
  %v1372 = vadd.f32 %v1371, %v1309
  %v1373 = vadd.f32 %v1372, %v1310
  %v1374 = vadd.f32 %v1373, %v1311
  %v1375 = vadd.f32 %v1374, %v1312
  %v1376 = vadd.f32 %v1375, %v1313
  %v1377 = vadd.f32 %v1376, %v1314
  %v1378 = vadd.f32 %v1377, %v1315
  %v1379 = vadd.f32 %v1378, %v1316
  %v1380 = vadd.f32 %v1379, %v1317
  %v1381 = vadd.f32 %v1380, %v1318
  %v1382 = vadd.f32 %v1381, %v1319
  %v1383 = vadd.f32 %v1382, %v1320
  %v1384 = vadd.f32 %v1383, %v1321
  %v1385 = vadd.f32 %v1384, %v1322
  %v1386 = vadd.f32 %v1385, %v1323
  %v1387 = vadd.f32 %v1386, %v1324
  %v1388 = vadd.f32 %v1387, %v1325
  %v1389 = vadd.f32 %v1388, %v1326
  %v1390 = vadd.f32 %v1389, %v1327
  %v1391 = vadd.f32 %v1390, %v1328
  %v1392 = vadd.f32 %v1391, %v1329
  %v1393 = vadd.f32 %v1392, %v1330
  %v1394 = vadd.f32 %v1393, %v1331
  %v1395 = vadd.f32 %v1394, %v1332
  %v1396 = vadd.f32 %v1395, %v1333
  %v1397 = vadd.f32 %v1396, %v1334
  %v1398 = vadd.f32 %v1397, %v1335
  %v1399 = vadd.f32 %v1398, %v1336
  %v1400 = vadd.f32 %v1399, %v1337
  %v1401 = vadd.f32 %v1400, %v1338
  %v1402 = vadd.f32 %v1401, %v1339
  %v1403 = vadd.f32 %v1402, %v1340
  %v1404 = vadd.f32 %v1403, %v1341
  %v1405 = vadd.f32 %v1404, %v1342
  %v1406 = vadd.f32 %v1405, %v1343
  %v1407 = vadd.f32 %v1406, %v1344
  %v1408 = vadd.f32 %v1407, %v1345
  %v1409 = vadd.f32 %v1408, %v1346
  %v1410 = vadd.f32 %v1409, %v1347
  %v1411 = vadd.f32 %v1410, %v1348
  %v1412 = vadd.f32 %v1411, %v1349
  %v1413 = vadd.f32 %v1412, %v1350
  %v1414 = vadd.f32 %v1413, %v1351
  %v1415 = vadd.f32 %v1414, %v1352
  %v1416 = vadd.f32 %v1415, %v1353
  %v1417 = vadd.f32 %v1416, %v1354
  %v1418 = vadd.f32 %v1417, %v1355
  %v1419 = vadd.f32 %v1418, %v1356
  %v1420 = vadd.f32 %v1419, %v1357
  %v1421 = vadd.f32 %v1420, %v1358
  %v1422 = vadd.f32 %v1421, %v1359
  %v1423 = vadd.f32 %v1422, %v1360
  %v1424 = vadd.f32 %v1423, %v1361
  %v1425 = vadd.f32 %v1424, %v1362
  %v1426 = vrot.slane %v1425, 4
  %v1427 = vadd.f32 %v1425, %v1426
  %v1428 = vrot.slane %v1427, 2
  %v1429 = vadd.f32 %v1427, %v1428
  %v1430 = vrot.slane %v1429, 1
  %v1431 = vadd.f32 %v1429, %v1430
  %v1432 = vsel %vm1232, %v1431, 0.0
  %1433 = vst [vmem:[%s4] sm:$0xff] %v1432
  // Predicated region
  $region10: #{residual_conv_block.4} parent=0 // pred_check
    _
  $region11: #{residual_conv_block.4} parent=0 // pred_check_branch
    %1435 = sbr.rel (0) target = $region13
  $region12: #{residual_conv_block.4} parent=0 // pred_region
    _
  $region13: #{residual_conv_block.4} parent=0 // pred_fallthru
    _
  // Predicated region
  $region14: #{residual_conv_block.4} parent=0 // pred_check
    _
  $region15: #{residual_conv_block.4} parent=0 // pred_check_branch
    %1437 = sbr.rel (0) target = $region17
  $region16: #{residual_conv_block.4} parent=0 // pred_region
    _
  $region17: #{residual_conv_block.4} parent=0 // pred_fallthru
    _
  // Predicated region
  $region18: #{residual_conv_block.4} parent=0 // pred_check
    _
  $region19: #{residual_conv_block.4} parent=0 // pred_check_branch
    %1439 = sbr.rel (0) target = $region21
  $region20: #{residual_conv_block.4} parent=0 // pred_region
    _
  $region21: #{residual_conv_block.4} parent=0 // pred_fallthru
    _
  // Predicated region
  $region22: #{residual_conv_block.4} parent=0 // pred_check
    _
  $region23: #{residual_conv_block.4} parent=0 // pred_check_branch
    %1441 = sbr.rel (0) target = $region25
  $region24: #{residual_conv_block.4} parent=0 // pred_region
    _
  $region25: #{residual_conv_block.4} parent=0 // pred_fallthru
    _
  // Predicated region
  $region26: #{residual_conv_block.4} parent=0 // pred_check
    _
  $region27: #{residual_conv_block.4} parent=0 // pred_check_branch
    %1443 = sbr.rel (0) target = $region29
  $region28: #{residual_conv_block.4} parent=0 // pred_region
    _
  $region29: #{residual_conv_block.4} parent=0 // pred_fallthru
    _
  // Predicated region
  $region30: #{residual_conv_block.4} parent=0 // pred_check
    _
  $region31: #{residual_conv_block.4} parent=0 // pred_check_branch
    %1445 = sbr.rel (0) target = $region33
  $region32: #{residual_conv_block.4} parent=0 // pred_region
    _
  $region33: #{residual_conv_block.4} parent=0 // pred_fallthru
    _

// kernel: residual_conv_block.5
$region0: #{residual_conv_block.5}
  #allocation0 [shape = 'u32[]', space=smem, size = 0x4, offset = 0x4, fixed_abs, tag = 'smem constant byte address 0x4 - core index']
  #allocation1 [shape = 'u32[144,128]{1,0:T(1,128)}', space=vmem, size = 0x12000, scoped, tag = 'internal scratch']
  %s0 = inlined_call_operand.vmem [shape: bf16[512,128], index: 0, kind: input, shape index: {}]
  %s1 = inlined_call_operand.vmem [shape: f32[1,128], index: 1, kind: input, shape index: {}]
  %s2 = inlined_call_operand.vmem [shape: f32[1,128], index: 2, kind: input, shape index: {}]
  %s3 = inlined_call_operand.vmem [shape: bf16[512,128], index: 3, kind: output, shape index: {}]
  %s4 = sld [smem:[#allocation0]]
  $region22: #{residual_conv_block.5} parent=0
    _
  %s6 = ssub.s32 1, %s4
  %s7 = scalar_select 0, %s6, %s4
  // Predicated region
  $region2: #{residual_conv_block.5} parent=0 // pred_check
    _
  $region3: #{residual_conv_block.5} parent=0 // pred_check_branch
    %9 = sbr.rel (0) target = $region5
  $region4: #{residual_conv_block.5} parent=0 // pred_region
    _
  $region5: #{residual_conv_block.5} parent=0 // pred_fallthru
    _
  // Predicated region
  $region6: #{residual_conv_block.5} parent=0 // pred_check
    _
  $region7: #{residual_conv_block.5} parent=0 // pred_check_branch
    %11 = sbr.rel (0) target = $region9
  $region8: #{residual_conv_block.5} parent=0 // pred_region
    _
  $region9: #{residual_conv_block.5} parent=0 // pred_fallthru
    _
  // Predicated region
  $region10: #{residual_conv_block.5} parent=0 // pred_check
    _
  $region11: #{residual_conv_block.5} parent=0 // pred_check_branch
    %13 = sbr.rel (0) target = $region13
  $region12: #{residual_conv_block.5} parent=0 // pred_region
    _
  $region13: #{residual_conv_block.5} parent=0 // pred_fallthru
    _
  %v14 = vld [vmem:[%s0] sm:$0xf]
  %v15 = vld [vmem:[%s0 + $0x4] sm:$0xf]
  %v16 = vld [vmem:[%s0 + $0x8] sm:$0xf]
  %v17 = vld [vmem:[%s0 + $0xc] sm:$0xf]
  %v18 = vld [vmem:[%s0 + $0x10] sm:$0xf]
  %v19 = vld [vmem:[%s0 + $0x14] sm:$0xf]
  %v20 = vld [vmem:[%s0 + $0x18] sm:$0xf]
  %v21 = vld [vmem:[%s0 + $0x1c] sm:$0xf]
  %v22 = vld [vmem:[%s0 + $0x20] sm:$0xf]
  %v23 = vld [vmem:[%s0 + $0x24] sm:$0xf]
  %v24 = vld [vmem:[%s0 + $0x28] sm:$0xf]
  %v25 = vld [vmem:[%s0 + $0x2c] sm:$0xf]
  %v26 = vld [vmem:[%s0 + $0x30] sm:$0xf]
  %v27 = vld [vmem:[%s0 + $0x34] sm:$0xf]
  %v28 = vld [vmem:[%s0 + $0x38] sm:$0xf]
  %v29 = vld [vmem:[%s0 + $0x3c] sm:$0xf]
  %v30 = vld [vmem:[%s0 + $0x40] sm:$0xf]
  %v31 = vld [vmem:[%s0 + $0x44] sm:$0xf]
  %v32 = vld [vmem:[%s0 + $0x48] sm:$0xf]
  %v33 = vld [vmem:[%s0 + $0x4c] sm:$0xf]
  %v34 = vld [vmem:[%s0 + $0x50] sm:$0xf]
  %v35 = vld [vmem:[%s0 + $0x54] sm:$0xf]
  %v36 = vld [vmem:[%s0 + $0x58] sm:$0xf]
  %v37 = vld [vmem:[%s0 + $0x5c] sm:$0xf]
  %v38 = vld [vmem:[%s0 + $0x60] sm:$0xf]
  %v39 = vld [vmem:[%s0 + $0x64] sm:$0xf]
  %v40 = vld [vmem:[%s0 + $0x68] sm:$0xf]
  %v41 = vld [vmem:[%s0 + $0x6c] sm:$0xf]
  %v42 = vld [vmem:[%s0 + $0x70] sm:$0xf]
  %v43 = vld [vmem:[%s0 + $0x74] sm:$0xf]
  %v44 = vld [vmem:[%s0 + $0x78] sm:$0xf]
  %v45 = vld [vmem:[%s0 + $0x7c] sm:$0xf]
  %v46 = vld [vmem:[%s0 + $0x80] sm:$0xf]
  %v47 = vld [vmem:[%s0 + $0x84] sm:$0xf]
  %v48 = vld [vmem:[%s0 + $0x88] sm:$0xf]
  %v49 = vld [vmem:[%s0 + $0x8c] sm:$0xf]
  %v50 = vld [vmem:[%s0 + $0x90] sm:$0xf]
  %v51 = vld [vmem:[%s0 + $0x94] sm:$0xf]
  %v52 = vld [vmem:[%s0 + $0x98] sm:$0xf]
  %v53 = vld [vmem:[%s0 + $0x9c] sm:$0xf]
  %v54 = vld [vmem:[%s0 + $0xa0] sm:$0xf]
  %v55 = vld [vmem:[%s0 + $0xa4] sm:$0xf]
  %v56 = vld [vmem:[%s0 + $0xa8] sm:$0xf]
  %v57 = vld [vmem:[%s0 + $0xac] sm:$0xf]
  %v58 = vld [vmem:[%s0 + $0xb0] sm:$0xf]
  %v59 = vld [vmem:[%s0 + $0xb4] sm:$0xf]
  %v60 = vld [vmem:[%s0 + $0xb8] sm:$0xf]
  %v61 = vld [vmem:[%s0 + $0xbc] sm:$0xf]
  %v62 = vld [vmem:[%s0 + $0xc0] sm:$0xf]
  %v63 = vld [vmem:[%s0 + $0xc4] sm:$0xf]
  %v64 = vld [vmem:[%s0 + $0xc8] sm:$0xf]
  %v65 = vld [vmem:[%s0 + $0xcc] sm:$0xf]
  %v66 = vld [vmem:[%s0 + $0xd0] sm:$0xf]
  %v67 = vld [vmem:[%s0 + $0xd4] sm:$0xf]
  %v68 = vld [vmem:[%s0 + $0xd8] sm:$0xf]
  %v69 = vld [vmem:[%s0 + $0xdc] sm:$0xf]
  %v70 = vld [vmem:[%s0 + $0xe0] sm:$0xf]
  %v71 = vld [vmem:[%s0 + $0xe4] sm:$0xf]
  %v72 = vld [vmem:[%s0 + $0xe8] sm:$0xf]
  %v73 = vld [vmem:[%s0 + $0xec] sm:$0xf]
  %v74 = vld [vmem:[%s0 + $0xf0] sm:$0xf]
  %v75 = vld [vmem:[%s0 + $0xf4] sm:$0xf]
  %v76 = vld [vmem:[%s0 + $0xf8] sm:$0xf]
  %v77 = vld [vmem:[%s0 + $0xfc] sm:$0xf]
  %v78 = vunpack.c.l.bf16 %v14
  %v79 = vunpack.c.l.bf16 %v15
  %v80 = vunpack.c.l.bf16 %v16
  %v81 = vunpack.c.l.bf16 %v17
  %v82 = vunpack.c.l.bf16 %v18
  %v83 = vunpack.c.l.bf16 %v19
  %v84 = vunpack.c.l.bf16 %v20
  %v85 = vunpack.c.l.bf16 %v21
  %v86 = vunpack.c.l.bf16 %v22
  %v87 = vunpack.c.l.bf16 %v23
  %v88 = vunpack.c.l.bf16 %v24
  %v89 = vunpack.c.l.bf16 %v25
  %v90 = vunpack.c.l.bf16 %v26
  %v91 = vunpack.c.l.bf16 %v27
  %v92 = vunpack.c.l.bf16 %v28
  %v93 = vunpack.c.l.bf16 %v29
  %v94 = vunpack.c.l.bf16 %v30
  %v95 = vunpack.c.l.bf16 %v31
  %v96 = vunpack.c.l.bf16 %v32
  %v97 = vunpack.c.l.bf16 %v33
  %v98 = vunpack.c.l.bf16 %v34
  %v99 = vunpack.c.l.bf16 %v35
  %v100 = vunpack.c.l.bf16 %v36
  %v101 = vunpack.c.l.bf16 %v37
  %v102 = vunpack.c.l.bf16 %v38
  %v103 = vunpack.c.l.bf16 %v39
  %v104 = vunpack.c.l.bf16 %v40
  %v105 = vunpack.c.l.bf16 %v41
  %v106 = vunpack.c.l.bf16 %v42
  %v107 = vunpack.c.l.bf16 %v43
  %v108 = vunpack.c.l.bf16 %v44
  %v109 = vunpack.c.l.bf16 %v45
  %v110 = vunpack.c.l.bf16 %v46
  %v111 = vunpack.c.l.bf16 %v47
  %v112 = vunpack.c.l.bf16 %v48
  %v113 = vunpack.c.l.bf16 %v49
  %v114 = vunpack.c.l.bf16 %v50
  %v115 = vunpack.c.l.bf16 %v51
  %v116 = vunpack.c.l.bf16 %v52
  %v117 = vunpack.c.l.bf16 %v53
  %v118 = vunpack.c.l.bf16 %v54
  %v119 = vunpack.c.l.bf16 %v55
  %v120 = vunpack.c.l.bf16 %v56
  %v121 = vunpack.c.l.bf16 %v57
  %v122 = vunpack.c.l.bf16 %v58
  %v123 = vunpack.c.l.bf16 %v59
  %v124 = vunpack.c.l.bf16 %v60
  %v125 = vunpack.c.l.bf16 %v61
  %v126 = vunpack.c.l.bf16 %v62
  %v127 = vunpack.c.l.bf16 %v63
  %v128 = vunpack.c.l.bf16 %v64
  %v129 = vunpack.c.l.bf16 %v65
  %v130 = vunpack.c.l.bf16 %v66
  %v131 = vunpack.c.l.bf16 %v67
  %v132 = vunpack.c.l.bf16 %v68
  %v133 = vunpack.c.l.bf16 %v69
  %v134 = vunpack.c.l.bf16 %v70
  %v135 = vunpack.c.l.bf16 %v71
  %v136 = vunpack.c.l.bf16 %v72
  %v137 = vunpack.c.l.bf16 %v73
  %v138 = vunpack.c.l.bf16 %v74
  %v139 = vunpack.c.l.bf16 %v75
  %v140 = vunpack.c.l.bf16 %v76
  %v141 = vunpack.c.l.bf16 %v77
  %v142 = vld [vmem:[%s1] sm:$0x1]
  %v144 = vlaneseq
  %v145 = vshrl.u32 %v144, 7
  %v146 = vsub.s32 0, %v145
  %v147 = vrot.slane %v142, %v146
  %v149 = vmul.f32 %v78, %v147
  %v150 = vmul.f32 %v79, %v147
  %v151 = vmul.f32 %v80, %v147
  %v152 = vmul.f32 %v81, %v147
  %v153 = vmul.f32 %v82, %v147
  %v154 = vmul.f32 %v83, %v147
  %v155 = vmul.f32 %v84, %v147
  %v156 = vmul.f32 %v85, %v147
  %v157 = vmul.f32 %v86, %v147
  %v158 = vmul.f32 %v87, %v147
  %v159 = vmul.f32 %v88, %v147
  %v160 = vmul.f32 %v89, %v147
  %v161 = vmul.f32 %v90, %v147
  %v162 = vmul.f32 %v91, %v147
  %v163 = vmul.f32 %v92, %v147
  %v164 = vmul.f32 %v93, %v147
  %v165 = vmul.f32 %v94, %v147
  %v166 = vmul.f32 %v95, %v147
  %v167 = vmul.f32 %v96, %v147
  %v168 = vmul.f32 %v97, %v147
  %v169 = vmul.f32 %v98, %v147
  %v170 = vmul.f32 %v99, %v147
  %v171 = vmul.f32 %v100, %v147
  %v172 = vmul.f32 %v101, %v147
  %v173 = vmul.f32 %v102, %v147
  %v174 = vmul.f32 %v103, %v147
  %v175 = vmul.f32 %v104, %v147
  %v176 = vmul.f32 %v105, %v147
  %v177 = vmul.f32 %v106, %v147
  %v178 = vmul.f32 %v107, %v147
  %v179 = vmul.f32 %v108, %v147
  %v180 = vmul.f32 %v109, %v147
  %v181 = vmul.f32 %v110, %v147
  %v182 = vmul.f32 %v111, %v147
  %v183 = vmul.f32 %v112, %v147
  %v184 = vmul.f32 %v113, %v147
  %v185 = vmul.f32 %v114, %v147
  %v186 = vmul.f32 %v115, %v147
  %v187 = vmul.f32 %v116, %v147
  %v188 = vmul.f32 %v117, %v147
  %v189 = vmul.f32 %v118, %v147
  %v190 = vmul.f32 %v119, %v147
  %v191 = vmul.f32 %v120, %v147
  %v192 = vmul.f32 %v121, %v147
  %v193 = vmul.f32 %v122, %v147
  %v194 = vmul.f32 %v123, %v147
  %v195 = vmul.f32 %v124, %v147
  %v196 = vmul.f32 %v125, %v147
  %v197 = vmul.f32 %v126, %v147
  %v198 = vmul.f32 %v127, %v147
  %v199 = vmul.f32 %v128, %v147
  %v200 = vmul.f32 %v129, %v147
  %v201 = vmul.f32 %v130, %v147
  %v202 = vmul.f32 %v131, %v147
  %v203 = vmul.f32 %v132, %v147
  %v204 = vmul.f32 %v133, %v147
  %v205 = vmul.f32 %v134, %v147
  %v206 = vmul.f32 %v135, %v147
  %v207 = vmul.f32 %v136, %v147
  %v208 = vmul.f32 %v137, %v147
  %v209 = vmul.f32 %v138, %v147
  %v210 = vmul.f32 %v139, %v147
  %v211 = vmul.f32 %v140, %v147
  %v212 = vmul.f32 %v141, %v147
  %v213 = vld [vmem:[%s2] sm:$0x1]
  %v215 = vlaneseq
  %v216 = vshrl.u32 %v215, 7
  %v217 = vsub.s32 0, %v216
  %v218 = vrot.slane %v213, %v217
  %v220 = vadd.f32 %v149, %v218
  %v221 = vadd.f32 %v150, %v218
  %v222 = vadd.f32 %v151, %v218
  %v223 = vadd.f32 %v152, %v218
  %v224 = vadd.f32 %v153, %v218
  %v225 = vadd.f32 %v154, %v218
  %v226 = vadd.f32 %v155, %v218
  %v227 = vadd.f32 %v156, %v218
  %v228 = vadd.f32 %v157, %v218
  %v229 = vadd.f32 %v158, %v218
  %v230 = vadd.f32 %v159, %v218
  %v231 = vadd.f32 %v160, %v218
  %v232 = vadd.f32 %v161, %v218
  %v233 = vadd.f32 %v162, %v218
  %v234 = vadd.f32 %v163, %v218
  %v235 = vadd.f32 %v164, %v218
  %v236 = vadd.f32 %v165, %v218
  %v237 = vadd.f32 %v166, %v218
  %v238 = vadd.f32 %v167, %v218
  %v239 = vadd.f32 %v168, %v218
  %v240 = vadd.f32 %v169, %v218
  %v241 = vadd.f32 %v170, %v218
  %v242 = vadd.f32 %v171, %v218
  %v243 = vadd.f32 %v172, %v218
  %v244 = vadd.f32 %v173, %v218
  %v245 = vadd.f32 %v174, %v218
  %v246 = vadd.f32 %v175, %v218
  %v247 = vadd.f32 %v176, %v218
  %v248 = vadd.f32 %v177, %v218
  %v249 = vadd.f32 %v178, %v218
  %v250 = vadd.f32 %v179, %v218
  %v251 = vadd.f32 %v180, %v218
  %v252 = vadd.f32 %v181, %v218
  %v253 = vadd.f32 %v182, %v218
  %v254 = vadd.f32 %v183, %v218
  %v255 = vadd.f32 %v184, %v218
  %v256 = vadd.f32 %v185, %v218
  %v257 = vadd.f32 %v186, %v218
  %v258 = vadd.f32 %v187, %v218
  %v259 = vadd.f32 %v188, %v218
  %v260 = vadd.f32 %v189, %v218
  %v261 = vadd.f32 %v190, %v218
  %v262 = vadd.f32 %v191, %v218
  %v263 = vadd.f32 %v192, %v218
  %v264 = vadd.f32 %v193, %v218
  %v265 = vadd.f32 %v194, %v218
  %v266 = vadd.f32 %v195, %v218
  %v267 = vadd.f32 %v196, %v218
  %v268 = vadd.f32 %v197, %v218
  %v269 = vadd.f32 %v198, %v218
  %v270 = vadd.f32 %v199, %v218
  %v271 = vadd.f32 %v200, %v218
  %v272 = vadd.f32 %v201, %v218
  %v273 = vadd.f32 %v202, %v218
  %v274 = vadd.f32 %v203, %v218
  %v275 = vadd.f32 %v204, %v218
  %v276 = vadd.f32 %v205, %v218
  %v277 = vadd.f32 %v206, %v218
  %v278 = vadd.f32 %v207, %v218
  %v279 = vadd.f32 %v208, %v218
  %v280 = vadd.f32 %v209, %v218
  %v281 = vadd.f32 %v210, %v218
  %v282 = vadd.f32 %v211, %v218
  %v283 = vadd.f32 %v212, %v218
  %v284 = vmul.f32 %v220, 0.5
  %v285 = vmul.f32 %v221, 0.5
  %v286 = vmul.f32 %v222, 0.5
  %v287 = vmul.f32 %v223, 0.5
  %v288 = vmul.f32 %v224, 0.5
  %v289 = vmul.f32 %v225, 0.5
  %v290 = vmul.f32 %v226, 0.5
  %v291 = vmul.f32 %v227, 0.5
  %v292 = vmul.f32 %v228, 0.5
  %v293 = vmul.f32 %v229, 0.5
  %v294 = vmul.f32 %v230, 0.5
  %v295 = vmul.f32 %v231, 0.5
  %v296 = vmul.f32 %v232, 0.5
  %v297 = vmul.f32 %v233, 0.5
  %v298 = vmul.f32 %v234, 0.5
  %v299 = vmul.f32 %v235, 0.5
  %v300 = vmul.f32 %v236, 0.5
  %v301 = vmul.f32 %v237, 0.5
  %v302 = vmul.f32 %v238, 0.5
  %v303 = vmul.f32 %v239, 0.5
  %v304 = vmul.f32 %v240, 0.5
  %v305 = vmul.f32 %v241, 0.5
  %v306 = vmul.f32 %v242, 0.5
  %v307 = vmul.f32 %v243, 0.5
  %v308 = vmul.f32 %v244, 0.5
  %v309 = vmul.f32 %v245, 0.5
  %v310 = vmul.f32 %v246, 0.5
  %v311 = vmul.f32 %v247, 0.5
  %v312 = vmul.f32 %v248, 0.5
  %v313 = vmul.f32 %v249, 0.5
  %v314 = vmul.f32 %v250, 0.5
  %v315 = vmul.f32 %v251, 0.5
  %v316 = vmul.f32 %v252, 0.5
  %v317 = vmul.f32 %v253, 0.5
  %v318 = vmul.f32 %v254, 0.5
  %v319 = vmul.f32 %v255, 0.5
  %v320 = vmul.f32 %v256, 0.5
  %v321 = vmul.f32 %v257, 0.5
  %v322 = vmul.f32 %v258, 0.5
  %v323 = vmul.f32 %v259, 0.5
  %v324 = vmul.f32 %v260, 0.5
  %v325 = vmul.f32 %v261, 0.5
  %v326 = vmul.f32 %v262, 0.5
  %v327 = vmul.f32 %v263, 0.5
  %v328 = vmul.f32 %v264, 0.5
  %v329 = vmul.f32 %v265, 0.5
  %v330 = vmul.f32 %v266, 0.5
  %v331 = vmul.f32 %v267, 0.5
  %v332 = vmul.f32 %v268, 0.5
  %v333 = vmul.f32 %v269, 0.5
  %v334 = vmul.f32 %v270, 0.5
  %v335 = vmul.f32 %v271, 0.5
  %v336 = vmul.f32 %v272, 0.5
  %v337 = vmul.f32 %v273, 0.5
  %v338 = vmul.f32 %v274, 0.5
  %v339 = vmul.f32 %v275, 0.5
  %v340 = vmul.f32 %v276, 0.5
  %v341 = vmul.f32 %v277, 0.5
  %v342 = vmul.f32 %v278, 0.5
  %v343 = vmul.f32 %v279, 0.5
  %v344 = vmul.f32 %v280, 0.5
  %v345 = vmul.f32 %v281, 0.5
  %v346 = vmul.f32 %v282, 0.5
  %v347 = vmul.f32 %v283, 0.5
  %v348 = vmul.f32 %v220, 0.70710677
  %v349 = vmul.f32 %v221, 0.70710677
  %v350 = vmul.f32 %v222, 0.70710677
  %v351 = vmul.f32 %v223, 0.70710677
  %v352 = vmul.f32 %v224, 0.70710677
  %v353 = vmul.f32 %v225, 0.70710677
  %v354 = vmul.f32 %v226, 0.70710677
  %v355 = vmul.f32 %v227, 0.70710677
  %v356 = vmul.f32 %v228, 0.70710677
  %v357 = vmul.f32 %v229, 0.70710677
  %v358 = vmul.f32 %v230, 0.70710677
  %v359 = vmul.f32 %v231, 0.70710677
  %v360 = vmul.f32 %v232, 0.70710677
  %v361 = vmul.f32 %v233, 0.70710677
  %v362 = vmul.f32 %v234, 0.70710677
  %v363 = vmul.f32 %v235, 0.70710677
  %v364 = vmul.f32 %v236, 0.70710677
  %v365 = vmul.f32 %v237, 0.70710677
  %v366 = vmul.f32 %v238, 0.70710677
  %v367 = vmul.f32 %v239, 0.70710677
  %v368 = vmul.f32 %v240, 0.70710677
  %v369 = vmul.f32 %v241, 0.70710677
  %v370 = vmul.f32 %v242, 0.70710677
  %v371 = vmul.f32 %v243, 0.70710677
  %v372 = vmul.f32 %v244, 0.70710677
  %v373 = vmul.f32 %v245, 0.70710677
  %v374 = vmul.f32 %v246, 0.70710677
  %v375 = vmul.f32 %v247, 0.70710677
  %v376 = vmul.f32 %v248, 0.70710677
  %v377 = vmul.f32 %v249, 0.70710677
  %v378 = vmul.f32 %v250, 0.70710677
  %v379 = vmul.f32 %v251, 0.70710677
  %v380 = vmul.f32 %v252, 0.70710677
  %v381 = vmul.f32 %v253, 0.70710677
  %v382 = vmul.f32 %v254, 0.70710677
  %v383 = vmul.f32 %v255, 0.70710677
  %v384 = vmul.f32 %v256, 0.70710677
  %v385 = vmul.f32 %v257, 0.70710677
  %v386 = vmul.f32 %v258, 0.70710677
  %v387 = vmul.f32 %v259, 0.70710677
  %v388 = vmul.f32 %v260, 0.70710677
  %v389 = vmul.f32 %v261, 0.70710677
  %v390 = vmul.f32 %v262, 0.70710677
  %v391 = vmul.f32 %v263, 0.70710677
  %v392 = vmul.f32 %v264, 0.70710677
  %v393 = vmul.f32 %v265, 0.70710677
  %v394 = vmul.f32 %v266, 0.70710677
  %v395 = vmul.f32 %v267, 0.70710677
  %v396 = vmul.f32 %v268, 0.70710677
  %v397 = vmul.f32 %v269, 0.70710677
  %v398 = vmul.f32 %v270, 0.70710677
  %v399 = vmul.f32 %v271, 0.70710677
  %v400 = vmul.f32 %v272, 0.70710677
  %v401 = vmul.f32 %v273, 0.70710677
  %v402 = vmul.f32 %v274, 0.70710677
  %v403 = vmul.f32 %v275, 0.70710677
  %v404 = vmul.f32 %v276, 0.70710677
  %v405 = vmul.f32 %v277, 0.70710677
  %v406 = vmul.f32 %v278, 0.70710677
  %v407 = vmul.f32 %v279, 0.70710677
  %v408 = vmul.f32 %v280, 0.70710677
  %v409 = vmul.f32 %v281, 0.70710677
  %v410 = vmul.f32 %v282, 0.70710677
  %v411 = vmul.f32 %v283, 0.70710677
  %vm412 = vcmp.ge.f32.partialorder %v348, 0.0
  %vm413 = vcmp.ge.f32.partialorder %v349, 0.0
  %vm414 = vcmp.ge.f32.partialorder %v350, 0.0
  %vm415 = vcmp.ge.f32.partialorder %v351, 0.0
  %vm416 = vcmp.ge.f32.partialorder %v352, 0.0
  %vm417 = vcmp.ge.f32.partialorder %v353, 0.0
  %vm418 = vcmp.ge.f32.partialorder %v354, 0.0
  %vm419 = vcmp.ge.f32.partialorder %v355, 0.0
  %vm420 = vcmp.ge.f32.partialorder %v356, 0.0
  %vm421 = vcmp.ge.f32.partialorder %v357, 0.0
  %vm422 = vcmp.ge.f32.partialorder %v358, 0.0
  %vm423 = vcmp.ge.f32.partialorder %v359, 0.0
  %vm424 = vcmp.ge.f32.partialorder %v360, 0.0
  %vm425 = vcmp.ge.f32.partialorder %v361, 0.0
  %vm426 = vcmp.ge.f32.partialorder %v362, 0.0
  %vm427 = vcmp.ge.f32.partialorder %v363, 0.0
  %vm428 = vcmp.ge.f32.partialorder %v364, 0.0
  %vm429 = vcmp.ge.f32.partialorder %v365, 0.0
  %vm430 = vcmp.ge.f32.partialorder %v366, 0.0
  %vm431 = vcmp.ge.f32.partialorder %v367, 0.0
  %vm432 = vcmp.ge.f32.partialorder %v368, 0.0
  %vm433 = vcmp.ge.f32.partialorder %v369, 0.0
  %vm434 = vcmp.ge.f32.partialorder %v370, 0.0
  %vm435 = vcmp.ge.f32.partialorder %v371, 0.0
  %vm436 = vcmp.ge.f32.partialorder %v372, 0.0
  %vm437 = vcmp.ge.f32.partialorder %v373, 0.0
  %vm438 = vcmp.ge.f32.partialorder %v374, 0.0
  %vm439 = vcmp.ge.f32.partialorder %v375, 0.0
  %vm440 = vcmp.ge.f32.partialorder %v376, 0.0
  %vm441 = vcmp.ge.f32.partialorder %v377, 0.0
  %vm442 = vcmp.ge.f32.partialorder %v378, 0.0
  %vm443 = vcmp.ge.f32.partialorder %v379, 0.0
  %vm444 = vcmp.ge.f32.partialorder %v380, 0.0
  %vm445 = vcmp.ge.f32.partialorder %v381, 0.0
  %vm446 = vcmp.ge.f32.partialorder %v382, 0.0
  %vm447 = vcmp.ge.f32.partialorder %v383, 0.0
  %vm448 = vcmp.ge.f32.partialorder %v384, 0.0
  %vm449 = vcmp.ge.f32.partialorder %v385, 0.0
  %vm450 = vcmp.ge.f32.partialorder %v386, 0.0
  %vm451 = vcmp.ge.f32.partialorder %v387, 0.0
  %vm452 = vcmp.ge.f32.partialorder %v388, 0.0
  %vm453 = vcmp.ge.f32.partialorder %v389, 0.0
  %vm454 = vcmp.ge.f32.partialorder %v390, 0.0
  %vm455 = vcmp.ge.f32.partialorder %v391, 0.0
  %vm456 = vcmp.ge.f32.partialorder %v392, 0.0
  %vm457 = vcmp.ge.f32.partialorder %v393, 0.0
  %vm458 = vcmp.ge.f32.partialorder %v394, 0.0
  %vm459 = vcmp.ge.f32.partialorder %v395, 0.0
  %vm460 = vcmp.ge.f32.partialorder %v396, 0.0
  %vm461 = vcmp.ge.f32.partialorder %v397, 0.0
  %vm462 = vcmp.ge.f32.partialorder %v398, 0.0
  %vm463 = vcmp.ge.f32.partialorder %v399, 0.0
  %vm464 = vcmp.ge.f32.partialorder %v400, 0.0
  %vm465 = vcmp.ge.f32.partialorder %v401, 0.0
  %vm466 = vcmp.ge.f32.partialorder %v402, 0.0
  %vm467 = vcmp.ge.f32.partialorder %v403, 0.0
  %vm468 = vcmp.ge.f32.partialorder %v404, 0.0
  %vm469 = vcmp.ge.f32.partialorder %v405, 0.0
  %vm470 = vcmp.ge.f32.partialorder %v406, 0.0
  %vm471 = vcmp.ge.f32.partialorder %v407, 0.0
  %vm472 = vcmp.ge.f32.partialorder %v408, 0.0
  %vm473 = vcmp.ge.f32.partialorder %v409, 0.0
  %vm474 = vcmp.ge.f32.partialorder %v410, 0.0
  %vm475 = vcmp.ge.f32.partialorder %v411, 0.0
  %v476 = vsel %vm412, 1.0, -1.0
  %v477 = vsel %vm413, 1.0, -1.0
  %v478 = vsel %vm414, 1.0, -1.0
  %v479 = vsel %vm415, 1.0, -1.0
  %v480 = vsel %vm416, 1.0, -1.0
  %v481 = vsel %vm417, 1.0, -1.0
  %v482 = vsel %vm418, 1.0, -1.0
  %v483 = vsel %vm419, 1.0, -1.0
  %v484 = vsel %vm420, 1.0, -1.0
  %v485 = vsel %vm421, 1.0, -1.0
  %v486 = vsel %vm422, 1.0, -1.0
  %v487 = vsel %vm423, 1.0, -1.0
  %v488 = vsel %vm424, 1.0, -1.0
  %v489 = vsel %vm425, 1.0, -1.0
  %v490 = vsel %vm426, 1.0, -1.0
  %v491 = vsel %vm427, 1.0, -1.0
  %v492 = vsel %vm428, 1.0, -1.0
  %v493 = vsel %vm429, 1.0, -1.0
  %v494 = vsel %vm430, 1.0, -1.0
  %v495 = vsel %vm431, 1.0, -1.0
  %v496 = vsel %vm432, 1.0, -1.0
  %v497 = vsel %vm433, 1.0, -1.0
  %v498 = vsel %vm434, 1.0, -1.0
  %v499 = vsel %vm435, 1.0, -1.0
  %v500 = vsel %vm436, 1.0, -1.0
  %v501 = vsel %vm437, 1.0, -1.0
  %v502 = vsel %vm438, 1.0, -1.0
  %v503 = vsel %vm439, 1.0, -1.0
  %v504 = vsel %vm440, 1.0, -1.0
  %v505 = vsel %vm441, 1.0, -1.0
  %v506 = vsel %vm442, 1.0, -1.0
  %v507 = vsel %vm443, 1.0, -1.0
  %v508 = vsel %vm444, 1.0, -1.0
  %v509 = vsel %vm445, 1.0, -1.0
  %v510 = vsel %vm446, 1.0, -1.0
  %v511 = vsel %vm447, 1.0, -1.0
  %v512 = vsel %vm448, 1.0, -1.0
  %v513 = vsel %vm449, 1.0, -1.0
  %v514 = vsel %vm450, 1.0, -1.0
  %v515 = vsel %vm451, 1.0, -1.0
  %v516 = vsel %vm452, 1.0, -1.0
  %v517 = vsel %vm453, 1.0, -1.0
  %v518 = vsel %vm454, 1.0, -1.0
  %v519 = vsel %vm455, 1.0, -1.0
  %v520 = vsel %vm456, 1.0, -1.0
  %v521 = vsel %vm457, 1.0, -1.0
  %v522 = vsel %vm458, 1.0, -1.0
  %v523 = vsel %vm459, 1.0, -1.0
  %v524 = vsel %vm460, 1.0, -1.0
  %v525 = vsel %vm461, 1.0, -1.0
  %v526 = vsel %vm462, 1.0, -1.0
  %v527 = vsel %vm463, 1.0, -1.0
  %v528 = vsel %vm464, 1.0, -1.0
  %v529 = vsel %vm465, 1.0, -1.0
  %v530 = vsel %vm466, 1.0, -1.0
  %v531 = vsel %vm467, 1.0, -1.0
  %v532 = vsel %vm468, 1.0, -1.0
  %v533 = vsel %vm469, 1.0, -1.0
  %v534 = vsel %vm470, 1.0, -1.0
  %v535 = vsel %vm471, 1.0, -1.0
  %v536 = vsel %vm472, 1.0, -1.0
  %v537 = vsel %vm473, 1.0, -1.0
  %v538 = vsel %vm474, 1.0, -1.0
  %v539 = vsel %vm475, 1.0, -1.0
  %v540 = vand.u32 2147483647, %v348
  %v541 = vand.u32 2147483647, %v349
  %v542 = vand.u32 2147483647, %v350
  %v543 = vand.u32 2147483647, %v351
  %v544 = vand.u32 2147483647, %v352
  %v545 = vand.u32 2147483647, %v353
  %v546 = vand.u32 2147483647, %v354
  %v547 = vand.u32 2147483647, %v355
  %v548 = vand.u32 2147483647, %v356
  %v549 = vand.u32 2147483647, %v357
  %v550 = vand.u32 2147483647, %v358
  %v551 = vand.u32 2147483647, %v359
  %v552 = vand.u32 2147483647, %v360
  %v553 = vand.u32 2147483647, %v361
  %v554 = vand.u32 2147483647, %v362
  %v555 = vand.u32 2147483647, %v363
  %v556 = vand.u32 2147483647, %v364
  %v557 = vand.u32 2147483647, %v365
  %v558 = vand.u32 2147483647, %v366
  %v559 = vand.u32 2147483647, %v367
  %v560 = vand.u32 2147483647, %v368
  %v561 = vand.u32 2147483647, %v369
  %v562 = vand.u32 2147483647, %v370
  %v563 = vand.u32 2147483647, %v371
  %v564 = vand.u32 2147483647, %v372
  %v565 = vand.u32 2147483647, %v373
  %v566 = vand.u32 2147483647, %v374
  %v567 = vand.u32 2147483647, %v375
  %v568 = vand.u32 2147483647, %v376
  %v569 = vand.u32 2147483647, %v377
  %v570 = vand.u32 2147483647, %v378
  %v571 = vand.u32 2147483647, %v379
  %v572 = vand.u32 2147483647, %v380
  %v573 = vand.u32 2147483647, %v381
  %v574 = vand.u32 2147483647, %v382
  %v575 = vand.u32 2147483647, %v383
  %v576 = vand.u32 2147483647, %v384
  %v577 = vand.u32 2147483647, %v385
  %v578 = vand.u32 2147483647, %v386
  %v579 = vand.u32 2147483647, %v387
  %v580 = vand.u32 2147483647, %v388
  %v581 = vand.u32 2147483647, %v389
  %v582 = vand.u32 2147483647, %v390
  %v583 = vand.u32 2147483647, %v391
  %v584 = vand.u32 2147483647, %v392
  %v585 = vand.u32 2147483647, %v393
  %v586 = vand.u32 2147483647, %v394
  %v587 = vand.u32 2147483647, %v395
  %v588 = vand.u32 2147483647, %v396
  %v589 = vand.u32 2147483647, %v397
  %v590 = vand.u32 2147483647, %v398
  %v591 = vand.u32 2147483647, %v399
  %v592 = vand.u32 2147483647, %v400
  %v593 = vand.u32 2147483647, %v401
  %v594 = vand.u32 2147483647, %v402
  %v595 = vand.u32 2147483647, %v403
  %v596 = vand.u32 2147483647, %v404
  %v597 = vand.u32 2147483647, %v405
  %v598 = vand.u32 2147483647, %v406
  %v599 = vand.u32 2147483647, %v407
  %v600 = vand.u32 2147483647, %v408
  %v601 = vand.u32 2147483647, %v409
  %v602 = vand.u32 2147483647, %v410
  %v603 = vand.u32 2147483647, %v411
  %v604 = vmul.f32 %v540, 0.3275911
  %v605 = vmul.f32 %v541, 0.3275911
  %v606 = vmul.f32 %v542, 0.3275911
  %v607 = vmul.f32 %v543, 0.3275911
  %v608 = vmul.f32 %v544, 0.3275911
  %v609 = vmul.f32 %v545, 0.3275911
  %v610 = vmul.f32 %v546, 0.3275911
  %v611 = vmul.f32 %v547, 0.3275911
  %v612 = vmul.f32 %v548, 0.3275911
  %v613 = vmul.f32 %v549, 0.3275911
  %v614 = vmul.f32 %v550, 0.3275911
  %v615 = vmul.f32 %v551, 0.3275911
  %v616 = vmul.f32 %v552, 0.3275911
  %v617 = vmul.f32 %v553, 0.3275911
  %v618 = vmul.f32 %v554, 0.3275911
  %v619 = vmul.f32 %v555, 0.3275911
  %v620 = vmul.f32 %v556, 0.3275911
  %v621 = vmul.f32 %v557, 0.3275911
  %v622 = vmul.f32 %v558, 0.3275911
  %v623 = vmul.f32 %v559, 0.3275911
  %v624 = vmul.f32 %v560, 0.3275911
  %v625 = vmul.f32 %v561, 0.3275911
  %v626 = vmul.f32 %v562, 0.3275911
  %v627 = vmul.f32 %v563, 0.3275911
  %v628 = vmul.f32 %v564, 0.3275911
  %v629 = vmul.f32 %v565, 0.3275911
  %v630 = vmul.f32 %v566, 0.3275911
  %v631 = vmul.f32 %v567, 0.3275911
  %v632 = vmul.f32 %v568, 0.3275911
  %v633 = vmul.f32 %v569, 0.3275911
  %v634 = vmul.f32 %v570, 0.3275911
  %v635 = vmul.f32 %v571, 0.3275911
  %v636 = vmul.f32 %v572, 0.3275911
  %v637 = vmul.f32 %v573, 0.3275911
  %v638 = vmul.f32 %v574, 0.3275911
  %v639 = vmul.f32 %v575, 0.3275911
  %v640 = vmul.f32 %v576, 0.3275911
  %v641 = vmul.f32 %v577, 0.3275911
  %v642 = vmul.f32 %v578, 0.3275911
  %v643 = vmul.f32 %v579, 0.3275911
  %v644 = vmul.f32 %v580, 0.3275911
  %v645 = vmul.f32 %v581, 0.3275911
  %v646 = vmul.f32 %v582, 0.3275911
  %v647 = vmul.f32 %v583, 0.3275911
  %v648 = vmul.f32 %v584, 0.3275911
  %v649 = vmul.f32 %v585, 0.3275911
  %v650 = vmul.f32 %v586, 0.3275911
  %v651 = vmul.f32 %v587, 0.3275911
  %v652 = vmul.f32 %v588, 0.3275911
  %v653 = vmul.f32 %v589, 0.3275911
  %v654 = vmul.f32 %v590, 0.3275911
  %v655 = vmul.f32 %v591, 0.3275911
  %v656 = vmul.f32 %v592, 0.3275911
  %v657 = vmul.f32 %v593, 0.3275911
  %v658 = vmul.f32 %v594, 0.3275911
  %v659 = vmul.f32 %v595, 0.3275911
  %v660 = vmul.f32 %v596, 0.3275911
  %v661 = vmul.f32 %v597, 0.3275911
  %v662 = vmul.f32 %v598, 0.3275911
  %v663 = vmul.f32 %v599, 0.3275911
  %v664 = vmul.f32 %v600, 0.3275911
  %v665 = vmul.f32 %v601, 0.3275911
  %v666 = vmul.f32 %v602, 0.3275911
  %v667 = vmul.f32 %v603, 0.3275911
  %v668 = vadd.f32 %v604, 1.0
  %v669 = vadd.f32 %v605, 1.0
  %v670 = vadd.f32 %v606, 1.0
  %v671 = vadd.f32 %v607, 1.0
  %v672 = vadd.f32 %v608, 1.0
  %v673 = vadd.f32 %v609, 1.0
  %v674 = vadd.f32 %v610, 1.0
  %v675 = vadd.f32 %v611, 1.0
  %v676 = vadd.f32 %v612, 1.0
  %v677 = vadd.f32 %v613, 1.0
  %v678 = vadd.f32 %v614, 1.0
  %v679 = vadd.f32 %v615, 1.0
  %v680 = vadd.f32 %v616, 1.0
  %v681 = vadd.f32 %v617, 1.0
  %v682 = vadd.f32 %v618, 1.0
  %v683 = vadd.f32 %v619, 1.0
  %v684 = vadd.f32 %v620, 1.0
  %v685 = vadd.f32 %v621, 1.0
  %v686 = vadd.f32 %v622, 1.0
  %v687 = vadd.f32 %v623, 1.0
  %v688 = vadd.f32 %v624, 1.0
  %v689 = vadd.f32 %v625, 1.0
  %v690 = vadd.f32 %v626, 1.0
  %v691 = vadd.f32 %v627, 1.0
  %v692 = vadd.f32 %v628, 1.0
  %v693 = vadd.f32 %v629, 1.0
  %v694 = vadd.f32 %v630, 1.0
  %v695 = vadd.f32 %v631, 1.0
  %v696 = vadd.f32 %v632, 1.0
  %v697 = vadd.f32 %v633, 1.0
  %v698 = vadd.f32 %v634, 1.0
  %v699 = vadd.f32 %v635, 1.0
  %v700 = vadd.f32 %v636, 1.0
  %v701 = vadd.f32 %v637, 1.0
  %v702 = vadd.f32 %v638, 1.0
  %v703 = vadd.f32 %v639, 1.0
  %v704 = vadd.f32 %v640, 1.0
  %v705 = vadd.f32 %v641, 1.0
  %v706 = vadd.f32 %v642, 1.0
  %v707 = vadd.f32 %v643, 1.0
  %v708 = vadd.f32 %v644, 1.0
  %v709 = vadd.f32 %v645, 1.0
  %v710 = vadd.f32 %v646, 1.0
  %v711 = vadd.f32 %v647, 1.0
  %v712 = vadd.f32 %v648, 1.0
  %v713 = vadd.f32 %v649, 1.0
  %v714 = vadd.f32 %v650, 1.0
  %v715 = vadd.f32 %v651, 1.0
  %v716 = vadd.f32 %v652, 1.0
  %v717 = vadd.f32 %v653, 1.0
  %v718 = vadd.f32 %v654, 1.0
  %v719 = vadd.f32 %v655, 1.0
  %v720 = vadd.f32 %v656, 1.0
  %v721 = vadd.f32 %v657, 1.0
  %v722 = vadd.f32 %v658, 1.0
  %v723 = vadd.f32 %v659, 1.0
  %v724 = vadd.f32 %v660, 1.0
  %v725 = vadd.f32 %v661, 1.0
  %v726 = vadd.f32 %v662, 1.0
  %v727 = vadd.f32 %v663, 1.0
  %v728 = vadd.f32 %v664, 1.0
  %v729 = vadd.f32 %v665, 1.0
  %v730 = vadd.f32 %v666, 1.0
  %v731 = vadd.f32 %v667, 1.0
  %v732 = vrcp.pop %v668
  %v733 = vrcp.pop %v669
  %v734 = vrcp.pop %v670
  %v735 = vrcp.pop %v671
  %v736 = vrcp.pop %v672
  %v737 = vrcp.pop %v673
  %v738 = vrcp.pop %v674
  %v739 = vrcp.pop %v675
  %v740 = vrcp.pop %v676
  %v741 = vrcp.pop %v677
  %v742 = vrcp.pop %v678
  %v743 = vrcp.pop %v679
  %v744 = vrcp.pop %v680
  %v745 = vrcp.pop %v681
  %v746 = vrcp.pop %v682
  %v747 = vrcp.pop %v683
  %v748 = vrcp.pop %v684
  %v749 = vrcp.pop %v685
  %v750 = vrcp.pop %v686
  %v751 = vrcp.pop %v687
  %v752 = vrcp.pop %v688
  %v753 = vrcp.pop %v689
  %v754 = vrcp.pop %v690
  %v755 = vrcp.pop %v691
  %v756 = vrcp.pop %v692
  %v757 = vrcp.pop %v693
  %v758 = vrcp.pop %v694
  %v759 = vrcp.pop %v695
  %v760 = vrcp.pop %v696
  %v761 = vrcp.pop %v697
  %v762 = vrcp.pop %v698
  %v763 = vrcp.pop %v699
  %v764 = vrcp.pop %v700
  %v765 = vrcp.pop %v701
  %v766 = vrcp.pop %v702
  %v767 = vrcp.pop %v703
  %v768 = vrcp.pop %v704
  %v769 = vrcp.pop %v705
  %v770 = vrcp.pop %v706
  %v771 = vrcp.pop %v707
  %v772 = vrcp.pop %v708
  %v773 = vrcp.pop %v709
  %v774 = vrcp.pop %v710
  %v775 = vrcp.pop %v711
  %v776 = vrcp.pop %v712
  %v777 = vrcp.pop %v713
  %v778 = vrcp.pop %v714
  %v779 = vrcp.pop %v715
  %v780 = vrcp.pop %v716
  %v781 = vrcp.pop %v717
  %v782 = vrcp.pop %v718
  %v783 = vrcp.pop %v719
  %v784 = vrcp.pop %v720
  %v785 = vrcp.pop %v721
  %v786 = vrcp.pop %v722
  %v787 = vrcp.pop %v723
  %v788 = vrcp.pop %v724
  %v789 = vrcp.pop %v725
  %v790 = vrcp.pop %v726
  %v791 = vrcp.pop %v727
  %v792 = vrcp.pop %v728
  %v793 = vrcp.pop %v729
  %v794 = vrcp.pop %v730
  %v795 = vrcp.pop %v731
  %v796 = vmul.f32 %v732, 1.0614054
  %v797 = vmul.f32 %v733, 1.0614054
  %v798 = vmul.f32 %v734, 1.0614054
  %v799 = vmul.f32 %v735, 1.0614054
  %v800 = vmul.f32 %v736, 1.0614054
  %v801 = vmul.f32 %v737, 1.0614054
  %v802 = vmul.f32 %v738, 1.0614054
  %v803 = vmul.f32 %v739, 1.0614054
  %v804 = vmul.f32 %v740, 1.0614054
  %v805 = vmul.f32 %v741, 1.0614054
  %v806 = vmul.f32 %v742, 1.0614054
  %v807 = vmul.f32 %v743, 1.0614054
  %v808 = vmul.f32 %v744, 1.0614054
  %v809 = vmul.f32 %v745, 1.0614054
  %v810 = vmul.f32 %v746, 1.0614054
  %v811 = vmul.f32 %v747, 1.0614054
  %v812 = vmul.f32 %v748, 1.0614054
  %v813 = vmul.f32 %v749, 1.0614054
  %v814 = vmul.f32 %v750, 1.0614054
  %v815 = vmul.f32 %v751, 1.0614054
  %v816 = vmul.f32 %v752, 1.0614054
  %v817 = vmul.f32 %v753, 1.0614054
  %v818 = vmul.f32 %v754, 1.0614054
  %v819 = vmul.f32 %v755, 1.0614054
  %v820 = vmul.f32 %v756, 1.0614054
  %v821 = vmul.f32 %v757, 1.0614054
  %v822 = vmul.f32 %v758, 1.0614054
  %v823 = vmul.f32 %v759, 1.0614054
  %v824 = vmul.f32 %v760, 1.0614054
  %v825 = vmul.f32 %v761, 1.0614054
  %v826 = vmul.f32 %v762, 1.0614054
  %v827 = vmul.f32 %v763, 1.0614054
  %v828 = vmul.f32 %v764, 1.0614054
  %v829 = vmul.f32 %v765, 1.0614054
  %v830 = vmul.f32 %v766, 1.0614054
  %v831 = vmul.f32 %v767, 1.0614054
  %v832 = vmul.f32 %v768, 1.0614054
  %v833 = vmul.f32 %v769, 1.0614054
  %v834 = vmul.f32 %v770, 1.0614054
  %v835 = vmul.f32 %v771, 1.0614054
  %v836 = vmul.f32 %v772, 1.0614054
  %v837 = vmul.f32 %v773, 1.0614054
  %v838 = vmul.f32 %v774, 1.0614054
  %v839 = vmul.f32 %v775, 1.0614054
  %v840 = vmul.f32 %v776, 1.0614054
  %v841 = vmul.f32 %v777, 1.0614054
  %v842 = vmul.f32 %v778, 1.0614054
  %v843 = vmul.f32 %v779, 1.0614054
  %v844 = vmul.f32 %v780, 1.0614054
  %v845 = vmul.f32 %v781, 1.0614054
  %v846 = vmul.f32 %v782, 1.0614054
  %v847 = vmul.f32 %v783, 1.0614054
  %v848 = vmul.f32 %v784, 1.0614054
  %v849 = vmul.f32 %v785, 1.0614054
  %v850 = vmul.f32 %v786, 1.0614054
  %v851 = vmul.f32 %v787, 1.0614054
  %v852 = vmul.f32 %v788, 1.0614054
  %v853 = vmul.f32 %v789, 1.0614054
  %v854 = vmul.f32 %v790, 1.0614054
  %v855 = vmul.f32 %v791, 1.0614054
  %v856 = vmul.f32 %v792, 1.0614054
  %v857 = vmul.f32 %v793, 1.0614054
  %v858 = vmul.f32 %v794, 1.0614054
  %v859 = vmul.f32 %v795, 1.0614054
  %v860 = vadd.f32 %v796, -1.4531521
  %v861 = vadd.f32 %v797, -1.4531521
  %v862 = vadd.f32 %v798, -1.4531521
  %v863 = vadd.f32 %v799, -1.4531521
  %v864 = vadd.f32 %v800, -1.4531521
  %v865 = vadd.f32 %v801, -1.4531521
  %v866 = vadd.f32 %v802, -1.4531521
  %v867 = vadd.f32 %v803, -1.4531521
  %v868 = vadd.f32 %v804, -1.4531521
  %v869 = vadd.f32 %v805, -1.4531521
  %v870 = vadd.f32 %v806, -1.4531521
  %v871 = vadd.f32 %v807, -1.4531521
  %v872 = vadd.f32 %v808, -1.4531521
  %v873 = vadd.f32 %v809, -1.4531521
  %v874 = vadd.f32 %v810, -1.4531521
  %v875 = vadd.f32 %v811, -1.4531521
  %v876 = vadd.f32 %v812, -1.4531521
  %v877 = vadd.f32 %v813, -1.4531521
  %v878 = vadd.f32 %v814, -1.4531521
  %v879 = vadd.f32 %v815, -1.4531521
  %v880 = vadd.f32 %v816, -1.4531521
  %v881 = vadd.f32 %v817, -1.4531521
  %v882 = vadd.f32 %v818, -1.4531521
  %v883 = vadd.f32 %v819, -1.4531521
  %v884 = vadd.f32 %v820, -1.4531521
  %v885 = vadd.f32 %v821, -1.4531521
  %v886 = vadd.f32 %v822, -1.4531521
  %v887 = vadd.f32 %v823, -1.4531521
  %v888 = vadd.f32 %v824, -1.4531521
  %v889 = vadd.f32 %v825, -1.4531521
  %v890 = vadd.f32 %v826, -1.4531521
  %v891 = vadd.f32 %v827, -1.4531521
  %v892 = vadd.f32 %v828, -1.4531521
  %v893 = vadd.f32 %v829, -1.4531521
  %v894 = vadd.f32 %v830, -1.4531521
  %v895 = vadd.f32 %v831, -1.4531521
  %v896 = vadd.f32 %v832, -1.4531521
  %v897 = vadd.f32 %v833, -1.4531521
  %v898 = vadd.f32 %v834, -1.4531521
  %v899 = vadd.f32 %v835, -1.4531521
  %v900 = vadd.f32 %v836, -1.4531521
  %v901 = vadd.f32 %v837, -1.4531521
  %v902 = vadd.f32 %v838, -1.4531521
  %v903 = vadd.f32 %v839, -1.4531521
  %v904 = vadd.f32 %v840, -1.4531521
  %v905 = vadd.f32 %v841, -1.4531521
  %v906 = vadd.f32 %v842, -1.4531521
  %v907 = vadd.f32 %v843, -1.4531521
  %v908 = vadd.f32 %v844, -1.4531521
  %v909 = vadd.f32 %v845, -1.4531521
  %v910 = vadd.f32 %v846, -1.4531521
  %v911 = vadd.f32 %v847, -1.4531521
  %v912 = vadd.f32 %v848, -1.4531521
  %v913 = vadd.f32 %v849, -1.4531521
  %v914 = vadd.f32 %v850, -1.4531521
  %v915 = vadd.f32 %v851, -1.4531521
  %v916 = vadd.f32 %v852, -1.4531521
  %v917 = vadd.f32 %v853, -1.4531521
  %v918 = vadd.f32 %v854, -1.4531521
  %v919 = vadd.f32 %v855, -1.4531521
  %v920 = vadd.f32 %v856, -1.4531521
  %v921 = vadd.f32 %v857, -1.4531521
  %v922 = vadd.f32 %v858, -1.4531521
  %v923 = vadd.f32 %v859, -1.4531521
  %v924 = vmul.f32 %v860, %v732
  %v925 = vmul.f32 %v861, %v733
  %v926 = vmul.f32 %v862, %v734
  %v927 = vmul.f32 %v863, %v735
  %v928 = vmul.f32 %v864, %v736
  %v929 = vmul.f32 %v865, %v737
  %v930 = vmul.f32 %v866, %v738
  %v931 = vmul.f32 %v867, %v739
  %v932 = vmul.f32 %v868, %v740
  %v933 = vmul.f32 %v869, %v741
  %v934 = vmul.f32 %v870, %v742
  %v935 = vmul.f32 %v871, %v743
  %v936 = vmul.f32 %v872, %v744
  %v937 = vmul.f32 %v873, %v745
  %v938 = vmul.f32 %v874, %v746
  %v939 = vmul.f32 %v875, %v747
  %v940 = vmul.f32 %v876, %v748
  %v941 = vmul.f32 %v877, %v749
  %v942 = vmul.f32 %v878, %v750
  %v943 = vmul.f32 %v879, %v751
  %v944 = vmul.f32 %v880, %v752
  %v945 = vmul.f32 %v881, %v753
  %v946 = vmul.f32 %v882, %v754
  %v947 = vmul.f32 %v883, %v755
  %v948 = vmul.f32 %v884, %v756
  %v949 = vmul.f32 %v885, %v757
  %v950 = vmul.f32 %v886, %v758
  %v951 = vmul.f32 %v887, %v759
  %v952 = vmul.f32 %v888, %v760
  %v953 = vmul.f32 %v889, %v761
  %v954 = vmul.f32 %v890, %v762
  %v955 = vmul.f32 %v891, %v763
  %v956 = vmul.f32 %v892, %v764
  %v957 = vmul.f32 %v893, %v765
  %v958 = vmul.f32 %v894, %v766
  %v959 = vmul.f32 %v895, %v767
  %v960 = vmul.f32 %v896, %v768
  %v961 = vmul.f32 %v897, %v769
  %v962 = vmul.f32 %v898, %v770
  %v963 = vmul.f32 %v899, %v771
  %v964 = vmul.f32 %v900, %v772
  %v965 = vmul.f32 %v901, %v773
  %v966 = vmul.f32 %v902, %v774
  %v967 = vmul.f32 %v903, %v775
  %v968 = vmul.f32 %v904, %v776
  %v969 = vmul.f32 %v905, %v777
  %v970 = vmul.f32 %v906, %v778
  %v971 = vmul.f32 %v907, %v779
  %v972 = vmul.f32 %v908, %v780
  %v973 = vmul.f32 %v909, %v781
  %v974 = vmul.f32 %v910, %v782
  %v975 = vmul.f32 %v911, %v783
  %v976 = vmul.f32 %v912, %v784
  %v977 = vmul.f32 %v913, %v785
  %v978 = vmul.f32 %v914, %v786
  %v979 = vmul.f32 %v915, %v787
  %v980 = vmul.f32 %v916, %v788
  %v981 = vmul.f32 %v917, %v789
  %v982 = vmul.f32 %v918, %v790
  %v983 = vmul.f32 %v919, %v791
  %v984 = vmul.f32 %v920, %v792
  %v985 = vmul.f32 %v921, %v793
  %v986 = vmul.f32 %v922, %v794
  %v987 = vmul.f32 %v923, %v795
  %v988 = vadd.f32 %v924, 1.4214138
  %v989 = vadd.f32 %v925, 1.4214138
  %v990 = vadd.f32 %v926, 1.4214138
  %v991 = vadd.f32 %v927, 1.4214138
  %v992 = vadd.f32 %v928, 1.4214138
  %v993 = vadd.f32 %v929, 1.4214138
  %v994 = vadd.f32 %v930, 1.4214138
  %v995 = vadd.f32 %v931, 1.4214138
  %v996 = vadd.f32 %v932, 1.4214138
  %v997 = vadd.f32 %v933, 1.4214138
  %v998 = vadd.f32 %v934, 1.4214138
  %v999 = vadd.f32 %v935, 1.4214138
  %v1000 = vadd.f32 %v936, 1.4214138
  %v1001 = vadd.f32 %v937, 1.4214138
  %v1002 = vadd.f32 %v938, 1.4214138
  %v1003 = vadd.f32 %v939, 1.4214138
  %v1004 = vadd.f32 %v940, 1.4214138
  %v1005 = vadd.f32 %v941, 1.4214138
  %v1006 = vadd.f32 %v942, 1.4214138
  %v1007 = vadd.f32 %v943, 1.4214138
  %v1008 = vadd.f32 %v944, 1.4214138
  %v1009 = vadd.f32 %v945, 1.4214138
  %v1010 = vadd.f32 %v946, 1.4214138
  %v1011 = vadd.f32 %v947, 1.4214138
  %v1012 = vadd.f32 %v948, 1.4214138
  %v1013 = vadd.f32 %v949, 1.4214138
  %v1014 = vadd.f32 %v950, 1.4214138
  %v1015 = vadd.f32 %v951, 1.4214138
  %v1016 = vadd.f32 %v952, 1.4214138
  %v1017 = vadd.f32 %v953, 1.4214138
  %v1018 = vadd.f32 %v954, 1.4214138
  %v1019 = vadd.f32 %v955, 1.4214138
  %v1020 = vadd.f32 %v956, 1.4214138
  %v1021 = vadd.f32 %v957, 1.4214138
  %v1022 = vadd.f32 %v958, 1.4214138
  %v1023 = vadd.f32 %v959, 1.4214138
  %v1024 = vadd.f32 %v960, 1.4214138
  %v1025 = vadd.f32 %v961, 1.4214138
  %v1026 = vadd.f32 %v962, 1.4214138
  %v1027 = vadd.f32 %v963, 1.4214138
  %v1028 = vadd.f32 %v964, 1.4214138
  %v1029 = vadd.f32 %v965, 1.4214138
  %v1030 = vadd.f32 %v966, 1.4214138
  %v1031 = vadd.f32 %v967, 1.4214138
  %v1032 = vadd.f32 %v968, 1.4214138
  %v1033 = vadd.f32 %v969, 1.4214138
  %v1034 = vadd.f32 %v970, 1.4214138
  %v1035 = vadd.f32 %v971, 1.4214138
  %v1036 = vadd.f32 %v972, 1.4214138
  %v1037 = vadd.f32 %v973, 1.4214138
  %v1038 = vadd.f32 %v974, 1.4214138
  %v1039 = vadd.f32 %v975, 1.4214138
  %v1040 = vadd.f32 %v976, 1.4214138
  %v1041 = vadd.f32 %v977, 1.4214138
  %v1042 = vadd.f32 %v978, 1.4214138
  %v1043 = vadd.f32 %v979, 1.4214138
  %v1044 = vadd.f32 %v980, 1.4214138
  %v1045 = vadd.f32 %v981, 1.4214138
  %v1046 = vadd.f32 %v982, 1.4214138
  %v1047 = vadd.f32 %v983, 1.4214138
  %v1048 = vadd.f32 %v984, 1.4214138
  %v1049 = vadd.f32 %v985, 1.4214138
  %v1050 = vadd.f32 %v986, 1.4214138
  %v1051 = vadd.f32 %v987, 1.4214138
  %v1052 = vmul.f32 %v988, %v732
  %v1053 = vmul.f32 %v989, %v733
  %v1054 = vmul.f32 %v990, %v734
  %v1055 = vmul.f32 %v991, %v735
  %v1056 = vmul.f32 %v992, %v736
  %v1057 = vmul.f32 %v993, %v737
  %v1058 = vmul.f32 %v994, %v738
  %v1059 = vmul.f32 %v995, %v739
  %v1060 = vmul.f32 %v996, %v740
  %v1061 = vmul.f32 %v997, %v741
  %v1062 = vmul.f32 %v998, %v742
  %v1063 = vmul.f32 %v999, %v743
  %v1064 = vmul.f32 %v1000, %v744
  %v1065 = vmul.f32 %v1001, %v745
  %v1066 = vmul.f32 %v1002, %v746
  %v1067 = vmul.f32 %v1003, %v747
  %v1068 = vmul.f32 %v1004, %v748
  %v1069 = vmul.f32 %v1005, %v749
  %v1070 = vmul.f32 %v1006, %v750
  %v1071 = vmul.f32 %v1007, %v751
  %v1072 = vmul.f32 %v1008, %v752
  %v1073 = vmul.f32 %v1009, %v753
  %v1074 = vmul.f32 %v1010, %v754
  %v1075 = vmul.f32 %v1011, %v755
  %v1076 = vmul.f32 %v1012, %v756
  %v1077 = vmul.f32 %v1013, %v757
  %v1078 = vmul.f32 %v1014, %v758
  %v1079 = vmul.f32 %v1015, %v759
  %v1080 = vmul.f32 %v1016, %v760
  %v1081 = vmul.f32 %v1017, %v761
  %v1082 = vmul.f32 %v1018, %v762
  %v1083 = vmul.f32 %v1019, %v763
  %v1084 = vmul.f32 %v1020, %v764
  %v1085 = vmul.f32 %v1021, %v765
  %v1086 = vmul.f32 %v1022, %v766
  %v1087 = vmul.f32 %v1023, %v767
  %v1088 = vmul.f32 %v1024, %v768
  %v1089 = vmul.f32 %v1025, %v769
  %v1090 = vmul.f32 %v1026, %v770
  %v1091 = vmul.f32 %v1027, %v771
  %v1092 = vmul.f32 %v1028, %v772
  %v1093 = vmul.f32 %v1029, %v773
  %v1094 = vmul.f32 %v1030, %v774
  %v1095 = vmul.f32 %v1031, %v775
  %v1096 = vmul.f32 %v1032, %v776
  %v1097 = vmul.f32 %v1033, %v777
  %v1098 = vmul.f32 %v1034, %v778
  %v1099 = vmul.f32 %v1035, %v779
  %v1100 = vmul.f32 %v1036, %v780
  %v1101 = vmul.f32 %v1037, %v781
  %v1102 = vmul.f32 %v1038, %v782
  %v1103 = vmul.f32 %v1039, %v783
  %v1104 = vmul.f32 %v1040, %v784
  %v1105 = vmul.f32 %v1041, %v785
  %v1106 = vmul.f32 %v1042, %v786
  %v1107 = vmul.f32 %v1043, %v787
  %v1108 = vmul.f32 %v1044, %v788
  %v1109 = vmul.f32 %v1045, %v789
  %v1110 = vmul.f32 %v1046, %v790
  %v1111 = vmul.f32 %v1047, %v791
  %v1112 = vmul.f32 %v1048, %v792
  %v1113 = vmul.f32 %v1049, %v793
  %v1114 = vmul.f32 %v1050, %v794
  %v1115 = vmul.f32 %v1051, %v795
  %v1116 = vadd.f32 %v1052, -0.28449672
  %v1117 = vadd.f32 %v1053, -0.28449672
  %v1118 = vadd.f32 %v1054, -0.28449672
  %v1119 = vadd.f32 %v1055, -0.28449672
  %v1120 = vadd.f32 %v1056, -0.28449672
  %v1121 = vadd.f32 %v1057, -0.28449672
  %v1122 = vadd.f32 %v1058, -0.28449672
  %v1123 = vadd.f32 %v1059, -0.28449672
  %v1124 = vadd.f32 %v1060, -0.28449672
  %v1125 = vadd.f32 %v1061, -0.28449672
  %v1126 = vadd.f32 %v1062, -0.28449672
  %v1127 = vadd.f32 %v1063, -0.28449672
  %v1128 = vadd.f32 %v1064, -0.28449672
  %v1129 = vadd.f32 %v1065, -0.28449672
  %v1130 = vadd.f32 %v1066, -0.28449672
  %v1131 = vadd.f32 %v1067, -0.28449672
  %v1132 = vadd.f32 %v1068, -0.28449672
  %v1133 = vadd.f32 %v1069, -0.28449672
  %v1134 = vadd.f32 %v1070, -0.28449672
  %v1135 = vadd.f32 %v1071, -0.28449672
  %v1136 = vadd.f32 %v1072, -0.28449672
  %v1137 = vadd.f32 %v1073, -0.28449672
  %v1138 = vadd.f32 %v1074, -0.28449672
  %v1139 = vadd.f32 %v1075, -0.28449672
  %v1140 = vadd.f32 %v1076, -0.28449672
  %v1141 = vadd.f32 %v1077, -0.28449672
  %v1142 = vadd.f32 %v1078, -0.28449672
  %v1143 = vadd.f32 %v1079, -0.28449672
  %v1144 = vadd.f32 %v1080, -0.28449672
  %v1145 = vadd.f32 %v1081, -0.28449672
  %v1146 = vadd.f32 %v1082, -0.28449672
  %v1147 = vadd.f32 %v1083, -0.28449672
  %v1148 = vadd.f32 %v1084, -0.28449672
  %v1149 = vadd.f32 %v1085, -0.28449672
  %v1150 = vadd.f32 %v1086, -0.28449672
  %v1151 = vadd.f32 %v1087, -0.28449672
  %v1152 = vadd.f32 %v1088, -0.28449672
  %v1153 = vadd.f32 %v1089, -0.28449672
  %v1154 = vadd.f32 %v1090, -0.28449672
  %v1155 = vadd.f32 %v1091, -0.28449672
  %v1156 = vadd.f32 %v1092, -0.28449672
  %v1157 = vadd.f32 %v1093, -0.28449672
  %v1158 = vadd.f32 %v1094, -0.28449672
  %v1159 = vadd.f32 %v1095, -0.28449672
  %v1160 = vadd.f32 %v1096, -0.28449672
  %v1161 = vadd.f32 %v1097, -0.28449672
  %v1162 = vadd.f32 %v1098, -0.28449672
  %v1163 = vadd.f32 %v1099, -0.28449672
  %v1164 = vadd.f32 %v1100, -0.28449672
  %v1165 = vadd.f32 %v1101, -0.28449672
  %v1166 = vadd.f32 %v1102, -0.28449672
  %v1167 = vadd.f32 %v1103, -0.28449672
  %v1168 = vadd.f32 %v1104, -0.28449672
  %v1169 = vadd.f32 %v1105, -0.28449672
  %v1170 = vadd.f32 %v1106, -0.28449672
  %v1171 = vadd.f32 %v1107, -0.28449672
  %v1172 = vadd.f32 %v1108, -0.28449672
  %v1173 = vadd.f32 %v1109, -0.28449672
  %v1174 = vadd.f32 %v1110, -0.28449672
  %v1175 = vadd.f32 %v1111, -0.28449672
  %v1176 = vadd.f32 %v1112, -0.28449672
  %v1177 = vadd.f32 %v1113, -0.28449672
  %v1178 = vadd.f32 %v1114, -0.28449672
  %v1179 = vadd.f32 %v1115, -0.28449672
  %v1180 = vmul.f32 %v1116, %v732
  %v1181 = vmul.f32 %v1117, %v733
  %v1182 = vmul.f32 %v1118, %v734
  %v1183 = vmul.f32 %v1119, %v735
  %v1184 = vmul.f32 %v1120, %v736
  %v1185 = vmul.f32 %v1121, %v737
  %v1186 = vmul.f32 %v1122, %v738
  %v1187 = vmul.f32 %v1123, %v739
  %v1188 = vmul.f32 %v1124, %v740
  %v1189 = vmul.f32 %v1125, %v741
  %v1190 = vmul.f32 %v1126, %v742
  %v1191 = vmul.f32 %v1127, %v743
  %v1192 = vmul.f32 %v1128, %v744
  %v1193 = vmul.f32 %v1129, %v745
  %v1194 = vmul.f32 %v1130, %v746
  %v1195 = vmul.f32 %v1131, %v747
  %v1196 = vmul.f32 %v1132, %v748
  %v1197 = vmul.f32 %v1133, %v749
  %v1198 = vmul.f32 %v1134, %v750
  %v1199 = vmul.f32 %v1135, %v751
  %v1200 = vmul.f32 %v1136, %v752
  %v1201 = vmul.f32 %v1137, %v753
  %v1202 = vmul.f32 %v1138, %v754
  %v1203 = vmul.f32 %v1139, %v755
  %v1204 = vmul.f32 %v1140, %v756
  %v1205 = vmul.f32 %v1141, %v757
  %v1206 = vmul.f32 %v1142, %v758
  %v1207 = vmul.f32 %v1143, %v759
  %v1208 = vmul.f32 %v1144, %v760
  %v1209 = vmul.f32 %v1145, %v761
  %v1210 = vmul.f32 %v1146, %v762
  %v1211 = vmul.f32 %v1147, %v763
  %v1212 = vmul.f32 %v1148, %v764
  %v1213 = vmul.f32 %v1149, %v765
  %v1214 = vmul.f32 %v1150, %v766
  %v1215 = vmul.f32 %v1151, %v767
  %v1216 = vmul.f32 %v1152, %v768
  %v1217 = vmul.f32 %v1153, %v769
  %v1218 = vmul.f32 %v1154, %v770
  %v1219 = vmul.f32 %v1155, %v771
  %v1220 = vmul.f32 %v1156, %v772
  %v1221 = vmul.f32 %v1157, %v773
  %v1222 = vmul.f32 %v1158, %v774
  %v1223 = vmul.f32 %v1159, %v775
  %v1224 = vmul.f32 %v1160, %v776
  %v1225 = vmul.f32 %v1161, %v777
  %v1226 = vmul.f32 %v1162, %v778
  %v1227 = vmul.f32 %v1163, %v779
  %v1228 = vmul.f32 %v1164, %v780
  %v1229 = vmul.f32 %v1165, %v781
  %v1230 = vmul.f32 %v1166, %v782
  %v1231 = vmul.f32 %v1167, %v783
  %v1232 = vmul.f32 %v1168, %v784
  %v1233 = vmul.f32 %v1169, %v785
  %v1234 = vmul.f32 %v1170, %v786
  %v1235 = vmul.f32 %v1171, %v787
  %v1236 = vmul.f32 %v1172, %v788
  %v1237 = vmul.f32 %v1173, %v789
  %v1238 = vmul.f32 %v1174, %v790
  %v1239 = vmul.f32 %v1175, %v791
  %v1240 = vmul.f32 %v1176, %v792
  %v1241 = vmul.f32 %v1177, %v793
  %v1242 = vmul.f32 %v1178, %v794
  %v1243 = vmul.f32 %v1179, %v795
  %v1244 = vadd.f32 %v1180, 0.2548296
  %v1245 = vadd.f32 %v1181, 0.2548296
  %v1246 = vadd.f32 %v1182, 0.2548296
  %v1247 = vadd.f32 %v1183, 0.2548296
  %v1248 = vadd.f32 %v1184, 0.2548296
  %v1249 = vadd.f32 %v1185, 0.2548296
  %v1250 = vadd.f32 %v1186, 0.2548296
  %v1251 = vadd.f32 %v1187, 0.2548296
  %v1252 = vadd.f32 %v1188, 0.2548296
  %v1253 = vadd.f32 %v1189, 0.2548296
  %v1254 = vadd.f32 %v1190, 0.2548296
  %v1255 = vadd.f32 %v1191, 0.2548296
  %v1256 = vadd.f32 %v1192, 0.2548296
  %v1257 = vadd.f32 %v1193, 0.2548296
  %v1258 = vadd.f32 %v1194, 0.2548296
  %v1259 = vadd.f32 %v1195, 0.2548296
  %v1260 = vadd.f32 %v1196, 0.2548296
  %v1261 = vadd.f32 %v1197, 0.2548296
  %v1262 = vadd.f32 %v1198, 0.2548296
  %v1263 = vadd.f32 %v1199, 0.2548296
  %v1264 = vadd.f32 %v1200, 0.2548296
  %v1265 = vadd.f32 %v1201, 0.2548296
  %v1266 = vadd.f32 %v1202, 0.2548296
  %v1267 = vadd.f32 %v1203, 0.2548296
  %v1268 = vadd.f32 %v1204, 0.2548296
  %v1269 = vadd.f32 %v1205, 0.2548296
  %v1270 = vadd.f32 %v1206, 0.2548296
  %v1271 = vadd.f32 %v1207, 0.2548296
  %v1272 = vadd.f32 %v1208, 0.2548296
  %v1273 = vadd.f32 %v1209, 0.2548296
  %v1274 = vadd.f32 %v1210, 0.2548296
  %v1275 = vadd.f32 %v1211, 0.2548296
  %v1276 = vadd.f32 %v1212, 0.2548296
  %v1277 = vadd.f32 %v1213, 0.2548296
  %v1278 = vadd.f32 %v1214, 0.2548296
  %v1279 = vadd.f32 %v1215, 0.2548296
  %v1280 = vadd.f32 %v1216, 0.2548296
  %v1281 = vadd.f32 %v1217, 0.2548296
  %v1282 = vadd.f32 %v1218, 0.2548296
  %v1283 = vadd.f32 %v1219, 0.2548296
  %v1284 = vadd.f32 %v1220, 0.2548296
  %v1285 = vadd.f32 %v1221, 0.2548296
  %v1286 = vadd.f32 %v1222, 0.2548296
  %v1287 = vadd.f32 %v1223, 0.2548296
  %v1288 = vadd.f32 %v1224, 0.2548296
  %v1289 = vadd.f32 %v1225, 0.2548296
  %v1290 = vadd.f32 %v1226, 0.2548296
  %v1291 = vadd.f32 %v1227, 0.2548296
  %v1292 = vadd.f32 %v1228, 0.2548296
  %v1293 = vadd.f32 %v1229, 0.2548296
  %v1294 = vadd.f32 %v1230, 0.2548296
  %v1295 = vadd.f32 %v1231, 0.2548296
  %v1296 = vadd.f32 %v1232, 0.2548296
  %v1297 = vadd.f32 %v1233, 0.2548296
  %v1298 = vadd.f32 %v1234, 0.2548296
  %v1299 = vadd.f32 %v1235, 0.2548296
  %v1300 = vadd.f32 %v1236, 0.2548296
  %v1301 = vadd.f32 %v1237, 0.2548296
  %v1302 = vadd.f32 %v1238, 0.2548296
  %v1303 = vadd.f32 %v1239, 0.2548296
  %v1304 = vadd.f32 %v1240, 0.2548296
  %v1305 = vadd.f32 %v1241, 0.2548296
  %v1306 = vadd.f32 %v1242, 0.2548296
  %v1307 = vadd.f32 %v1243, 0.2548296
  %v1308 = vmul.f32 %v1244, %v732
  %v1309 = vmul.f32 %v1245, %v733
  %v1310 = vmul.f32 %v1246, %v734
  %v1311 = vmul.f32 %v1247, %v735
  %v1312 = vmul.f32 %v1248, %v736
  %v1313 = vmul.f32 %v1249, %v737
  %v1314 = vmul.f32 %v1250, %v738
  %v1315 = vmul.f32 %v1251, %v739
  %v1316 = vmul.f32 %v1252, %v740
  %v1317 = vmul.f32 %v1253, %v741
  %v1318 = vmul.f32 %v1254, %v742
  %v1319 = vmul.f32 %v1255, %v743
  %v1320 = vmul.f32 %v1256, %v744
  %v1321 = vmul.f32 %v1257, %v745
  %v1322 = vmul.f32 %v1258, %v746
  %v1323 = vmul.f32 %v1259, %v747
  %v1324 = vmul.f32 %v1260, %v748
  %v1325 = vmul.f32 %v1261, %v749
  %v1326 = vmul.f32 %v1262, %v750
  %v1327 = vmul.f32 %v1263, %v751
  %v1328 = vmul.f32 %v1264, %v752
  %v1329 = vmul.f32 %v1265, %v753
  %v1330 = vmul.f32 %v1266, %v754
  %v1331 = vmul.f32 %v1267, %v755
  %v1332 = vmul.f32 %v1268, %v756
  %v1333 = vmul.f32 %v1269, %v757
  %v1334 = vmul.f32 %v1270, %v758
  %v1335 = vmul.f32 %v1271, %v759
  %v1336 = vmul.f32 %v1272, %v760
  %v1337 = vmul.f32 %v1273, %v761
  %v1338 = vmul.f32 %v1274, %v762
  %v1339 = vmul.f32 %v1275, %v763
  %v1340 = vmul.f32 %v1276, %v764
  %v1341 = vmul.f32 %v1277, %v765
  %v1342 = vmul.f32 %v1278, %v766
  %v1343 = vmul.f32 %v1279, %v767
  %v1344 = vmul.f32 %v1280, %v768
  %v1345 = vmul.f32 %v1281, %v769
  %v1346 = vmul.f32 %v1282, %v770
  %v1347 = vmul.f32 %v1283, %v771
  %v1348 = vmul.f32 %v1284, %v772
  %v1349 = vmul.f32 %v1285, %v773
  %v1350 = vmul.f32 %v1286, %v774
  %v1351 = vmul.f32 %v1287, %v775
  %v1352 = vmul.f32 %v1288, %v776
  %v1353 = vmul.f32 %v1289, %v777
  %v1354 = vmul.f32 %v1290, %v778
  %v1355 = vmul.f32 %v1291, %v779
  %v1356 = vmul.f32 %v1292, %v780
  %v1357 = vmul.f32 %v1293, %v781
  %v1358 = vmul.f32 %v1294, %v782
  %v1359 = vmul.f32 %v1295, %v783
  %v1360 = vmul.f32 %v1296, %v784
  %v1361 = vmul.f32 %v1297, %v785
  %v1362 = vmul.f32 %v1298, %v786
  %v1363 = vmul.f32 %v1299, %v787
  %v1364 = vmul.f32 %v1300, %v788
  %v1365 = vmul.f32 %v1301, %v789
  %v1366 = vmul.f32 %v1302, %v790
  %v1367 = vmul.f32 %v1303, %v791
  %v1368 = vmul.f32 %v1304, %v792
  %v1369 = vmul.f32 %v1305, %v793
  %v1370 = vmul.f32 %v1306, %v794
  %v1371 = vmul.f32 %v1307, %v795
  %v1372 = vsub.f32 0.0, %v540
  %v1373 = vsub.f32 0.0, %v541
  %v1374 = vsub.f32 0.0, %v542
  %v1375 = vsub.f32 0.0, %v543
  %v1376 = vsub.f32 0.0, %v544
  %v1377 = vsub.f32 0.0, %v545
  %v1378 = vsub.f32 0.0, %v546
  %v1379 = vsub.f32 0.0, %v547
  %v1380 = vsub.f32 0.0, %v548
  %v1381 = vsub.f32 0.0, %v549
  %v1382 = vsub.f32 0.0, %v550
  %v1383 = vsub.f32 0.0, %v551
  %v1384 = vsub.f32 0.0, %v552
  %v1385 = vsub.f32 0.0, %v553
  %v1386 = vsub.f32 0.0, %v554
  %v1387 = vsub.f32 0.0, %v555
  %v1388 = vsub.f32 0.0, %v556
  %v1389 = vsub.f32 0.0, %v557
  %v1390 = vsub.f32 0.0, %v558
  %v1391 = vsub.f32 0.0, %v559
  %v1392 = vsub.f32 0.0, %v560
  %v1393 = vsub.f32 0.0, %v561
  %v1394 = vsub.f32 0.0, %v562
  %v1395 = vsub.f32 0.0, %v563
  %v1396 = vsub.f32 0.0, %v564
  %v1397 = vsub.f32 0.0, %v565
  %v1398 = vsub.f32 0.0, %v566
  %v1399 = vsub.f32 0.0, %v567
  %v1400 = vsub.f32 0.0, %v568
  %v1401 = vsub.f32 0.0, %v569
  %v1402 = vsub.f32 0.0, %v570
  %v1403 = vsub.f32 0.0, %v571
  %v1404 = vsub.f32 0.0, %v572
  %v1405 = vsub.f32 0.0, %v573
  %v1406 = vsub.f32 0.0, %v574
  %v1407 = vsub.f32 0.0, %v575
  %v1408 = vsub.f32 0.0, %v576
  %v1409 = vsub.f32 0.0, %v577
  %v1410 = vsub.f32 0.0, %v578
  %v1411 = vsub.f32 0.0, %v579
  %v1412 = vsub.f32 0.0, %v580
  %v1413 = vsub.f32 0.0, %v581
  %v1414 = vsub.f32 0.0, %v582
  %v1415 = vsub.f32 0.0, %v583
  %v1416 = vsub.f32 0.0, %v584
  %v1417 = vsub.f32 0.0, %v585
  %v1418 = vsub.f32 0.0, %v586
  %v1419 = vsub.f32 0.0, %v587
  %v1420 = vsub.f32 0.0, %v588
  %v1421 = vsub.f32 0.0, %v589
  %v1422 = vsub.f32 0.0, %v590
  %v1423 = vsub.f32 0.0, %v591
  %v1424 = vsub.f32 0.0, %v592
  %v1425 = vsub.f32 0.0, %v593
  %v1426 = vsub.f32 0.0, %v594
  %v1427 = vsub.f32 0.0, %v595
  %v1428 = vsub.f32 0.0, %v596
  %v1429 = vsub.f32 0.0, %v597
  %v1430 = vsub.f32 0.0, %v598
  %v1431 = vsub.f32 0.0, %v599
  %v1432 = vsub.f32 0.0, %v600
  %v1433 = vsub.f32 0.0, %v601
  %v1434 = vsub.f32 0.0, %v602
  %v1435 = vsub.f32 0.0, %v603
  %v1436 = vmul.f32 %v1372, %v540
  %v1437 = vmul.f32 %v1373, %v541
  %v1438 = vmul.f32 %v1374, %v542
  %v1439 = vmul.f32 %v1375, %v543
  %v1440 = vmul.f32 %v1376, %v544
  %v1441 = vmul.f32 %v1377, %v545
  %v1442 = vmul.f32 %v1378, %v546
  %v1443 = vmul.f32 %v1379, %v547
  %v1444 = vmul.f32 %v1380, %v548
  %v1445 = vmul.f32 %v1381, %v549
  %v1446 = vmul.f32 %v1382, %v550
  %v1447 = vmul.f32 %v1383, %v551
  %v1448 = vmul.f32 %v1384, %v552
  %v1449 = vmul.f32 %v1385, %v553
  %v1450 = vmul.f32 %v1386, %v554
  %v1451 = vmul.f32 %v1387, %v555
  %v1452 = vmul.f32 %v1388, %v556
  %v1453 = vmul.f32 %v1389, %v557
  %v1454 = vmul.f32 %v1390, %v558
  %v1455 = vmul.f32 %v1391, %v559
  %v1456 = vmul.f32 %v1392, %v560
  %v1457 = vmul.f32 %v1393, %v561
  %v1458 = vmul.f32 %v1394, %v562
  %v1459 = vmul.f32 %v1395, %v563
  %v1460 = vmul.f32 %v1396, %v564
  %v1461 = vmul.f32 %v1397, %v565
  %v1462 = vmul.f32 %v1398, %v566
  %v1463 = vmul.f32 %v1399, %v567
  %v1464 = vmul.f32 %v1400, %v568
  %v1465 = vmul.f32 %v1401, %v569
  %v1466 = vmul.f32 %v1402, %v570
  %v1467 = vmul.f32 %v1403, %v571
  %v1468 = vmul.f32 %v1404, %v572
  %v1469 = vmul.f32 %v1405, %v573
  %v1470 = vmul.f32 %v1406, %v574
  %v1471 = vmul.f32 %v1407, %v575
  %v1472 = vmul.f32 %v1408, %v576
  %v1473 = vmul.f32 %v1409, %v577
  %v1474 = vmul.f32 %v1410, %v578
  %v1475 = vmul.f32 %v1411, %v579
  %v1476 = vmul.f32 %v1412, %v580
  %v1477 = vmul.f32 %v1413, %v581
  %v1478 = vmul.f32 %v1414, %v582
  %v1479 = vmul.f32 %v1415, %v583
  %v1480 = vmul.f32 %v1416, %v584
  %v1481 = vmul.f32 %v1417, %v585
  %v1482 = vmul.f32 %v1418, %v586
  %v1483 = vmul.f32 %v1419, %v587
  %v1484 = vmul.f32 %v1420, %v588
  %v1485 = vmul.f32 %v1421, %v589
  %v1486 = vmul.f32 %v1422, %v590
  %v1487 = vmul.f32 %v1423, %v591
  %v1488 = vmul.f32 %v1424, %v592
  %v1489 = vmul.f32 %v1425, %v593
  %v1490 = vmul.f32 %v1426, %v594
  %v1491 = vmul.f32 %v1427, %v595
  %v1492 = vmul.f32 %v1428, %v596
  %v1493 = vmul.f32 %v1429, %v597
  %v1494 = vmul.f32 %v1430, %v598
  %v1495 = vmul.f32 %v1431, %v599
  %v1496 = vmul.f32 %v1432, %v600
  %v1497 = vmul.f32 %v1433, %v601
  %v1498 = vmul.f32 %v1434, %v602
  %v1499 = vmul.f32 %v1435, %v603
  %v1500 = vmul.f32 %v1436, 1.442695
  %v1501 = vpow.pop %v1500
  %v1502 = vmul.f32 %v1437, 1.442695
  %v1503 = vpow.pop %v1502
  %v1504 = vmul.f32 %v1438, 1.442695
  %v1505 = vpow.pop %v1504
  %v1506 = vmul.f32 %v1439, 1.442695
  %v1507 = vpow.pop %v1506
  %v1508 = vmul.f32 %v1440, 1.442695
  %v1509 = vpow.pop %v1508
  %v1510 = vmul.f32 %v1441, 1.442695
  %v1511 = vpow.pop %v1510
  %v1512 = vmul.f32 %v1442, 1.442695
  %v1513 = vpow.pop %v1512
  %v1514 = vmul.f32 %v1443, 1.442695
  %v1515 = vpow.pop %v1514
  %v1516 = vmul.f32 %v1444, 1.442695
  %v1517 = vpow.pop %v1516
  %v1518 = vmul.f32 %v1445, 1.442695
  %v1519 = vpow.pop %v1518
  %v1520 = vmul.f32 %v1446, 1.442695
  %v1521 = vpow.pop %v1520
  %v1522 = vmul.f32 %v1447, 1.442695
  %v1523 = vpow.pop %v1522
  %v1524 = vmul.f32 %v1448, 1.442695
  %v1525 = vpow.pop %v1524
  %v1526 = vmul.f32 %v1449, 1.442695
  %v1527 = vpow.pop %v1526
  %v1528 = vmul.f32 %v1450, 1.442695
  %v1529 = vpow.pop %v1528
  %v1530 = vmul.f32 %v1451, 1.442695
  %v1531 = vpow.pop %v1530
  %v1532 = vmul.f32 %v1452, 1.442695
  %v1533 = vpow.pop %v1532
  %v1534 = vmul.f32 %v1453, 1.442695
  %v1535 = vpow.pop %v1534
  %v1536 = vmul.f32 %v1454, 1.442695
  %v1537 = vpow.pop %v1536
  %v1538 = vmul.f32 %v1455, 1.442695
  %v1539 = vpow.pop %v1538
  %v1540 = vmul.f32 %v1456, 1.442695
  %v1541 = vpow.pop %v1540
  %v1542 = vmul.f32 %v1457, 1.442695
  %v1543 = vpow.pop %v1542
  %v1544 = vmul.f32 %v1458, 1.442695
  %v1545 = vpow.pop %v1544
  %v1546 = vmul.f32 %v1459, 1.442695
  %v1547 = vpow.pop %v1546
  %v1548 = vmul.f32 %v1460, 1.442695
  %v1549 = vpow.pop %v1548
  %v1550 = vmul.f32 %v1461, 1.442695
  %v1551 = vpow.pop %v1550
  %v1552 = vmul.f32 %v1462, 1.442695
  %v1553 = vpow.pop %v1552
  %v1554 = vmul.f32 %v1463, 1.442695
  %v1555 = vpow.pop %v1554
  %v1556 = vmul.f32 %v1464, 1.442695
  %v1557 = vpow.pop %v1556
  %v1558 = vmul.f32 %v1465, 1.442695
  %v1559 = vpow.pop %v1558
  %v1560 = vmul.f32 %v1466, 1.442695
  %v1561 = vpow.pop %v1560
  %v1562 = vmul.f32 %v1467, 1.442695
  %v1563 = vpow.pop %v1562
  %v1564 = vmul.f32 %v1468, 1.442695
  %v1565 = vpow.pop %v1564
  %v1566 = vmul.f32 %v1469, 1.442695
  %v1567 = vpow.pop %v1566
  %v1568 = vmul.f32 %v1470, 1.442695
  %v1569 = vpow.pop %v1568
  %v1570 = vmul.f32 %v1471, 1.442695
  %v1571 = vpow.pop %v1570
  %v1572 = vmul.f32 %v1472, 1.442695
  %v1573 = vpow.pop %v1572
  %v1574 = vmul.f32 %v1473, 1.442695
  %v1575 = vpow.pop %v1574
  %v1576 = vmul.f32 %v1474, 1.442695
  %v1577 = vpow.pop %v1576
  %v1578 = vmul.f32 %v1475, 1.442695
  %v1579 = vpow.pop %v1578
  %v1580 = vmul.f32 %v1476, 1.442695
  %v1581 = vpow.pop %v1580
  %v1582 = vmul.f32 %v1477, 1.442695
  %v1583 = vpow.pop %v1582
  %v1584 = vmul.f32 %v1478, 1.442695
  %v1585 = vpow.pop %v1584
  %v1586 = vmul.f32 %v1479, 1.442695
  %v1587 = vpow.pop %v1586
  %v1588 = vmul.f32 %v1480, 1.442695
  %v1589 = vpow.pop %v1588
  %v1590 = vmul.f32 %v1481, 1.442695
  %v1591 = vpow.pop %v1590
  %v1592 = vmul.f32 %v1482, 1.442695
  %v1593 = vpow.pop %v1592
  %v1594 = vmul.f32 %v1483, 1.442695
  %v1595 = vpow.pop %v1594
  %v1596 = vmul.f32 %v1484, 1.442695
  %v1597 = vpow.pop %v1596
  %v1598 = vmul.f32 %v1485, 1.442695
  %v1599 = vpow.pop %v1598
  %v1600 = vmul.f32 %v1486, 1.442695
  %v1601 = vpow.pop %v1600
  %v1602 = vmul.f32 %v1487, 1.442695
  %v1603 = vpow.pop %v1602
  %v1604 = vmul.f32 %v1488, 1.442695
  %v1605 = vpow.pop %v1604
  %v1606 = vmul.f32 %v1489, 1.442695
  %v1607 = vpow.pop %v1606
  %v1608 = vmul.f32 %v1490, 1.442695
  %v1609 = vpow.pop %v1608
  %v1610 = vmul.f32 %v1491, 1.442695
  %v1611 = vpow.pop %v1610
  %v1612 = vmul.f32 %v1492, 1.442695
  %v1613 = vpow.pop %v1612
  %v1614 = vmul.f32 %v1493, 1.442695
  %v1615 = vpow.pop %v1614
  %v1616 = vmul.f32 %v1494, 1.442695
  %v1617 = vpow.pop %v1616
  %v1618 = vmul.f32 %v1495, 1.442695
  %v1619 = vpow.pop %v1618
  %v1620 = vmul.f32 %v1496, 1.442695
  %v1621 = vpow.pop %v1620
  %v1622 = vmul.f32 %v1497, 1.442695
  %v1623 = vpow.pop %v1622
  %v1624 = vmul.f32 %v1498, 1.442695
  %v1625 = vpow.pop %v1624
  %v1626 = vmul.f32 %v1499, 1.442695
  %v1627 = vpow.pop %v1626
  %v1628 = vmul.f32 %v1308, %v1501
  %v1629 = vmul.f32 %v1309, %v1503
  %v1630 = vmul.f32 %v1310, %v1505
  %v1631 = vmul.f32 %v1311, %v1507
  %v1632 = vmul.f32 %v1312, %v1509
  %v1633 = vmul.f32 %v1313, %v1511
  %v1634 = vmul.f32 %v1314, %v1513
  %v1635 = vmul.f32 %v1315, %v1515
  %v1636 = vmul.f32 %v1316, %v1517
  %v1637 = vmul.f32 %v1317, %v1519
  %v1638 = vmul.f32 %v1318, %v1521
  %v1639 = vmul.f32 %v1319, %v1523
  %v1640 = vmul.f32 %v1320, %v1525
  %v1641 = vmul.f32 %v1321, %v1527
  %v1642 = vmul.f32 %v1322, %v1529
  %v1643 = vmul.f32 %v1323, %v1531
  %v1644 = vmul.f32 %v1324, %v1533
  %v1645 = vmul.f32 %v1325, %v1535
  %v1646 = vmul.f32 %v1326, %v1537
  %v1647 = vmul.f32 %v1327, %v1539
  %v1648 = vmul.f32 %v1328, %v1541
  %v1649 = vmul.f32 %v1329, %v1543
  %v1650 = vmul.f32 %v1330, %v1545
  %v1651 = vmul.f32 %v1331, %v1547
  %v1652 = vmul.f32 %v1332, %v1549
  %v1653 = vmul.f32 %v1333, %v1551
  %v1654 = vmul.f32 %v1334, %v1553
  %v1655 = vmul.f32 %v1335, %v1555
  %v1656 = vmul.f32 %v1336, %v1557
  %v1657 = vmul.f32 %v1337, %v1559
  %v1658 = vmul.f32 %v1338, %v1561
  %v1659 = vmul.f32 %v1339, %v1563
  %v1660 = vmul.f32 %v1340, %v1565
  %v1661 = vmul.f32 %v1341, %v1567
  %v1662 = vmul.f32 %v1342, %v1569
  %v1663 = vmul.f32 %v1343, %v1571
  %v1664 = vmul.f32 %v1344, %v1573
  %v1665 = vmul.f32 %v1345, %v1575
  %v1666 = vmul.f32 %v1346, %v1577
  %v1667 = vmul.f32 %v1347, %v1579
  %v1668 = vmul.f32 %v1348, %v1581
  %v1669 = vmul.f32 %v1349, %v1583
  %v1670 = vmul.f32 %v1350, %v1585
  %v1671 = vmul.f32 %v1351, %v1587
  %v1672 = vmul.f32 %v1352, %v1589
  %v1673 = vmul.f32 %v1353, %v1591
  %v1674 = vmul.f32 %v1354, %v1593
  %v1675 = vmul.f32 %v1355, %v1595
  %v1676 = vmul.f32 %v1356, %v1597
  %v1677 = vmul.f32 %v1357, %v1599
  %v1678 = vmul.f32 %v1358, %v1601
  %v1679 = vmul.f32 %v1359, %v1603
  %v1680 = vmul.f32 %v1360, %v1605
  %v1681 = vmul.f32 %v1361, %v1607
  %v1682 = vmul.f32 %v1362, %v1609
  %v1683 = vmul.f32 %v1363, %v1611
  %v1684 = vmul.f32 %v1364, %v1613
  %v1685 = vmul.f32 %v1365, %v1615
  %v1686 = vmul.f32 %v1366, %v1617
  %v1687 = vmul.f32 %v1367, %v1619
  %v1688 = vmul.f32 %v1368, %v1621
  %v1689 = vmul.f32 %v1369, %v1623
  %v1690 = vmul.f32 %v1370, %v1625
  %v1691 = vmul.f32 %v1371, %v1627
  %v1692 = vsub.f32 1.0, %v1628
  %v1693 = vsub.f32 1.0, %v1629
  %v1694 = vsub.f32 1.0, %v1630
  %v1695 = vsub.f32 1.0, %v1631
  %v1696 = vsub.f32 1.0, %v1632
  %v1697 = vsub.f32 1.0, %v1633
  %v1698 = vsub.f32 1.0, %v1634
  %v1699 = vsub.f32 1.0, %v1635
  %v1700 = vsub.f32 1.0, %v1636
  %v1701 = vsub.f32 1.0, %v1637
  %v1702 = vsub.f32 1.0, %v1638
  %v1703 = vsub.f32 1.0, %v1639
  %v1704 = vsub.f32 1.0, %v1640
  %v1705 = vsub.f32 1.0, %v1641
  %v1706 = vsub.f32 1.0, %v1642
  %v1707 = vsub.f32 1.0, %v1643
  %v1708 = vsub.f32 1.0, %v1644
  %v1709 = vsub.f32 1.0, %v1645
  %v1710 = vsub.f32 1.0, %v1646
  %v1711 = vsub.f32 1.0, %v1647
  %v1712 = vsub.f32 1.0, %v1648
  %v1713 = vsub.f32 1.0, %v1649
  %v1714 = vsub.f32 1.0, %v1650
  %v1715 = vsub.f32 1.0, %v1651
  %v1716 = vsub.f32 1.0, %v1652
  %v1717 = vsub.f32 1.0, %v1653
  %v1718 = vsub.f32 1.0, %v1654
  %v1719 = vsub.f32 1.0, %v1655
  %v1720 = vsub.f32 1.0, %v1656
  %v1721 = vsub.f32 1.0, %v1657
  %v1722 = vsub.f32 1.0, %v1658
  %v1723 = vsub.f32 1.0, %v1659
  %v1724 = vsub.f32 1.0, %v1660
  %v1725 = vsub.f32 1.0, %v1661
  %v1726 = vsub.f32 1.0, %v1662
  %v1727 = vsub.f32 1.0, %v1663
  %v1728 = vsub.f32 1.0, %v1664
  %v1729 = vsub.f32 1.0, %v1665
  %v1730 = vsub.f32 1.0, %v1666
  %v1731 = vsub.f32 1.0, %v1667
  %v1732 = vsub.f32 1.0, %v1668
  %v1733 = vsub.f32 1.0, %v1669
  %v1734 = vsub.f32 1.0, %v1670
  %v1735 = vsub.f32 1.0, %v1671
  %v1736 = vsub.f32 1.0, %v1672
  %v1737 = vsub.f32 1.0, %v1673
  %v1738 = vsub.f32 1.0, %v1674
  %v1739 = vsub.f32 1.0, %v1675
  %v1740 = vsub.f32 1.0, %v1676
  %v1741 = vsub.f32 1.0, %v1677
  %v1742 = vsub.f32 1.0, %v1678
  %v1743 = vsub.f32 1.0, %v1679
  %v1744 = vsub.f32 1.0, %v1680
  %v1745 = vsub.f32 1.0, %v1681
  %v1746 = vsub.f32 1.0, %v1682
  %v1747 = vsub.f32 1.0, %v1683
  %v1748 = vsub.f32 1.0, %v1684
  %v1749 = vsub.f32 1.0, %v1685
  %v1750 = vsub.f32 1.0, %v1686
  %v1751 = vsub.f32 1.0, %v1687
  %v1752 = vsub.f32 1.0, %v1688
  %v1753 = vsub.f32 1.0, %v1689
  %v1754 = vsub.f32 1.0, %v1690
  %v1755 = vsub.f32 1.0, %v1691
  %v1756 = vmul.f32 %v476, %v1692
  %v1757 = vmul.f32 %v477, %v1693
  %v1758 = vmul.f32 %v478, %v1694
  %v1759 = vmul.f32 %v479, %v1695
  %v1760 = vmul.f32 %v480, %v1696
  %v1761 = vmul.f32 %v481, %v1697
  %v1762 = vmul.f32 %v482, %v1698
  %v1763 = vmul.f32 %v483, %v1699
  %v1764 = vmul.f32 %v484, %v1700
  %v1765 = vmul.f32 %v485, %v1701
  %v1766 = vmul.f32 %v486, %v1702
  %v1767 = vmul.f32 %v487, %v1703
  %v1768 = vmul.f32 %v488, %v1704
  %v1769 = vmul.f32 %v489, %v1705
  %v1770 = vmul.f32 %v490, %v1706
  %v1771 = vmul.f32 %v491, %v1707
  %v1772 = vmul.f32 %v492, %v1708
  %v1773 = vmul.f32 %v493, %v1709
  %v1774 = vmul.f32 %v494, %v1710
  %v1775 = vmul.f32 %v495, %v1711
  %v1776 = vmul.f32 %v496, %v1712
  %v1777 = vmul.f32 %v497, %v1713
  %v1778 = vmul.f32 %v498, %v1714
  %v1779 = vmul.f32 %v499, %v1715
  %v1780 = vmul.f32 %v500, %v1716
  %v1781 = vmul.f32 %v501, %v1717
  %v1782 = vmul.f32 %v502, %v1718
  %v1783 = vmul.f32 %v503, %v1719
  %v1784 = vmul.f32 %v504, %v1720
  %v1785 = vmul.f32 %v505, %v1721
  %v1786 = vmul.f32 %v506, %v1722
  %v1787 = vmul.f32 %v507, %v1723
  %v1788 = vmul.f32 %v508, %v1724
  %v1789 = vmul.f32 %v509, %v1725
  %v1790 = vmul.f32 %v510, %v1726
  %v1791 = vmul.f32 %v511, %v1727
  %v1792 = vmul.f32 %v512, %v1728
  %v1793 = vmul.f32 %v513, %v1729
  %v1794 = vmul.f32 %v514, %v1730
  %v1795 = vmul.f32 %v515, %v1731
  %v1796 = vmul.f32 %v516, %v1732
  %v1797 = vmul.f32 %v517, %v1733
  %v1798 = vmul.f32 %v518, %v1734
  %v1799 = vmul.f32 %v519, %v1735
  %v1800 = vmul.f32 %v520, %v1736
  %v1801 = vmul.f32 %v521, %v1737
  %v1802 = vmul.f32 %v522, %v1738
  %v1803 = vmul.f32 %v523, %v1739
  %v1804 = vmul.f32 %v524, %v1740
  %v1805 = vmul.f32 %v525, %v1741
  %v1806 = vmul.f32 %v526, %v1742
  %v1807 = vmul.f32 %v527, %v1743
  %v1808 = vmul.f32 %v528, %v1744
  %v1809 = vmul.f32 %v529, %v1745
  %v1810 = vmul.f32 %v530, %v1746
  %v1811 = vmul.f32 %v531, %v1747
  %v1812 = vmul.f32 %v532, %v1748
  %v1813 = vmul.f32 %v533, %v1749
  %v1814 = vmul.f32 %v534, %v1750
  %v1815 = vmul.f32 %v535, %v1751
  %v1816 = vmul.f32 %v536, %v1752
  %v1817 = vmul.f32 %v537, %v1753
  %v1818 = vmul.f32 %v538, %v1754
  %v1819 = vmul.f32 %v539, %v1755
  %v1820 = vadd.f32 %v1756, 1.0
  %v1821 = vadd.f32 %v1757, 1.0
  %v1822 = vadd.f32 %v1758, 1.0
  %v1823 = vadd.f32 %v1759, 1.0
  %v1824 = vadd.f32 %v1760, 1.0
  %v1825 = vadd.f32 %v1761, 1.0
  %v1826 = vadd.f32 %v1762, 1.0
  %v1827 = vadd.f32 %v1763, 1.0
  %v1828 = vadd.f32 %v1764, 1.0
  %v1829 = vadd.f32 %v1765, 1.0
  %v1830 = vadd.f32 %v1766, 1.0
  %v1831 = vadd.f32 %v1767, 1.0
  %v1832 = vadd.f32 %v1768, 1.0
  %v1833 = vadd.f32 %v1769, 1.0
  %v1834 = vadd.f32 %v1770, 1.0
  %v1835 = vadd.f32 %v1771, 1.0
  %v1836 = vadd.f32 %v1772, 1.0
  %v1837 = vadd.f32 %v1773, 1.0
  %v1838 = vadd.f32 %v1774, 1.0
  %v1839 = vadd.f32 %v1775, 1.0
  %v1840 = vadd.f32 %v1776, 1.0
  %v1841 = vadd.f32 %v1777, 1.0
  %v1842 = vadd.f32 %v1778, 1.0
  %v1843 = vadd.f32 %v1779, 1.0
  %v1844 = vadd.f32 %v1780, 1.0
  %v1845 = vadd.f32 %v1781, 1.0
  %v1846 = vadd.f32 %v1782, 1.0
  %v1847 = vadd.f32 %v1783, 1.0
  %v1848 = vadd.f32 %v1784, 1.0
  %v1849 = vadd.f32 %v1785, 1.0
  %v1850 = vadd.f32 %v1786, 1.0
  %v1851 = vadd.f32 %v1787, 1.0
  %v1852 = vadd.f32 %v1788, 1.0
  %v1853 = vadd.f32 %v1789, 1.0
  %v1854 = vadd.f32 %v1790, 1.0
  %v1855 = vadd.f32 %v1791, 1.0
  %v1856 = vadd.f32 %v1792, 1.0
  %v1857 = vadd.f32 %v1793, 1.0
  %v1858 = vadd.f32 %v1794, 1.0
  %v1859 = vadd.f32 %v1795, 1.0
  %v1860 = vadd.f32 %v1796, 1.0
  %v1861 = vadd.f32 %v1797, 1.0
  %v1862 = vadd.f32 %v1798, 1.0
  %v1863 = vadd.f32 %v1799, 1.0
  %v1864 = vadd.f32 %v1800, 1.0
  %v1865 = vadd.f32 %v1801, 1.0
  %v1866 = vadd.f32 %v1802, 1.0
  %v1867 = vadd.f32 %v1803, 1.0
  %v1868 = vadd.f32 %v1804, 1.0
  %v1869 = vadd.f32 %v1805, 1.0
  %v1870 = vadd.f32 %v1806, 1.0
  %v1871 = vadd.f32 %v1807, 1.0
  %v1872 = vadd.f32 %v1808, 1.0
  %v1873 = vadd.f32 %v1809, 1.0
  %v1874 = vadd.f32 %v1810, 1.0
  %v1875 = vadd.f32 %v1811, 1.0
  %v1876 = vadd.f32 %v1812, 1.0
  %v1877 = vadd.f32 %v1813, 1.0
  %v1878 = vadd.f32 %v1814, 1.0
  %v1879 = vadd.f32 %v1815, 1.0
  %v1880 = vadd.f32 %v1816, 1.0
  %v1881 = vadd.f32 %v1817, 1.0
  %v1882 = vadd.f32 %v1818, 1.0
  %v1883 = vadd.f32 %v1819, 1.0
  %v1884 = vmul.f32 %v284, %v1820
  %v1885 = vmul.f32 %v285, %v1821
  %v1886 = vmul.f32 %v286, %v1822
  %v1887 = vmul.f32 %v287, %v1823
  %v1888 = vmul.f32 %v288, %v1824
  %v1889 = vmul.f32 %v289, %v1825
  %v1890 = vmul.f32 %v290, %v1826
  %v1891 = vmul.f32 %v291, %v1827
  %v1892 = vmul.f32 %v292, %v1828
  %v1893 = vmul.f32 %v293, %v1829
  %v1894 = vmul.f32 %v294, %v1830
  %v1895 = vmul.f32 %v295, %v1831
  %v1896 = vmul.f32 %v296, %v1832
  %v1897 = vmul.f32 %v297, %v1833
  %v1898 = vmul.f32 %v298, %v1834
  %v1899 = vmul.f32 %v299, %v1835
  %v1900 = vmul.f32 %v300, %v1836
  %v1901 = vmul.f32 %v301, %v1837
  %v1902 = vmul.f32 %v302, %v1838
  %v1903 = vmul.f32 %v303, %v1839
  %v1904 = vmul.f32 %v304, %v1840
  %v1905 = vmul.f32 %v305, %v1841
  %v1906 = vmul.f32 %v306, %v1842
  %v1907 = vmul.f32 %v307, %v1843
  %v1908 = vmul.f32 %v308, %v1844
  %v1909 = vmul.f32 %v309, %v1845
  %v1910 = vmul.f32 %v310, %v1846
  %v1911 = vmul.f32 %v311, %v1847
  %v1912 = vmul.f32 %v312, %v1848
  %v1913 = vmul.f32 %v313, %v1849
  %v1914 = vmul.f32 %v314, %v1850
  %v1915 = vmul.f32 %v315, %v1851
  %v1916 = vmul.f32 %v316, %v1852
  %v1917 = vmul.f32 %v317, %v1853
  %v1918 = vmul.f32 %v318, %v1854
  %v1919 = vmul.f32 %v319, %v1855
  %v1920 = vmul.f32 %v320, %v1856
  %v1921 = vmul.f32 %v321, %v1857
  %v1922 = vmul.f32 %v322, %v1858
  %v1923 = vmul.f32 %v323, %v1859
  %v1924 = vmul.f32 %v324, %v1860
  %v1925 = vmul.f32 %v325, %v1861
  %v1926 = vmul.f32 %v326, %v1862
  %v1927 = vmul.f32 %v327, %v1863
  %v1928 = vmul.f32 %v328, %v1864
  %v1929 = vmul.f32 %v329, %v1865
  %v1930 = vmul.f32 %v330, %v1866
  %v1931 = vmul.f32 %v331, %v1867
  %v1932 = vmul.f32 %v332, %v1868
  %v1933 = vmul.f32 %v333, %v1869
  %v1934 = vmul.f32 %v334, %v1870
  %v1935 = vmul.f32 %v335, %v1871
  %v1936 = vmul.f32 %v336, %v1872
  %v1937 = vmul.f32 %v337, %v1873
  %v1938 = vmul.f32 %v338, %v1874
  %v1939 = vmul.f32 %v339, %v1875
  %v1940 = vmul.f32 %v340, %v1876
  %v1941 = vmul.f32 %v341, %v1877
  %v1942 = vmul.f32 %v342, %v1878
  %v1943 = vmul.f32 %v343, %v1879
  %v1944 = vmul.f32 %v344, %v1880
  %v1945 = vmul.f32 %v345, %v1881
  %v1946 = vmul.f32 %v346, %v1882
  %v1947 = vmul.f32 %v347, %v1883
  %v1948 = vpack.c.bf16 %v1885, %v1884
  %v1949 = vpack.c.bf16 %v1887, %v1886
  %v1950 = vpack.c.bf16 %v1889, %v1888
  %v1951 = vpack.c.bf16 %v1891, %v1890
  %v1952 = vpack.c.bf16 %v1893, %v1892
  %v1953 = vpack.c.bf16 %v1895, %v1894
  %v1954 = vpack.c.bf16 %v1897, %v1896
  %v1955 = vpack.c.bf16 %v1899, %v1898
  %v1956 = vpack.c.bf16 %v1901, %v1900
  %v1957 = vpack.c.bf16 %v1903, %v1902
  %v1958 = vpack.c.bf16 %v1905, %v1904
  %v1959 = vpack.c.bf16 %v1907, %v1906
  %v1960 = vpack.c.bf16 %v1909, %v1908
  %v1961 = vpack.c.bf16 %v1911, %v1910
  %v1962 = vpack.c.bf16 %v1913, %v1912
  %v1963 = vpack.c.bf16 %v1915, %v1914
  %v1964 = vpack.c.bf16 %v1917, %v1916
  %v1965 = vpack.c.bf16 %v1919, %v1918
  %v1966 = vpack.c.bf16 %v1921, %v1920
  %v1967 = vpack.c.bf16 %v1923, %v1922
  %v1968 = vpack.c.bf16 %v1925, %v1924
  %v1969 = vpack.c.bf16 %v1927, %v1926
  %v1970 = vpack.c.bf16 %v1929, %v1928
  %v1971 = vpack.c.bf16 %v1931, %v1930
  %v1972 = vpack.c.bf16 %v1933, %v1932
  %v1973 = vpack.c.bf16 %v1935, %v1934
  %v1974 = vpack.c.bf16 %v1937, %v1936
  %v1975 = vpack.c.bf16 %v1939, %v1938
  %v1976 = vpack.c.bf16 %v1941, %v1940
  %v1977 = vpack.c.bf16 %v1943, %v1942
  %v1978 = vpack.c.bf16 %v1945, %v1944
  %v1979 = vpack.c.bf16 %v1947, %v1946
  %v2012 = vunpack.c.l.b16 %v1948
  %v2013 = vunpack.c.h.b16 %v1948
  %v2014 = vunpack.c.l.b16 %v1949
  %v2015 = vunpack.c.h.b16 %v1949
  %v2016 = vunpack.c.l.b16 %v1950
  %v2017 = vunpack.c.h.b16 %v1950
  %v2018 = vunpack.c.l.b16 %v1951
  %v2019 = vunpack.c.h.b16 %v1951
  %v2020 = vunpack.c.l.b16 %v1952
  %v2021 = vunpack.c.h.b16 %v1952
  %v2022 = vunpack.c.l.b16 %v1953
  %v2023 = vunpack.c.h.b16 %v1953
  %v2024 = vunpack.c.l.b16 %v1954
  %v2025 = vunpack.c.h.b16 %v1954
  %v2026 = vunpack.c.l.b16 %v1955
  %v2027 = vunpack.c.h.b16 %v1955
  %v2028 = vunpack.c.l.b16 %v1956
  %v2029 = vunpack.c.h.b16 %v1956
  %v2030 = vunpack.c.l.b16 %v1957
  %v2031 = vunpack.c.h.b16 %v1957
  %v2032 = vunpack.c.l.b16 %v1958
  %v2033 = vunpack.c.h.b16 %v1958
  %v2034 = vunpack.c.l.b16 %v1959
  %v2035 = vunpack.c.h.b16 %v1959
  %v2036 = vunpack.c.l.b16 %v1960
  %v2037 = vunpack.c.h.b16 %v1960
  %v2038 = vunpack.c.l.b16 %v1961
  %v2039 = vunpack.c.h.b16 %v1961
  %v2040 = vunpack.c.l.b16 %v1962
  %v2041 = vunpack.c.h.b16 %v1962
  %v2042 = vunpack.c.l.b16 %v1963
  %v2043 = vunpack.c.h.b16 %v1963
  %v2044 = vunpack.c.l.b16 %v1964
  %v2045 = vunpack.c.h.b16 %v1964
  %v2046 = vunpack.c.l.b16 %v1965
  %v2047 = vunpack.c.h.b16 %v1965
  %v2048 = vunpack.c.l.b16 %v1966
  %v2049 = vunpack.c.h.b16 %v1966
  %v2050 = vunpack.c.l.b16 %v1967
  %v2051 = vunpack.c.h.b16 %v1967
  %v2052 = vunpack.c.l.b16 %v1968
  %v2053 = vunpack.c.h.b16 %v1968
  %v2054 = vunpack.c.l.b16 %v1969
  %v2055 = vunpack.c.h.b16 %v1969
  %v2056 = vunpack.c.l.b16 %v1970
  %v2057 = vunpack.c.h.b16 %v1970
  %v2058 = vunpack.c.l.b16 %v1971
  %v2059 = vunpack.c.h.b16 %v1971
  %v2060 = vunpack.c.l.b16 %v1972
  %v2061 = vunpack.c.h.b16 %v1972
  %v2062 = vunpack.c.l.b16 %v1973
  %v2063 = vunpack.c.h.b16 %v1973
  %v2064 = vunpack.c.l.b16 %v1974
  %v2065 = vunpack.c.h.b16 %v1974
  %v2066 = vunpack.c.l.b16 %v1975
  %v2067 = vunpack.c.h.b16 %v1975
  %v2068 = vunpack.c.l.b16 %v1976
  %v2069 = vunpack.c.h.b16 %v1976
  %v2070 = vunpack.c.l.b16 %v1977
  %v2071 = vunpack.c.h.b16 %v1977
  %v2072 = vunpack.c.l.b16 %v1978
  %v2073 = vunpack.c.h.b16 %v1978
  %v2074 = vunpack.c.l.b16 %v1979
  %v2075 = vunpack.c.h.b16 %v1979
  %v2076 = vpack.c.b16 %v2012, %v2012
  %v2077 = vpack.c.b16 %v2013, %v2013
  %v2078 = vpack.c.b16 %v2014, %v2014
  %v2079 = vpack.c.b16 %v2015, %v2015
  %v2080 = vpack.c.b16 %v2016, %v2016
  %v2081 = vpack.c.b16 %v2017, %v2017
  %v2082 = vpack.c.b16 %v2018, %v2018
  %v2083 = vpack.c.b16 %v2019, %v2019
  %v2084 = vpack.c.b16 %v2020, %v2020
  %v2085 = vpack.c.b16 %v2021, %v2021
  %v2086 = vpack.c.b16 %v2022, %v2022
  %v2087 = vpack.c.b16 %v2023, %v2023
  %v2088 = vpack.c.b16 %v2024, %v2024
  %v2089 = vpack.c.b16 %v2025, %v2025
  %v2090 = vpack.c.b16 %v2026, %v2026
  %v2091 = vpack.c.b16 %v2027, %v2027
  %v2092 = vpack.c.b16 %v2028, %v2028
  %v2093 = vpack.c.b16 %v2029, %v2029
  %v2094 = vpack.c.b16 %v2030, %v2030
  %v2095 = vpack.c.b16 %v2031, %v2031
  %v2096 = vpack.c.b16 %v2032, %v2032
  %v2097 = vpack.c.b16 %v2033, %v2033
  %v2098 = vpack.c.b16 %v2034, %v2034
  %v2099 = vpack.c.b16 %v2035, %v2035
  %v2100 = vpack.c.b16 %v2036, %v2036
  %v2101 = vpack.c.b16 %v2037, %v2037
  %v2102 = vpack.c.b16 %v2038, %v2038
  %v2103 = vpack.c.b16 %v2039, %v2039
  %v2104 = vpack.c.b16 %v2040, %v2040
  %v2105 = vpack.c.b16 %v2041, %v2041
  %v2106 = vpack.c.b16 %v2042, %v2042
  %v2107 = vpack.c.b16 %v2043, %v2043
  %v2108 = vpack.c.b16 %v2044, %v2044
  %v2109 = vpack.c.b16 %v2045, %v2045
  %v2110 = vpack.c.b16 %v2046, %v2046
  %v2111 = vpack.c.b16 %v2047, %v2047
  %v2112 = vpack.c.b16 %v2048, %v2048
  %v2113 = vpack.c.b16 %v2049, %v2049
  %v2114 = vpack.c.b16 %v2050, %v2050
  %v2115 = vpack.c.b16 %v2051, %v2051
  %v2116 = vpack.c.b16 %v2052, %v2052
  %v2117 = vpack.c.b16 %v2053, %v2053
  %v2118 = vpack.c.b16 %v2054, %v2054
  %v2119 = vpack.c.b16 %v2055, %v2055
  %v2120 = vpack.c.b16 %v2056, %v2056
  %v2121 = vpack.c.b16 %v2057, %v2057
  %v2122 = vpack.c.b16 %v2058, %v2058
  %v2123 = vpack.c.b16 %v2059, %v2059
  %v2124 = vpack.c.b16 %v2060, %v2060
  %v2125 = vpack.c.b16 %v2061, %v2061
  %v2126 = vpack.c.b16 %v2062, %v2062
  %v2127 = vpack.c.b16 %v2063, %v2063
  %v2128 = vpack.c.b16 %v2064, %v2064
  %v2129 = vpack.c.b16 %v2065, %v2065
  %v2130 = vpack.c.b16 %v2066, %v2066
  %v2131 = vpack.c.b16 %v2067, %v2067
  %v2132 = vpack.c.b16 %v2068, %v2068
  %v2133 = vpack.c.b16 %v2069, %v2069
  %v2134 = vpack.c.b16 %v2070, %v2070
  %v2135 = vpack.c.b16 %v2071, %v2071
  %v2136 = vpack.c.b16 %v2072, %v2072
  %v2137 = vpack.c.b16 %v2073, %v2073
  %v2138 = vpack.c.b16 %v2074, %v2074
  %v2139 = vpack.c.b16 %v2075, %v2075
  %2204 = vst [vmem:[%s3] sm:$0xf] %v2076
  %2205 = vst [vmem:[%s3 + $0x4] sm:$0xf] %v2077
  %2206 = vst [vmem:[%s3 + $0x8] sm:$0xf] %v2078
  %2207 = vst [vmem:[%s3 + $0xc] sm:$0xf] %v2079
  %2208 = vst [vmem:[%s3 + $0x10] sm:$0xf] %v2080
  %2209 = vst [vmem:[%s3 + $0x14] sm:$0xf] %v2081
  %2210 = vst [vmem:[%s3 + $0x18] sm:$0xf] %v2082
  %2211 = vst [vmem:[%s3 + $0x1c] sm:$0xf] %v2083
  %2212 = vst [vmem:[%s3 + $0x20] sm:$0xf] %v2084
  %2213 = vst [vmem:[%s3 + $0x24] sm:$0xf] %v2085
  %2214 = vst [vmem:[%s3 + $0x28] sm:$0xf] %v2086
  %2215 = vst [vmem:[%s3 + $0x2c] sm:$0xf] %v2087
  %2216 = vst [vmem:[%s3 + $0x30] sm:$0xf] %v2088
  %2217 = vst [vmem:[%s3 + $0x34] sm:$0xf] %v2089
  %2218 = vst [vmem:[%s3 + $0x38] sm:$0xf] %v2090
  %2219 = vst [vmem:[%s3 + $0x3c] sm:$0xf] %v2091
  %2220 = vst [vmem:[%s3 + $0x40] sm:$0xf] %v2092
  %2221 = vst [vmem:[%s3 + $0x44] sm:$0xf] %v2093
  %2222 = vst [vmem:[%s3 + $0x48] sm:$0xf] %v2094
  %2223 = vst [vmem:[%s3 + $0x4c] sm:$0xf] %v2095
  %2224 = vst [vmem:[%s3 + $0x50] sm:$0xf] %v2096
  %2225 = vst [vmem:[%s3 + $0x54] sm:$0xf] %v2097
  %2226 = vst [vmem:[%s3 + $0x58] sm:$0xf] %v2098
  %2227 = vst [vmem:[%s3 + $0x5c] sm:$0xf] %v2099
  %2228 = vst [vmem:[%s3 + $0x60] sm:$0xf] %v2100
  %2229 = vst [vmem:[%s3 + $0x64] sm:$0xf] %v2101
  %2230 = vst [vmem:[%s3 + $0x68] sm:$0xf] %v2102
  %2231 = vst [vmem:[%s3 + $0x6c] sm:$0xf] %v2103
  %2232 = vst [vmem:[%s3 + $0x70] sm:$0xf] %v2104
  %2233 = vst [vmem:[%s3 + $0x74] sm:$0xf] %v2105
  %2234 = vst [vmem:[%s3 + $0x78] sm:$0xf] %v2106
  %2235 = vst [vmem:[%s3 + $0x7c] sm:$0xf] %v2107
  %2236 = vst [vmem:[%s3 + $0x80] sm:$0xf] %v2108
  %2237 = vst [vmem:[%s3 + $0x84] sm:$0xf] %v2109
  %2238 = vst [vmem:[%s3 + $0x88] sm:$0xf] %v2110
  %2239 = vst [vmem:[%s3 + $0x8c] sm:$0xf] %v2111
  %2240 = vst [vmem:[%s3 + $0x90] sm:$0xf] %v2112
  %2241 = vst [vmem:[%s3 + $0x94] sm:$0xf] %v2113
  %2242 = vst [vmem:[%s3 + $0x98] sm:$0xf] %v2114
  %2243 = vst [vmem:[%s3 + $0x9c] sm:$0xf] %v2115
  %2244 = vst [vmem:[%s3 + $0xa0] sm:$0xf] %v2116
  %2245 = vst [vmem:[%s3 + $0xa4] sm:$0xf] %v2117
  %2246 = vst [vmem:[%s3 + $0xa8] sm:$0xf] %v2118
  %2247 = vst [vmem:[%s3 + $0xac] sm:$0xf] %v2119
  %2248 = vst [vmem:[%s3 + $0xb0] sm:$0xf] %v2120
  %2249 = vst [vmem:[%s3 + $0xb4] sm:$0xf] %v2121
  %2250 = vst [vmem:[%s3 + $0xb8] sm:$0xf] %v2122
  %2251 = vst [vmem:[%s3 + $0xbc] sm:$0xf] %v2123
  %2252 = vst [vmem:[%s3 + $0xc0] sm:$0xf] %v2124
  %2253 = vst [vmem:[%s3 + $0xc4] sm:$0xf] %v2125
  %2254 = vst [vmem:[%s3 + $0xc8] sm:$0xf] %v2126
  %2255 = vst [vmem:[%s3 + $0xcc] sm:$0xf] %v2127
  %2256 = vst [vmem:[%s3 + $0xd0] sm:$0xf] %v2128
  %2257 = vst [vmem:[%s3 + $0xd4] sm:$0xf] %v2129
  %2258 = vst [vmem:[%s3 + $0xd8] sm:$0xf] %v2130
  %2259 = vst [vmem:[%s3 + $0xdc] sm:$0xf] %v2131
  %2260 = vst [vmem:[%s3 + $0xe0] sm:$0xf] %v2132
  %2261 = vst [vmem:[%s3 + $0xe4] sm:$0xf] %v2133
  %2262 = vst [vmem:[%s3 + $0xe8] sm:$0xf] %v2134
  %2263 = vst [vmem:[%s3 + $0xec] sm:$0xf] %v2135
  %2264 = vst [vmem:[%s3 + $0xf0] sm:$0xf] %v2136
  %2265 = vst [vmem:[%s3 + $0xf4] sm:$0xf] %v2137
  %2266 = vst [vmem:[%s3 + $0xf8] sm:$0xf] %v2138
  %2267 = vst [vmem:[%s3 + $0xfc] sm:$0xf] %v2139
  // Predicated region
  $region14: #{residual_conv_block.5} parent=0 // pred_check
    _
  $region15: #{residual_conv_block.5} parent=0 // pred_check_branch
    %2269 = sbr.rel (0) target = $region17
  $region16: #{residual_conv_block.5} parent=0 // pred_region
    _
  $region17: #{residual_conv_block.5} parent=0 // pred_fallthru
    _
  // Predicated region
  $region18: #{residual_conv_block.5} parent=0 // pred_check
    _
  $region19: #{residual_conv_block.5} parent=0 // pred_check_branch
    %2271 = sbr.rel (0) target = $region21
  $region20: #{residual_conv_block.5} parent=0 // pred_region
    _
  $region21: #{residual_conv_block.5} parent=0 // pred_fallthru
    _

// kernel: residual_conv_block.6
$region0: #{residual_conv_block.6}
  #allocation0 [shape = 'u32[]', space=smem, size = 0x4, offset = 0x4, fixed_abs, tag = 'smem constant byte address 0x4 - core index']
  #allocation1 [shape = 'u32[144,128]{1,0:T(1,128)}', space=vmem, size = 0x12000, scoped, tag = 'internal scratch']
  #allocation2 [shape = 'f32[512,128]{1,0:T(8,128)}', space=vmem, size = 0x40000, scoped, tag = 'scratch operand']
  %s0 = inlined_call_operand.vmem [shape: bf16[512,72], index: 0, kind: input, shape index: {}]
  %s1 = inlined_call_operand.vmem [shape: bf16[72,128], index: 1, kind: input, shape index: {}]
  %s2 = inlined_call_operand.vmem [shape: bf16[512,128], index: 2, kind: output, shape index: {0}]
  %s3 = inlined_call_operand.vmem [shape: f32[8,128], index: 3, kind: output, shape index: {1}]
  %s4 = inlined_call_operand.vmem [shape: f32[8,128], index: 4, kind: output, shape index: {2}]
  %5 = xla_tuple %s2, %s3, %s4
  %s6 = sld [smem:[#allocation0]]
  $region34: #{residual_conv_block.6} parent=0
    _
  %s8 = ssub.s32 1, %s6
  %s9 = scalar_select 0, %s8, %s6
  // Predicated region
  $region2: #{residual_conv_block.6} parent=0 // pred_check
    _
  $region3: #{residual_conv_block.6} parent=0 // pred_check_branch
    %11 = sbr.rel (0) target = $region5
  $region4: #{residual_conv_block.6} parent=0 // pred_region
    _
  $region5: #{residual_conv_block.6} parent=0 // pred_fallthru
    _
  // Predicated region
  $region6: #{residual_conv_block.6} parent=0 // pred_check
    _
  $region7: #{residual_conv_block.6} parent=0 // pred_check_branch
    %13 = sbr.rel (0) target = $region9
  $region8: #{residual_conv_block.6} parent=0 // pred_region
    _
  $region9: #{residual_conv_block.6} parent=0 // pred_fallthru
    _
  %v15 = vld [vmem:[%s0] sm:$0xf]
  %v16 = vld [vmem:[%s0 + $0x4] sm:$0xf]
  %v17 = vld [vmem:[%s0 + $0x8] sm:$0xf]
  %v18 = vld [vmem:[%s0 + $0xc] sm:$0xf]
  %v19 = vld [vmem:[%s0 + $0x10] sm:$0xf]
  %v20 = vld [vmem:[%s0 + $0x14] sm:$0xf]
  %v21 = vld [vmem:[%s0 + $0x18] sm:$0xf]
  %v22 = vld [vmem:[%s0 + $0x1c] sm:$0xf]
  %v23 = vld [vmem:[%s0 + $0x20] sm:$0xf]
  %v24 = vld [vmem:[%s0 + $0x24] sm:$0xf]
  %v25 = vld [vmem:[%s0 + $0x28] sm:$0xf]
  %v26 = vld [vmem:[%s0 + $0x2c] sm:$0xf]
  %v27 = vld [vmem:[%s0 + $0x30] sm:$0xf]
  %v28 = vld [vmem:[%s0 + $0x34] sm:$0xf]
  %v29 = vld [vmem:[%s0 + $0x38] sm:$0xf]
  %v30 = vld [vmem:[%s0 + $0x3c] sm:$0xf]
  %v31 = vld [vmem:[%s0 + $0x40] sm:$0xf]
  %v32 = vld [vmem:[%s0 + $0x44] sm:$0xf]
  %v33 = vld [vmem:[%s0 + $0x48] sm:$0xf]
  %v34 = vld [vmem:[%s0 + $0x4c] sm:$0xf]
  %v35 = vld [vmem:[%s0 + $0x50] sm:$0xf]
  %v36 = vld [vmem:[%s0 + $0x54] sm:$0xf]
  %v37 = vld [vmem:[%s0 + $0x58] sm:$0xf]
  %v38 = vld [vmem:[%s0 + $0x5c] sm:$0xf]
  %v39 = vld [vmem:[%s0 + $0x60] sm:$0xf]
  %v40 = vld [vmem:[%s0 + $0x64] sm:$0xf]
  %v41 = vld [vmem:[%s0 + $0x68] sm:$0xf]
  %v42 = vld [vmem:[%s0 + $0x6c] sm:$0xf]
  %v43 = vld [vmem:[%s0 + $0x70] sm:$0xf]
  %v44 = vld [vmem:[%s0 + $0x74] sm:$0xf]
  %v45 = vld [vmem:[%s0 + $0x78] sm:$0xf]
  %v46 = vld [vmem:[%s0 + $0x7c] sm:$0xf]
  %v47 = vld [vmem:[%s0 + $0x80] sm:$0xf]
  %v48 = vld [vmem:[%s0 + $0x84] sm:$0xf]
  %v49 = vld [vmem:[%s0 + $0x88] sm:$0xf]
  %v50 = vld [vmem:[%s0 + $0x8c] sm:$0xf]
  %v51 = vld [vmem:[%s0 + $0x90] sm:$0xf]
  %v52 = vld [vmem:[%s0 + $0x94] sm:$0xf]
  %v53 = vld [vmem:[%s0 + $0x98] sm:$0xf]
  %v54 = vld [vmem:[%s0 + $0x9c] sm:$0xf]
  %v55 = vld [vmem:[%s0 + $0xa0] sm:$0xf]
  %v56 = vld [vmem:[%s0 + $0xa4] sm:$0xf]
  %v57 = vld [vmem:[%s0 + $0xa8] sm:$0xf]
  %v58 = vld [vmem:[%s0 + $0xac] sm:$0xf]
  %v59 = vld [vmem:[%s0 + $0xb0] sm:$0xf]
  %v60 = vld [vmem:[%s0 + $0xb4] sm:$0xf]
  %v61 = vld [vmem:[%s0 + $0xb8] sm:$0xf]
  %v62 = vld [vmem:[%s0 + $0xbc] sm:$0xf]
  %v63 = vld [vmem:[%s0 + $0xc0] sm:$0xf]
  %v64 = vld [vmem:[%s0 + $0xc4] sm:$0xf]
  %v65 = vld [vmem:[%s0 + $0xc8] sm:$0xf]
  %v66 = vld [vmem:[%s0 + $0xcc] sm:$0xf]
  %v67 = vld [vmem:[%s0 + $0xd0] sm:$0xf]
  %v68 = vld [vmem:[%s0 + $0xd4] sm:$0xf]
  %v69 = vld [vmem:[%s0 + $0xd8] sm:$0xf]
  %v70 = vld [vmem:[%s0 + $0xdc] sm:$0xf]
  %v71 = vld [vmem:[%s0 + $0xe0] sm:$0xf]
  %v72 = vld [vmem:[%s0 + $0xe4] sm:$0xf]
  %v73 = vld [vmem:[%s0 + $0xe8] sm:$0xf]
  %v74 = vld [vmem:[%s0 + $0xec] sm:$0xf]
  %v75 = vld [vmem:[%s0 + $0xf0] sm:$0xf]
  %v76 = vld [vmem:[%s0 + $0xf4] sm:$0xf]
  %v77 = vld [vmem:[%s0 + $0xf8] sm:$0xf]
  %v78 = vld [vmem:[%s0 + $0xfc] sm:$0xf]
  %v79 = vld [vmem:[%s1] sm:$0xf]
  %v80 = vld [vmem:[%s1 + $0x4] sm:$0xf]
  %v81 = vld [vmem:[%s1 + $0x8] sm:$0xf]
  %v82 = vld [vmem:[%s1 + $0xc] sm:$0xf]
  %v83 = vld [vmem:[%s1 + $0x10] sm:$0xf]
  %v84 = vld [vmem:[%s1 + $0x14] sm:$0xf]
  %v85 = vld [vmem:[%s1 + $0x18] sm:$0xf]
  %v86 = vld [vmem:[%s1 + $0x1c] sm:$0xf]
  %v87 = vld [vmem:[%s1 + $0x20] sm:$0xf]
  %v152 = vunpack.c.l.b16 %v15
  %v153 = vunpack.c.l.b16 %v16
  %v154 = vunpack.c.l.b16 %v17
  %v155 = vunpack.c.l.b16 %v18
  %v156 = vunpack.c.l.b16 %v19
  %v157 = vunpack.c.l.b16 %v20
  %v158 = vunpack.c.l.b16 %v21
  %v159 = vunpack.c.l.b16 %v22
  %v160 = vunpack.c.l.b16 %v23
  %v161 = vunpack.c.l.b16 %v24
  %v162 = vunpack.c.l.b16 %v25
  %v163 = vunpack.c.l.b16 %v26
  %v164 = vunpack.c.l.b16 %v27
  %v165 = vunpack.c.l.b16 %v28
  %v166 = vunpack.c.l.b16 %v29
  %v167 = vunpack.c.l.b16 %v30
  %v168 = vunpack.c.l.b16 %v31
  %v169 = vunpack.c.l.b16 %v32
  %v170 = vunpack.c.l.b16 %v33
  %v171 = vunpack.c.l.b16 %v34
  %v172 = vunpack.c.l.b16 %v35
  %v173 = vunpack.c.l.b16 %v36
  %v174 = vunpack.c.l.b16 %v37
  %v175 = vunpack.c.l.b16 %v38
  %v176 = vunpack.c.l.b16 %v39
  %v177 = vunpack.c.l.b16 %v40
  %v178 = vunpack.c.l.b16 %v41
  %v179 = vunpack.c.l.b16 %v42
  %v180 = vunpack.c.l.b16 %v43
  %v181 = vunpack.c.l.b16 %v44
  %v182 = vunpack.c.l.b16 %v45
  %v183 = vunpack.c.l.b16 %v46
  %v184 = vunpack.c.l.b16 %v47
  %v185 = vunpack.c.l.b16 %v48
  %v186 = vunpack.c.l.b16 %v49
  %v187 = vunpack.c.l.b16 %v50
  %v188 = vunpack.c.l.b16 %v51
  %v189 = vunpack.c.l.b16 %v52
  %v190 = vunpack.c.l.b16 %v53
  %v191 = vunpack.c.l.b16 %v54
  %v192 = vunpack.c.l.b16 %v55
  %v193 = vunpack.c.l.b16 %v56
  %v194 = vunpack.c.l.b16 %v57
  %v195 = vunpack.c.l.b16 %v58
  %v196 = vunpack.c.l.b16 %v59
  %v197 = vunpack.c.l.b16 %v60
  %v198 = vunpack.c.l.b16 %v61
  %v199 = vunpack.c.l.b16 %v62
  %v200 = vunpack.c.l.b16 %v63
  %v201 = vunpack.c.l.b16 %v64
  %v202 = vunpack.c.l.b16 %v65
  %v203 = vunpack.c.l.b16 %v66
  %v204 = vunpack.c.l.b16 %v67
  %v205 = vunpack.c.l.b16 %v68
  %v206 = vunpack.c.l.b16 %v69
  %v207 = vunpack.c.l.b16 %v70
  %v208 = vunpack.c.l.b16 %v71
  %v209 = vunpack.c.l.b16 %v72
  %v210 = vunpack.c.l.b16 %v73
  %v211 = vunpack.c.l.b16 %v74
  %v212 = vunpack.c.l.b16 %v75
  %v213 = vunpack.c.l.b16 %v76
  %v214 = vunpack.c.l.b16 %v77
  %v215 = vunpack.c.l.b16 %v78
  %v216 = vpack.c.b16 %v153, %v152
  %v217 = vpack.c.b16 %v155, %v154
  %v218 = vpack.c.b16 %v157, %v156
  %v219 = vpack.c.b16 %v159, %v158
  %v220 = vpack.c.b16 %v161, %v160
  %v221 = vpack.c.b16 %v163, %v162
  %v222 = vpack.c.b16 %v165, %v164
  %v223 = vpack.c.b16 %v167, %v166
  %v224 = vpack.c.b16 %v169, %v168
  %v225 = vpack.c.b16 %v171, %v170
  %v226 = vpack.c.b16 %v173, %v172
  %v227 = vpack.c.b16 %v175, %v174
  %v228 = vpack.c.b16 %v177, %v176
  %v229 = vpack.c.b16 %v179, %v178
  %v230 = vpack.c.b16 %v181, %v180
  %v231 = vpack.c.b16 %v183, %v182
  %v232 = vpack.c.b16 %v185, %v184
  %v233 = vpack.c.b16 %v187, %v186
  %v234 = vpack.c.b16 %v189, %v188
  %v235 = vpack.c.b16 %v191, %v190
  %v236 = vpack.c.b16 %v193, %v192
  %v237 = vpack.c.b16 %v195, %v194
  %v238 = vpack.c.b16 %v197, %v196
  %v239 = vpack.c.b16 %v199, %v198
  %v240 = vpack.c.b16 %v201, %v200
  %v241 = vpack.c.b16 %v203, %v202
  %v242 = vpack.c.b16 %v205, %v204
  %v243 = vpack.c.b16 %v207, %v206
  %v244 = vpack.c.b16 %v209, %v208
  %v245 = vpack.c.b16 %v211, %v210
  %v246 = vpack.c.b16 %v213, %v212
  %v247 = vpack.c.b16 %v215, %v214
  %v257 = vunpack.c.l.b16 %v79
  %v258 = vunpack.c.l.b16 %v80
  %v259 = vunpack.c.l.b16 %v81
  %v260 = vunpack.c.l.b16 %v82
  %v261 = vunpack.c.l.b16 %v83
  %v262 = vunpack.c.l.b16 %v84
  %v263 = vunpack.c.l.b16 %v85
  %v264 = vunpack.c.l.b16 %v86
  %v265 = vunpack.c.l.b16 %v87
  %v266 = vpack.c.b16 %v258, %v257
  %v267 = vpack.c.b16 %v260, %v259
  %v268 = vpack.c.b16 %v262, %v261
  %v269 = vpack.c.b16 %v264, %v263
  %v270 = vpack.c.b16 %v265, %v265
  %vm275 = vcmask 588800
  %v277 = vsel %vm275, %v216, 0
  %v280 = vsel %vm275, %v217, 0
  %v283 = vsel %vm275, %v218, 0
  %v286 = vsel %vm275, %v219, 0
  %v289 = vsel %vm275, %v220, 0
  %v292 = vsel %vm275, %v221, 0
  %v295 = vsel %vm275, %v222, 0
  %v298 = vsel %vm275, %v223, 0
  %v301 = vsel %vm275, %v224, 0
  %v304 = vsel %vm275, %v225, 0
  %v307 = vsel %vm275, %v226, 0
  %v310 = vsel %vm275, %v227, 0
  %v313 = vsel %vm275, %v228, 0
  %v316 = vsel %vm275, %v229, 0
  %v319 = vsel %vm275, %v230, 0
  %v322 = vsel %vm275, %v231, 0
  %v325 = vsel %vm275, %v232, 0
  %v328 = vsel %vm275, %v233, 0
  %v331 = vsel %vm275, %v234, 0
  %v334 = vsel %vm275, %v235, 0
  %v337 = vsel %vm275, %v236, 0
  %v340 = vsel %vm275, %v237, 0
  %v343 = vsel %vm275, %v238, 0
  %v346 = vsel %vm275, %v239, 0
  %v349 = vsel %vm275, %v240, 0
  %v352 = vsel %vm275, %v241, 0
  %v355 = vsel %vm275, %v242, 0
  %v358 = vsel %vm275, %v243, 0
  %v361 = vsel %vm275, %v244, 0
  %v364 = vsel %vm275, %v245, 0
  %v367 = vsel %vm275, %v246, 0
  %v370 = vsel %vm275, %v247, 0
  %vm372 = vcmask 1043456
  %v374 = vsel %vm372, %v270, 0
  %376 = vmatprep.subr.bf16.mxu0 0
  %377 = vmatpush1.bf16.msra.mxu0 %v266
  %378 = vmatprep.subr.bf16.mxu0 0
  %379 = vmatpush1.bf16.msra.mxu0 %v267
  %380 = vmatprep.subr.bf16.mxu0 0
  %381 = vmatpush1.bf16.msra.mxu0 %v268
  %382 = vmatprep.subr.bf16.mxu0 0
  %383 = vmatpush1.bf16.msra.mxu0 %v269
  %384 = vmatprep.subr.bf16.mxu0 0
  %385 = vmatpush1.bf16.msra.mxu0 %v374
  %386 = vmatprep.subr.bf16.mxu0 0
  %387 = vmatpush1.bf16.msra.mxu0 0
  %388 = vmatprep.subr.bf16.mxu0 0
  %389 = vmatpush1.bf16.msra.mxu0 0
  %390 = vmatprep.subr.bf16.mxu0 0
  %391 = vmatpush1.bf16.msra.mxu0 0
  %392 = vmatprep.subr.bf16.mxu0 0
  %393 = vmatpush1.bf16.msra.mxu0 0
  %394 = vmatprep.subr.bf16.mxu0 0
  %395 = vmatpush1.bf16.msra.mxu0 0
  %396 = vmatprep.subr.bf16.mxu0 0
  %397 = vmatpush1.bf16.msra.mxu0 0
  %398 = vmatprep.subr.bf16.mxu0 0
  %399 = vmatpush1.bf16.msra.mxu0 0
  %400 = vmatprep.subr.bf16.mxu0 0
  %401 = vmatpush1.bf16.msra.mxu0 0
  %402 = vmatprep.subr.bf16.mxu0 0
  %403 = vmatpush1.bf16.msra.mxu0 0
  %404 = vmatprep.subr.bf16.mxu0 0
  %405 = vmatpush1.bf16.msra.mxu0 0
  %406 = vmatprep.subr.bf16.mxu0 0
  %407 = vmatpush1.bf16.msra.mxu0 0
  %408 = vmatprep.mubr.bf16.mxu0 0
  %409 = vmatmul.mubr.bf16.gmra.mrb[0].mxu0 %v277
  %v410 = vpop.f32.mrb[0].mxu0
  %v411 = vadd.f32 0.0, %v410
  %v412 = vpop.f32.mrb[0].mxu0
  %v413 = vpop.f32.mrb[0].mxu0
  %v414 = vadd.f32 0.0, %v413
  %v415 = vpop.f32.mrb[0].mxu0
  %416 = vmatprep.mubr.bf16.mxu0 0
  %417 = vmatmul.mubr.bf16.gmra.mrb[0].mxu0 %v280
  %v418 = vpop.f32.mrb[0].mxu0
  %v419 = vadd.f32 0.0, %v418
  %v420 = vpop.f32.mrb[0].mxu0
  %v421 = vpop.f32.mrb[0].mxu0
  %v422 = vadd.f32 0.0, %v421
  %v423 = vpop.f32.mrb[0].mxu0
  %424 = vmatprep.mubr.bf16.mxu0 0
  %425 = vmatmul.mubr.bf16.gmra.mrb[0].mxu0 %v283
  %v426 = vpop.f32.mrb[0].mxu0
  %v427 = vadd.f32 0.0, %v426
  %v428 = vpop.f32.mrb[0].mxu0
  %v429 = vpop.f32.mrb[0].mxu0
  %v430 = vadd.f32 0.0, %v429
  %v431 = vpop.f32.mrb[0].mxu0
  %432 = vmatprep.mubr.bf16.mxu0 0
  %433 = vmatmul.mubr.bf16.gmra.mrb[0].mxu0 %v286
  %v434 = vpop.f32.mrb[0].mxu0
  %v435 = vadd.f32 0.0, %v434
  %v436 = vpop.f32.mrb[0].mxu0
  %v437 = vpop.f32.mrb[0].mxu0
  %v438 = vadd.f32 0.0, %v437
  %v439 = vpop.f32.mrb[0].mxu0
  %440 = vmatprep.mubr.bf16.mxu0 0
  %441 = vmatmul.mubr.bf16.gmra.mrb[0].mxu0 %v289
  %v442 = vpop.f32.mrb[0].mxu0
  %v443 = vadd.f32 0.0, %v442
  %v444 = vpop.f32.mrb[0].mxu0
  %v445 = vpop.f32.mrb[0].mxu0
  %v446 = vadd.f32 0.0, %v445
  %v447 = vpop.f32.mrb[0].mxu0
  %448 = vmatprep.mubr.bf16.mxu0 0
  %449 = vmatmul.mubr.bf16.gmra.mrb[0].mxu0 %v292
  %v450 = vpop.f32.mrb[0].mxu0
  %v451 = vadd.f32 0.0, %v450
  %v452 = vpop.f32.mrb[0].mxu0
  %v453 = vpop.f32.mrb[0].mxu0
  %v454 = vadd.f32 0.0, %v453
  %v455 = vpop.f32.mrb[0].mxu0
  %456 = vmatprep.mubr.bf16.mxu0 0
  %457 = vmatmul.mubr.bf16.gmra.mrb[0].mxu0 %v295
  %v458 = vpop.f32.mrb[0].mxu0
  %v459 = vadd.f32 0.0, %v458
  %v460 = vpop.f32.mrb[0].mxu0
  %v461 = vpop.f32.mrb[0].mxu0
  %v462 = vadd.f32 0.0, %v461
  %v463 = vpop.f32.mrb[0].mxu0
  %464 = vmatprep.mubr.bf16.mxu0 0
  %465 = vmatmul.mubr.bf16.gmra.mrb[0].mxu0 %v298
  %v466 = vpop.f32.mrb[0].mxu0
  %v467 = vadd.f32 0.0, %v466
  %v468 = vpop.f32.mrb[0].mxu0
  %v469 = vpop.f32.mrb[0].mxu0
  %v470 = vadd.f32 0.0, %v469
  %v471 = vpop.f32.mrb[0].mxu0
  %472 = vmatprep.mubr.bf16.mxu0 0
  %473 = vmatmul.mubr.bf16.gmra.mrb[0].mxu0 %v301
  %v474 = vpop.f32.mrb[0].mxu0
  %v475 = vadd.f32 0.0, %v474
  %v476 = vpop.f32.mrb[0].mxu0
  %v477 = vpop.f32.mrb[0].mxu0
  %v478 = vadd.f32 0.0, %v477
  %v479 = vpop.f32.mrb[0].mxu0
  %480 = vmatprep.mubr.bf16.mxu0 0
  %481 = vmatmul.mubr.bf16.gmra.mrb[0].mxu0 %v304
  %v482 = vpop.f32.mrb[0].mxu0
  %v483 = vadd.f32 0.0, %v482
  %v484 = vpop.f32.mrb[0].mxu0
  %v485 = vpop.f32.mrb[0].mxu0
  %v486 = vadd.f32 0.0, %v485
  %v487 = vpop.f32.mrb[0].mxu0
  %488 = vmatprep.mubr.bf16.mxu0 0
  %489 = vmatmul.mubr.bf16.gmra.mrb[0].mxu0 %v307
  %v490 = vpop.f32.mrb[0].mxu0
  %v491 = vadd.f32 0.0, %v490
  %v492 = vpop.f32.mrb[0].mxu0
  %v493 = vpop.f32.mrb[0].mxu0
  %v494 = vadd.f32 0.0, %v493
  %v495 = vpop.f32.mrb[0].mxu0
  %496 = vmatprep.mubr.bf16.mxu0 0
  %497 = vmatmul.mubr.bf16.gmra.mrb[0].mxu0 %v310
  %v498 = vpop.f32.mrb[0].mxu0
  %v499 = vadd.f32 0.0, %v498
  %v500 = vpop.f32.mrb[0].mxu0
  %v501 = vpop.f32.mrb[0].mxu0
  %v502 = vadd.f32 0.0, %v501
  %v503 = vpop.f32.mrb[0].mxu0
  %504 = vmatprep.mubr.bf16.mxu0 0
  %505 = vmatmul.mubr.bf16.gmra.mrb[0].mxu0 %v313
  %v506 = vpop.f32.mrb[0].mxu0
  %v507 = vadd.f32 0.0, %v506
  %v508 = vpop.f32.mrb[0].mxu0
  %v509 = vpop.f32.mrb[0].mxu0
  %v510 = vadd.f32 0.0, %v509
  %v511 = vpop.f32.mrb[0].mxu0
  %512 = vmatprep.mubr.bf16.mxu0 0
  %513 = vmatmul.mubr.bf16.gmra.mrb[0].mxu0 %v316
  %v514 = vpop.f32.mrb[0].mxu0
  %v515 = vadd.f32 0.0, %v514
  %v516 = vpop.f32.mrb[0].mxu0
  %v517 = vpop.f32.mrb[0].mxu0
  %v518 = vadd.f32 0.0, %v517
  %v519 = vpop.f32.mrb[0].mxu0
  %520 = vmatprep.mubr.bf16.mxu0 0
  %521 = vmatmul.mubr.bf16.gmra.mrb[0].mxu0 %v319
  %v522 = vpop.f32.mrb[0].mxu0
  %v523 = vadd.f32 0.0, %v522
  %v524 = vpop.f32.mrb[0].mxu0
  %v525 = vpop.f32.mrb[0].mxu0
  %v526 = vadd.f32 0.0, %v525
  %v527 = vpop.f32.mrb[0].mxu0
  %528 = vmatprep.mubr.bf16.mxu0 0
  %529 = vmatmul.mubr.bf16.gmra.mrb[0].mxu0 %v322
  %v530 = vpop.f32.mrb[0].mxu0
  %v531 = vadd.f32 0.0, %v530
  %v532 = vpop.f32.mrb[0].mxu0
  %v533 = vpop.f32.mrb[0].mxu0
  %v534 = vadd.f32 0.0, %v533
  %v535 = vpop.f32.mrb[0].mxu0
  %536 = vmatprep.mubr.bf16.mxu0 0
  %537 = vmatmul.mubr.bf16.gmra.mrb[0].mxu0 %v325
  %v538 = vpop.f32.mrb[0].mxu0
  %v539 = vadd.f32 0.0, %v538
  %v540 = vpop.f32.mrb[0].mxu0
  %v541 = vpop.f32.mrb[0].mxu0
  %v542 = vadd.f32 0.0, %v541
  %v543 = vpop.f32.mrb[0].mxu0
  %544 = vmatprep.mubr.bf16.mxu0 0
  %545 = vmatmul.mubr.bf16.gmra.mrb[0].mxu0 %v328
  %v546 = vpop.f32.mrb[0].mxu0
  %v547 = vadd.f32 0.0, %v546
  %v548 = vpop.f32.mrb[0].mxu0
  %v549 = vpop.f32.mrb[0].mxu0
  %v550 = vadd.f32 0.0, %v549
  %v551 = vpop.f32.mrb[0].mxu0
  %552 = vmatprep.mubr.bf16.mxu0 0
  %553 = vmatmul.mubr.bf16.gmra.mrb[0].mxu0 %v331
  %v554 = vpop.f32.mrb[0].mxu0
  %v555 = vadd.f32 0.0, %v554
  %v556 = vpop.f32.mrb[0].mxu0
  %v557 = vpop.f32.mrb[0].mxu0
  %v558 = vadd.f32 0.0, %v557
  %v559 = vpop.f32.mrb[0].mxu0
  %560 = vmatprep.mubr.bf16.mxu0 0
  %561 = vmatmul.mubr.bf16.gmra.mrb[0].mxu0 %v334
  %v562 = vpop.f32.mrb[0].mxu0
  %v563 = vadd.f32 0.0, %v562
  %v564 = vpop.f32.mrb[0].mxu0
  %v565 = vpop.f32.mrb[0].mxu0
  %v566 = vadd.f32 0.0, %v565
  %v567 = vpop.f32.mrb[0].mxu0
  %568 = vmatprep.mubr.bf16.mxu0 0
  %569 = vmatmul.mubr.bf16.gmra.mrb[0].mxu0 %v337
  %v570 = vpop.f32.mrb[0].mxu0
  %v571 = vadd.f32 0.0, %v570
  %v572 = vpop.f32.mrb[0].mxu0
  %v573 = vpop.f32.mrb[0].mxu0
  %v574 = vadd.f32 0.0, %v573
  %v575 = vpop.f32.mrb[0].mxu0
  %576 = vmatprep.mubr.bf16.mxu0 0
  %577 = vmatmul.mubr.bf16.gmra.mrb[0].mxu0 %v340
  %v578 = vpop.f32.mrb[0].mxu0
  %v579 = vadd.f32 0.0, %v578
  %v580 = vpop.f32.mrb[0].mxu0
  %v581 = vpop.f32.mrb[0].mxu0
  %v582 = vadd.f32 0.0, %v581
  %v583 = vpop.f32.mrb[0].mxu0
  %584 = vmatprep.mubr.bf16.mxu0 0
  %585 = vmatmul.mubr.bf16.gmra.mrb[0].mxu0 %v343
  %v586 = vpop.f32.mrb[0].mxu0
  %v587 = vadd.f32 0.0, %v586
  %v588 = vpop.f32.mrb[0].mxu0
  %v589 = vpop.f32.mrb[0].mxu0
  %v590 = vadd.f32 0.0, %v589
  %v591 = vpop.f32.mrb[0].mxu0
  %592 = vmatprep.mubr.bf16.mxu0 0
  %593 = vmatmul.mubr.bf16.gmra.mrb[0].mxu0 %v346
  %v594 = vpop.f32.mrb[0].mxu0
  %v595 = vadd.f32 0.0, %v594
  %v596 = vpop.f32.mrb[0].mxu0
  %v597 = vpop.f32.mrb[0].mxu0
  %v598 = vadd.f32 0.0, %v597
  %v599 = vpop.f32.mrb[0].mxu0
  %600 = vmatprep.mubr.bf16.mxu0 0
  %601 = vmatmul.mubr.bf16.gmra.mrb[0].mxu0 %v349
  %v602 = vpop.f32.mrb[0].mxu0
  %v603 = vadd.f32 0.0, %v602
  %v604 = vpop.f32.mrb[0].mxu0
  %v605 = vpop.f32.mrb[0].mxu0
  %v606 = vadd.f32 0.0, %v605
  %v607 = vpop.f32.mrb[0].mxu0
  %608 = vmatprep.mubr.bf16.mxu0 0
  %609 = vmatmul.mubr.bf16.gmra.mrb[0].mxu0 %v352
  %v610 = vpop.f32.mrb[0].mxu0
  %v611 = vadd.f32 0.0, %v610
  %v612 = vpop.f32.mrb[0].mxu0
  %v613 = vpop.f32.mrb[0].mxu0
  %v614 = vadd.f32 0.0, %v613
  %v615 = vpop.f32.mrb[0].mxu0
  %616 = vmatprep.mubr.bf16.mxu0 0
  %617 = vmatmul.mubr.bf16.gmra.mrb[0].mxu0 %v355
  %v618 = vpop.f32.mrb[0].mxu0
  %v619 = vadd.f32 0.0, %v618
  %v620 = vpop.f32.mrb[0].mxu0
  %v621 = vpop.f32.mrb[0].mxu0
  %v622 = vadd.f32 0.0, %v621
  %v623 = vpop.f32.mrb[0].mxu0
  %624 = vmatprep.mubr.bf16.mxu0 0
  %625 = vmatmul.mubr.bf16.gmra.mrb[0].mxu0 %v358
  %v626 = vpop.f32.mrb[0].mxu0
  %v627 = vadd.f32 0.0, %v626
  %v628 = vpop.f32.mrb[0].mxu0
  %v629 = vpop.f32.mrb[0].mxu0
  %v630 = vadd.f32 0.0, %v629
  %v631 = vpop.f32.mrb[0].mxu0
  %632 = vmatprep.mubr.bf16.mxu0 0
  %633 = vmatmul.mubr.bf16.gmra.mrb[0].mxu0 %v361
  %v634 = vpop.f32.mrb[0].mxu0
  %v635 = vadd.f32 0.0, %v634
  %v636 = vpop.f32.mrb[0].mxu0
  %v637 = vpop.f32.mrb[0].mxu0
  %v638 = vadd.f32 0.0, %v637
  %v639 = vpop.f32.mrb[0].mxu0
  %640 = vmatprep.mubr.bf16.mxu0 0
  %641 = vmatmul.mubr.bf16.gmra.mrb[0].mxu0 %v364
  %v642 = vpop.f32.mrb[0].mxu0
  %v643 = vadd.f32 0.0, %v642
  %v644 = vpop.f32.mrb[0].mxu0
  %v645 = vpop.f32.mrb[0].mxu0
  %v646 = vadd.f32 0.0, %v645
  %v647 = vpop.f32.mrb[0].mxu0
  %648 = vmatprep.mubr.bf16.mxu0 0
  %649 = vmatmul.mubr.bf16.gmra.mrb[0].mxu0 %v367
  %v650 = vpop.f32.mrb[0].mxu0
  %v651 = vadd.f32 0.0, %v650
  %v652 = vpop.f32.mrb[0].mxu0
  %v653 = vpop.f32.mrb[0].mxu0
  %v654 = vadd.f32 0.0, %v653
  %v655 = vpop.f32.mrb[0].mxu0
  %656 = vmatprep.mubr.bf16.mxu0 0
  %657 = vmatmul.mubr.bf16.gmra.mrb[0].mxu0 %v370
  %v658 = vpop.f32.mrb[0].mxu0
  %v659 = vadd.f32 0.0, %v658
  %v660 = vpop.f32.mrb[0].mxu0
  %v661 = vpop.f32.mrb[0].mxu0
  %v662 = vadd.f32 0.0, %v661
  %v663 = vpop.f32.mrb[0].mxu0
  %664 = vdwg.mxu0
  %665 = vst [vmem:[#allocation2] sm:$0xff] %v411
  %666 = vst [vmem:[#allocation2 + $0x8] sm:$0xff] %v414
  %667 = vst [vmem:[#allocation2 + $0x10] sm:$0xff] %v419
  %668 = vst [vmem:[#allocation2 + $0x18] sm:$0xff] %v422
  %669 = vst [vmem:[#allocation2 + $0x20] sm:$0xff] %v427
  %670 = vst [vmem:[#allocation2 + $0x28] sm:$0xff] %v430
  %671 = vst [vmem:[#allocation2 + $0x30] sm:$0xff] %v435
  %672 = vst [vmem:[#allocation2 + $0x38] sm:$0xff] %v438
  %673 = vst [vmem:[#allocation2 + $0x40] sm:$0xff] %v443
  %674 = vst [vmem:[#allocation2 + $0x48] sm:$0xff] %v446
  %675 = vst [vmem:[#allocation2 + $0x50] sm:$0xff] %v451
  %676 = vst [vmem:[#allocation2 + $0x58] sm:$0xff] %v454
  %677 = vst [vmem:[#allocation2 + $0x60] sm:$0xff] %v459
  %678 = vst [vmem:[#allocation2 + $0x68] sm:$0xff] %v462
  %679 = vst [vmem:[#allocation2 + $0x70] sm:$0xff] %v467
  %680 = vst [vmem:[#allocation2 + $0x78] sm:$0xff] %v470
  %681 = vst [vmem:[#allocation2 + $0x80] sm:$0xff] %v475
  %682 = vst [vmem:[#allocation2 + $0x88] sm:$0xff] %v478
  %683 = vst [vmem:[#allocation2 + $0x90] sm:$0xff] %v483
  %684 = vst [vmem:[#allocation2 + $0x98] sm:$0xff] %v486
  %685 = vst [vmem:[#allocation2 + $0xa0] sm:$0xff] %v491
  %686 = vst [vmem:[#allocation2 + $0xa8] sm:$0xff] %v494
  %687 = vst [vmem:[#allocation2 + $0xb0] sm:$0xff] %v499
  %688 = vst [vmem:[#allocation2 + $0xb8] sm:$0xff] %v502
  %689 = vst [vmem:[#allocation2 + $0xc0] sm:$0xff] %v507
  %690 = vst [vmem:[#allocation2 + $0xc8] sm:$0xff] %v510
  %691 = vst [vmem:[#allocation2 + $0xd0] sm:$0xff] %v515
  %692 = vst [vmem:[#allocation2 + $0xd8] sm:$0xff] %v518
  %693 = vst [vmem:[#allocation2 + $0xe0] sm:$0xff] %v523
  %694 = vst [vmem:[#allocation2 + $0xe8] sm:$0xff] %v526
  %695 = vst [vmem:[#allocation2 + $0xf0] sm:$0xff] %v531
  %696 = vst [vmem:[#allocation2 + $0xf8] sm:$0xff] %v534
  %697 = vst [vmem:[#allocation2 + $0x100] sm:$0xff] %v539
  %698 = vst [vmem:[#allocation2 + $0x108] sm:$0xff] %v542
  %699 = vst [vmem:[#allocation2 + $0x110] sm:$0xff] %v547
  %700 = vst [vmem:[#allocation2 + $0x118] sm:$0xff] %v550
  %701 = vst [vmem:[#allocation2 + $0x120] sm:$0xff] %v555
  %702 = vst [vmem:[#allocation2 + $0x128] sm:$0xff] %v558
  %703 = vst [vmem:[#allocation2 + $0x130] sm:$0xff] %v563
  %704 = vst [vmem:[#allocation2 + $0x138] sm:$0xff] %v566
  %705 = vst [vmem:[#allocation2 + $0x140] sm:$0xff] %v571
  %706 = vst [vmem:[#allocation2 + $0x148] sm:$0xff] %v574
  %707 = vst [vmem:[#allocation2 + $0x150] sm:$0xff] %v579
  %708 = vst [vmem:[#allocation2 + $0x158] sm:$0xff] %v582
  %709 = vst [vmem:[#allocation2 + $0x160] sm:$0xff] %v587
  %710 = vst [vmem:[#allocation2 + $0x168] sm:$0xff] %v590
  %711 = vst [vmem:[#allocation2 + $0x170] sm:$0xff] %v595
  %712 = vst [vmem:[#allocation2 + $0x178] sm:$0xff] %v598
  %713 = vst [vmem:[#allocation2 + $0x180] sm:$0xff] %v603
  %714 = vst [vmem:[#allocation2 + $0x188] sm:$0xff] %v606
  %715 = vst [vmem:[#allocation2 + $0x190] sm:$0xff] %v611
  %716 = vst [vmem:[#allocation2 + $0x198] sm:$0xff] %v614
  %717 = vst [vmem:[#allocation2 + $0x1a0] sm:$0xff] %v619
  %718 = vst [vmem:[#allocation2 + $0x1a8] sm:$0xff] %v622
  %719 = vst [vmem:[#allocation2 + $0x1b0] sm:$0xff] %v627
  %720 = vst [vmem:[#allocation2 + $0x1b8] sm:$0xff] %v630
  %721 = vst [vmem:[#allocation2 + $0x1c0] sm:$0xff] %v635
  %722 = vst [vmem:[#allocation2 + $0x1c8] sm:$0xff] %v638
  %723 = vst [vmem:[#allocation2 + $0x1d0] sm:$0xff] %v643
  %724 = vst [vmem:[#allocation2 + $0x1d8] sm:$0xff] %v646
  %725 = vst [vmem:[#allocation2 + $0x1e0] sm:$0xff] %v651
  %726 = vst [vmem:[#allocation2 + $0x1e8] sm:$0xff] %v654
  %727 = vst [vmem:[#allocation2 + $0x1f0] sm:$0xff] %v659
  %728 = vst [vmem:[#allocation2 + $0x1f8] sm:$0xff] %v662
  %v729 = vld [vmem:[#allocation2] sm:$0xff]
  %v730 = vld [vmem:[#allocation2 + $0x8] sm:$0xff]
  %v731 = vld [vmem:[#allocation2 + $0x10] sm:$0xff]
  %v732 = vld [vmem:[#allocation2 + $0x18] sm:$0xff]
  %v733 = vld [vmem:[#allocation2 + $0x20] sm:$0xff]
  %v734 = vld [vmem:[#allocation2 + $0x28] sm:$0xff]
  %v735 = vld [vmem:[#allocation2 + $0x30] sm:$0xff]
  %v736 = vld [vmem:[#allocation2 + $0x38] sm:$0xff]
  %v737 = vld [vmem:[#allocation2 + $0x40] sm:$0xff]
  %v738 = vld [vmem:[#allocation2 + $0x48] sm:$0xff]
  %v739 = vld [vmem:[#allocation2 + $0x50] sm:$0xff]
  %v740 = vld [vmem:[#allocation2 + $0x58] sm:$0xff]
  %v741 = vld [vmem:[#allocation2 + $0x60] sm:$0xff]
  %v742 = vld [vmem:[#allocation2 + $0x68] sm:$0xff]
  %v743 = vld [vmem:[#allocation2 + $0x70] sm:$0xff]
  %v744 = vld [vmem:[#allocation2 + $0x78] sm:$0xff]
  %v745 = vld [vmem:[#allocation2 + $0x80] sm:$0xff]
  %v746 = vld [vmem:[#allocation2 + $0x88] sm:$0xff]
  %v747 = vld [vmem:[#allocation2 + $0x90] sm:$0xff]
  %v748 = vld [vmem:[#allocation2 + $0x98] sm:$0xff]
  %v749 = vld [vmem:[#allocation2 + $0xa0] sm:$0xff]
  %v750 = vld [vmem:[#allocation2 + $0xa8] sm:$0xff]
  %v751 = vld [vmem:[#allocation2 + $0xb0] sm:$0xff]
  %v752 = vld [vmem:[#allocation2 + $0xb8] sm:$0xff]
  %v753 = vld [vmem:[#allocation2 + $0xc0] sm:$0xff]
  %v754 = vld [vmem:[#allocation2 + $0xc8] sm:$0xff]
  %v755 = vld [vmem:[#allocation2 + $0xd0] sm:$0xff]
  %v756 = vld [vmem:[#allocation2 + $0xd8] sm:$0xff]
  %v757 = vld [vmem:[#allocation2 + $0xe0] sm:$0xff]
  %v758 = vld [vmem:[#allocation2 + $0xe8] sm:$0xff]
  %v759 = vld [vmem:[#allocation2 + $0xf0] sm:$0xff]
  %v760 = vld [vmem:[#allocation2 + $0xf8] sm:$0xff]
  %v761 = vld [vmem:[#allocation2 + $0x100] sm:$0xff]
  %v762 = vld [vmem:[#allocation2 + $0x108] sm:$0xff]
  %v763 = vld [vmem:[#allocation2 + $0x110] sm:$0xff]
  %v764 = vld [vmem:[#allocation2 + $0x118] sm:$0xff]
  %v765 = vld [vmem:[#allocation2 + $0x120] sm:$0xff]
  %v766 = vld [vmem:[#allocation2 + $0x128] sm:$0xff]
  %v767 = vld [vmem:[#allocation2 + $0x130] sm:$0xff]
  %v768 = vld [vmem:[#allocation2 + $0x138] sm:$0xff]
  %v769 = vld [vmem:[#allocation2 + $0x140] sm:$0xff]
  %v770 = vld [vmem:[#allocation2 + $0x148] sm:$0xff]
  %v771 = vld [vmem:[#allocation2 + $0x150] sm:$0xff]
  %v772 = vld [vmem:[#allocation2 + $0x158] sm:$0xff]
  %v773 = vld [vmem:[#allocation2 + $0x160] sm:$0xff]
  %v774 = vld [vmem:[#allocation2 + $0x168] sm:$0xff]
  %v775 = vld [vmem:[#allocation2 + $0x170] sm:$0xff]
  %v776 = vld [vmem:[#allocation2 + $0x178] sm:$0xff]
  %v777 = vld [vmem:[#allocation2 + $0x180] sm:$0xff]
  %v778 = vld [vmem:[#allocation2 + $0x188] sm:$0xff]
  %v779 = vld [vmem:[#allocation2 + $0x190] sm:$0xff]
  %v780 = vld [vmem:[#allocation2 + $0x198] sm:$0xff]
  %v781 = vld [vmem:[#allocation2 + $0x1a0] sm:$0xff]
  %v782 = vld [vmem:[#allocation2 + $0x1a8] sm:$0xff]
  %v783 = vld [vmem:[#allocation2 + $0x1b0] sm:$0xff]
  %v784 = vld [vmem:[#allocation2 + $0x1b8] sm:$0xff]
  %v785 = vld [vmem:[#allocation2 + $0x1c0] sm:$0xff]
  %v786 = vld [vmem:[#allocation2 + $0x1c8] sm:$0xff]
  %v787 = vld [vmem:[#allocation2 + $0x1d0] sm:$0xff]
  %v788 = vld [vmem:[#allocation2 + $0x1d8] sm:$0xff]
  %v789 = vld [vmem:[#allocation2 + $0x1e0] sm:$0xff]
  %v790 = vld [vmem:[#allocation2 + $0x1e8] sm:$0xff]
  %v791 = vld [vmem:[#allocation2 + $0x1f0] sm:$0xff]
  %v792 = vld [vmem:[#allocation2 + $0x1f8] sm:$0xff]
  %v793 = vpack.c.bf16 %v730, %v729
  %v794 = vpack.c.bf16 %v732, %v731
  %v795 = vpack.c.bf16 %v734, %v733
  %v796 = vpack.c.bf16 %v736, %v735
  %v797 = vpack.c.bf16 %v738, %v737
  %v798 = vpack.c.bf16 %v740, %v739
  %v799 = vpack.c.bf16 %v742, %v741
  %v800 = vpack.c.bf16 %v744, %v743
  %v801 = vpack.c.bf16 %v746, %v745
  %v802 = vpack.c.bf16 %v748, %v747
  %v803 = vpack.c.bf16 %v750, %v749
  %v804 = vpack.c.bf16 %v752, %v751
  %v805 = vpack.c.bf16 %v754, %v753
  %v806 = vpack.c.bf16 %v756, %v755
  %v807 = vpack.c.bf16 %v758, %v757
  %v808 = vpack.c.bf16 %v760, %v759
  %v809 = vpack.c.bf16 %v762, %v761
  %v810 = vpack.c.bf16 %v764, %v763
  %v811 = vpack.c.bf16 %v766, %v765
  %v812 = vpack.c.bf16 %v768, %v767
  %v813 = vpack.c.bf16 %v770, %v769
  %v814 = vpack.c.bf16 %v772, %v771
  %v815 = vpack.c.bf16 %v774, %v773
  %v816 = vpack.c.bf16 %v776, %v775
  %v817 = vpack.c.bf16 %v778, %v777
  %v818 = vpack.c.bf16 %v780, %v779
  %v819 = vpack.c.bf16 %v782, %v781
  %v820 = vpack.c.bf16 %v784, %v783
  %v821 = vpack.c.bf16 %v786, %v785
  %v822 = vpack.c.bf16 %v788, %v787
  %v823 = vpack.c.bf16 %v790, %v789
  %v824 = vpack.c.bf16 %v792, %v791
  %v857 = vunpack.c.l.b16 %v793
  %v858 = vunpack.c.h.b16 %v793
  %v859 = vunpack.c.l.b16 %v794
  %v860 = vunpack.c.h.b16 %v794
  %v861 = vunpack.c.l.b16 %v795
  %v862 = vunpack.c.h.b16 %v795
  %v863 = vunpack.c.l.b16 %v796
  %v864 = vunpack.c.h.b16 %v796
  %v865 = vunpack.c.l.b16 %v797
  %v866 = vunpack.c.h.b16 %v797
  %v867 = vunpack.c.l.b16 %v798
  %v868 = vunpack.c.h.b16 %v798
  %v869 = vunpack.c.l.b16 %v799
  %v870 = vunpack.c.h.b16 %v799
  %v871 = vunpack.c.l.b16 %v800
  %v872 = vunpack.c.h.b16 %v800
  %v873 = vunpack.c.l.b16 %v801
  %v874 = vunpack.c.h.b16 %v801
  %v875 = vunpack.c.l.b16 %v802
  %v876 = vunpack.c.h.b16 %v802
  %v877 = vunpack.c.l.b16 %v803
  %v878 = vunpack.c.h.b16 %v803
  %v879 = vunpack.c.l.b16 %v804
  %v880 = vunpack.c.h.b16 %v804
  %v881 = vunpack.c.l.b16 %v805
  %v882 = vunpack.c.h.b16 %v805
  %v883 = vunpack.c.l.b16 %v806
  %v884 = vunpack.c.h.b16 %v806
  %v885 = vunpack.c.l.b16 %v807
  %v886 = vunpack.c.h.b16 %v807
  %v887 = vunpack.c.l.b16 %v808
  %v888 = vunpack.c.h.b16 %v808
  %v889 = vunpack.c.l.b16 %v809
  %v890 = vunpack.c.h.b16 %v809
  %v891 = vunpack.c.l.b16 %v810
  %v892 = vunpack.c.h.b16 %v810
  %v893 = vunpack.c.l.b16 %v811
  %v894 = vunpack.c.h.b16 %v811
  %v895 = vunpack.c.l.b16 %v812
  %v896 = vunpack.c.h.b16 %v812
  %v897 = vunpack.c.l.b16 %v813
  %v898 = vunpack.c.h.b16 %v813
  %v899 = vunpack.c.l.b16 %v814
  %v900 = vunpack.c.h.b16 %v814
  %v901 = vunpack.c.l.b16 %v815
  %v902 = vunpack.c.h.b16 %v815
  %v903 = vunpack.c.l.b16 %v816
  %v904 = vunpack.c.h.b16 %v816
  %v905 = vunpack.c.l.b16 %v817
  %v906 = vunpack.c.h.b16 %v817
  %v907 = vunpack.c.l.b16 %v818
  %v908 = vunpack.c.h.b16 %v818
  %v909 = vunpack.c.l.b16 %v819
  %v910 = vunpack.c.h.b16 %v819
  %v911 = vunpack.c.l.b16 %v820
  %v912 = vunpack.c.h.b16 %v820
  %v913 = vunpack.c.l.b16 %v821
  %v914 = vunpack.c.h.b16 %v821
  %v915 = vunpack.c.l.b16 %v822
  %v916 = vunpack.c.h.b16 %v822
  %v917 = vunpack.c.l.b16 %v823
  %v918 = vunpack.c.h.b16 %v823
  %v919 = vunpack.c.l.b16 %v824
  %v920 = vunpack.c.h.b16 %v824
  %v921 = vpack.c.b16 %v857, %v857
  %v922 = vpack.c.b16 %v858, %v858
  %v923 = vpack.c.b16 %v859, %v859
  %v924 = vpack.c.b16 %v860, %v860
  %v925 = vpack.c.b16 %v861, %v861
  %v926 = vpack.c.b16 %v862, %v862
  %v927 = vpack.c.b16 %v863, %v863
  %v928 = vpack.c.b16 %v864, %v864
  %v929 = vpack.c.b16 %v865, %v865
  %v930 = vpack.c.b16 %v866, %v866
  %v931 = vpack.c.b16 %v867, %v867
  %v932 = vpack.c.b16 %v868, %v868
  %v933 = vpack.c.b16 %v869, %v869
  %v934 = vpack.c.b16 %v870, %v870
  %v935 = vpack.c.b16 %v871, %v871
  %v936 = vpack.c.b16 %v872, %v872
  %v937 = vpack.c.b16 %v873, %v873
  %v938 = vpack.c.b16 %v874, %v874
  %v939 = vpack.c.b16 %v875, %v875
  %v940 = vpack.c.b16 %v876, %v876
  %v941 = vpack.c.b16 %v877, %v877
  %v942 = vpack.c.b16 %v878, %v878
  %v943 = vpack.c.b16 %v879, %v879
  %v944 = vpack.c.b16 %v880, %v880
  %v945 = vpack.c.b16 %v881, %v881
  %v946 = vpack.c.b16 %v882, %v882
  %v947 = vpack.c.b16 %v883, %v883
  %v948 = vpack.c.b16 %v884, %v884
  %v949 = vpack.c.b16 %v885, %v885
  %v950 = vpack.c.b16 %v886, %v886
  %v951 = vpack.c.b16 %v887, %v887
  %v952 = vpack.c.b16 %v888, %v888
  %v953 = vpack.c.b16 %v889, %v889
  %v954 = vpack.c.b16 %v890, %v890
  %v955 = vpack.c.b16 %v891, %v891
  %v956 = vpack.c.b16 %v892, %v892
  %v957 = vpack.c.b16 %v893, %v893
  %v958 = vpack.c.b16 %v894, %v894
  %v959 = vpack.c.b16 %v895, %v895
  %v960 = vpack.c.b16 %v896, %v896
  %v961 = vpack.c.b16 %v897, %v897
  %v962 = vpack.c.b16 %v898, %v898
  %v963 = vpack.c.b16 %v899, %v899
  %v964 = vpack.c.b16 %v900, %v900
  %v965 = vpack.c.b16 %v901, %v901
  %v966 = vpack.c.b16 %v902, %v902
  %v967 = vpack.c.b16 %v903, %v903
  %v968 = vpack.c.b16 %v904, %v904
  %v969 = vpack.c.b16 %v905, %v905
  %v970 = vpack.c.b16 %v906, %v906
  %v971 = vpack.c.b16 %v907, %v907
  %v972 = vpack.c.b16 %v908, %v908
  %v973 = vpack.c.b16 %v909, %v909
  %v974 = vpack.c.b16 %v910, %v910
  %v975 = vpack.c.b16 %v911, %v911
  %v976 = vpack.c.b16 %v912, %v912
  %v977 = vpack.c.b16 %v913, %v913
  %v978 = vpack.c.b16 %v914, %v914
  %v979 = vpack.c.b16 %v915, %v915
  %v980 = vpack.c.b16 %v916, %v916
  %v981 = vpack.c.b16 %v917, %v917
  %v982 = vpack.c.b16 %v918, %v918
  %v983 = vpack.c.b16 %v919, %v919
  %v984 = vpack.c.b16 %v920, %v920
  %1049 = vst [vmem:[%s2] sm:$0xf] %v921
  %1050 = vst [vmem:[%s2 + $0x4] sm:$0xf] %v922
  %1051 = vst [vmem:[%s2 + $0x8] sm:$0xf] %v923
  %1052 = vst [vmem:[%s2 + $0xc] sm:$0xf] %v924
  %1053 = vst [vmem:[%s2 + $0x10] sm:$0xf] %v925
  %1054 = vst [vmem:[%s2 + $0x14] sm:$0xf] %v926
  %1055 = vst [vmem:[%s2 + $0x18] sm:$0xf] %v927
  %1056 = vst [vmem:[%s2 + $0x1c] sm:$0xf] %v928
  %1057 = vst [vmem:[%s2 + $0x20] sm:$0xf] %v929
  %1058 = vst [vmem:[%s2 + $0x24] sm:$0xf] %v930
  %1059 = vst [vmem:[%s2 + $0x28] sm:$0xf] %v931
  %1060 = vst [vmem:[%s2 + $0x2c] sm:$0xf] %v932
  %1061 = vst [vmem:[%s2 + $0x30] sm:$0xf] %v933
  %1062 = vst [vmem:[%s2 + $0x34] sm:$0xf] %v934
  %1063 = vst [vmem:[%s2 + $0x38] sm:$0xf] %v935
  %1064 = vst [vmem:[%s2 + $0x3c] sm:$0xf] %v936
  %1065 = vst [vmem:[%s2 + $0x40] sm:$0xf] %v937
  %1066 = vst [vmem:[%s2 + $0x44] sm:$0xf] %v938
  %1067 = vst [vmem:[%s2 + $0x48] sm:$0xf] %v939
  %1068 = vst [vmem:[%s2 + $0x4c] sm:$0xf] %v940
  %1069 = vst [vmem:[%s2 + $0x50] sm:$0xf] %v941
  %1070 = vst [vmem:[%s2 + $0x54] sm:$0xf] %v942
  %1071 = vst [vmem:[%s2 + $0x58] sm:$0xf] %v943
  %1072 = vst [vmem:[%s2 + $0x5c] sm:$0xf] %v944
  %1073 = vst [vmem:[%s2 + $0x60] sm:$0xf] %v945
  %1074 = vst [vmem:[%s2 + $0x64] sm:$0xf] %v946
  %1075 = vst [vmem:[%s2 + $0x68] sm:$0xf] %v947
  %1076 = vst [vmem:[%s2 + $0x6c] sm:$0xf] %v948
  %1077 = vst [vmem:[%s2 + $0x70] sm:$0xf] %v949
  %1078 = vst [vmem:[%s2 + $0x74] sm:$0xf] %v950
  %1079 = vst [vmem:[%s2 + $0x78] sm:$0xf] %v951
  %1080 = vst [vmem:[%s2 + $0x7c] sm:$0xf] %v952
  %1081 = vst [vmem:[%s2 + $0x80] sm:$0xf] %v953
  %1082 = vst [vmem:[%s2 + $0x84] sm:$0xf] %v954
  %1083 = vst [vmem:[%s2 + $0x88] sm:$0xf] %v955
  %1084 = vst [vmem:[%s2 + $0x8c] sm:$0xf] %v956
  %1085 = vst [vmem:[%s2 + $0x90] sm:$0xf] %v957
  %1086 = vst [vmem:[%s2 + $0x94] sm:$0xf] %v958
  %1087 = vst [vmem:[%s2 + $0x98] sm:$0xf] %v959
  %1088 = vst [vmem:[%s2 + $0x9c] sm:$0xf] %v960
  %1089 = vst [vmem:[%s2 + $0xa0] sm:$0xf] %v961
  %1090 = vst [vmem:[%s2 + $0xa4] sm:$0xf] %v962
  %1091 = vst [vmem:[%s2 + $0xa8] sm:$0xf] %v963
  %1092 = vst [vmem:[%s2 + $0xac] sm:$0xf] %v964
  %1093 = vst [vmem:[%s2 + $0xb0] sm:$0xf] %v965
  %1094 = vst [vmem:[%s2 + $0xb4] sm:$0xf] %v966
  %1095 = vst [vmem:[%s2 + $0xb8] sm:$0xf] %v967
  %1096 = vst [vmem:[%s2 + $0xbc] sm:$0xf] %v968
  %1097 = vst [vmem:[%s2 + $0xc0] sm:$0xf] %v969
  %1098 = vst [vmem:[%s2 + $0xc4] sm:$0xf] %v970
  %1099 = vst [vmem:[%s2 + $0xc8] sm:$0xf] %v971
  %1100 = vst [vmem:[%s2 + $0xcc] sm:$0xf] %v972
  %1101 = vst [vmem:[%s2 + $0xd0] sm:$0xf] %v973
  %1102 = vst [vmem:[%s2 + $0xd4] sm:$0xf] %v974
  %1103 = vst [vmem:[%s2 + $0xd8] sm:$0xf] %v975
  %1104 = vst [vmem:[%s2 + $0xdc] sm:$0xf] %v976
  %1105 = vst [vmem:[%s2 + $0xe0] sm:$0xf] %v977
  %1106 = vst [vmem:[%s2 + $0xe4] sm:$0xf] %v978
  %1107 = vst [vmem:[%s2 + $0xe8] sm:$0xf] %v979
  %1108 = vst [vmem:[%s2 + $0xec] sm:$0xf] %v980
  %1109 = vst [vmem:[%s2 + $0xf0] sm:$0xf] %v981
  %1110 = vst [vmem:[%s2 + $0xf4] sm:$0xf] %v982
  %1111 = vst [vmem:[%s2 + $0xf8] sm:$0xf] %v983
  %1112 = vst [vmem:[%s2 + $0xfc] sm:$0xf] %v984
  %v1113 = vlaneseq
  %v1114 = vshrl.u32 %v1113, 7
  %v1115 = vld [vmem:[#allocation2] sm:$0xff]
  %v1116 = vld [vmem:[#allocation2 + $0x8] sm:$0xff]
  %v1117 = vld [vmem:[#allocation2 + $0x10] sm:$0xff]
  %v1118 = vld [vmem:[#allocation2 + $0x18] sm:$0xff]
  %v1119 = vld [vmem:[#allocation2 + $0x20] sm:$0xff]
  %v1120 = vld [vmem:[#allocation2 + $0x28] sm:$0xff]
  %v1121 = vld [vmem:[#allocation2 + $0x30] sm:$0xff]
  %v1122 = vld [vmem:[#allocation2 + $0x38] sm:$0xff]
  %v1123 = vld [vmem:[#allocation2 + $0x40] sm:$0xff]
  %v1124 = vld [vmem:[#allocation2 + $0x48] sm:$0xff]
  %v1125 = vld [vmem:[#allocation2 + $0x50] sm:$0xff]
  %v1126 = vld [vmem:[#allocation2 + $0x58] sm:$0xff]
  %v1127 = vld [vmem:[#allocation2 + $0x60] sm:$0xff]
  %v1128 = vld [vmem:[#allocation2 + $0x68] sm:$0xff]
  %v1129 = vld [vmem:[#allocation2 + $0x70] sm:$0xff]
  %v1130 = vld [vmem:[#allocation2 + $0x78] sm:$0xff]
  %v1131 = vld [vmem:[#allocation2 + $0x80] sm:$0xff]
  %v1132 = vld [vmem:[#allocation2 + $0x88] sm:$0xff]
  %v1133 = vld [vmem:[#allocation2 + $0x90] sm:$0xff]
  %v1134 = vld [vmem:[#allocation2 + $0x98] sm:$0xff]
  %v1135 = vld [vmem:[#allocation2 + $0xa0] sm:$0xff]
  %v1136 = vld [vmem:[#allocation2 + $0xa8] sm:$0xff]
  %v1137 = vld [vmem:[#allocation2 + $0xb0] sm:$0xff]
  %v1138 = vld [vmem:[#allocation2 + $0xb8] sm:$0xff]
  %v1139 = vld [vmem:[#allocation2 + $0xc0] sm:$0xff]
  %v1140 = vld [vmem:[#allocation2 + $0xc8] sm:$0xff]
  %v1141 = vld [vmem:[#allocation2 + $0xd0] sm:$0xff]
  %v1142 = vld [vmem:[#allocation2 + $0xd8] sm:$0xff]
  %v1143 = vld [vmem:[#allocation2 + $0xe0] sm:$0xff]
  %v1144 = vld [vmem:[#allocation2 + $0xe8] sm:$0xff]
  %v1145 = vld [vmem:[#allocation2 + $0xf0] sm:$0xff]
  %v1146 = vld [vmem:[#allocation2 + $0xf8] sm:$0xff]
  %v1147 = vld [vmem:[#allocation2 + $0x100] sm:$0xff]
  %v1148 = vld [vmem:[#allocation2 + $0x108] sm:$0xff]
  %v1149 = vld [vmem:[#allocation2 + $0x110] sm:$0xff]
  %v1150 = vld [vmem:[#allocation2 + $0x118] sm:$0xff]
  %v1151 = vld [vmem:[#allocation2 + $0x120] sm:$0xff]
  %v1152 = vld [vmem:[#allocation2 + $0x128] sm:$0xff]
  %v1153 = vld [vmem:[#allocation2 + $0x130] sm:$0xff]
  %v1154 = vld [vmem:[#allocation2 + $0x138] sm:$0xff]
  %v1155 = vld [vmem:[#allocation2 + $0x140] sm:$0xff]
  %v1156 = vld [vmem:[#allocation2 + $0x148] sm:$0xff]
  %v1157 = vld [vmem:[#allocation2 + $0x150] sm:$0xff]
  %v1158 = vld [vmem:[#allocation2 + $0x158] sm:$0xff]
  %v1159 = vld [vmem:[#allocation2 + $0x160] sm:$0xff]
  %v1160 = vld [vmem:[#allocation2 + $0x168] sm:$0xff]
  %v1161 = vld [vmem:[#allocation2 + $0x170] sm:$0xff]
  %v1162 = vld [vmem:[#allocation2 + $0x178] sm:$0xff]
  %v1163 = vld [vmem:[#allocation2 + $0x180] sm:$0xff]
  %v1164 = vld [vmem:[#allocation2 + $0x188] sm:$0xff]
  %v1165 = vld [vmem:[#allocation2 + $0x190] sm:$0xff]
  %v1166 = vld [vmem:[#allocation2 + $0x198] sm:$0xff]
  %v1167 = vld [vmem:[#allocation2 + $0x1a0] sm:$0xff]
  %v1168 = vld [vmem:[#allocation2 + $0x1a8] sm:$0xff]
  %v1169 = vld [vmem:[#allocation2 + $0x1b0] sm:$0xff]
  %v1170 = vld [vmem:[#allocation2 + $0x1b8] sm:$0xff]
  %v1171 = vld [vmem:[#allocation2 + $0x1c0] sm:$0xff]
  %v1172 = vld [vmem:[#allocation2 + $0x1c8] sm:$0xff]
  %v1173 = vld [vmem:[#allocation2 + $0x1d0] sm:$0xff]
  %v1174 = vld [vmem:[#allocation2 + $0x1d8] sm:$0xff]
  %v1175 = vld [vmem:[#allocation2 + $0x1e0] sm:$0xff]
  %v1176 = vld [vmem:[#allocation2 + $0x1e8] sm:$0xff]
  %v1177 = vld [vmem:[#allocation2 + $0x1f0] sm:$0xff]
  %v1178 = vld [vmem:[#allocation2 + $0x1f8] sm:$0xff]
  %v1179 = vadd.f32 %v1115, %v1116
  %v1180 = vadd.f32 %v1179, %v1117
  %v1181 = vadd.f32 %v1180, %v1118
  %v1182 = vadd.f32 %v1181, %v1119
  %v1183 = vadd.f32 %v1182, %v1120
  %v1184 = vadd.f32 %v1183, %v1121
  %v1185 = vadd.f32 %v1184, %v1122
  %v1186 = vadd.f32 %v1185, %v1123
  %v1187 = vadd.f32 %v1186, %v1124
  %v1188 = vadd.f32 %v1187, %v1125
  %v1189 = vadd.f32 %v1188, %v1126
  %v1190 = vadd.f32 %v1189, %v1127
  %v1191 = vadd.f32 %v1190, %v1128
  %v1192 = vadd.f32 %v1191, %v1129
  %v1193 = vadd.f32 %v1192, %v1130
  %v1194 = vadd.f32 %v1193, %v1131
  %v1195 = vadd.f32 %v1194, %v1132
  %v1196 = vadd.f32 %v1195, %v1133
  %v1197 = vadd.f32 %v1196, %v1134
  %v1198 = vadd.f32 %v1197, %v1135
  %v1199 = vadd.f32 %v1198, %v1136
  %v1200 = vadd.f32 %v1199, %v1137
  %v1201 = vadd.f32 %v1200, %v1138
  %v1202 = vadd.f32 %v1201, %v1139
  %v1203 = vadd.f32 %v1202, %v1140
  %v1204 = vadd.f32 %v1203, %v1141
  %v1205 = vadd.f32 %v1204, %v1142
  %v1206 = vadd.f32 %v1205, %v1143
  %v1207 = vadd.f32 %v1206, %v1144
  %v1208 = vadd.f32 %v1207, %v1145
  %v1209 = vadd.f32 %v1208, %v1146
  %v1210 = vadd.f32 %v1209, %v1147
  %v1211 = vadd.f32 %v1210, %v1148
  %v1212 = vadd.f32 %v1211, %v1149
  %v1213 = vadd.f32 %v1212, %v1150
  %v1214 = vadd.f32 %v1213, %v1151
  %v1215 = vadd.f32 %v1214, %v1152
  %v1216 = vadd.f32 %v1215, %v1153
  %v1217 = vadd.f32 %v1216, %v1154
  %v1218 = vadd.f32 %v1217, %v1155
  %v1219 = vadd.f32 %v1218, %v1156
  %v1220 = vadd.f32 %v1219, %v1157
  %v1221 = vadd.f32 %v1220, %v1158
  %v1222 = vadd.f32 %v1221, %v1159
  %v1223 = vadd.f32 %v1222, %v1160
  %v1224 = vadd.f32 %v1223, %v1161
  %v1225 = vadd.f32 %v1224, %v1162
  %v1226 = vadd.f32 %v1225, %v1163
  %v1227 = vadd.f32 %v1226, %v1164
  %v1228 = vadd.f32 %v1227, %v1165
  %v1229 = vadd.f32 %v1228, %v1166
  %v1230 = vadd.f32 %v1229, %v1167
  %v1231 = vadd.f32 %v1230, %v1168
  %v1232 = vadd.f32 %v1231, %v1169
  %v1233 = vadd.f32 %v1232, %v1170
  %v1234 = vadd.f32 %v1233, %v1171
  %v1235 = vadd.f32 %v1234, %v1172
  %v1236 = vadd.f32 %v1235, %v1173
  %v1237 = vadd.f32 %v1236, %v1174
  %v1238 = vadd.f32 %v1237, %v1175
  %v1239 = vadd.f32 %v1238, %v1176
  %v1240 = vadd.f32 %v1239, %v1177
  %v1241 = vadd.f32 %v1240, %v1178
  %v1242 = vrot.slane %v1241, 4
  %v1243 = vadd.f32 %v1241, %v1242
  %v1244 = vrot.slane %v1243, 2
  %v1245 = vadd.f32 %v1243, %v1244
  %v1246 = vrot.slane %v1245, 1
  %v1247 = vadd.f32 %v1245, %v1246
  %vm1248 = vcmp.eq.s32.totalorder %v1114, 0
  %v1249 = vsel %vm1248, %v1247, 0.0
  %1250 = vst [vmem:[%s3] sm:$0xff] %v1249
  %v1251 = vld [vmem:[#allocation2] sm:$0xff]
  %v1252 = vld [vmem:[#allocation2 + $0x8] sm:$0xff]
  %v1253 = vld [vmem:[#allocation2 + $0x10] sm:$0xff]
  %v1254 = vld [vmem:[#allocation2 + $0x18] sm:$0xff]
  %v1255 = vld [vmem:[#allocation2 + $0x20] sm:$0xff]
  %v1256 = vld [vmem:[#allocation2 + $0x28] sm:$0xff]
  %v1257 = vld [vmem:[#allocation2 + $0x30] sm:$0xff]
  %v1258 = vld [vmem:[#allocation2 + $0x38] sm:$0xff]
  %v1259 = vld [vmem:[#allocation2 + $0x40] sm:$0xff]
  %v1260 = vld [vmem:[#allocation2 + $0x48] sm:$0xff]
  %v1261 = vld [vmem:[#allocation2 + $0x50] sm:$0xff]
  %v1262 = vld [vmem:[#allocation2 + $0x58] sm:$0xff]
  %v1263 = vld [vmem:[#allocation2 + $0x60] sm:$0xff]
  %v1264 = vld [vmem:[#allocation2 + $0x68] sm:$0xff]
  %v1265 = vld [vmem:[#allocation2 + $0x70] sm:$0xff]
  %v1266 = vld [vmem:[#allocation2 + $0x78] sm:$0xff]
  %v1267 = vld [vmem:[#allocation2 + $0x80] sm:$0xff]
  %v1268 = vld [vmem:[#allocation2 + $0x88] sm:$0xff]
  %v1269 = vld [vmem:[#allocation2 + $0x90] sm:$0xff]
  %v1270 = vld [vmem:[#allocation2 + $0x98] sm:$0xff]
  %v1271 = vld [vmem:[#allocation2 + $0xa0] sm:$0xff]
  %v1272 = vld [vmem:[#allocation2 + $0xa8] sm:$0xff]
  %v1273 = vld [vmem:[#allocation2 + $0xb0] sm:$0xff]
  %v1274 = vld [vmem:[#allocation2 + $0xb8] sm:$0xff]
  %v1275 = vld [vmem:[#allocation2 + $0xc0] sm:$0xff]
  %v1276 = vld [vmem:[#allocation2 + $0xc8] sm:$0xff]
  %v1277 = vld [vmem:[#allocation2 + $0xd0] sm:$0xff]
  %v1278 = vld [vmem:[#allocation2 + $0xd8] sm:$0xff]
  %v1279 = vld [vmem:[#allocation2 + $0xe0] sm:$0xff]
  %v1280 = vld [vmem:[#allocation2 + $0xe8] sm:$0xff]
  %v1281 = vld [vmem:[#allocation2 + $0xf0] sm:$0xff]
  %v1282 = vld [vmem:[#allocation2 + $0xf8] sm:$0xff]
  %v1283 = vld [vmem:[#allocation2 + $0x100] sm:$0xff]
  %v1284 = vld [vmem:[#allocation2 + $0x108] sm:$0xff]
  %v1285 = vld [vmem:[#allocation2 + $0x110] sm:$0xff]
  %v1286 = vld [vmem:[#allocation2 + $0x118] sm:$0xff]
  %v1287 = vld [vmem:[#allocation2 + $0x120] sm:$0xff]
  %v1288 = vld [vmem:[#allocation2 + $0x128] sm:$0xff]
  %v1289 = vld [vmem:[#allocation2 + $0x130] sm:$0xff]
  %v1290 = vld [vmem:[#allocation2 + $0x138] sm:$0xff]
  %v1291 = vld [vmem:[#allocation2 + $0x140] sm:$0xff]
  %v1292 = vld [vmem:[#allocation2 + $0x148] sm:$0xff]
  %v1293 = vld [vmem:[#allocation2 + $0x150] sm:$0xff]
  %v1294 = vld [vmem:[#allocation2 + $0x158] sm:$0xff]
  %v1295 = vld [vmem:[#allocation2 + $0x160] sm:$0xff]
  %v1296 = vld [vmem:[#allocation2 + $0x168] sm:$0xff]
  %v1297 = vld [vmem:[#allocation2 + $0x170] sm:$0xff]
  %v1298 = vld [vmem:[#allocation2 + $0x178] sm:$0xff]
  %v1299 = vld [vmem:[#allocation2 + $0x180] sm:$0xff]
  %v1300 = vld [vmem:[#allocation2 + $0x188] sm:$0xff]
  %v1301 = vld [vmem:[#allocation2 + $0x190] sm:$0xff]
  %v1302 = vld [vmem:[#allocation2 + $0x198] sm:$0xff]
  %v1303 = vld [vmem:[#allocation2 + $0x1a0] sm:$0xff]
  %v1304 = vld [vmem:[#allocation2 + $0x1a8] sm:$0xff]
  %v1305 = vld [vmem:[#allocation2 + $0x1b0] sm:$0xff]
  %v1306 = vld [vmem:[#allocation2 + $0x1b8] sm:$0xff]
  %v1307 = vld [vmem:[#allocation2 + $0x1c0] sm:$0xff]
  %v1308 = vld [vmem:[#allocation2 + $0x1c8] sm:$0xff]
  %v1309 = vld [vmem:[#allocation2 + $0x1d0] sm:$0xff]
  %v1310 = vld [vmem:[#allocation2 + $0x1d8] sm:$0xff]
  %v1311 = vld [vmem:[#allocation2 + $0x1e0] sm:$0xff]
  %v1312 = vld [vmem:[#allocation2 + $0x1e8] sm:$0xff]
  %v1313 = vld [vmem:[#allocation2 + $0x1f0] sm:$0xff]
  %v1314 = vld [vmem:[#allocation2 + $0x1f8] sm:$0xff]
  %v1315 = vmul.f32 %v1251, %v1251
  %v1316 = vmul.f32 %v1252, %v1252
  %v1317 = vmul.f32 %v1253, %v1253
  %v1318 = vmul.f32 %v1254, %v1254
  %v1319 = vmul.f32 %v1255, %v1255
  %v1320 = vmul.f32 %v1256, %v1256
  %v1321 = vmul.f32 %v1257, %v1257
  %v1322 = vmul.f32 %v1258, %v1258
  %v1323 = vmul.f32 %v1259, %v1259
  %v1324 = vmul.f32 %v1260, %v1260
  %v1325 = vmul.f32 %v1261, %v1261
  %v1326 = vmul.f32 %v1262, %v1262
  %v1327 = vmul.f32 %v1263, %v1263
  %v1328 = vmul.f32 %v1264, %v1264
  %v1329 = vmul.f32 %v1265, %v1265
  %v1330 = vmul.f32 %v1266, %v1266
  %v1331 = vmul.f32 %v1267, %v1267
  %v1332 = vmul.f32 %v1268, %v1268
  %v1333 = vmul.f32 %v1269, %v1269
  %v1334 = vmul.f32 %v1270, %v1270
  %v1335 = vmul.f32 %v1271, %v1271
  %v1336 = vmul.f32 %v1272, %v1272
  %v1337 = vmul.f32 %v1273, %v1273
  %v1338 = vmul.f32 %v1274, %v1274
  %v1339 = vmul.f32 %v1275, %v1275
  %v1340 = vmul.f32 %v1276, %v1276
  %v1341 = vmul.f32 %v1277, %v1277
  %v1342 = vmul.f32 %v1278, %v1278
  %v1343 = vmul.f32 %v1279, %v1279
  %v1344 = vmul.f32 %v1280, %v1280
  %v1345 = vmul.f32 %v1281, %v1281
  %v1346 = vmul.f32 %v1282, %v1282
  %v1347 = vmul.f32 %v1283, %v1283
  %v1348 = vmul.f32 %v1284, %v1284
  %v1349 = vmul.f32 %v1285, %v1285
  %v1350 = vmul.f32 %v1286, %v1286
  %v1351 = vmul.f32 %v1287, %v1287
  %v1352 = vmul.f32 %v1288, %v1288
  %v1353 = vmul.f32 %v1289, %v1289
  %v1354 = vmul.f32 %v1290, %v1290
  %v1355 = vmul.f32 %v1291, %v1291
  %v1356 = vmul.f32 %v1292, %v1292
  %v1357 = vmul.f32 %v1293, %v1293
  %v1358 = vmul.f32 %v1294, %v1294
  %v1359 = vmul.f32 %v1295, %v1295
  %v1360 = vmul.f32 %v1296, %v1296
  %v1361 = vmul.f32 %v1297, %v1297
  %v1362 = vmul.f32 %v1298, %v1298
  %v1363 = vmul.f32 %v1299, %v1299
  %v1364 = vmul.f32 %v1300, %v1300
  %v1365 = vmul.f32 %v1301, %v1301
  %v1366 = vmul.f32 %v1302, %v1302
  %v1367 = vmul.f32 %v1303, %v1303
  %v1368 = vmul.f32 %v1304, %v1304
  %v1369 = vmul.f32 %v1305, %v1305
  %v1370 = vmul.f32 %v1306, %v1306
  %v1371 = vmul.f32 %v1307, %v1307
  %v1372 = vmul.f32 %v1308, %v1308
  %v1373 = vmul.f32 %v1309, %v1309
  %v1374 = vmul.f32 %v1310, %v1310
  %v1375 = vmul.f32 %v1311, %v1311
  %v1376 = vmul.f32 %v1312, %v1312
  %v1377 = vmul.f32 %v1313, %v1313
  %v1378 = vmul.f32 %v1314, %v1314
  %v1379 = vadd.f32 %v1315, %v1316
  %v1380 = vadd.f32 %v1379, %v1317
  %v1381 = vadd.f32 %v1380, %v1318
  %v1382 = vadd.f32 %v1381, %v1319
  %v1383 = vadd.f32 %v1382, %v1320
  %v1384 = vadd.f32 %v1383, %v1321
  %v1385 = vadd.f32 %v1384, %v1322
  %v1386 = vadd.f32 %v1385, %v1323
  %v1387 = vadd.f32 %v1386, %v1324
  %v1388 = vadd.f32 %v1387, %v1325
  %v1389 = vadd.f32 %v1388, %v1326
  %v1390 = vadd.f32 %v1389, %v1327
  %v1391 = vadd.f32 %v1390, %v1328
  %v1392 = vadd.f32 %v1391, %v1329
  %v1393 = vadd.f32 %v1392, %v1330
  %v1394 = vadd.f32 %v1393, %v1331
  %v1395 = vadd.f32 %v1394, %v1332
  %v1396 = vadd.f32 %v1395, %v1333
  %v1397 = vadd.f32 %v1396, %v1334
  %v1398 = vadd.f32 %v1397, %v1335
  %v1399 = vadd.f32 %v1398, %v1336
  %v1400 = vadd.f32 %v1399, %v1337
  %v1401 = vadd.f32 %v1400, %v1338
  %v1402 = vadd.f32 %v1401, %v1339
  %v1403 = vadd.f32 %v1402, %v1340
  %v1404 = vadd.f32 %v1403, %v1341
  %v1405 = vadd.f32 %v1404, %v1342
  %v1406 = vadd.f32 %v1405, %v1343
  %v1407 = vadd.f32 %v1406, %v1344
  %v1408 = vadd.f32 %v1407, %v1345
  %v1409 = vadd.f32 %v1408, %v1346
  %v1410 = vadd.f32 %v1409, %v1347
  %v1411 = vadd.f32 %v1410, %v1348
  %v1412 = vadd.f32 %v1411, %v1349
  %v1413 = vadd.f32 %v1412, %v1350
  %v1414 = vadd.f32 %v1413, %v1351
  %v1415 = vadd.f32 %v1414, %v1352
  %v1416 = vadd.f32 %v1415, %v1353
  %v1417 = vadd.f32 %v1416, %v1354
  %v1418 = vadd.f32 %v1417, %v1355
  %v1419 = vadd.f32 %v1418, %v1356
  %v1420 = vadd.f32 %v1419, %v1357
  %v1421 = vadd.f32 %v1420, %v1358
  %v1422 = vadd.f32 %v1421, %v1359
  %v1423 = vadd.f32 %v1422, %v1360
  %v1424 = vadd.f32 %v1423, %v1361
  %v1425 = vadd.f32 %v1424, %v1362
  %v1426 = vadd.f32 %v1425, %v1363
  %v1427 = vadd.f32 %v1426, %v1364
  %v1428 = vadd.f32 %v1427, %v1365
  %v1429 = vadd.f32 %v1428, %v1366
  %v1430 = vadd.f32 %v1429, %v1367
  %v1431 = vadd.f32 %v1430, %v1368
  %v1432 = vadd.f32 %v1431, %v1369
  %v1433 = vadd.f32 %v1432, %v1370
  %v1434 = vadd.f32 %v1433, %v1371
  %v1435 = vadd.f32 %v1434, %v1372
  %v1436 = vadd.f32 %v1435, %v1373
  %v1437 = vadd.f32 %v1436, %v1374
  %v1438 = vadd.f32 %v1437, %v1375
  %v1439 = vadd.f32 %v1438, %v1376
  %v1440 = vadd.f32 %v1439, %v1377
  %v1441 = vadd.f32 %v1440, %v1378
  %v1442 = vrot.slane %v1441, 4
  %v1443 = vadd.f32 %v1441, %v1442
  %v1444 = vrot.slane %v1443, 2
  %v1445 = vadd.f32 %v1443, %v1444
  %v1446 = vrot.slane %v1445, 1
  %v1447 = vadd.f32 %v1445, %v1446
  %v1448 = vsel %vm1248, %v1447, 0.0
  %1449 = vst [vmem:[%s4] sm:$0xff] %v1448
  // Predicated region
  $region10: #{residual_conv_block.6} parent=0 // pred_check
    _
  $region11: #{residual_conv_block.6} parent=0 // pred_check_branch
    %1451 = sbr.rel (0) target = $region13
  $region12: #{residual_conv_block.6} parent=0 // pred_region
    _
  $region13: #{residual_conv_block.6} parent=0 // pred_fallthru
    _
  // Predicated region
  $region14: #{residual_conv_block.6} parent=0 // pred_check
    _
  $region15: #{residual_conv_block.6} parent=0 // pred_check_branch
    %1453 = sbr.rel (0) target = $region17
  $region16: #{residual_conv_block.6} parent=0 // pred_region
    _
  $region17: #{residual_conv_block.6} parent=0 // pred_fallthru
    _
  // Predicated region
  $region18: #{residual_conv_block.6} parent=0 // pred_check
    _
  $region19: #{residual_conv_block.6} parent=0 // pred_check_branch
    %1455 = sbr.rel (0) target = $region21
  $region20: #{residual_conv_block.6} parent=0 // pred_region
    _
  $region21: #{residual_conv_block.6} parent=0 // pred_fallthru
    _
  // Predicated region
  $region22: #{residual_conv_block.6} parent=0 // pred_check
    _
  $region23: #{residual_conv_block.6} parent=0 // pred_check_branch
    %1457 = sbr.rel (0) target = $region25
  $region24: #{residual_conv_block.6} parent=0 // pred_region
    _
  $region25: #{residual_conv_block.6} parent=0 // pred_fallthru
    _
  // Predicated region
  $region26: #{residual_conv_block.6} parent=0 // pred_check
    _
  $region27: #{residual_conv_block.6} parent=0 // pred_check_branch
    %1459 = sbr.rel (0) target = $region29
  $region28: #{residual_conv_block.6} parent=0 // pred_region
    _
  $region29: #{residual_conv_block.6} parent=0 // pred_fallthru
    _
  // Predicated region
  $region30: #{residual_conv_block.6} parent=0 // pred_check
    _
  $region31: #{residual_conv_block.6} parent=0 // pred_check_branch
    %1461 = sbr.rel (0) target = $region33
  $region32: #{residual_conv_block.6} parent=0 // pred_region
    _
  $region33: #{residual_conv_block.6} parent=0 // pred_fallthru
    _

// kernel: residual_conv_block.7
$region0: #{residual_conv_block.7}
  #allocation0 [shape = 'u32[]', space=smem, size = 0x4, offset = 0x4, fixed_abs, tag = 'smem constant byte address 0x4 - core index']
  #allocation1 [shape = 'u32[144,128]{1,0:T(1,128)}', space=vmem, size = 0x12000, scoped, tag = 'internal scratch']
  %s0 = inlined_call_operand.vmem [shape: bf16[512,128], index: 0, kind: input, shape index: {}]
  %s1 = inlined_call_operand.vmem [shape: f32[1,128], index: 1, kind: input, shape index: {}]
  %s2 = inlined_call_operand.vmem [shape: f32[1,128], index: 2, kind: input, shape index: {}]
  %s3 = inlined_call_operand.vmem [shape: bf16[512,128], index: 3, kind: input, shape index: {}]
  %s4 = inlined_call_operand.vmem [shape: bf16[512,128], index: 4, kind: output, shape index: {}]
  %s5 = sld [smem:[#allocation0]]
  $region26: #{residual_conv_block.7} parent=0
    _
  %s7 = ssub.s32 1, %s5
  %s8 = scalar_select 0, %s7, %s5
  // Predicated region
  $region2: #{residual_conv_block.7} parent=0 // pred_check
    _
  $region3: #{residual_conv_block.7} parent=0 // pred_check_branch
    %10 = sbr.rel (0) target = $region5
  $region4: #{residual_conv_block.7} parent=0 // pred_region
    _
  $region5: #{residual_conv_block.7} parent=0 // pred_fallthru
    _
  // Predicated region
  $region6: #{residual_conv_block.7} parent=0 // pred_check
    _
  $region7: #{residual_conv_block.7} parent=0 // pred_check_branch
    %12 = sbr.rel (0) target = $region9
  $region8: #{residual_conv_block.7} parent=0 // pred_region
    _
  $region9: #{residual_conv_block.7} parent=0 // pred_fallthru
    _
  // Predicated region
  $region10: #{residual_conv_block.7} parent=0 // pred_check
    _
  $region11: #{residual_conv_block.7} parent=0 // pred_check_branch
    %14 = sbr.rel (0) target = $region13
  $region12: #{residual_conv_block.7} parent=0 // pred_region
    _
  $region13: #{residual_conv_block.7} parent=0 // pred_fallthru
    _
  // Predicated region
  $region14: #{residual_conv_block.7} parent=0 // pred_check
    _
  $region15: #{residual_conv_block.7} parent=0 // pred_check_branch
    %16 = sbr.rel (0) target = $region17
  $region16: #{residual_conv_block.7} parent=0 // pred_region
    _
  $region17: #{residual_conv_block.7} parent=0 // pred_fallthru
    _
  %v17 = vld [vmem:[%s0] sm:$0xf]
  %v18 = vld [vmem:[%s0 + $0x4] sm:$0xf]
  %v19 = vld [vmem:[%s0 + $0x8] sm:$0xf]
  %v20 = vld [vmem:[%s0 + $0xc] sm:$0xf]
  %v21 = vld [vmem:[%s0 + $0x10] sm:$0xf]
  %v22 = vld [vmem:[%s0 + $0x14] sm:$0xf]
  %v23 = vld [vmem:[%s0 + $0x18] sm:$0xf]
  %v24 = vld [vmem:[%s0 + $0x1c] sm:$0xf]
  %v25 = vld [vmem:[%s0 + $0x20] sm:$0xf]
  %v26 = vld [vmem:[%s0 + $0x24] sm:$0xf]
  %v27 = vld [vmem:[%s0 + $0x28] sm:$0xf]
  %v28 = vld [vmem:[%s0 + $0x2c] sm:$0xf]
  %v29 = vld [vmem:[%s0 + $0x30] sm:$0xf]
  %v30 = vld [vmem:[%s0 + $0x34] sm:$0xf]
  %v31 = vld [vmem:[%s0 + $0x38] sm:$0xf]
  %v32 = vld [vmem:[%s0 + $0x3c] sm:$0xf]
  %v33 = vld [vmem:[%s0 + $0x40] sm:$0xf]
  %v34 = vld [vmem:[%s0 + $0x44] sm:$0xf]
  %v35 = vld [vmem:[%s0 + $0x48] sm:$0xf]
  %v36 = vld [vmem:[%s0 + $0x4c] sm:$0xf]
  %v37 = vld [vmem:[%s0 + $0x50] sm:$0xf]
  %v38 = vld [vmem:[%s0 + $0x54] sm:$0xf]
  %v39 = vld [vmem:[%s0 + $0x58] sm:$0xf]
  %v40 = vld [vmem:[%s0 + $0x5c] sm:$0xf]
  %v41 = vld [vmem:[%s0 + $0x60] sm:$0xf]
  %v42 = vld [vmem:[%s0 + $0x64] sm:$0xf]
  %v43 = vld [vmem:[%s0 + $0x68] sm:$0xf]
  %v44 = vld [vmem:[%s0 + $0x6c] sm:$0xf]
  %v45 = vld [vmem:[%s0 + $0x70] sm:$0xf]
  %v46 = vld [vmem:[%s0 + $0x74] sm:$0xf]
  %v47 = vld [vmem:[%s0 + $0x78] sm:$0xf]
  %v48 = vld [vmem:[%s0 + $0x7c] sm:$0xf]
  %v49 = vld [vmem:[%s0 + $0x80] sm:$0xf]
  %v50 = vld [vmem:[%s0 + $0x84] sm:$0xf]
  %v51 = vld [vmem:[%s0 + $0x88] sm:$0xf]
  %v52 = vld [vmem:[%s0 + $0x8c] sm:$0xf]
  %v53 = vld [vmem:[%s0 + $0x90] sm:$0xf]
  %v54 = vld [vmem:[%s0 + $0x94] sm:$0xf]
  %v55 = vld [vmem:[%s0 + $0x98] sm:$0xf]
  %v56 = vld [vmem:[%s0 + $0x9c] sm:$0xf]
  %v57 = vld [vmem:[%s0 + $0xa0] sm:$0xf]
  %v58 = vld [vmem:[%s0 + $0xa4] sm:$0xf]
  %v59 = vld [vmem:[%s0 + $0xa8] sm:$0xf]
  %v60 = vld [vmem:[%s0 + $0xac] sm:$0xf]
  %v61 = vld [vmem:[%s0 + $0xb0] sm:$0xf]
  %v62 = vld [vmem:[%s0 + $0xb4] sm:$0xf]
  %v63 = vld [vmem:[%s0 + $0xb8] sm:$0xf]
  %v64 = vld [vmem:[%s0 + $0xbc] sm:$0xf]
  %v65 = vld [vmem:[%s0 + $0xc0] sm:$0xf]
  %v66 = vld [vmem:[%s0 + $0xc4] sm:$0xf]
  %v67 = vld [vmem:[%s0 + $0xc8] sm:$0xf]
  %v68 = vld [vmem:[%s0 + $0xcc] sm:$0xf]
  %v69 = vld [vmem:[%s0 + $0xd0] sm:$0xf]
  %v70 = vld [vmem:[%s0 + $0xd4] sm:$0xf]
  %v71 = vld [vmem:[%s0 + $0xd8] sm:$0xf]
  %v72 = vld [vmem:[%s0 + $0xdc] sm:$0xf]
  %v73 = vld [vmem:[%s0 + $0xe0] sm:$0xf]
  %v74 = vld [vmem:[%s0 + $0xe4] sm:$0xf]
  %v75 = vld [vmem:[%s0 + $0xe8] sm:$0xf]
  %v76 = vld [vmem:[%s0 + $0xec] sm:$0xf]
  %v77 = vld [vmem:[%s0 + $0xf0] sm:$0xf]
  %v78 = vld [vmem:[%s0 + $0xf4] sm:$0xf]
  %v79 = vld [vmem:[%s0 + $0xf8] sm:$0xf]
  %v80 = vld [vmem:[%s0 + $0xfc] sm:$0xf]
  %v81 = vunpack.c.l.bf16 %v17
  %v82 = vunpack.c.l.bf16 %v18
  %v83 = vunpack.c.l.bf16 %v19
  %v84 = vunpack.c.l.bf16 %v20
  %v85 = vunpack.c.l.bf16 %v21
  %v86 = vunpack.c.l.bf16 %v22
  %v87 = vunpack.c.l.bf16 %v23
  %v88 = vunpack.c.l.bf16 %v24
  %v89 = vunpack.c.l.bf16 %v25
  %v90 = vunpack.c.l.bf16 %v26
  %v91 = vunpack.c.l.bf16 %v27
  %v92 = vunpack.c.l.bf16 %v28
  %v93 = vunpack.c.l.bf16 %v29
  %v94 = vunpack.c.l.bf16 %v30
  %v95 = vunpack.c.l.bf16 %v31
  %v96 = vunpack.c.l.bf16 %v32
  %v97 = vunpack.c.l.bf16 %v33
  %v98 = vunpack.c.l.bf16 %v34
  %v99 = vunpack.c.l.bf16 %v35
  %v100 = vunpack.c.l.bf16 %v36
  %v101 = vunpack.c.l.bf16 %v37
  %v102 = vunpack.c.l.bf16 %v38
  %v103 = vunpack.c.l.bf16 %v39
  %v104 = vunpack.c.l.bf16 %v40
  %v105 = vunpack.c.l.bf16 %v41
  %v106 = vunpack.c.l.bf16 %v42
  %v107 = vunpack.c.l.bf16 %v43
  %v108 = vunpack.c.l.bf16 %v44
  %v109 = vunpack.c.l.bf16 %v45
  %v110 = vunpack.c.l.bf16 %v46
  %v111 = vunpack.c.l.bf16 %v47
  %v112 = vunpack.c.l.bf16 %v48
  %v113 = vunpack.c.l.bf16 %v49
  %v114 = vunpack.c.l.bf16 %v50
  %v115 = vunpack.c.l.bf16 %v51
  %v116 = vunpack.c.l.bf16 %v52
  %v117 = vunpack.c.l.bf16 %v53
  %v118 = vunpack.c.l.bf16 %v54
  %v119 = vunpack.c.l.bf16 %v55
  %v120 = vunpack.c.l.bf16 %v56
  %v121 = vunpack.c.l.bf16 %v57
  %v122 = vunpack.c.l.bf16 %v58
  %v123 = vunpack.c.l.bf16 %v59
  %v124 = vunpack.c.l.bf16 %v60
  %v125 = vunpack.c.l.bf16 %v61
  %v126 = vunpack.c.l.bf16 %v62
  %v127 = vunpack.c.l.bf16 %v63
  %v128 = vunpack.c.l.bf16 %v64
  %v129 = vunpack.c.l.bf16 %v65
  %v130 = vunpack.c.l.bf16 %v66
  %v131 = vunpack.c.l.bf16 %v67
  %v132 = vunpack.c.l.bf16 %v68
  %v133 = vunpack.c.l.bf16 %v69
  %v134 = vunpack.c.l.bf16 %v70
  %v135 = vunpack.c.l.bf16 %v71
  %v136 = vunpack.c.l.bf16 %v72
  %v137 = vunpack.c.l.bf16 %v73
  %v138 = vunpack.c.l.bf16 %v74
  %v139 = vunpack.c.l.bf16 %v75
  %v140 = vunpack.c.l.bf16 %v76
  %v141 = vunpack.c.l.bf16 %v77
  %v142 = vunpack.c.l.bf16 %v78
  %v143 = vunpack.c.l.bf16 %v79
  %v144 = vunpack.c.l.bf16 %v80
  %v145 = vld [vmem:[%s1] sm:$0x1]
  %v147 = vlaneseq
  %v148 = vshrl.u32 %v147, 7
  %v149 = vsub.s32 0, %v148
  %v150 = vrot.slane %v145, %v149
  %v152 = vmul.f32 %v81, %v150
  %v153 = vmul.f32 %v82, %v150
  %v154 = vmul.f32 %v83, %v150
  %v155 = vmul.f32 %v84, %v150
  %v156 = vmul.f32 %v85, %v150
  %v157 = vmul.f32 %v86, %v150
  %v158 = vmul.f32 %v87, %v150
  %v159 = vmul.f32 %v88, %v150
  %v160 = vmul.f32 %v89, %v150
  %v161 = vmul.f32 %v90, %v150
  %v162 = vmul.f32 %v91, %v150
  %v163 = vmul.f32 %v92, %v150
  %v164 = vmul.f32 %v93, %v150
  %v165 = vmul.f32 %v94, %v150
  %v166 = vmul.f32 %v95, %v150
  %v167 = vmul.f32 %v96, %v150
  %v168 = vmul.f32 %v97, %v150
  %v169 = vmul.f32 %v98, %v150
  %v170 = vmul.f32 %v99, %v150
  %v171 = vmul.f32 %v100, %v150
  %v172 = vmul.f32 %v101, %v150
  %v173 = vmul.f32 %v102, %v150
  %v174 = vmul.f32 %v103, %v150
  %v175 = vmul.f32 %v104, %v150
  %v176 = vmul.f32 %v105, %v150
  %v177 = vmul.f32 %v106, %v150
  %v178 = vmul.f32 %v107, %v150
  %v179 = vmul.f32 %v108, %v150
  %v180 = vmul.f32 %v109, %v150
  %v181 = vmul.f32 %v110, %v150
  %v182 = vmul.f32 %v111, %v150
  %v183 = vmul.f32 %v112, %v150
  %v184 = vmul.f32 %v113, %v150
  %v185 = vmul.f32 %v114, %v150
  %v186 = vmul.f32 %v115, %v150
  %v187 = vmul.f32 %v116, %v150
  %v188 = vmul.f32 %v117, %v150
  %v189 = vmul.f32 %v118, %v150
  %v190 = vmul.f32 %v119, %v150
  %v191 = vmul.f32 %v120, %v150
  %v192 = vmul.f32 %v121, %v150
  %v193 = vmul.f32 %v122, %v150
  %v194 = vmul.f32 %v123, %v150
  %v195 = vmul.f32 %v124, %v150
  %v196 = vmul.f32 %v125, %v150
  %v197 = vmul.f32 %v126, %v150
  %v198 = vmul.f32 %v127, %v150
  %v199 = vmul.f32 %v128, %v150
  %v200 = vmul.f32 %v129, %v150
  %v201 = vmul.f32 %v130, %v150
  %v202 = vmul.f32 %v131, %v150
  %v203 = vmul.f32 %v132, %v150
  %v204 = vmul.f32 %v133, %v150
  %v205 = vmul.f32 %v134, %v150
  %v206 = vmul.f32 %v135, %v150
  %v207 = vmul.f32 %v136, %v150
  %v208 = vmul.f32 %v137, %v150
  %v209 = vmul.f32 %v138, %v150
  %v210 = vmul.f32 %v139, %v150
  %v211 = vmul.f32 %v140, %v150
  %v212 = vmul.f32 %v141, %v150
  %v213 = vmul.f32 %v142, %v150
  %v214 = vmul.f32 %v143, %v150
  %v215 = vmul.f32 %v144, %v150
  %v216 = vld [vmem:[%s2] sm:$0x1]
  %v218 = vlaneseq
  %v219 = vshrl.u32 %v218, 7
  %v220 = vsub.s32 0, %v219
  %v221 = vrot.slane %v216, %v220
  %v223 = vadd.f32 %v152, %v221
  %v224 = vadd.f32 %v153, %v221
  %v225 = vadd.f32 %v154, %v221
  %v226 = vadd.f32 %v155, %v221
  %v227 = vadd.f32 %v156, %v221
  %v228 = vadd.f32 %v157, %v221
  %v229 = vadd.f32 %v158, %v221
  %v230 = vadd.f32 %v159, %v221
  %v231 = vadd.f32 %v160, %v221
  %v232 = vadd.f32 %v161, %v221
  %v233 = vadd.f32 %v162, %v221
  %v234 = vadd.f32 %v163, %v221
  %v235 = vadd.f32 %v164, %v221
  %v236 = vadd.f32 %v165, %v221
  %v237 = vadd.f32 %v166, %v221
  %v238 = vadd.f32 %v167, %v221
  %v239 = vadd.f32 %v168, %v221
  %v240 = vadd.f32 %v169, %v221
  %v241 = vadd.f32 %v170, %v221
  %v242 = vadd.f32 %v171, %v221
  %v243 = vadd.f32 %v172, %v221
  %v244 = vadd.f32 %v173, %v221
  %v245 = vadd.f32 %v174, %v221
  %v246 = vadd.f32 %v175, %v221
  %v247 = vadd.f32 %v176, %v221
  %v248 = vadd.f32 %v177, %v221
  %v249 = vadd.f32 %v178, %v221
  %v250 = vadd.f32 %v179, %v221
  %v251 = vadd.f32 %v180, %v221
  %v252 = vadd.f32 %v181, %v221
  %v253 = vadd.f32 %v182, %v221
  %v254 = vadd.f32 %v183, %v221
  %v255 = vadd.f32 %v184, %v221
  %v256 = vadd.f32 %v185, %v221
  %v257 = vadd.f32 %v186, %v221
  %v258 = vadd.f32 %v187, %v221
  %v259 = vadd.f32 %v188, %v221
  %v260 = vadd.f32 %v189, %v221
  %v261 = vadd.f32 %v190, %v221
  %v262 = vadd.f32 %v191, %v221
  %v263 = vadd.f32 %v192, %v221
  %v264 = vadd.f32 %v193, %v221
  %v265 = vadd.f32 %v194, %v221
  %v266 = vadd.f32 %v195, %v221
  %v267 = vadd.f32 %v196, %v221
  %v268 = vadd.f32 %v197, %v221
  %v269 = vadd.f32 %v198, %v221
  %v270 = vadd.f32 %v199, %v221
  %v271 = vadd.f32 %v200, %v221
  %v272 = vadd.f32 %v201, %v221
  %v273 = vadd.f32 %v202, %v221
  %v274 = vadd.f32 %v203, %v221
  %v275 = vadd.f32 %v204, %v221
  %v276 = vadd.f32 %v205, %v221
  %v277 = vadd.f32 %v206, %v221
  %v278 = vadd.f32 %v207, %v221
  %v279 = vadd.f32 %v208, %v221
  %v280 = vadd.f32 %v209, %v221
  %v281 = vadd.f32 %v210, %v221
  %v282 = vadd.f32 %v211, %v221
  %v283 = vadd.f32 %v212, %v221
  %v284 = vadd.f32 %v213, %v221
  %v285 = vadd.f32 %v214, %v221
  %v286 = vadd.f32 %v215, %v221
  %v287 = vmul.f32 %v223, 0.5
  %v288 = vmul.f32 %v224, 0.5
  %v289 = vmul.f32 %v225, 0.5
  %v290 = vmul.f32 %v226, 0.5
  %v291 = vmul.f32 %v227, 0.5
  %v292 = vmul.f32 %v228, 0.5
  %v293 = vmul.f32 %v229, 0.5
  %v294 = vmul.f32 %v230, 0.5
  %v295 = vmul.f32 %v231, 0.5
  %v296 = vmul.f32 %v232, 0.5
  %v297 = vmul.f32 %v233, 0.5
  %v298 = vmul.f32 %v234, 0.5
  %v299 = vmul.f32 %v235, 0.5
  %v300 = vmul.f32 %v236, 0.5
  %v301 = vmul.f32 %v237, 0.5
  %v302 = vmul.f32 %v238, 0.5
  %v303 = vmul.f32 %v239, 0.5
  %v304 = vmul.f32 %v240, 0.5
  %v305 = vmul.f32 %v241, 0.5
  %v306 = vmul.f32 %v242, 0.5
  %v307 = vmul.f32 %v243, 0.5
  %v308 = vmul.f32 %v244, 0.5
  %v309 = vmul.f32 %v245, 0.5
  %v310 = vmul.f32 %v246, 0.5
  %v311 = vmul.f32 %v247, 0.5
  %v312 = vmul.f32 %v248, 0.5
  %v313 = vmul.f32 %v249, 0.5
  %v314 = vmul.f32 %v250, 0.5
  %v315 = vmul.f32 %v251, 0.5
  %v316 = vmul.f32 %v252, 0.5
  %v317 = vmul.f32 %v253, 0.5
  %v318 = vmul.f32 %v254, 0.5
  %v319 = vmul.f32 %v255, 0.5
  %v320 = vmul.f32 %v256, 0.5
  %v321 = vmul.f32 %v257, 0.5
  %v322 = vmul.f32 %v258, 0.5
  %v323 = vmul.f32 %v259, 0.5
  %v324 = vmul.f32 %v260, 0.5
  %v325 = vmul.f32 %v261, 0.5
  %v326 = vmul.f32 %v262, 0.5
  %v327 = vmul.f32 %v263, 0.5
  %v328 = vmul.f32 %v264, 0.5
  %v329 = vmul.f32 %v265, 0.5
  %v330 = vmul.f32 %v266, 0.5
  %v331 = vmul.f32 %v267, 0.5
  %v332 = vmul.f32 %v268, 0.5
  %v333 = vmul.f32 %v269, 0.5
  %v334 = vmul.f32 %v270, 0.5
  %v335 = vmul.f32 %v271, 0.5
  %v336 = vmul.f32 %v272, 0.5
  %v337 = vmul.f32 %v273, 0.5
  %v338 = vmul.f32 %v274, 0.5
  %v339 = vmul.f32 %v275, 0.5
  %v340 = vmul.f32 %v276, 0.5
  %v341 = vmul.f32 %v277, 0.5
  %v342 = vmul.f32 %v278, 0.5
  %v343 = vmul.f32 %v279, 0.5
  %v344 = vmul.f32 %v280, 0.5
  %v345 = vmul.f32 %v281, 0.5
  %v346 = vmul.f32 %v282, 0.5
  %v347 = vmul.f32 %v283, 0.5
  %v348 = vmul.f32 %v284, 0.5
  %v349 = vmul.f32 %v285, 0.5
  %v350 = vmul.f32 %v286, 0.5
  %v351 = vmul.f32 %v223, 0.70710677
  %v352 = vmul.f32 %v224, 0.70710677
  %v353 = vmul.f32 %v225, 0.70710677
  %v354 = vmul.f32 %v226, 0.70710677
  %v355 = vmul.f32 %v227, 0.70710677
  %v356 = vmul.f32 %v228, 0.70710677
  %v357 = vmul.f32 %v229, 0.70710677
  %v358 = vmul.f32 %v230, 0.70710677
  %v359 = vmul.f32 %v231, 0.70710677
  %v360 = vmul.f32 %v232, 0.70710677
  %v361 = vmul.f32 %v233, 0.70710677
  %v362 = vmul.f32 %v234, 0.70710677
  %v363 = vmul.f32 %v235, 0.70710677
  %v364 = vmul.f32 %v236, 0.70710677
  %v365 = vmul.f32 %v237, 0.70710677
  %v366 = vmul.f32 %v238, 0.70710677
  %v367 = vmul.f32 %v239, 0.70710677
  %v368 = vmul.f32 %v240, 0.70710677
  %v369 = vmul.f32 %v241, 0.70710677
  %v370 = vmul.f32 %v242, 0.70710677
  %v371 = vmul.f32 %v243, 0.70710677
  %v372 = vmul.f32 %v244, 0.70710677
  %v373 = vmul.f32 %v245, 0.70710677
  %v374 = vmul.f32 %v246, 0.70710677
  %v375 = vmul.f32 %v247, 0.70710677
  %v376 = vmul.f32 %v248, 0.70710677
  %v377 = vmul.f32 %v249, 0.70710677
  %v378 = vmul.f32 %v250, 0.70710677
  %v379 = vmul.f32 %v251, 0.70710677
  %v380 = vmul.f32 %v252, 0.70710677
  %v381 = vmul.f32 %v253, 0.70710677
  %v382 = vmul.f32 %v254, 0.70710677
  %v383 = vmul.f32 %v255, 0.70710677
  %v384 = vmul.f32 %v256, 0.70710677
  %v385 = vmul.f32 %v257, 0.70710677
  %v386 = vmul.f32 %v258, 0.70710677
  %v387 = vmul.f32 %v259, 0.70710677
  %v388 = vmul.f32 %v260, 0.70710677
  %v389 = vmul.f32 %v261, 0.70710677
  %v390 = vmul.f32 %v262, 0.70710677
  %v391 = vmul.f32 %v263, 0.70710677
  %v392 = vmul.f32 %v264, 0.70710677
  %v393 = vmul.f32 %v265, 0.70710677
  %v394 = vmul.f32 %v266, 0.70710677
  %v395 = vmul.f32 %v267, 0.70710677
  %v396 = vmul.f32 %v268, 0.70710677
  %v397 = vmul.f32 %v269, 0.70710677
  %v398 = vmul.f32 %v270, 0.70710677
  %v399 = vmul.f32 %v271, 0.70710677
  %v400 = vmul.f32 %v272, 0.70710677
  %v401 = vmul.f32 %v273, 0.70710677
  %v402 = vmul.f32 %v274, 0.70710677
  %v403 = vmul.f32 %v275, 0.70710677
  %v404 = vmul.f32 %v276, 0.70710677
  %v405 = vmul.f32 %v277, 0.70710677
  %v406 = vmul.f32 %v278, 0.70710677
  %v407 = vmul.f32 %v279, 0.70710677
  %v408 = vmul.f32 %v280, 0.70710677
  %v409 = vmul.f32 %v281, 0.70710677
  %v410 = vmul.f32 %v282, 0.70710677
  %v411 = vmul.f32 %v283, 0.70710677
  %v412 = vmul.f32 %v284, 0.70710677
  %v413 = vmul.f32 %v285, 0.70710677
  %v414 = vmul.f32 %v286, 0.70710677
  %vm415 = vcmp.ge.f32.partialorder %v351, 0.0
  %vm416 = vcmp.ge.f32.partialorder %v352, 0.0
  %vm417 = vcmp.ge.f32.partialorder %v353, 0.0
  %vm418 = vcmp.ge.f32.partialorder %v354, 0.0
  %vm419 = vcmp.ge.f32.partialorder %v355, 0.0
  %vm420 = vcmp.ge.f32.partialorder %v356, 0.0
  %vm421 = vcmp.ge.f32.partialorder %v357, 0.0
  %vm422 = vcmp.ge.f32.partialorder %v358, 0.0
  %vm423 = vcmp.ge.f32.partialorder %v359, 0.0
  %vm424 = vcmp.ge.f32.partialorder %v360, 0.0
  %vm425 = vcmp.ge.f32.partialorder %v361, 0.0
  %vm426 = vcmp.ge.f32.partialorder %v362, 0.0
  %vm427 = vcmp.ge.f32.partialorder %v363, 0.0
  %vm428 = vcmp.ge.f32.partialorder %v364, 0.0
  %vm429 = vcmp.ge.f32.partialorder %v365, 0.0
  %vm430 = vcmp.ge.f32.partialorder %v366, 0.0
  %vm431 = vcmp.ge.f32.partialorder %v367, 0.0
  %vm432 = vcmp.ge.f32.partialorder %v368, 0.0
  %vm433 = vcmp.ge.f32.partialorder %v369, 0.0
  %vm434 = vcmp.ge.f32.partialorder %v370, 0.0
  %vm435 = vcmp.ge.f32.partialorder %v371, 0.0
  %vm436 = vcmp.ge.f32.partialorder %v372, 0.0
  %vm437 = vcmp.ge.f32.partialorder %v373, 0.0
  %vm438 = vcmp.ge.f32.partialorder %v374, 0.0
  %vm439 = vcmp.ge.f32.partialorder %v375, 0.0
  %vm440 = vcmp.ge.f32.partialorder %v376, 0.0
  %vm441 = vcmp.ge.f32.partialorder %v377, 0.0
  %vm442 = vcmp.ge.f32.partialorder %v378, 0.0
  %vm443 = vcmp.ge.f32.partialorder %v379, 0.0
  %vm444 = vcmp.ge.f32.partialorder %v380, 0.0
  %vm445 = vcmp.ge.f32.partialorder %v381, 0.0
  %vm446 = vcmp.ge.f32.partialorder %v382, 0.0
  %vm447 = vcmp.ge.f32.partialorder %v383, 0.0
  %vm448 = vcmp.ge.f32.partialorder %v384, 0.0
  %vm449 = vcmp.ge.f32.partialorder %v385, 0.0
  %vm450 = vcmp.ge.f32.partialorder %v386, 0.0
  %vm451 = vcmp.ge.f32.partialorder %v387, 0.0
  %vm452 = vcmp.ge.f32.partialorder %v388, 0.0
  %vm453 = vcmp.ge.f32.partialorder %v389, 0.0
  %vm454 = vcmp.ge.f32.partialorder %v390, 0.0
  %vm455 = vcmp.ge.f32.partialorder %v391, 0.0
  %vm456 = vcmp.ge.f32.partialorder %v392, 0.0
  %vm457 = vcmp.ge.f32.partialorder %v393, 0.0
  %vm458 = vcmp.ge.f32.partialorder %v394, 0.0
  %vm459 = vcmp.ge.f32.partialorder %v395, 0.0
  %vm460 = vcmp.ge.f32.partialorder %v396, 0.0
  %vm461 = vcmp.ge.f32.partialorder %v397, 0.0
  %vm462 = vcmp.ge.f32.partialorder %v398, 0.0
  %vm463 = vcmp.ge.f32.partialorder %v399, 0.0
  %vm464 = vcmp.ge.f32.partialorder %v400, 0.0
  %vm465 = vcmp.ge.f32.partialorder %v401, 0.0
  %vm466 = vcmp.ge.f32.partialorder %v402, 0.0
  %vm467 = vcmp.ge.f32.partialorder %v403, 0.0
  %vm468 = vcmp.ge.f32.partialorder %v404, 0.0
  %vm469 = vcmp.ge.f32.partialorder %v405, 0.0
  %vm470 = vcmp.ge.f32.partialorder %v406, 0.0
  %vm471 = vcmp.ge.f32.partialorder %v407, 0.0
  %vm472 = vcmp.ge.f32.partialorder %v408, 0.0
  %vm473 = vcmp.ge.f32.partialorder %v409, 0.0
  %vm474 = vcmp.ge.f32.partialorder %v410, 0.0
  %vm475 = vcmp.ge.f32.partialorder %v411, 0.0
  %vm476 = vcmp.ge.f32.partialorder %v412, 0.0
  %vm477 = vcmp.ge.f32.partialorder %v413, 0.0
  %vm478 = vcmp.ge.f32.partialorder %v414, 0.0
  %v479 = vsel %vm415, 1.0, -1.0
  %v480 = vsel %vm416, 1.0, -1.0
  %v481 = vsel %vm417, 1.0, -1.0
  %v482 = vsel %vm418, 1.0, -1.0
  %v483 = vsel %vm419, 1.0, -1.0
  %v484 = vsel %vm420, 1.0, -1.0
  %v485 = vsel %vm421, 1.0, -1.0
  %v486 = vsel %vm422, 1.0, -1.0
  %v487 = vsel %vm423, 1.0, -1.0
  %v488 = vsel %vm424, 1.0, -1.0
  %v489 = vsel %vm425, 1.0, -1.0
  %v490 = vsel %vm426, 1.0, -1.0
  %v491 = vsel %vm427, 1.0, -1.0
  %v492 = vsel %vm428, 1.0, -1.0
  %v493 = vsel %vm429, 1.0, -1.0
  %v494 = vsel %vm430, 1.0, -1.0
  %v495 = vsel %vm431, 1.0, -1.0
  %v496 = vsel %vm432, 1.0, -1.0
  %v497 = vsel %vm433, 1.0, -1.0
  %v498 = vsel %vm434, 1.0, -1.0
  %v499 = vsel %vm435, 1.0, -1.0
  %v500 = vsel %vm436, 1.0, -1.0
  %v501 = vsel %vm437, 1.0, -1.0
  %v502 = vsel %vm438, 1.0, -1.0
  %v503 = vsel %vm439, 1.0, -1.0
  %v504 = vsel %vm440, 1.0, -1.0
  %v505 = vsel %vm441, 1.0, -1.0
  %v506 = vsel %vm442, 1.0, -1.0
  %v507 = vsel %vm443, 1.0, -1.0
  %v508 = vsel %vm444, 1.0, -1.0
  %v509 = vsel %vm445, 1.0, -1.0
  %v510 = vsel %vm446, 1.0, -1.0
  %v511 = vsel %vm447, 1.0, -1.0
  %v512 = vsel %vm448, 1.0, -1.0
  %v513 = vsel %vm449, 1.0, -1.0
  %v514 = vsel %vm450, 1.0, -1.0
  %v515 = vsel %vm451, 1.0, -1.0
  %v516 = vsel %vm452, 1.0, -1.0
  %v517 = vsel %vm453, 1.0, -1.0
  %v518 = vsel %vm454, 1.0, -1.0
  %v519 = vsel %vm455, 1.0, -1.0
  %v520 = vsel %vm456, 1.0, -1.0
  %v521 = vsel %vm457, 1.0, -1.0
  %v522 = vsel %vm458, 1.0, -1.0
  %v523 = vsel %vm459, 1.0, -1.0
  %v524 = vsel %vm460, 1.0, -1.0
  %v525 = vsel %vm461, 1.0, -1.0
  %v526 = vsel %vm462, 1.0, -1.0
  %v527 = vsel %vm463, 1.0, -1.0
  %v528 = vsel %vm464, 1.0, -1.0
  %v529 = vsel %vm465, 1.0, -1.0
  %v530 = vsel %vm466, 1.0, -1.0
  %v531 = vsel %vm467, 1.0, -1.0
  %v532 = vsel %vm468, 1.0, -1.0
  %v533 = vsel %vm469, 1.0, -1.0
  %v534 = vsel %vm470, 1.0, -1.0
  %v535 = vsel %vm471, 1.0, -1.0
  %v536 = vsel %vm472, 1.0, -1.0
  %v537 = vsel %vm473, 1.0, -1.0
  %v538 = vsel %vm474, 1.0, -1.0
  %v539 = vsel %vm475, 1.0, -1.0
  %v540 = vsel %vm476, 1.0, -1.0
  %v541 = vsel %vm477, 1.0, -1.0
  %v542 = vsel %vm478, 1.0, -1.0
  %v543 = vand.u32 2147483647, %v351
  %v544 = vand.u32 2147483647, %v352
  %v545 = vand.u32 2147483647, %v353
  %v546 = vand.u32 2147483647, %v354
  %v547 = vand.u32 2147483647, %v355
  %v548 = vand.u32 2147483647, %v356
  %v549 = vand.u32 2147483647, %v357
  %v550 = vand.u32 2147483647, %v358
  %v551 = vand.u32 2147483647, %v359
  %v552 = vand.u32 2147483647, %v360
  %v553 = vand.u32 2147483647, %v361
  %v554 = vand.u32 2147483647, %v362
  %v555 = vand.u32 2147483647, %v363
  %v556 = vand.u32 2147483647, %v364
  %v557 = vand.u32 2147483647, %v365
  %v558 = vand.u32 2147483647, %v366
  %v559 = vand.u32 2147483647, %v367
  %v560 = vand.u32 2147483647, %v368
  %v561 = vand.u32 2147483647, %v369
  %v562 = vand.u32 2147483647, %v370
  %v563 = vand.u32 2147483647, %v371
  %v564 = vand.u32 2147483647, %v372
  %v565 = vand.u32 2147483647, %v373
  %v566 = vand.u32 2147483647, %v374
  %v567 = vand.u32 2147483647, %v375
  %v568 = vand.u32 2147483647, %v376
  %v569 = vand.u32 2147483647, %v377
  %v570 = vand.u32 2147483647, %v378
  %v571 = vand.u32 2147483647, %v379
  %v572 = vand.u32 2147483647, %v380
  %v573 = vand.u32 2147483647, %v381
  %v574 = vand.u32 2147483647, %v382
  %v575 = vand.u32 2147483647, %v383
  %v576 = vand.u32 2147483647, %v384
  %v577 = vand.u32 2147483647, %v385
  %v578 = vand.u32 2147483647, %v386
  %v579 = vand.u32 2147483647, %v387
  %v580 = vand.u32 2147483647, %v388
  %v581 = vand.u32 2147483647, %v389
  %v582 = vand.u32 2147483647, %v390
  %v583 = vand.u32 2147483647, %v391
  %v584 = vand.u32 2147483647, %v392
  %v585 = vand.u32 2147483647, %v393
  %v586 = vand.u32 2147483647, %v394
  %v587 = vand.u32 2147483647, %v395
  %v588 = vand.u32 2147483647, %v396
  %v589 = vand.u32 2147483647, %v397
  %v590 = vand.u32 2147483647, %v398
  %v591 = vand.u32 2147483647, %v399
  %v592 = vand.u32 2147483647, %v400
  %v593 = vand.u32 2147483647, %v401
  %v594 = vand.u32 2147483647, %v402
  %v595 = vand.u32 2147483647, %v403
  %v596 = vand.u32 2147483647, %v404
  %v597 = vand.u32 2147483647, %v405
  %v598 = vand.u32 2147483647, %v406
  %v599 = vand.u32 2147483647, %v407
  %v600 = vand.u32 2147483647, %v408
  %v601 = vand.u32 2147483647, %v409
  %v602 = vand.u32 2147483647, %v410
  %v603 = vand.u32 2147483647, %v411
  %v604 = vand.u32 2147483647, %v412
  %v605 = vand.u32 2147483647, %v413
  %v606 = vand.u32 2147483647, %v414
  %v607 = vmul.f32 %v543, 0.3275911
  %v608 = vmul.f32 %v544, 0.3275911
  %v609 = vmul.f32 %v545, 0.3275911
  %v610 = vmul.f32 %v546, 0.3275911
  %v611 = vmul.f32 %v547, 0.3275911
  %v612 = vmul.f32 %v548, 0.3275911
  %v613 = vmul.f32 %v549, 0.3275911
  %v614 = vmul.f32 %v550, 0.3275911
  %v615 = vmul.f32 %v551, 0.3275911
  %v616 = vmul.f32 %v552, 0.3275911
  %v617 = vmul.f32 %v553, 0.3275911
  %v618 = vmul.f32 %v554, 0.3275911
  %v619 = vmul.f32 %v555, 0.3275911
  %v620 = vmul.f32 %v556, 0.3275911
  %v621 = vmul.f32 %v557, 0.3275911
  %v622 = vmul.f32 %v558, 0.3275911
  %v623 = vmul.f32 %v559, 0.3275911
  %v624 = vmul.f32 %v560, 0.3275911
  %v625 = vmul.f32 %v561, 0.3275911
  %v626 = vmul.f32 %v562, 0.3275911
  %v627 = vmul.f32 %v563, 0.3275911
  %v628 = vmul.f32 %v564, 0.3275911
  %v629 = vmul.f32 %v565, 0.3275911
  %v630 = vmul.f32 %v566, 0.3275911
  %v631 = vmul.f32 %v567, 0.3275911
  %v632 = vmul.f32 %v568, 0.3275911
  %v633 = vmul.f32 %v569, 0.3275911
  %v634 = vmul.f32 %v570, 0.3275911
  %v635 = vmul.f32 %v571, 0.3275911
  %v636 = vmul.f32 %v572, 0.3275911
  %v637 = vmul.f32 %v573, 0.3275911
  %v638 = vmul.f32 %v574, 0.3275911
  %v639 = vmul.f32 %v575, 0.3275911
  %v640 = vmul.f32 %v576, 0.3275911
  %v641 = vmul.f32 %v577, 0.3275911
  %v642 = vmul.f32 %v578, 0.3275911
  %v643 = vmul.f32 %v579, 0.3275911
  %v644 = vmul.f32 %v580, 0.3275911
  %v645 = vmul.f32 %v581, 0.3275911
  %v646 = vmul.f32 %v582, 0.3275911
  %v647 = vmul.f32 %v583, 0.3275911
  %v648 = vmul.f32 %v584, 0.3275911
  %v649 = vmul.f32 %v585, 0.3275911
  %v650 = vmul.f32 %v586, 0.3275911
  %v651 = vmul.f32 %v587, 0.3275911
  %v652 = vmul.f32 %v588, 0.3275911
  %v653 = vmul.f32 %v589, 0.3275911
  %v654 = vmul.f32 %v590, 0.3275911
  %v655 = vmul.f32 %v591, 0.3275911
  %v656 = vmul.f32 %v592, 0.3275911
  %v657 = vmul.f32 %v593, 0.3275911
  %v658 = vmul.f32 %v594, 0.3275911
  %v659 = vmul.f32 %v595, 0.3275911
  %v660 = vmul.f32 %v596, 0.3275911
  %v661 = vmul.f32 %v597, 0.3275911
  %v662 = vmul.f32 %v598, 0.3275911
  %v663 = vmul.f32 %v599, 0.3275911
  %v664 = vmul.f32 %v600, 0.3275911
  %v665 = vmul.f32 %v601, 0.3275911
  %v666 = vmul.f32 %v602, 0.3275911
  %v667 = vmul.f32 %v603, 0.3275911
  %v668 = vmul.f32 %v604, 0.3275911
  %v669 = vmul.f32 %v605, 0.3275911
  %v670 = vmul.f32 %v606, 0.3275911
  %v671 = vadd.f32 %v607, 1.0
  %v672 = vadd.f32 %v608, 1.0
  %v673 = vadd.f32 %v609, 1.0
  %v674 = vadd.f32 %v610, 1.0
  %v675 = vadd.f32 %v611, 1.0
  %v676 = vadd.f32 %v612, 1.0
  %v677 = vadd.f32 %v613, 1.0
  %v678 = vadd.f32 %v614, 1.0
  %v679 = vadd.f32 %v615, 1.0
  %v680 = vadd.f32 %v616, 1.0
  %v681 = vadd.f32 %v617, 1.0
  %v682 = vadd.f32 %v618, 1.0
  %v683 = vadd.f32 %v619, 1.0
  %v684 = vadd.f32 %v620, 1.0
  %v685 = vadd.f32 %v621, 1.0
  %v686 = vadd.f32 %v622, 1.0
  %v687 = vadd.f32 %v623, 1.0
  %v688 = vadd.f32 %v624, 1.0
  %v689 = vadd.f32 %v625, 1.0
  %v690 = vadd.f32 %v626, 1.0
  %v691 = vadd.f32 %v627, 1.0
  %v692 = vadd.f32 %v628, 1.0
  %v693 = vadd.f32 %v629, 1.0
  %v694 = vadd.f32 %v630, 1.0
  %v695 = vadd.f32 %v631, 1.0
  %v696 = vadd.f32 %v632, 1.0
  %v697 = vadd.f32 %v633, 1.0
  %v698 = vadd.f32 %v634, 1.0
  %v699 = vadd.f32 %v635, 1.0
  %v700 = vadd.f32 %v636, 1.0
  %v701 = vadd.f32 %v637, 1.0
  %v702 = vadd.f32 %v638, 1.0
  %v703 = vadd.f32 %v639, 1.0
  %v704 = vadd.f32 %v640, 1.0
  %v705 = vadd.f32 %v641, 1.0
  %v706 = vadd.f32 %v642, 1.0
  %v707 = vadd.f32 %v643, 1.0
  %v708 = vadd.f32 %v644, 1.0
  %v709 = vadd.f32 %v645, 1.0
  %v710 = vadd.f32 %v646, 1.0
  %v711 = vadd.f32 %v647, 1.0
  %v712 = vadd.f32 %v648, 1.0
  %v713 = vadd.f32 %v649, 1.0
  %v714 = vadd.f32 %v650, 1.0
  %v715 = vadd.f32 %v651, 1.0
  %v716 = vadd.f32 %v652, 1.0
  %v717 = vadd.f32 %v653, 1.0
  %v718 = vadd.f32 %v654, 1.0
  %v719 = vadd.f32 %v655, 1.0
  %v720 = vadd.f32 %v656, 1.0
  %v721 = vadd.f32 %v657, 1.0
  %v722 = vadd.f32 %v658, 1.0
  %v723 = vadd.f32 %v659, 1.0
  %v724 = vadd.f32 %v660, 1.0
  %v725 = vadd.f32 %v661, 1.0
  %v726 = vadd.f32 %v662, 1.0
  %v727 = vadd.f32 %v663, 1.0
  %v728 = vadd.f32 %v664, 1.0
  %v729 = vadd.f32 %v665, 1.0
  %v730 = vadd.f32 %v666, 1.0
  %v731 = vadd.f32 %v667, 1.0
  %v732 = vadd.f32 %v668, 1.0
  %v733 = vadd.f32 %v669, 1.0
  %v734 = vadd.f32 %v670, 1.0
  %v735 = vrcp.pop %v671
  %v736 = vrcp.pop %v672
  %v737 = vrcp.pop %v673
  %v738 = vrcp.pop %v674
  %v739 = vrcp.pop %v675
  %v740 = vrcp.pop %v676
  %v741 = vrcp.pop %v677
  %v742 = vrcp.pop %v678
  %v743 = vrcp.pop %v679
  %v744 = vrcp.pop %v680
  %v745 = vrcp.pop %v681
  %v746 = vrcp.pop %v682
  %v747 = vrcp.pop %v683
  %v748 = vrcp.pop %v684
  %v749 = vrcp.pop %v685
  %v750 = vrcp.pop %v686
  %v751 = vrcp.pop %v687
  %v752 = vrcp.pop %v688
  %v753 = vrcp.pop %v689
  %v754 = vrcp.pop %v690
  %v755 = vrcp.pop %v691
  %v756 = vrcp.pop %v692
  %v757 = vrcp.pop %v693
  %v758 = vrcp.pop %v694
  %v759 = vrcp.pop %v695
  %v760 = vrcp.pop %v696
  %v761 = vrcp.pop %v697
  %v762 = vrcp.pop %v698
  %v763 = vrcp.pop %v699
  %v764 = vrcp.pop %v700
  %v765 = vrcp.pop %v701
  %v766 = vrcp.pop %v702
  %v767 = vrcp.pop %v703
  %v768 = vrcp.pop %v704
  %v769 = vrcp.pop %v705
  %v770 = vrcp.pop %v706
  %v771 = vrcp.pop %v707
  %v772 = vrcp.pop %v708
  %v773 = vrcp.pop %v709
  %v774 = vrcp.pop %v710
  %v775 = vrcp.pop %v711
  %v776 = vrcp.pop %v712
  %v777 = vrcp.pop %v713
  %v778 = vrcp.pop %v714
  %v779 = vrcp.pop %v715
  %v780 = vrcp.pop %v716
  %v781 = vrcp.pop %v717
  %v782 = vrcp.pop %v718
  %v783 = vrcp.pop %v719
  %v784 = vrcp.pop %v720
  %v785 = vrcp.pop %v721
  %v786 = vrcp.pop %v722
  %v787 = vrcp.pop %v723
  %v788 = vrcp.pop %v724
  %v789 = vrcp.pop %v725
  %v790 = vrcp.pop %v726
  %v791 = vrcp.pop %v727
  %v792 = vrcp.pop %v728
  %v793 = vrcp.pop %v729
  %v794 = vrcp.pop %v730
  %v795 = vrcp.pop %v731
  %v796 = vrcp.pop %v732
  %v797 = vrcp.pop %v733
  %v798 = vrcp.pop %v734
  %v799 = vmul.f32 %v735, 1.0614054
  %v800 = vmul.f32 %v736, 1.0614054
  %v801 = vmul.f32 %v737, 1.0614054
  %v802 = vmul.f32 %v738, 1.0614054
  %v803 = vmul.f32 %v739, 1.0614054
  %v804 = vmul.f32 %v740, 1.0614054
  %v805 = vmul.f32 %v741, 1.0614054
  %v806 = vmul.f32 %v742, 1.0614054
  %v807 = vmul.f32 %v743, 1.0614054
  %v808 = vmul.f32 %v744, 1.0614054
  %v809 = vmul.f32 %v745, 1.0614054
  %v810 = vmul.f32 %v746, 1.0614054
  %v811 = vmul.f32 %v747, 1.0614054
  %v812 = vmul.f32 %v748, 1.0614054
  %v813 = vmul.f32 %v749, 1.0614054
  %v814 = vmul.f32 %v750, 1.0614054
  %v815 = vmul.f32 %v751, 1.0614054
  %v816 = vmul.f32 %v752, 1.0614054
  %v817 = vmul.f32 %v753, 1.0614054
  %v818 = vmul.f32 %v754, 1.0614054
  %v819 = vmul.f32 %v755, 1.0614054
  %v820 = vmul.f32 %v756, 1.0614054
  %v821 = vmul.f32 %v757, 1.0614054
  %v822 = vmul.f32 %v758, 1.0614054
  %v823 = vmul.f32 %v759, 1.0614054
  %v824 = vmul.f32 %v760, 1.0614054
  %v825 = vmul.f32 %v761, 1.0614054
  %v826 = vmul.f32 %v762, 1.0614054
  %v827 = vmul.f32 %v763, 1.0614054
  %v828 = vmul.f32 %v764, 1.0614054
  %v829 = vmul.f32 %v765, 1.0614054
  %v830 = vmul.f32 %v766, 1.0614054
  %v831 = vmul.f32 %v767, 1.0614054
  %v832 = vmul.f32 %v768, 1.0614054
  %v833 = vmul.f32 %v769, 1.0614054
  %v834 = vmul.f32 %v770, 1.0614054
  %v835 = vmul.f32 %v771, 1.0614054
  %v836 = vmul.f32 %v772, 1.0614054
  %v837 = vmul.f32 %v773, 1.0614054
  %v838 = vmul.f32 %v774, 1.0614054
  %v839 = vmul.f32 %v775, 1.0614054
  %v840 = vmul.f32 %v776, 1.0614054
  %v841 = vmul.f32 %v777, 1.0614054
  %v842 = vmul.f32 %v778, 1.0614054
  %v843 = vmul.f32 %v779, 1.0614054
  %v844 = vmul.f32 %v780, 1.0614054
  %v845 = vmul.f32 %v781, 1.0614054
  %v846 = vmul.f32 %v782, 1.0614054
  %v847 = vmul.f32 %v783, 1.0614054
  %v848 = vmul.f32 %v784, 1.0614054
  %v849 = vmul.f32 %v785, 1.0614054
  %v850 = vmul.f32 %v786, 1.0614054
  %v851 = vmul.f32 %v787, 1.0614054
  %v852 = vmul.f32 %v788, 1.0614054
  %v853 = vmul.f32 %v789, 1.0614054
  %v854 = vmul.f32 %v790, 1.0614054
  %v855 = vmul.f32 %v791, 1.0614054
  %v856 = vmul.f32 %v792, 1.0614054
  %v857 = vmul.f32 %v793, 1.0614054
  %v858 = vmul.f32 %v794, 1.0614054
  %v859 = vmul.f32 %v795, 1.0614054
  %v860 = vmul.f32 %v796, 1.0614054
  %v861 = vmul.f32 %v797, 1.0614054
  %v862 = vmul.f32 %v798, 1.0614054
  %v863 = vadd.f32 %v799, -1.4531521
  %v864 = vadd.f32 %v800, -1.4531521
  %v865 = vadd.f32 %v801, -1.4531521
  %v866 = vadd.f32 %v802, -1.4531521
  %v867 = vadd.f32 %v803, -1.4531521
  %v868 = vadd.f32 %v804, -1.4531521
  %v869 = vadd.f32 %v805, -1.4531521
  %v870 = vadd.f32 %v806, -1.4531521
  %v871 = vadd.f32 %v807, -1.4531521
  %v872 = vadd.f32 %v808, -1.4531521
  %v873 = vadd.f32 %v809, -1.4531521
  %v874 = vadd.f32 %v810, -1.4531521
  %v875 = vadd.f32 %v811, -1.4531521
  %v876 = vadd.f32 %v812, -1.4531521
  %v877 = vadd.f32 %v813, -1.4531521
  %v878 = vadd.f32 %v814, -1.4531521
  %v879 = vadd.f32 %v815, -1.4531521
  %v880 = vadd.f32 %v816, -1.4531521
  %v881 = vadd.f32 %v817, -1.4531521
  %v882 = vadd.f32 %v818, -1.4531521
  %v883 = vadd.f32 %v819, -1.4531521
  %v884 = vadd.f32 %v820, -1.4531521
  %v885 = vadd.f32 %v821, -1.4531521
  %v886 = vadd.f32 %v822, -1.4531521
  %v887 = vadd.f32 %v823, -1.4531521
  %v888 = vadd.f32 %v824, -1.4531521
  %v889 = vadd.f32 %v825, -1.4531521
  %v890 = vadd.f32 %v826, -1.4531521
  %v891 = vadd.f32 %v827, -1.4531521
  %v892 = vadd.f32 %v828, -1.4531521
  %v893 = vadd.f32 %v829, -1.4531521
  %v894 = vadd.f32 %v830, -1.4531521
  %v895 = vadd.f32 %v831, -1.4531521
  %v896 = vadd.f32 %v832, -1.4531521
  %v897 = vadd.f32 %v833, -1.4531521
  %v898 = vadd.f32 %v834, -1.4531521
  %v899 = vadd.f32 %v835, -1.4531521
  %v900 = vadd.f32 %v836, -1.4531521
  %v901 = vadd.f32 %v837, -1.4531521
  %v902 = vadd.f32 %v838, -1.4531521
  %v903 = vadd.f32 %v839, -1.4531521
  %v904 = vadd.f32 %v840, -1.4531521
  %v905 = vadd.f32 %v841, -1.4531521
  %v906 = vadd.f32 %v842, -1.4531521
  %v907 = vadd.f32 %v843, -1.4531521
  %v908 = vadd.f32 %v844, -1.4531521
  %v909 = vadd.f32 %v845, -1.4531521
  %v910 = vadd.f32 %v846, -1.4531521
  %v911 = vadd.f32 %v847, -1.4531521
  %v912 = vadd.f32 %v848, -1.4531521
  %v913 = vadd.f32 %v849, -1.4531521
  %v914 = vadd.f32 %v850, -1.4531521
  %v915 = vadd.f32 %v851, -1.4531521
  %v916 = vadd.f32 %v852, -1.4531521
  %v917 = vadd.f32 %v853, -1.4531521
  %v918 = vadd.f32 %v854, -1.4531521
  %v919 = vadd.f32 %v855, -1.4531521
  %v920 = vadd.f32 %v856, -1.4531521
  %v921 = vadd.f32 %v857, -1.4531521
  %v922 = vadd.f32 %v858, -1.4531521
  %v923 = vadd.f32 %v859, -1.4531521
  %v924 = vadd.f32 %v860, -1.4531521
  %v925 = vadd.f32 %v861, -1.4531521
  %v926 = vadd.f32 %v862, -1.4531521
  %v927 = vmul.f32 %v863, %v735
  %v928 = vmul.f32 %v864, %v736
  %v929 = vmul.f32 %v865, %v737
  %v930 = vmul.f32 %v866, %v738
  %v931 = vmul.f32 %v867, %v739
  %v932 = vmul.f32 %v868, %v740
  %v933 = vmul.f32 %v869, %v741
  %v934 = vmul.f32 %v870, %v742
  %v935 = vmul.f32 %v871, %v743
  %v936 = vmul.f32 %v872, %v744
  %v937 = vmul.f32 %v873, %v745
  %v938 = vmul.f32 %v874, %v746
  %v939 = vmul.f32 %v875, %v747
  %v940 = vmul.f32 %v876, %v748
  %v941 = vmul.f32 %v877, %v749
  %v942 = vmul.f32 %v878, %v750
  %v943 = vmul.f32 %v879, %v751
  %v944 = vmul.f32 %v880, %v752
  %v945 = vmul.f32 %v881, %v753
  %v946 = vmul.f32 %v882, %v754
  %v947 = vmul.f32 %v883, %v755
  %v948 = vmul.f32 %v884, %v756
  %v949 = vmul.f32 %v885, %v757
  %v950 = vmul.f32 %v886, %v758
  %v951 = vmul.f32 %v887, %v759
  %v952 = vmul.f32 %v888, %v760
  %v953 = vmul.f32 %v889, %v761
  %v954 = vmul.f32 %v890, %v762
  %v955 = vmul.f32 %v891, %v763
  %v956 = vmul.f32 %v892, %v764
  %v957 = vmul.f32 %v893, %v765
  %v958 = vmul.f32 %v894, %v766
  %v959 = vmul.f32 %v895, %v767
  %v960 = vmul.f32 %v896, %v768
  %v961 = vmul.f32 %v897, %v769
  %v962 = vmul.f32 %v898, %v770
  %v963 = vmul.f32 %v899, %v771
  %v964 = vmul.f32 %v900, %v772
  %v965 = vmul.f32 %v901, %v773
  %v966 = vmul.f32 %v902, %v774
  %v967 = vmul.f32 %v903, %v775
  %v968 = vmul.f32 %v904, %v776
  %v969 = vmul.f32 %v905, %v777
  %v970 = vmul.f32 %v906, %v778
  %v971 = vmul.f32 %v907, %v779
  %v972 = vmul.f32 %v908, %v780
  %v973 = vmul.f32 %v909, %v781
  %v974 = vmul.f32 %v910, %v782
  %v975 = vmul.f32 %v911, %v783
  %v976 = vmul.f32 %v912, %v784
  %v977 = vmul.f32 %v913, %v785
  %v978 = vmul.f32 %v914, %v786
  %v979 = vmul.f32 %v915, %v787
  %v980 = vmul.f32 %v916, %v788
  %v981 = vmul.f32 %v917, %v789
  %v982 = vmul.f32 %v918, %v790
  %v983 = vmul.f32 %v919, %v791
  %v984 = vmul.f32 %v920, %v792
  %v985 = vmul.f32 %v921, %v793
  %v986 = vmul.f32 %v922, %v794
  %v987 = vmul.f32 %v923, %v795
  %v988 = vmul.f32 %v924, %v796
  %v989 = vmul.f32 %v925, %v797
  %v990 = vmul.f32 %v926, %v798
  %v991 = vadd.f32 %v927, 1.4214138
  %v992 = vadd.f32 %v928, 1.4214138
  %v993 = vadd.f32 %v929, 1.4214138
  %v994 = vadd.f32 %v930, 1.4214138
  %v995 = vadd.f32 %v931, 1.4214138
  %v996 = vadd.f32 %v932, 1.4214138
  %v997 = vadd.f32 %v933, 1.4214138
  %v998 = vadd.f32 %v934, 1.4214138
  %v999 = vadd.f32 %v935, 1.4214138
  %v1000 = vadd.f32 %v936, 1.4214138
  %v1001 = vadd.f32 %v937, 1.4214138
  %v1002 = vadd.f32 %v938, 1.4214138
  %v1003 = vadd.f32 %v939, 1.4214138
  %v1004 = vadd.f32 %v940, 1.4214138
  %v1005 = vadd.f32 %v941, 1.4214138
  %v1006 = vadd.f32 %v942, 1.4214138
  %v1007 = vadd.f32 %v943, 1.4214138
  %v1008 = vadd.f32 %v944, 1.4214138
  %v1009 = vadd.f32 %v945, 1.4214138
  %v1010 = vadd.f32 %v946, 1.4214138
  %v1011 = vadd.f32 %v947, 1.4214138
  %v1012 = vadd.f32 %v948, 1.4214138
  %v1013 = vadd.f32 %v949, 1.4214138
  %v1014 = vadd.f32 %v950, 1.4214138
  %v1015 = vadd.f32 %v951, 1.4214138
  %v1016 = vadd.f32 %v952, 1.4214138
  %v1017 = vadd.f32 %v953, 1.4214138
  %v1018 = vadd.f32 %v954, 1.4214138
  %v1019 = vadd.f32 %v955, 1.4214138
  %v1020 = vadd.f32 %v956, 1.4214138
  %v1021 = vadd.f32 %v957, 1.4214138
  %v1022 = vadd.f32 %v958, 1.4214138
  %v1023 = vadd.f32 %v959, 1.4214138
  %v1024 = vadd.f32 %v960, 1.4214138
  %v1025 = vadd.f32 %v961, 1.4214138
  %v1026 = vadd.f32 %v962, 1.4214138
  %v1027 = vadd.f32 %v963, 1.4214138
  %v1028 = vadd.f32 %v964, 1.4214138
  %v1029 = vadd.f32 %v965, 1.4214138
  %v1030 = vadd.f32 %v966, 1.4214138
  %v1031 = vadd.f32 %v967, 1.4214138
  %v1032 = vadd.f32 %v968, 1.4214138
  %v1033 = vadd.f32 %v969, 1.4214138
  %v1034 = vadd.f32 %v970, 1.4214138
  %v1035 = vadd.f32 %v971, 1.4214138
  %v1036 = vadd.f32 %v972, 1.4214138
  %v1037 = vadd.f32 %v973, 1.4214138
  %v1038 = vadd.f32 %v974, 1.4214138
  %v1039 = vadd.f32 %v975, 1.4214138
  %v1040 = vadd.f32 %v976, 1.4214138
  %v1041 = vadd.f32 %v977, 1.4214138
  %v1042 = vadd.f32 %v978, 1.4214138
  %v1043 = vadd.f32 %v979, 1.4214138
  %v1044 = vadd.f32 %v980, 1.4214138
  %v1045 = vadd.f32 %v981, 1.4214138
  %v1046 = vadd.f32 %v982, 1.4214138
  %v1047 = vadd.f32 %v983, 1.4214138
  %v1048 = vadd.f32 %v984, 1.4214138
  %v1049 = vadd.f32 %v985, 1.4214138
  %v1050 = vadd.f32 %v986, 1.4214138
  %v1051 = vadd.f32 %v987, 1.4214138
  %v1052 = vadd.f32 %v988, 1.4214138
  %v1053 = vadd.f32 %v989, 1.4214138
  %v1054 = vadd.f32 %v990, 1.4214138
  %v1055 = vmul.f32 %v991, %v735
  %v1056 = vmul.f32 %v992, %v736
  %v1057 = vmul.f32 %v993, %v737
  %v1058 = vmul.f32 %v994, %v738
  %v1059 = vmul.f32 %v995, %v739
  %v1060 = vmul.f32 %v996, %v740
  %v1061 = vmul.f32 %v997, %v741
  %v1062 = vmul.f32 %v998, %v742
  %v1063 = vmul.f32 %v999, %v743
  %v1064 = vmul.f32 %v1000, %v744
  %v1065 = vmul.f32 %v1001, %v745
  %v1066 = vmul.f32 %v1002, %v746
  %v1067 = vmul.f32 %v1003, %v747
  %v1068 = vmul.f32 %v1004, %v748
  %v1069 = vmul.f32 %v1005, %v749
  %v1070 = vmul.f32 %v1006, %v750
  %v1071 = vmul.f32 %v1007, %v751
  %v1072 = vmul.f32 %v1008, %v752
  %v1073 = vmul.f32 %v1009, %v753
  %v1074 = vmul.f32 %v1010, %v754
  %v1075 = vmul.f32 %v1011, %v755
  %v1076 = vmul.f32 %v1012, %v756
  %v1077 = vmul.f32 %v1013, %v757
  %v1078 = vmul.f32 %v1014, %v758
  %v1079 = vmul.f32 %v1015, %v759
  %v1080 = vmul.f32 %v1016, %v760
  %v1081 = vmul.f32 %v1017, %v761
  %v1082 = vmul.f32 %v1018, %v762
  %v1083 = vmul.f32 %v1019, %v763
  %v1084 = vmul.f32 %v1020, %v764
  %v1085 = vmul.f32 %v1021, %v765
  %v1086 = vmul.f32 %v1022, %v766
  %v1087 = vmul.f32 %v1023, %v767
  %v1088 = vmul.f32 %v1024, %v768
  %v1089 = vmul.f32 %v1025, %v769
  %v1090 = vmul.f32 %v1026, %v770
  %v1091 = vmul.f32 %v1027, %v771
  %v1092 = vmul.f32 %v1028, %v772
  %v1093 = vmul.f32 %v1029, %v773
  %v1094 = vmul.f32 %v1030, %v774
  %v1095 = vmul.f32 %v1031, %v775
  %v1096 = vmul.f32 %v1032, %v776
  %v1097 = vmul.f32 %v1033, %v777
  %v1098 = vmul.f32 %v1034, %v778
  %v1099 = vmul.f32 %v1035, %v779
  %v1100 = vmul.f32 %v1036, %v780
  %v1101 = vmul.f32 %v1037, %v781
  %v1102 = vmul.f32 %v1038, %v782
  %v1103 = vmul.f32 %v1039, %v783
  %v1104 = vmul.f32 %v1040, %v784
  %v1105 = vmul.f32 %v1041, %v785
  %v1106 = vmul.f32 %v1042, %v786
  %v1107 = vmul.f32 %v1043, %v787
  %v1108 = vmul.f32 %v1044, %v788
  %v1109 = vmul.f32 %v1045, %v789
  %v1110 = vmul.f32 %v1046, %v790
  %v1111 = vmul.f32 %v1047, %v791
  %v1112 = vmul.f32 %v1048, %v792
  %v1113 = vmul.f32 %v1049, %v793
  %v1114 = vmul.f32 %v1050, %v794
  %v1115 = vmul.f32 %v1051, %v795
  %v1116 = vmul.f32 %v1052, %v796
  %v1117 = vmul.f32 %v1053, %v797
  %v1118 = vmul.f32 %v1054, %v798
  %v1119 = vadd.f32 %v1055, -0.28449672
  %v1120 = vadd.f32 %v1056, -0.28449672
  %v1121 = vadd.f32 %v1057, -0.28449672
  %v1122 = vadd.f32 %v1058, -0.28449672
  %v1123 = vadd.f32 %v1059, -0.28449672
  %v1124 = vadd.f32 %v1060, -0.28449672
  %v1125 = vadd.f32 %v1061, -0.28449672
  %v1126 = vadd.f32 %v1062, -0.28449672
  %v1127 = vadd.f32 %v1063, -0.28449672
  %v1128 = vadd.f32 %v1064, -0.28449672
  %v1129 = vadd.f32 %v1065, -0.28449672
  %v1130 = vadd.f32 %v1066, -0.28449672
  %v1131 = vadd.f32 %v1067, -0.28449672
  %v1132 = vadd.f32 %v1068, -0.28449672
  %v1133 = vadd.f32 %v1069, -0.28449672
  %v1134 = vadd.f32 %v1070, -0.28449672
  %v1135 = vadd.f32 %v1071, -0.28449672
  %v1136 = vadd.f32 %v1072, -0.28449672
  %v1137 = vadd.f32 %v1073, -0.28449672
  %v1138 = vadd.f32 %v1074, -0.28449672
  %v1139 = vadd.f32 %v1075, -0.28449672
  %v1140 = vadd.f32 %v1076, -0.28449672
  %v1141 = vadd.f32 %v1077, -0.28449672
  %v1142 = vadd.f32 %v1078, -0.28449672
  %v1143 = vadd.f32 %v1079, -0.28449672
  %v1144 = vadd.f32 %v1080, -0.28449672
  %v1145 = vadd.f32 %v1081, -0.28449672
  %v1146 = vadd.f32 %v1082, -0.28449672
  %v1147 = vadd.f32 %v1083, -0.28449672
  %v1148 = vadd.f32 %v1084, -0.28449672
  %v1149 = vadd.f32 %v1085, -0.28449672
  %v1150 = vadd.f32 %v1086, -0.28449672
  %v1151 = vadd.f32 %v1087, -0.28449672
  %v1152 = vadd.f32 %v1088, -0.28449672
  %v1153 = vadd.f32 %v1089, -0.28449672
  %v1154 = vadd.f32 %v1090, -0.28449672
  %v1155 = vadd.f32 %v1091, -0.28449672
  %v1156 = vadd.f32 %v1092, -0.28449672
  %v1157 = vadd.f32 %v1093, -0.28449672
  %v1158 = vadd.f32 %v1094, -0.28449672
  %v1159 = vadd.f32 %v1095, -0.28449672
  %v1160 = vadd.f32 %v1096, -0.28449672
  %v1161 = vadd.f32 %v1097, -0.28449672
  %v1162 = vadd.f32 %v1098, -0.28449672
  %v1163 = vadd.f32 %v1099, -0.28449672
  %v1164 = vadd.f32 %v1100, -0.28449672
  %v1165 = vadd.f32 %v1101, -0.28449672
  %v1166 = vadd.f32 %v1102, -0.28449672
  %v1167 = vadd.f32 %v1103, -0.28449672
  %v1168 = vadd.f32 %v1104, -0.28449672
  %v1169 = vadd.f32 %v1105, -0.28449672
  %v1170 = vadd.f32 %v1106, -0.28449672
  %v1171 = vadd.f32 %v1107, -0.28449672
  %v1172 = vadd.f32 %v1108, -0.28449672
  %v1173 = vadd.f32 %v1109, -0.28449672
  %v1174 = vadd.f32 %v1110, -0.28449672
  %v1175 = vadd.f32 %v1111, -0.28449672
  %v1176 = vadd.f32 %v1112, -0.28449672
  %v1177 = vadd.f32 %v1113, -0.28449672
  %v1178 = vadd.f32 %v1114, -0.28449672
  %v1179 = vadd.f32 %v1115, -0.28449672
  %v1180 = vadd.f32 %v1116, -0.28449672
  %v1181 = vadd.f32 %v1117, -0.28449672
  %v1182 = vadd.f32 %v1118, -0.28449672
  %v1183 = vmul.f32 %v1119, %v735
  %v1184 = vmul.f32 %v1120, %v736
  %v1185 = vmul.f32 %v1121, %v737
  %v1186 = vmul.f32 %v1122, %v738
  %v1187 = vmul.f32 %v1123, %v739
  %v1188 = vmul.f32 %v1124, %v740
  %v1189 = vmul.f32 %v1125, %v741
  %v1190 = vmul.f32 %v1126, %v742
  %v1191 = vmul.f32 %v1127, %v743
  %v1192 = vmul.f32 %v1128, %v744
  %v1193 = vmul.f32 %v1129, %v745
  %v1194 = vmul.f32 %v1130, %v746
  %v1195 = vmul.f32 %v1131, %v747
  %v1196 = vmul.f32 %v1132, %v748
  %v1197 = vmul.f32 %v1133, %v749
  %v1198 = vmul.f32 %v1134, %v750
  %v1199 = vmul.f32 %v1135, %v751
  %v1200 = vmul.f32 %v1136, %v752
  %v1201 = vmul.f32 %v1137, %v753
  %v1202 = vmul.f32 %v1138, %v754
  %v1203 = vmul.f32 %v1139, %v755
  %v1204 = vmul.f32 %v1140, %v756
  %v1205 = vmul.f32 %v1141, %v757
  %v1206 = vmul.f32 %v1142, %v758
  %v1207 = vmul.f32 %v1143, %v759
  %v1208 = vmul.f32 %v1144, %v760
  %v1209 = vmul.f32 %v1145, %v761
  %v1210 = vmul.f32 %v1146, %v762
  %v1211 = vmul.f32 %v1147, %v763
  %v1212 = vmul.f32 %v1148, %v764
  %v1213 = vmul.f32 %v1149, %v765
  %v1214 = vmul.f32 %v1150, %v766
  %v1215 = vmul.f32 %v1151, %v767
  %v1216 = vmul.f32 %v1152, %v768
  %v1217 = vmul.f32 %v1153, %v769
  %v1218 = vmul.f32 %v1154, %v770
  %v1219 = vmul.f32 %v1155, %v771
  %v1220 = vmul.f32 %v1156, %v772
  %v1221 = vmul.f32 %v1157, %v773
  %v1222 = vmul.f32 %v1158, %v774
  %v1223 = vmul.f32 %v1159, %v775
  %v1224 = vmul.f32 %v1160, %v776
  %v1225 = vmul.f32 %v1161, %v777
  %v1226 = vmul.f32 %v1162, %v778
  %v1227 = vmul.f32 %v1163, %v779
  %v1228 = vmul.f32 %v1164, %v780
  %v1229 = vmul.f32 %v1165, %v781
  %v1230 = vmul.f32 %v1166, %v782
  %v1231 = vmul.f32 %v1167, %v783
  %v1232 = vmul.f32 %v1168, %v784
  %v1233 = vmul.f32 %v1169, %v785
  %v1234 = vmul.f32 %v1170, %v786
  %v1235 = vmul.f32 %v1171, %v787
  %v1236 = vmul.f32 %v1172, %v788
  %v1237 = vmul.f32 %v1173, %v789
  %v1238 = vmul.f32 %v1174, %v790
  %v1239 = vmul.f32 %v1175, %v791
  %v1240 = vmul.f32 %v1176, %v792
  %v1241 = vmul.f32 %v1177, %v793
  %v1242 = vmul.f32 %v1178, %v794
  %v1243 = vmul.f32 %v1179, %v795
  %v1244 = vmul.f32 %v1180, %v796
  %v1245 = vmul.f32 %v1181, %v797
  %v1246 = vmul.f32 %v1182, %v798
  %v1247 = vadd.f32 %v1183, 0.2548296
  %v1248 = vadd.f32 %v1184, 0.2548296
  %v1249 = vadd.f32 %v1185, 0.2548296
  %v1250 = vadd.f32 %v1186, 0.2548296
  %v1251 = vadd.f32 %v1187, 0.2548296
  %v1252 = vadd.f32 %v1188, 0.2548296
  %v1253 = vadd.f32 %v1189, 0.2548296
  %v1254 = vadd.f32 %v1190, 0.2548296
  %v1255 = vadd.f32 %v1191, 0.2548296
  %v1256 = vadd.f32 %v1192, 0.2548296
  %v1257 = vadd.f32 %v1193, 0.2548296
  %v1258 = vadd.f32 %v1194, 0.2548296
  %v1259 = vadd.f32 %v1195, 0.2548296
  %v1260 = vadd.f32 %v1196, 0.2548296
  %v1261 = vadd.f32 %v1197, 0.2548296
  %v1262 = vadd.f32 %v1198, 0.2548296
  %v1263 = vadd.f32 %v1199, 0.2548296
  %v1264 = vadd.f32 %v1200, 0.2548296
  %v1265 = vadd.f32 %v1201, 0.2548296
  %v1266 = vadd.f32 %v1202, 0.2548296
  %v1267 = vadd.f32 %v1203, 0.2548296
  %v1268 = vadd.f32 %v1204, 0.2548296
  %v1269 = vadd.f32 %v1205, 0.2548296
  %v1270 = vadd.f32 %v1206, 0.2548296
  %v1271 = vadd.f32 %v1207, 0.2548296
  %v1272 = vadd.f32 %v1208, 0.2548296
  %v1273 = vadd.f32 %v1209, 0.2548296
  %v1274 = vadd.f32 %v1210, 0.2548296
  %v1275 = vadd.f32 %v1211, 0.2548296
  %v1276 = vadd.f32 %v1212, 0.2548296
  %v1277 = vadd.f32 %v1213, 0.2548296
  %v1278 = vadd.f32 %v1214, 0.2548296
  %v1279 = vadd.f32 %v1215, 0.2548296
  %v1280 = vadd.f32 %v1216, 0.2548296
  %v1281 = vadd.f32 %v1217, 0.2548296
  %v1282 = vadd.f32 %v1218, 0.2548296
  %v1283 = vadd.f32 %v1219, 0.2548296
  %v1284 = vadd.f32 %v1220, 0.2548296
  %v1285 = vadd.f32 %v1221, 0.2548296
  %v1286 = vadd.f32 %v1222, 0.2548296
  %v1287 = vadd.f32 %v1223, 0.2548296
  %v1288 = vadd.f32 %v1224, 0.2548296
  %v1289 = vadd.f32 %v1225, 0.2548296
  %v1290 = vadd.f32 %v1226, 0.2548296
  %v1291 = vadd.f32 %v1227, 0.2548296
  %v1292 = vadd.f32 %v1228, 0.2548296
  %v1293 = vadd.f32 %v1229, 0.2548296
  %v1294 = vadd.f32 %v1230, 0.2548296
  %v1295 = vadd.f32 %v1231, 0.2548296
  %v1296 = vadd.f32 %v1232, 0.2548296
  %v1297 = vadd.f32 %v1233, 0.2548296
  %v1298 = vadd.f32 %v1234, 0.2548296
  %v1299 = vadd.f32 %v1235, 0.2548296
  %v1300 = vadd.f32 %v1236, 0.2548296
  %v1301 = vadd.f32 %v1237, 0.2548296
  %v1302 = vadd.f32 %v1238, 0.2548296
  %v1303 = vadd.f32 %v1239, 0.2548296
  %v1304 = vadd.f32 %v1240, 0.2548296
  %v1305 = vadd.f32 %v1241, 0.2548296
  %v1306 = vadd.f32 %v1242, 0.2548296
  %v1307 = vadd.f32 %v1243, 0.2548296
  %v1308 = vadd.f32 %v1244, 0.2548296
  %v1309 = vadd.f32 %v1245, 0.2548296
  %v1310 = vadd.f32 %v1246, 0.2548296
  %v1311 = vmul.f32 %v1247, %v735
  %v1312 = vmul.f32 %v1248, %v736
  %v1313 = vmul.f32 %v1249, %v737
  %v1314 = vmul.f32 %v1250, %v738
  %v1315 = vmul.f32 %v1251, %v739
  %v1316 = vmul.f32 %v1252, %v740
  %v1317 = vmul.f32 %v1253, %v741
  %v1318 = vmul.f32 %v1254, %v742
  %v1319 = vmul.f32 %v1255, %v743
  %v1320 = vmul.f32 %v1256, %v744
  %v1321 = vmul.f32 %v1257, %v745
  %v1322 = vmul.f32 %v1258, %v746
  %v1323 = vmul.f32 %v1259, %v747
  %v1324 = vmul.f32 %v1260, %v748
  %v1325 = vmul.f32 %v1261, %v749
  %v1326 = vmul.f32 %v1262, %v750
  %v1327 = vmul.f32 %v1263, %v751
  %v1328 = vmul.f32 %v1264, %v752
  %v1329 = vmul.f32 %v1265, %v753
  %v1330 = vmul.f32 %v1266, %v754
  %v1331 = vmul.f32 %v1267, %v755
  %v1332 = vmul.f32 %v1268, %v756
  %v1333 = vmul.f32 %v1269, %v757
  %v1334 = vmul.f32 %v1270, %v758
  %v1335 = vmul.f32 %v1271, %v759
  %v1336 = vmul.f32 %v1272, %v760
  %v1337 = vmul.f32 %v1273, %v761
  %v1338 = vmul.f32 %v1274, %v762
  %v1339 = vmul.f32 %v1275, %v763
  %v1340 = vmul.f32 %v1276, %v764
  %v1341 = vmul.f32 %v1277, %v765
  %v1342 = vmul.f32 %v1278, %v766
  %v1343 = vmul.f32 %v1279, %v767
  %v1344 = vmul.f32 %v1280, %v768
  %v1345 = vmul.f32 %v1281, %v769
  %v1346 = vmul.f32 %v1282, %v770
  %v1347 = vmul.f32 %v1283, %v771
  %v1348 = vmul.f32 %v1284, %v772
  %v1349 = vmul.f32 %v1285, %v773
  %v1350 = vmul.f32 %v1286, %v774
  %v1351 = vmul.f32 %v1287, %v775
  %v1352 = vmul.f32 %v1288, %v776
  %v1353 = vmul.f32 %v1289, %v777
  %v1354 = vmul.f32 %v1290, %v778
  %v1355 = vmul.f32 %v1291, %v779
  %v1356 = vmul.f32 %v1292, %v780
  %v1357 = vmul.f32 %v1293, %v781
  %v1358 = vmul.f32 %v1294, %v782
  %v1359 = vmul.f32 %v1295, %v783
  %v1360 = vmul.f32 %v1296, %v784
  %v1361 = vmul.f32 %v1297, %v785
  %v1362 = vmul.f32 %v1298, %v786
  %v1363 = vmul.f32 %v1299, %v787
  %v1364 = vmul.f32 %v1300, %v788
  %v1365 = vmul.f32 %v1301, %v789
  %v1366 = vmul.f32 %v1302, %v790
  %v1367 = vmul.f32 %v1303, %v791
  %v1368 = vmul.f32 %v1304, %v792
  %v1369 = vmul.f32 %v1305, %v793
  %v1370 = vmul.f32 %v1306, %v794
  %v1371 = vmul.f32 %v1307, %v795
  %v1372 = vmul.f32 %v1308, %v796
  %v1373 = vmul.f32 %v1309, %v797
  %v1374 = vmul.f32 %v1310, %v798
  %v1375 = vsub.f32 0.0, %v543
  %v1376 = vsub.f32 0.0, %v544
  %v1377 = vsub.f32 0.0, %v545
  %v1378 = vsub.f32 0.0, %v546
  %v1379 = vsub.f32 0.0, %v547
  %v1380 = vsub.f32 0.0, %v548
  %v1381 = vsub.f32 0.0, %v549
  %v1382 = vsub.f32 0.0, %v550
  %v1383 = vsub.f32 0.0, %v551
  %v1384 = vsub.f32 0.0, %v552
  %v1385 = vsub.f32 0.0, %v553
  %v1386 = vsub.f32 0.0, %v554
  %v1387 = vsub.f32 0.0, %v555
  %v1388 = vsub.f32 0.0, %v556
  %v1389 = vsub.f32 0.0, %v557
  %v1390 = vsub.f32 0.0, %v558
  %v1391 = vsub.f32 0.0, %v559
  %v1392 = vsub.f32 0.0, %v560
  %v1393 = vsub.f32 0.0, %v561
  %v1394 = vsub.f32 0.0, %v562
  %v1395 = vsub.f32 0.0, %v563
  %v1396 = vsub.f32 0.0, %v564
  %v1397 = vsub.f32 0.0, %v565
  %v1398 = vsub.f32 0.0, %v566
  %v1399 = vsub.f32 0.0, %v567
  %v1400 = vsub.f32 0.0, %v568
  %v1401 = vsub.f32 0.0, %v569
  %v1402 = vsub.f32 0.0, %v570
  %v1403 = vsub.f32 0.0, %v571
  %v1404 = vsub.f32 0.0, %v572
  %v1405 = vsub.f32 0.0, %v573
  %v1406 = vsub.f32 0.0, %v574
  %v1407 = vsub.f32 0.0, %v575
  %v1408 = vsub.f32 0.0, %v576
  %v1409 = vsub.f32 0.0, %v577
  %v1410 = vsub.f32 0.0, %v578
  %v1411 = vsub.f32 0.0, %v579
  %v1412 = vsub.f32 0.0, %v580
  %v1413 = vsub.f32 0.0, %v581
  %v1414 = vsub.f32 0.0, %v582
  %v1415 = vsub.f32 0.0, %v583
  %v1416 = vsub.f32 0.0, %v584
  %v1417 = vsub.f32 0.0, %v585
  %v1418 = vsub.f32 0.0, %v586
  %v1419 = vsub.f32 0.0, %v587
  %v1420 = vsub.f32 0.0, %v588
  %v1421 = vsub.f32 0.0, %v589
  %v1422 = vsub.f32 0.0, %v590
  %v1423 = vsub.f32 0.0, %v591
  %v1424 = vsub.f32 0.0, %v592
  %v1425 = vsub.f32 0.0, %v593
  %v1426 = vsub.f32 0.0, %v594
  %v1427 = vsub.f32 0.0, %v595
  %v1428 = vsub.f32 0.0, %v596
  %v1429 = vsub.f32 0.0, %v597
  %v1430 = vsub.f32 0.0, %v598
  %v1431 = vsub.f32 0.0, %v599
  %v1432 = vsub.f32 0.0, %v600
  %v1433 = vsub.f32 0.0, %v601
  %v1434 = vsub.f32 0.0, %v602
  %v1435 = vsub.f32 0.0, %v603
  %v1436 = vsub.f32 0.0, %v604
  %v1437 = vsub.f32 0.0, %v605
  %v1438 = vsub.f32 0.0, %v606
  %v1439 = vmul.f32 %v1375, %v543
  %v1440 = vmul.f32 %v1376, %v544
  %v1441 = vmul.f32 %v1377, %v545
  %v1442 = vmul.f32 %v1378, %v546
  %v1443 = vmul.f32 %v1379, %v547
  %v1444 = vmul.f32 %v1380, %v548
  %v1445 = vmul.f32 %v1381, %v549
  %v1446 = vmul.f32 %v1382, %v550
  %v1447 = vmul.f32 %v1383, %v551
  %v1448 = vmul.f32 %v1384, %v552
  %v1449 = vmul.f32 %v1385, %v553
  %v1450 = vmul.f32 %v1386, %v554
  %v1451 = vmul.f32 %v1387, %v555
  %v1452 = vmul.f32 %v1388, %v556
  %v1453 = vmul.f32 %v1389, %v557
  %v1454 = vmul.f32 %v1390, %v558
  %v1455 = vmul.f32 %v1391, %v559
  %v1456 = vmul.f32 %v1392, %v560
  %v1457 = vmul.f32 %v1393, %v561
  %v1458 = vmul.f32 %v1394, %v562
  %v1459 = vmul.f32 %v1395, %v563
  %v1460 = vmul.f32 %v1396, %v564
  %v1461 = vmul.f32 %v1397, %v565
  %v1462 = vmul.f32 %v1398, %v566
  %v1463 = vmul.f32 %v1399, %v567
  %v1464 = vmul.f32 %v1400, %v568
  %v1465 = vmul.f32 %v1401, %v569
  %v1466 = vmul.f32 %v1402, %v570
  %v1467 = vmul.f32 %v1403, %v571
  %v1468 = vmul.f32 %v1404, %v572
  %v1469 = vmul.f32 %v1405, %v573
  %v1470 = vmul.f32 %v1406, %v574
  %v1471 = vmul.f32 %v1407, %v575
  %v1472 = vmul.f32 %v1408, %v576
  %v1473 = vmul.f32 %v1409, %v577
  %v1474 = vmul.f32 %v1410, %v578
  %v1475 = vmul.f32 %v1411, %v579
  %v1476 = vmul.f32 %v1412, %v580
  %v1477 = vmul.f32 %v1413, %v581
  %v1478 = vmul.f32 %v1414, %v582
  %v1479 = vmul.f32 %v1415, %v583
  %v1480 = vmul.f32 %v1416, %v584
  %v1481 = vmul.f32 %v1417, %v585
  %v1482 = vmul.f32 %v1418, %v586
  %v1483 = vmul.f32 %v1419, %v587
  %v1484 = vmul.f32 %v1420, %v588
  %v1485 = vmul.f32 %v1421, %v589
  %v1486 = vmul.f32 %v1422, %v590
  %v1487 = vmul.f32 %v1423, %v591
  %v1488 = vmul.f32 %v1424, %v592
  %v1489 = vmul.f32 %v1425, %v593
  %v1490 = vmul.f32 %v1426, %v594
  %v1491 = vmul.f32 %v1427, %v595
  %v1492 = vmul.f32 %v1428, %v596
  %v1493 = vmul.f32 %v1429, %v597
  %v1494 = vmul.f32 %v1430, %v598
  %v1495 = vmul.f32 %v1431, %v599
  %v1496 = vmul.f32 %v1432, %v600
  %v1497 = vmul.f32 %v1433, %v601
  %v1498 = vmul.f32 %v1434, %v602
  %v1499 = vmul.f32 %v1435, %v603
  %v1500 = vmul.f32 %v1436, %v604
  %v1501 = vmul.f32 %v1437, %v605
  %v1502 = vmul.f32 %v1438, %v606
  %v1503 = vmul.f32 %v1439, 1.442695
  %v1504 = vpow.pop %v1503
  %v1505 = vmul.f32 %v1440, 1.442695
  %v1506 = vpow.pop %v1505
  %v1507 = vmul.f32 %v1441, 1.442695
  %v1508 = vpow.pop %v1507
  %v1509 = vmul.f32 %v1442, 1.442695
  %v1510 = vpow.pop %v1509
  %v1511 = vmul.f32 %v1443, 1.442695
  %v1512 = vpow.pop %v1511
  %v1513 = vmul.f32 %v1444, 1.442695
  %v1514 = vpow.pop %v1513
  %v1515 = vmul.f32 %v1445, 1.442695
  %v1516 = vpow.pop %v1515
  %v1517 = vmul.f32 %v1446, 1.442695
  %v1518 = vpow.pop %v1517
  %v1519 = vmul.f32 %v1447, 1.442695
  %v1520 = vpow.pop %v1519
  %v1521 = vmul.f32 %v1448, 1.442695
  %v1522 = vpow.pop %v1521
  %v1523 = vmul.f32 %v1449, 1.442695
  %v1524 = vpow.pop %v1523
  %v1525 = vmul.f32 %v1450, 1.442695
  %v1526 = vpow.pop %v1525
  %v1527 = vmul.f32 %v1451, 1.442695
  %v1528 = vpow.pop %v1527
  %v1529 = vmul.f32 %v1452, 1.442695
  %v1530 = vpow.pop %v1529
  %v1531 = vmul.f32 %v1453, 1.442695
  %v1532 = vpow.pop %v1531
  %v1533 = vmul.f32 %v1454, 1.442695
  %v1534 = vpow.pop %v1533
  %v1535 = vmul.f32 %v1455, 1.442695
  %v1536 = vpow.pop %v1535
  %v1537 = vmul.f32 %v1456, 1.442695
  %v1538 = vpow.pop %v1537
  %v1539 = vmul.f32 %v1457, 1.442695
  %v1540 = vpow.pop %v1539
  %v1541 = vmul.f32 %v1458, 1.442695
  %v1542 = vpow.pop %v1541
  %v1543 = vmul.f32 %v1459, 1.442695
  %v1544 = vpow.pop %v1543
  %v1545 = vmul.f32 %v1460, 1.442695
  %v1546 = vpow.pop %v1545
  %v1547 = vmul.f32 %v1461, 1.442695
  %v1548 = vpow.pop %v1547
  %v1549 = vmul.f32 %v1462, 1.442695
  %v1550 = vpow.pop %v1549
  %v1551 = vmul.f32 %v1463, 1.442695
  %v1552 = vpow.pop %v1551
  %v1553 = vmul.f32 %v1464, 1.442695
  %v1554 = vpow.pop %v1553
  %v1555 = vmul.f32 %v1465, 1.442695
  %v1556 = vpow.pop %v1555
  %v1557 = vmul.f32 %v1466, 1.442695
  %v1558 = vpow.pop %v1557
  %v1559 = vmul.f32 %v1467, 1.442695
  %v1560 = vpow.pop %v1559
  %v1561 = vmul.f32 %v1468, 1.442695
  %v1562 = vpow.pop %v1561
  %v1563 = vmul.f32 %v1469, 1.442695
  %v1564 = vpow.pop %v1563
  %v1565 = vmul.f32 %v1470, 1.442695
  %v1566 = vpow.pop %v1565
  %v1567 = vmul.f32 %v1471, 1.442695
  %v1568 = vpow.pop %v1567
  %v1569 = vmul.f32 %v1472, 1.442695
  %v1570 = vpow.pop %v1569
  %v1571 = vmul.f32 %v1473, 1.442695
  %v1572 = vpow.pop %v1571
  %v1573 = vmul.f32 %v1474, 1.442695
  %v1574 = vpow.pop %v1573
  %v1575 = vmul.f32 %v1475, 1.442695
  %v1576 = vpow.pop %v1575
  %v1577 = vmul.f32 %v1476, 1.442695
  %v1578 = vpow.pop %v1577
  %v1579 = vmul.f32 %v1477, 1.442695
  %v1580 = vpow.pop %v1579
  %v1581 = vmul.f32 %v1478, 1.442695
  %v1582 = vpow.pop %v1581
  %v1583 = vmul.f32 %v1479, 1.442695
  %v1584 = vpow.pop %v1583
  %v1585 = vmul.f32 %v1480, 1.442695
  %v1586 = vpow.pop %v1585
  %v1587 = vmul.f32 %v1481, 1.442695
  %v1588 = vpow.pop %v1587
  %v1589 = vmul.f32 %v1482, 1.442695
  %v1590 = vpow.pop %v1589
  %v1591 = vmul.f32 %v1483, 1.442695
  %v1592 = vpow.pop %v1591
  %v1593 = vmul.f32 %v1484, 1.442695
  %v1594 = vpow.pop %v1593
  %v1595 = vmul.f32 %v1485, 1.442695
  %v1596 = vpow.pop %v1595
  %v1597 = vmul.f32 %v1486, 1.442695
  %v1598 = vpow.pop %v1597
  %v1599 = vmul.f32 %v1487, 1.442695
  %v1600 = vpow.pop %v1599
  %v1601 = vmul.f32 %v1488, 1.442695
  %v1602 = vpow.pop %v1601
  %v1603 = vmul.f32 %v1489, 1.442695
  %v1604 = vpow.pop %v1603
  %v1605 = vmul.f32 %v1490, 1.442695
  %v1606 = vpow.pop %v1605
  %v1607 = vmul.f32 %v1491, 1.442695
  %v1608 = vpow.pop %v1607
  %v1609 = vmul.f32 %v1492, 1.442695
  %v1610 = vpow.pop %v1609
  %v1611 = vmul.f32 %v1493, 1.442695
  %v1612 = vpow.pop %v1611
  %v1613 = vmul.f32 %v1494, 1.442695
  %v1614 = vpow.pop %v1613
  %v1615 = vmul.f32 %v1495, 1.442695
  %v1616 = vpow.pop %v1615
  %v1617 = vmul.f32 %v1496, 1.442695
  %v1618 = vpow.pop %v1617
  %v1619 = vmul.f32 %v1497, 1.442695
  %v1620 = vpow.pop %v1619
  %v1621 = vmul.f32 %v1498, 1.442695
  %v1622 = vpow.pop %v1621
  %v1623 = vmul.f32 %v1499, 1.442695
  %v1624 = vpow.pop %v1623
  %v1625 = vmul.f32 %v1500, 1.442695
  %v1626 = vpow.pop %v1625
  %v1627 = vmul.f32 %v1501, 1.442695
  %v1628 = vpow.pop %v1627
  %v1629 = vmul.f32 %v1502, 1.442695
  %v1630 = vpow.pop %v1629
  %v1631 = vmul.f32 %v1311, %v1504
  %v1632 = vmul.f32 %v1312, %v1506
  %v1633 = vmul.f32 %v1313, %v1508
  %v1634 = vmul.f32 %v1314, %v1510
  %v1635 = vmul.f32 %v1315, %v1512
  %v1636 = vmul.f32 %v1316, %v1514
  %v1637 = vmul.f32 %v1317, %v1516
  %v1638 = vmul.f32 %v1318, %v1518
  %v1639 = vmul.f32 %v1319, %v1520
  %v1640 = vmul.f32 %v1320, %v1522
  %v1641 = vmul.f32 %v1321, %v1524
  %v1642 = vmul.f32 %v1322, %v1526
  %v1643 = vmul.f32 %v1323, %v1528
  %v1644 = vmul.f32 %v1324, %v1530
  %v1645 = vmul.f32 %v1325, %v1532
  %v1646 = vmul.f32 %v1326, %v1534
  %v1647 = vmul.f32 %v1327, %v1536
  %v1648 = vmul.f32 %v1328, %v1538
  %v1649 = vmul.f32 %v1329, %v1540
  %v1650 = vmul.f32 %v1330, %v1542
  %v1651 = vmul.f32 %v1331, %v1544
  %v1652 = vmul.f32 %v1332, %v1546
  %v1653 = vmul.f32 %v1333, %v1548
  %v1654 = vmul.f32 %v1334, %v1550
  %v1655 = vmul.f32 %v1335, %v1552
  %v1656 = vmul.f32 %v1336, %v1554
  %v1657 = vmul.f32 %v1337, %v1556
  %v1658 = vmul.f32 %v1338, %v1558
  %v1659 = vmul.f32 %v1339, %v1560
  %v1660 = vmul.f32 %v1340, %v1562
  %v1661 = vmul.f32 %v1341, %v1564
  %v1662 = vmul.f32 %v1342, %v1566
  %v1663 = vmul.f32 %v1343, %v1568
  %v1664 = vmul.f32 %v1344, %v1570
  %v1665 = vmul.f32 %v1345, %v1572
  %v1666 = vmul.f32 %v1346, %v1574
  %v1667 = vmul.f32 %v1347, %v1576
  %v1668 = vmul.f32 %v1348, %v1578
  %v1669 = vmul.f32 %v1349, %v1580
  %v1670 = vmul.f32 %v1350, %v1582
  %v1671 = vmul.f32 %v1351, %v1584
  %v1672 = vmul.f32 %v1352, %v1586
  %v1673 = vmul.f32 %v1353, %v1588
  %v1674 = vmul.f32 %v1354, %v1590
  %v1675 = vmul.f32 %v1355, %v1592
  %v1676 = vmul.f32 %v1356, %v1594
  %v1677 = vmul.f32 %v1357, %v1596
  %v1678 = vmul.f32 %v1358, %v1598
  %v1679 = vmul.f32 %v1359, %v1600
  %v1680 = vmul.f32 %v1360, %v1602
  %v1681 = vmul.f32 %v1361, %v1604
  %v1682 = vmul.f32 %v1362, %v1606
  %v1683 = vmul.f32 %v1363, %v1608
  %v1684 = vmul.f32 %v1364, %v1610
  %v1685 = vmul.f32 %v1365, %v1612
  %v1686 = vmul.f32 %v1366, %v1614
  %v1687 = vmul.f32 %v1367, %v1616
  %v1688 = vmul.f32 %v1368, %v1618
  %v1689 = vmul.f32 %v1369, %v1620
  %v1690 = vmul.f32 %v1370, %v1622
  %v1691 = vmul.f32 %v1371, %v1624
  %v1692 = vmul.f32 %v1372, %v1626
  %v1693 = vmul.f32 %v1373, %v1628
  %v1694 = vmul.f32 %v1374, %v1630
  %v1695 = vsub.f32 1.0, %v1631
  %v1696 = vsub.f32 1.0, %v1632
  %v1697 = vsub.f32 1.0, %v1633
  %v1698 = vsub.f32 1.0, %v1634
  %v1699 = vsub.f32 1.0, %v1635
  %v1700 = vsub.f32 1.0, %v1636
  %v1701 = vsub.f32 1.0, %v1637
  %v1702 = vsub.f32 1.0, %v1638
  %v1703 = vsub.f32 1.0, %v1639
  %v1704 = vsub.f32 1.0, %v1640
  %v1705 = vsub.f32 1.0, %v1641
  %v1706 = vsub.f32 1.0, %v1642
  %v1707 = vsub.f32 1.0, %v1643
  %v1708 = vsub.f32 1.0, %v1644
  %v1709 = vsub.f32 1.0, %v1645
  %v1710 = vsub.f32 1.0, %v1646
  %v1711 = vsub.f32 1.0, %v1647
  %v1712 = vsub.f32 1.0, %v1648
  %v1713 = vsub.f32 1.0, %v1649
  %v1714 = vsub.f32 1.0, %v1650
  %v1715 = vsub.f32 1.0, %v1651
  %v1716 = vsub.f32 1.0, %v1652
  %v1717 = vsub.f32 1.0, %v1653
  %v1718 = vsub.f32 1.0, %v1654
  %v1719 = vsub.f32 1.0, %v1655
  %v1720 = vsub.f32 1.0, %v1656
  %v1721 = vsub.f32 1.0, %v1657
  %v1722 = vsub.f32 1.0, %v1658
  %v1723 = vsub.f32 1.0, %v1659
  %v1724 = vsub.f32 1.0, %v1660
  %v1725 = vsub.f32 1.0, %v1661
  %v1726 = vsub.f32 1.0, %v1662
  %v1727 = vsub.f32 1.0, %v1663
  %v1728 = vsub.f32 1.0, %v1664
  %v1729 = vsub.f32 1.0, %v1665
  %v1730 = vsub.f32 1.0, %v1666
  %v1731 = vsub.f32 1.0, %v1667
  %v1732 = vsub.f32 1.0, %v1668
  %v1733 = vsub.f32 1.0, %v1669
  %v1734 = vsub.f32 1.0, %v1670
  %v1735 = vsub.f32 1.0, %v1671
  %v1736 = vsub.f32 1.0, %v1672
  %v1737 = vsub.f32 1.0, %v1673
  %v1738 = vsub.f32 1.0, %v1674
  %v1739 = vsub.f32 1.0, %v1675
  %v1740 = vsub.f32 1.0, %v1676
  %v1741 = vsub.f32 1.0, %v1677
  %v1742 = vsub.f32 1.0, %v1678
  %v1743 = vsub.f32 1.0, %v1679
  %v1744 = vsub.f32 1.0, %v1680
  %v1745 = vsub.f32 1.0, %v1681
  %v1746 = vsub.f32 1.0, %v1682
  %v1747 = vsub.f32 1.0, %v1683
  %v1748 = vsub.f32 1.0, %v1684
  %v1749 = vsub.f32 1.0, %v1685
  %v1750 = vsub.f32 1.0, %v1686
  %v1751 = vsub.f32 1.0, %v1687
  %v1752 = vsub.f32 1.0, %v1688
  %v1753 = vsub.f32 1.0, %v1689
  %v1754 = vsub.f32 1.0, %v1690
  %v1755 = vsub.f32 1.0, %v1691
  %v1756 = vsub.f32 1.0, %v1692
  %v1757 = vsub.f32 1.0, %v1693
  %v1758 = vsub.f32 1.0, %v1694
  %v1759 = vmul.f32 %v479, %v1695
  %v1760 = vmul.f32 %v480, %v1696
  %v1761 = vmul.f32 %v481, %v1697
  %v1762 = vmul.f32 %v482, %v1698
  %v1763 = vmul.f32 %v483, %v1699
  %v1764 = vmul.f32 %v484, %v1700
  %v1765 = vmul.f32 %v485, %v1701
  %v1766 = vmul.f32 %v486, %v1702
  %v1767 = vmul.f32 %v487, %v1703
  %v1768 = vmul.f32 %v488, %v1704
  %v1769 = vmul.f32 %v489, %v1705
  %v1770 = vmul.f32 %v490, %v1706
  %v1771 = vmul.f32 %v491, %v1707
  %v1772 = vmul.f32 %v492, %v1708
  %v1773 = vmul.f32 %v493, %v1709
  %v1774 = vmul.f32 %v494, %v1710
  %v1775 = vmul.f32 %v495, %v1711
  %v1776 = vmul.f32 %v496, %v1712
  %v1777 = vmul.f32 %v497, %v1713
  %v1778 = vmul.f32 %v498, %v1714
  %v1779 = vmul.f32 %v499, %v1715
  %v1780 = vmul.f32 %v500, %v1716
  %v1781 = vmul.f32 %v501, %v1717
  %v1782 = vmul.f32 %v502, %v1718
  %v1783 = vmul.f32 %v503, %v1719
  %v1784 = vmul.f32 %v504, %v1720
  %v1785 = vmul.f32 %v505, %v1721
  %v1786 = vmul.f32 %v506, %v1722
  %v1787 = vmul.f32 %v507, %v1723
  %v1788 = vmul.f32 %v508, %v1724
  %v1789 = vmul.f32 %v509, %v1725
  %v1790 = vmul.f32 %v510, %v1726
  %v1791 = vmul.f32 %v511, %v1727
  %v1792 = vmul.f32 %v512, %v1728
  %v1793 = vmul.f32 %v513, %v1729
  %v1794 = vmul.f32 %v514, %v1730
  %v1795 = vmul.f32 %v515, %v1731
  %v1796 = vmul.f32 %v516, %v1732
  %v1797 = vmul.f32 %v517, %v1733
  %v1798 = vmul.f32 %v518, %v1734
  %v1799 = vmul.f32 %v519, %v1735
  %v1800 = vmul.f32 %v520, %v1736
  %v1801 = vmul.f32 %v521, %v1737
  %v1802 = vmul.f32 %v522, %v1738
  %v1803 = vmul.f32 %v523, %v1739
  %v1804 = vmul.f32 %v524, %v1740
  %v1805 = vmul.f32 %v525, %v1741
  %v1806 = vmul.f32 %v526, %v1742
  %v1807 = vmul.f32 %v527, %v1743
  %v1808 = vmul.f32 %v528, %v1744
  %v1809 = vmul.f32 %v529, %v1745
  %v1810 = vmul.f32 %v530, %v1746
  %v1811 = vmul.f32 %v531, %v1747
  %v1812 = vmul.f32 %v532, %v1748
  %v1813 = vmul.f32 %v533, %v1749
  %v1814 = vmul.f32 %v534, %v1750
  %v1815 = vmul.f32 %v535, %v1751
  %v1816 = vmul.f32 %v536, %v1752
  %v1817 = vmul.f32 %v537, %v1753
  %v1818 = vmul.f32 %v538, %v1754
  %v1819 = vmul.f32 %v539, %v1755
  %v1820 = vmul.f32 %v540, %v1756
  %v1821 = vmul.f32 %v541, %v1757
  %v1822 = vmul.f32 %v542, %v1758
  %v1823 = vadd.f32 %v1759, 1.0
  %v1824 = vadd.f32 %v1760, 1.0
  %v1825 = vadd.f32 %v1761, 1.0
  %v1826 = vadd.f32 %v1762, 1.0
  %v1827 = vadd.f32 %v1763, 1.0
  %v1828 = vadd.f32 %v1764, 1.0
  %v1829 = vadd.f32 %v1765, 1.0
  %v1830 = vadd.f32 %v1766, 1.0
  %v1831 = vadd.f32 %v1767, 1.0
  %v1832 = vadd.f32 %v1768, 1.0
  %v1833 = vadd.f32 %v1769, 1.0
  %v1834 = vadd.f32 %v1770, 1.0
  %v1835 = vadd.f32 %v1771, 1.0
  %v1836 = vadd.f32 %v1772, 1.0
  %v1837 = vadd.f32 %v1773, 1.0
  %v1838 = vadd.f32 %v1774, 1.0
  %v1839 = vadd.f32 %v1775, 1.0
  %v1840 = vadd.f32 %v1776, 1.0
  %v1841 = vadd.f32 %v1777, 1.0
  %v1842 = vadd.f32 %v1778, 1.0
  %v1843 = vadd.f32 %v1779, 1.0
  %v1844 = vadd.f32 %v1780, 1.0
  %v1845 = vadd.f32 %v1781, 1.0
  %v1846 = vadd.f32 %v1782, 1.0
  %v1847 = vadd.f32 %v1783, 1.0
  %v1848 = vadd.f32 %v1784, 1.0
  %v1849 = vadd.f32 %v1785, 1.0
  %v1850 = vadd.f32 %v1786, 1.0
  %v1851 = vadd.f32 %v1787, 1.0
  %v1852 = vadd.f32 %v1788, 1.0
  %v1853 = vadd.f32 %v1789, 1.0
  %v1854 = vadd.f32 %v1790, 1.0
  %v1855 = vadd.f32 %v1791, 1.0
  %v1856 = vadd.f32 %v1792, 1.0
  %v1857 = vadd.f32 %v1793, 1.0
  %v1858 = vadd.f32 %v1794, 1.0
  %v1859 = vadd.f32 %v1795, 1.0
  %v1860 = vadd.f32 %v1796, 1.0
  %v1861 = vadd.f32 %v1797, 1.0
  %v1862 = vadd.f32 %v1798, 1.0
  %v1863 = vadd.f32 %v1799, 1.0
  %v1864 = vadd.f32 %v1800, 1.0
  %v1865 = vadd.f32 %v1801, 1.0
  %v1866 = vadd.f32 %v1802, 1.0
  %v1867 = vadd.f32 %v1803, 1.0
  %v1868 = vadd.f32 %v1804, 1.0
  %v1869 = vadd.f32 %v1805, 1.0
  %v1870 = vadd.f32 %v1806, 1.0
  %v1871 = vadd.f32 %v1807, 1.0
  %v1872 = vadd.f32 %v1808, 1.0
  %v1873 = vadd.f32 %v1809, 1.0
  %v1874 = vadd.f32 %v1810, 1.0
  %v1875 = vadd.f32 %v1811, 1.0
  %v1876 = vadd.f32 %v1812, 1.0
  %v1877 = vadd.f32 %v1813, 1.0
  %v1878 = vadd.f32 %v1814, 1.0
  %v1879 = vadd.f32 %v1815, 1.0
  %v1880 = vadd.f32 %v1816, 1.0
  %v1881 = vadd.f32 %v1817, 1.0
  %v1882 = vadd.f32 %v1818, 1.0
  %v1883 = vadd.f32 %v1819, 1.0
  %v1884 = vadd.f32 %v1820, 1.0
  %v1885 = vadd.f32 %v1821, 1.0
  %v1886 = vadd.f32 %v1822, 1.0
  %v1887 = vmul.f32 %v287, %v1823
  %v1888 = vmul.f32 %v288, %v1824
  %v1889 = vmul.f32 %v289, %v1825
  %v1890 = vmul.f32 %v290, %v1826
  %v1891 = vmul.f32 %v291, %v1827
  %v1892 = vmul.f32 %v292, %v1828
  %v1893 = vmul.f32 %v293, %v1829
  %v1894 = vmul.f32 %v294, %v1830
  %v1895 = vmul.f32 %v295, %v1831
  %v1896 = vmul.f32 %v296, %v1832
  %v1897 = vmul.f32 %v297, %v1833
  %v1898 = vmul.f32 %v298, %v1834
  %v1899 = vmul.f32 %v299, %v1835
  %v1900 = vmul.f32 %v300, %v1836
  %v1901 = vmul.f32 %v301, %v1837
  %v1902 = vmul.f32 %v302, %v1838
  %v1903 = vmul.f32 %v303, %v1839
  %v1904 = vmul.f32 %v304, %v1840
  %v1905 = vmul.f32 %v305, %v1841
  %v1906 = vmul.f32 %v306, %v1842
  %v1907 = vmul.f32 %v307, %v1843
  %v1908 = vmul.f32 %v308, %v1844
  %v1909 = vmul.f32 %v309, %v1845
  %v1910 = vmul.f32 %v310, %v1846
  %v1911 = vmul.f32 %v311, %v1847
  %v1912 = vmul.f32 %v312, %v1848
  %v1913 = vmul.f32 %v313, %v1849
  %v1914 = vmul.f32 %v314, %v1850
  %v1915 = vmul.f32 %v315, %v1851
  %v1916 = vmul.f32 %v316, %v1852
  %v1917 = vmul.f32 %v317, %v1853
  %v1918 = vmul.f32 %v318, %v1854
  %v1919 = vmul.f32 %v319, %v1855
  %v1920 = vmul.f32 %v320, %v1856
  %v1921 = vmul.f32 %v321, %v1857
  %v1922 = vmul.f32 %v322, %v1858
  %v1923 = vmul.f32 %v323, %v1859
  %v1924 = vmul.f32 %v324, %v1860
  %v1925 = vmul.f32 %v325, %v1861
  %v1926 = vmul.f32 %v326, %v1862
  %v1927 = vmul.f32 %v327, %v1863
  %v1928 = vmul.f32 %v328, %v1864
  %v1929 = vmul.f32 %v329, %v1865
  %v1930 = vmul.f32 %v330, %v1866
  %v1931 = vmul.f32 %v331, %v1867
  %v1932 = vmul.f32 %v332, %v1868
  %v1933 = vmul.f32 %v333, %v1869
  %v1934 = vmul.f32 %v334, %v1870
  %v1935 = vmul.f32 %v335, %v1871
  %v1936 = vmul.f32 %v336, %v1872
  %v1937 = vmul.f32 %v337, %v1873
  %v1938 = vmul.f32 %v338, %v1874
  %v1939 = vmul.f32 %v339, %v1875
  %v1940 = vmul.f32 %v340, %v1876
  %v1941 = vmul.f32 %v341, %v1877
  %v1942 = vmul.f32 %v342, %v1878
  %v1943 = vmul.f32 %v343, %v1879
  %v1944 = vmul.f32 %v344, %v1880
  %v1945 = vmul.f32 %v345, %v1881
  %v1946 = vmul.f32 %v346, %v1882
  %v1947 = vmul.f32 %v347, %v1883
  %v1948 = vmul.f32 %v348, %v1884
  %v1949 = vmul.f32 %v349, %v1885
  %v1950 = vmul.f32 %v350, %v1886
  %v1951 = vld [vmem:[%s3] sm:$0xf]
  %v1952 = vld [vmem:[%s3 + $0x4] sm:$0xf]
  %v1953 = vld [vmem:[%s3 + $0x8] sm:$0xf]
  %v1954 = vld [vmem:[%s3 + $0xc] sm:$0xf]
  %v1955 = vld [vmem:[%s3 + $0x10] sm:$0xf]
  %v1956 = vld [vmem:[%s3 + $0x14] sm:$0xf]
  %v1957 = vld [vmem:[%s3 + $0x18] sm:$0xf]
  %v1958 = vld [vmem:[%s3 + $0x1c] sm:$0xf]
  %v1959 = vld [vmem:[%s3 + $0x20] sm:$0xf]
  %v1960 = vld [vmem:[%s3 + $0x24] sm:$0xf]
  %v1961 = vld [vmem:[%s3 + $0x28] sm:$0xf]
  %v1962 = vld [vmem:[%s3 + $0x2c] sm:$0xf]
  %v1963 = vld [vmem:[%s3 + $0x30] sm:$0xf]
  %v1964 = vld [vmem:[%s3 + $0x34] sm:$0xf]
  %v1965 = vld [vmem:[%s3 + $0x38] sm:$0xf]
  %v1966 = vld [vmem:[%s3 + $0x3c] sm:$0xf]
  %v1967 = vld [vmem:[%s3 + $0x40] sm:$0xf]
  %v1968 = vld [vmem:[%s3 + $0x44] sm:$0xf]
  %v1969 = vld [vmem:[%s3 + $0x48] sm:$0xf]
  %v1970 = vld [vmem:[%s3 + $0x4c] sm:$0xf]
  %v1971 = vld [vmem:[%s3 + $0x50] sm:$0xf]
  %v1972 = vld [vmem:[%s3 + $0x54] sm:$0xf]
  %v1973 = vld [vmem:[%s3 + $0x58] sm:$0xf]
  %v1974 = vld [vmem:[%s3 + $0x5c] sm:$0xf]
  %v1975 = vld [vmem:[%s3 + $0x60] sm:$0xf]
  %v1976 = vld [vmem:[%s3 + $0x64] sm:$0xf]
  %v1977 = vld [vmem:[%s3 + $0x68] sm:$0xf]
  %v1978 = vld [vmem:[%s3 + $0x6c] sm:$0xf]
  %v1979 = vld [vmem:[%s3 + $0x70] sm:$0xf]
  %v1980 = vld [vmem:[%s3 + $0x74] sm:$0xf]
  %v1981 = vld [vmem:[%s3 + $0x78] sm:$0xf]
  %v1982 = vld [vmem:[%s3 + $0x7c] sm:$0xf]
  %v1983 = vld [vmem:[%s3 + $0x80] sm:$0xf]
  %v1984 = vld [vmem:[%s3 + $0x84] sm:$0xf]
  %v1985 = vld [vmem:[%s3 + $0x88] sm:$0xf]
  %v1986 = vld [vmem:[%s3 + $0x8c] sm:$0xf]
  %v1987 = vld [vmem:[%s3 + $0x90] sm:$0xf]
  %v1988 = vld [vmem:[%s3 + $0x94] sm:$0xf]
  %v1989 = vld [vmem:[%s3 + $0x98] sm:$0xf]
  %v1990 = vld [vmem:[%s3 + $0x9c] sm:$0xf]
  %v1991 = vld [vmem:[%s3 + $0xa0] sm:$0xf]
  %v1992 = vld [vmem:[%s3 + $0xa4] sm:$0xf]
  %v1993 = vld [vmem:[%s3 + $0xa8] sm:$0xf]
  %v1994 = vld [vmem:[%s3 + $0xac] sm:$0xf]
  %v1995 = vld [vmem:[%s3 + $0xb0] sm:$0xf]
  %v1996 = vld [vmem:[%s3 + $0xb4] sm:$0xf]
  %v1997 = vld [vmem:[%s3 + $0xb8] sm:$0xf]
  %v1998 = vld [vmem:[%s3 + $0xbc] sm:$0xf]
  %v1999 = vld [vmem:[%s3 + $0xc0] sm:$0xf]
  %v2000 = vld [vmem:[%s3 + $0xc4] sm:$0xf]
  %v2001 = vld [vmem:[%s3 + $0xc8] sm:$0xf]
  %v2002 = vld [vmem:[%s3 + $0xcc] sm:$0xf]
  %v2003 = vld [vmem:[%s3 + $0xd0] sm:$0xf]
  %v2004 = vld [vmem:[%s3 + $0xd4] sm:$0xf]
  %v2005 = vld [vmem:[%s3 + $0xd8] sm:$0xf]
  %v2006 = vld [vmem:[%s3 + $0xdc] sm:$0xf]
  %v2007 = vld [vmem:[%s3 + $0xe0] sm:$0xf]
  %v2008 = vld [vmem:[%s3 + $0xe4] sm:$0xf]
  %v2009 = vld [vmem:[%s3 + $0xe8] sm:$0xf]
  %v2010 = vld [vmem:[%s3 + $0xec] sm:$0xf]
  %v2011 = vld [vmem:[%s3 + $0xf0] sm:$0xf]
  %v2012 = vld [vmem:[%s3 + $0xf4] sm:$0xf]
  %v2013 = vld [vmem:[%s3 + $0xf8] sm:$0xf]
  %v2014 = vld [vmem:[%s3 + $0xfc] sm:$0xf]
  %v2015 = vunpack.c.l.bf16 %v1951
  %v2016 = vunpack.c.l.bf16 %v1952
  %v2017 = vunpack.c.l.bf16 %v1953
  %v2018 = vunpack.c.l.bf16 %v1954
  %v2019 = vunpack.c.l.bf16 %v1955
  %v2020 = vunpack.c.l.bf16 %v1956
  %v2021 = vunpack.c.l.bf16 %v1957
  %v2022 = vunpack.c.l.bf16 %v1958
  %v2023 = vunpack.c.l.bf16 %v1959
  %v2024 = vunpack.c.l.bf16 %v1960
  %v2025 = vunpack.c.l.bf16 %v1961
  %v2026 = vunpack.c.l.bf16 %v1962
  %v2027 = vunpack.c.l.bf16 %v1963
  %v2028 = vunpack.c.l.bf16 %v1964
  %v2029 = vunpack.c.l.bf16 %v1965
  %v2030 = vunpack.c.l.bf16 %v1966
  %v2031 = vunpack.c.l.bf16 %v1967
  %v2032 = vunpack.c.l.bf16 %v1968
  %v2033 = vunpack.c.l.bf16 %v1969
  %v2034 = vunpack.c.l.bf16 %v1970
  %v2035 = vunpack.c.l.bf16 %v1971
  %v2036 = vunpack.c.l.bf16 %v1972
  %v2037 = vunpack.c.l.bf16 %v1973
  %v2038 = vunpack.c.l.bf16 %v1974
  %v2039 = vunpack.c.l.bf16 %v1975
  %v2040 = vunpack.c.l.bf16 %v1976
  %v2041 = vunpack.c.l.bf16 %v1977
  %v2042 = vunpack.c.l.bf16 %v1978
  %v2043 = vunpack.c.l.bf16 %v1979
  %v2044 = vunpack.c.l.bf16 %v1980
  %v2045 = vunpack.c.l.bf16 %v1981
  %v2046 = vunpack.c.l.bf16 %v1982
  %v2047 = vunpack.c.l.bf16 %v1983
  %v2048 = vunpack.c.l.bf16 %v1984
  %v2049 = vunpack.c.l.bf16 %v1985
  %v2050 = vunpack.c.l.bf16 %v1986
  %v2051 = vunpack.c.l.bf16 %v1987
  %v2052 = vunpack.c.l.bf16 %v1988
  %v2053 = vunpack.c.l.bf16 %v1989
  %v2054 = vunpack.c.l.bf16 %v1990
  %v2055 = vunpack.c.l.bf16 %v1991
  %v2056 = vunpack.c.l.bf16 %v1992
  %v2057 = vunpack.c.l.bf16 %v1993
  %v2058 = vunpack.c.l.bf16 %v1994
  %v2059 = vunpack.c.l.bf16 %v1995
  %v2060 = vunpack.c.l.bf16 %v1996
  %v2061 = vunpack.c.l.bf16 %v1997
  %v2062 = vunpack.c.l.bf16 %v1998
  %v2063 = vunpack.c.l.bf16 %v1999
  %v2064 = vunpack.c.l.bf16 %v2000
  %v2065 = vunpack.c.l.bf16 %v2001
  %v2066 = vunpack.c.l.bf16 %v2002
  %v2067 = vunpack.c.l.bf16 %v2003
  %v2068 = vunpack.c.l.bf16 %v2004
  %v2069 = vunpack.c.l.bf16 %v2005
  %v2070 = vunpack.c.l.bf16 %v2006
  %v2071 = vunpack.c.l.bf16 %v2007
  %v2072 = vunpack.c.l.bf16 %v2008
  %v2073 = vunpack.c.l.bf16 %v2009
  %v2074 = vunpack.c.l.bf16 %v2010
  %v2075 = vunpack.c.l.bf16 %v2011
  %v2076 = vunpack.c.l.bf16 %v2012
  %v2077 = vunpack.c.l.bf16 %v2013
  %v2078 = vunpack.c.l.bf16 %v2014
  %v2079 = vadd.f32 %v1887, %v2015
  %v2080 = vadd.f32 %v1888, %v2016
  %v2081 = vadd.f32 %v1889, %v2017
  %v2082 = vadd.f32 %v1890, %v2018
  %v2083 = vadd.f32 %v1891, %v2019
  %v2084 = vadd.f32 %v1892, %v2020
  %v2085 = vadd.f32 %v1893, %v2021
  %v2086 = vadd.f32 %v1894, %v2022
  %v2087 = vadd.f32 %v1895, %v2023
  %v2088 = vadd.f32 %v1896, %v2024
  %v2089 = vadd.f32 %v1897, %v2025
  %v2090 = vadd.f32 %v1898, %v2026
  %v2091 = vadd.f32 %v1899, %v2027
  %v2092 = vadd.f32 %v1900, %v2028
  %v2093 = vadd.f32 %v1901, %v2029
  %v2094 = vadd.f32 %v1902, %v2030
  %v2095 = vadd.f32 %v1903, %v2031
  %v2096 = vadd.f32 %v1904, %v2032
  %v2097 = vadd.f32 %v1905, %v2033
  %v2098 = vadd.f32 %v1906, %v2034
  %v2099 = vadd.f32 %v1907, %v2035
  %v2100 = vadd.f32 %v1908, %v2036
  %v2101 = vadd.f32 %v1909, %v2037
  %v2102 = vadd.f32 %v1910, %v2038
  %v2103 = vadd.f32 %v1911, %v2039
  %v2104 = vadd.f32 %v1912, %v2040
  %v2105 = vadd.f32 %v1913, %v2041
  %v2106 = vadd.f32 %v1914, %v2042
  %v2107 = vadd.f32 %v1915, %v2043
  %v2108 = vadd.f32 %v1916, %v2044
  %v2109 = vadd.f32 %v1917, %v2045
  %v2110 = vadd.f32 %v1918, %v2046
  %v2111 = vadd.f32 %v1919, %v2047
  %v2112 = vadd.f32 %v1920, %v2048
  %v2113 = vadd.f32 %v1921, %v2049
  %v2114 = vadd.f32 %v1922, %v2050
  %v2115 = vadd.f32 %v1923, %v2051
  %v2116 = vadd.f32 %v1924, %v2052
  %v2117 = vadd.f32 %v1925, %v2053
  %v2118 = vadd.f32 %v1926, %v2054
  %v2119 = vadd.f32 %v1927, %v2055
  %v2120 = vadd.f32 %v1928, %v2056
  %v2121 = vadd.f32 %v1929, %v2057
  %v2122 = vadd.f32 %v1930, %v2058
  %v2123 = vadd.f32 %v1931, %v2059
  %v2124 = vadd.f32 %v1932, %v2060
  %v2125 = vadd.f32 %v1933, %v2061
  %v2126 = vadd.f32 %v1934, %v2062
  %v2127 = vadd.f32 %v1935, %v2063
  %v2128 = vadd.f32 %v1936, %v2064
  %v2129 = vadd.f32 %v1937, %v2065
  %v2130 = vadd.f32 %v1938, %v2066
  %v2131 = vadd.f32 %v1939, %v2067
  %v2132 = vadd.f32 %v1940, %v2068
  %v2133 = vadd.f32 %v1941, %v2069
  %v2134 = vadd.f32 %v1942, %v2070
  %v2135 = vadd.f32 %v1943, %v2071
  %v2136 = vadd.f32 %v1944, %v2072
  %v2137 = vadd.f32 %v1945, %v2073
  %v2138 = vadd.f32 %v1946, %v2074
  %v2139 = vadd.f32 %v1947, %v2075
  %v2140 = vadd.f32 %v1948, %v2076
  %v2141 = vadd.f32 %v1949, %v2077
  %v2142 = vadd.f32 %v1950, %v2078
  %v2143 = vmul.f32 %v2079, 0.7072136
  %v2144 = vmul.f32 %v2080, 0.7072136
  %v2145 = vmul.f32 %v2081, 0.7072136
  %v2146 = vmul.f32 %v2082, 0.7072136
  %v2147 = vmul.f32 %v2083, 0.7072136
  %v2148 = vmul.f32 %v2084, 0.7072136
  %v2149 = vmul.f32 %v2085, 0.7072136
  %v2150 = vmul.f32 %v2086, 0.7072136
  %v2151 = vmul.f32 %v2087, 0.7072136
  %v2152 = vmul.f32 %v2088, 0.7072136
  %v2153 = vmul.f32 %v2089, 0.7072136
  %v2154 = vmul.f32 %v2090, 0.7072136
  %v2155 = vmul.f32 %v2091, 0.7072136
  %v2156 = vmul.f32 %v2092, 0.7072136
  %v2157 = vmul.f32 %v2093, 0.7072136
  %v2158 = vmul.f32 %v2094, 0.7072136
  %v2159 = vmul.f32 %v2095, 0.7072136
  %v2160 = vmul.f32 %v2096, 0.7072136
  %v2161 = vmul.f32 %v2097, 0.7072136
  %v2162 = vmul.f32 %v2098, 0.7072136
  %v2163 = vmul.f32 %v2099, 0.7072136
  %v2164 = vmul.f32 %v2100, 0.7072136
  %v2165 = vmul.f32 %v2101, 0.7072136
  %v2166 = vmul.f32 %v2102, 0.7072136
  %v2167 = vmul.f32 %v2103, 0.7072136
  %v2168 = vmul.f32 %v2104, 0.7072136
  %v2169 = vmul.f32 %v2105, 0.7072136
  %v2170 = vmul.f32 %v2106, 0.7072136
  %v2171 = vmul.f32 %v2107, 0.7072136
  %v2172 = vmul.f32 %v2108, 0.7072136
  %v2173 = vmul.f32 %v2109, 0.7072136
  %v2174 = vmul.f32 %v2110, 0.7072136
  %v2175 = vmul.f32 %v2111, 0.7072136
  %v2176 = vmul.f32 %v2112, 0.7072136
  %v2177 = vmul.f32 %v2113, 0.7072136
  %v2178 = vmul.f32 %v2114, 0.7072136
  %v2179 = vmul.f32 %v2115, 0.7072136
  %v2180 = vmul.f32 %v2116, 0.7072136
  %v2181 = vmul.f32 %v2117, 0.7072136
  %v2182 = vmul.f32 %v2118, 0.7072136
  %v2183 = vmul.f32 %v2119, 0.7072136
  %v2184 = vmul.f32 %v2120, 0.7072136
  %v2185 = vmul.f32 %v2121, 0.7072136
  %v2186 = vmul.f32 %v2122, 0.7072136
  %v2187 = vmul.f32 %v2123, 0.7072136
  %v2188 = vmul.f32 %v2124, 0.7072136
  %v2189 = vmul.f32 %v2125, 0.7072136
  %v2190 = vmul.f32 %v2126, 0.7072136
  %v2191 = vmul.f32 %v2127, 0.7072136
  %v2192 = vmul.f32 %v2128, 0.7072136
  %v2193 = vmul.f32 %v2129, 0.7072136
  %v2194 = vmul.f32 %v2130, 0.7072136
  %v2195 = vmul.f32 %v2131, 0.7072136
  %v2196 = vmul.f32 %v2132, 0.7072136
  %v2197 = vmul.f32 %v2133, 0.7072136
  %v2198 = vmul.f32 %v2134, 0.7072136
  %v2199 = vmul.f32 %v2135, 0.7072136
  %v2200 = vmul.f32 %v2136, 0.7072136
  %v2201 = vmul.f32 %v2137, 0.7072136
  %v2202 = vmul.f32 %v2138, 0.7072136
  %v2203 = vmul.f32 %v2139, 0.7072136
  %v2204 = vmul.f32 %v2140, 0.7072136
  %v2205 = vmul.f32 %v2141, 0.7072136
  %v2206 = vmul.f32 %v2142, 0.7072136
  %v2207 = vpack.c.bf16 %v2144, %v2143
  %v2208 = vpack.c.bf16 %v2146, %v2145
  %v2209 = vpack.c.bf16 %v2148, %v2147
  %v2210 = vpack.c.bf16 %v2150, %v2149
  %v2211 = vpack.c.bf16 %v2152, %v2151
  %v2212 = vpack.c.bf16 %v2154, %v2153
  %v2213 = vpack.c.bf16 %v2156, %v2155
  %v2214 = vpack.c.bf16 %v2158, %v2157
  %v2215 = vpack.c.bf16 %v2160, %v2159
  %v2216 = vpack.c.bf16 %v2162, %v2161
  %v2217 = vpack.c.bf16 %v2164, %v2163
  %v2218 = vpack.c.bf16 %v2166, %v2165
  %v2219 = vpack.c.bf16 %v2168, %v2167
  %v2220 = vpack.c.bf16 %v2170, %v2169
  %v2221 = vpack.c.bf16 %v2172, %v2171
  %v2222 = vpack.c.bf16 %v2174, %v2173
  %v2223 = vpack.c.bf16 %v2176, %v2175
  %v2224 = vpack.c.bf16 %v2178, %v2177
  %v2225 = vpack.c.bf16 %v2180, %v2179
  %v2226 = vpack.c.bf16 %v2182, %v2181
  %v2227 = vpack.c.bf16 %v2184, %v2183
  %v2228 = vpack.c.bf16 %v2186, %v2185
  %v2229 = vpack.c.bf16 %v2188, %v2187
  %v2230 = vpack.c.bf16 %v2190, %v2189
  %v2231 = vpack.c.bf16 %v2192, %v2191
  %v2232 = vpack.c.bf16 %v2194, %v2193
  %v2233 = vpack.c.bf16 %v2196, %v2195
  %v2234 = vpack.c.bf16 %v2198, %v2197
  %v2235 = vpack.c.bf16 %v2200, %v2199
  %v2236 = vpack.c.bf16 %v2202, %v2201
  %v2237 = vpack.c.bf16 %v2204, %v2203
  %v2238 = vpack.c.bf16 %v2206, %v2205
  %v2271 = vunpack.c.l.b16 %v2207
  %v2272 = vunpack.c.h.b16 %v2207
  %v2273 = vunpack.c.l.b16 %v2208
  %v2274 = vunpack.c.h.b16 %v2208
  %v2275 = vunpack.c.l.b16 %v2209
  %v2276 = vunpack.c.h.b16 %v2209
  %v2277 = vunpack.c.l.b16 %v2210
  %v2278 = vunpack.c.h.b16 %v2210
  %v2279 = vunpack.c.l.b16 %v2211
  %v2280 = vunpack.c.h.b16 %v2211
  %v2281 = vunpack.c.l.b16 %v2212
  %v2282 = vunpack.c.h.b16 %v2212
  %v2283 = vunpack.c.l.b16 %v2213
  %v2284 = vunpack.c.h.b16 %v2213
  %v2285 = vunpack.c.l.b16 %v2214
  %v2286 = vunpack.c.h.b16 %v2214
  %v2287 = vunpack.c.l.b16 %v2215
  %v2288 = vunpack.c.h.b16 %v2215
  %v2289 = vunpack.c.l.b16 %v2216
  %v2290 = vunpack.c.h.b16 %v2216
  %v2291 = vunpack.c.l.b16 %v2217
  %v2292 = vunpack.c.h.b16 %v2217
  %v2293 = vunpack.c.l.b16 %v2218
  %v2294 = vunpack.c.h.b16 %v2218
  %v2295 = vunpack.c.l.b16 %v2219
  %v2296 = vunpack.c.h.b16 %v2219
  %v2297 = vunpack.c.l.b16 %v2220
  %v2298 = vunpack.c.h.b16 %v2220
  %v2299 = vunpack.c.l.b16 %v2221
  %v2300 = vunpack.c.h.b16 %v2221
  %v2301 = vunpack.c.l.b16 %v2222
  %v2302 = vunpack.c.h.b16 %v2222
  %v2303 = vunpack.c.l.b16 %v2223
  %v2304 = vunpack.c.h.b16 %v2223
  %v2305 = vunpack.c.l.b16 %v2224
  %v2306 = vunpack.c.h.b16 %v2224
  %v2307 = vunpack.c.l.b16 %v2225
  %v2308 = vunpack.c.h.b16 %v2225
  %v2309 = vunpack.c.l.b16 %v2226
  %v2310 = vunpack.c.h.b16 %v2226
  %v2311 = vunpack.c.l.b16 %v2227
  %v2312 = vunpack.c.h.b16 %v2227
  %v2313 = vunpack.c.l.b16 %v2228
  %v2314 = vunpack.c.h.b16 %v2228
  %v2315 = vunpack.c.l.b16 %v2229
  %v2316 = vunpack.c.h.b16 %v2229
  %v2317 = vunpack.c.l.b16 %v2230
  %v2318 = vunpack.c.h.b16 %v2230
  %v2319 = vunpack.c.l.b16 %v2231
  %v2320 = vunpack.c.h.b16 %v2231
  %v2321 = vunpack.c.l.b16 %v2232
  %v2322 = vunpack.c.h.b16 %v2232
  %v2323 = vunpack.c.l.b16 %v2233
  %v2324 = vunpack.c.h.b16 %v2233
  %v2325 = vunpack.c.l.b16 %v2234
  %v2326 = vunpack.c.h.b16 %v2234
  %v2327 = vunpack.c.l.b16 %v2235
  %v2328 = vunpack.c.h.b16 %v2235
  %v2329 = vunpack.c.l.b16 %v2236
  %v2330 = vunpack.c.h.b16 %v2236
  %v2331 = vunpack.c.l.b16 %v2237
  %v2332 = vunpack.c.h.b16 %v2237
  %v2333 = vunpack.c.l.b16 %v2238
  %v2334 = vunpack.c.h.b16 %v2238
  %v2335 = vpack.c.b16 %v2271, %v2271
  %v2336 = vpack.c.b16 %v2272, %v2272
  %v2337 = vpack.c.b16 %v2273, %v2273
  %v2338 = vpack.c.b16 %v2274, %v2274
  %v2339 = vpack.c.b16 %v2275, %v2275
  %v2340 = vpack.c.b16 %v2276, %v2276
  %v2341 = vpack.c.b16 %v2277, %v2277
  %v2342 = vpack.c.b16 %v2278, %v2278
  %v2343 = vpack.c.b16 %v2279, %v2279
  %v2344 = vpack.c.b16 %v2280, %v2280
  %v2345 = vpack.c.b16 %v2281, %v2281
  %v2346 = vpack.c.b16 %v2282, %v2282
  %v2347 = vpack.c.b16 %v2283, %v2283
  %v2348 = vpack.c.b16 %v2284, %v2284
  %v2349 = vpack.c.b16 %v2285, %v2285
  %v2350 = vpack.c.b16 %v2286, %v2286
  %v2351 = vpack.c.b16 %v2287, %v2287
  %v2352 = vpack.c.b16 %v2288, %v2288
  %v2353 = vpack.c.b16 %v2289, %v2289
  %v2354 = vpack.c.b16 %v2290, %v2290
  %v2355 = vpack.c.b16 %v2291, %v2291
  %v2356 = vpack.c.b16 %v2292, %v2292
  %v2357 = vpack.c.b16 %v2293, %v2293
  %v2358 = vpack.c.b16 %v2294, %v2294
  %v2359 = vpack.c.b16 %v2295, %v2295
  %v2360 = vpack.c.b16 %v2296, %v2296
  %v2361 = vpack.c.b16 %v2297, %v2297
  %v2362 = vpack.c.b16 %v2298, %v2298
  %v2363 = vpack.c.b16 %v2299, %v2299
  %v2364 = vpack.c.b16 %v2300, %v2300
  %v2365 = vpack.c.b16 %v2301, %v2301
  %v2366 = vpack.c.b16 %v2302, %v2302
  %v2367 = vpack.c.b16 %v2303, %v2303
  %v2368 = vpack.c.b16 %v2304, %v2304
  %v2369 = vpack.c.b16 %v2305, %v2305
  %v2370 = vpack.c.b16 %v2306, %v2306
  %v2371 = vpack.c.b16 %v2307, %v2307
  %v2372 = vpack.c.b16 %v2308, %v2308
  %v2373 = vpack.c.b16 %v2309, %v2309
  %v2374 = vpack.c.b16 %v2310, %v2310
  %v2375 = vpack.c.b16 %v2311, %v2311
  %v2376 = vpack.c.b16 %v2312, %v2312
  %v2377 = vpack.c.b16 %v2313, %v2313
  %v2378 = vpack.c.b16 %v2314, %v2314
  %v2379 = vpack.c.b16 %v2315, %v2315
  %v2380 = vpack.c.b16 %v2316, %v2316
  %v2381 = vpack.c.b16 %v2317, %v2317
  %v2382 = vpack.c.b16 %v2318, %v2318
  %v2383 = vpack.c.b16 %v2319, %v2319
  %v2384 = vpack.c.b16 %v2320, %v2320
  %v2385 = vpack.c.b16 %v2321, %v2321
  %v2386 = vpack.c.b16 %v2322, %v2322
  %v2387 = vpack.c.b16 %v2323, %v2323
  %v2388 = vpack.c.b16 %v2324, %v2324
  %v2389 = vpack.c.b16 %v2325, %v2325
  %v2390 = vpack.c.b16 %v2326, %v2326
  %v2391 = vpack.c.b16 %v2327, %v2327
  %v2392 = vpack.c.b16 %v2328, %v2328
  %v2393 = vpack.c.b16 %v2329, %v2329
  %v2394 = vpack.c.b16 %v2330, %v2330
  %v2395 = vpack.c.b16 %v2331, %v2331
  %v2396 = vpack.c.b16 %v2332, %v2332
  %v2397 = vpack.c.b16 %v2333, %v2333
  %v2398 = vpack.c.b16 %v2334, %v2334
  %2463 = vst [vmem:[%s4] sm:$0xf] %v2335
  %2464 = vst [vmem:[%s4 + $0x4] sm:$0xf] %v2336
  %2465 = vst [vmem:[%s4 + $0x8] sm:$0xf] %v2337
  %2466 = vst [vmem:[%s4 + $0xc] sm:$0xf] %v2338
  %2467 = vst [vmem:[%s4 + $0x10] sm:$0xf] %v2339
  %2468 = vst [vmem:[%s4 + $0x14] sm:$0xf] %v2340
  %2469 = vst [vmem:[%s4 + $0x18] sm:$0xf] %v2341
  %2470 = vst [vmem:[%s4 + $0x1c] sm:$0xf] %v2342
  %2471 = vst [vmem:[%s4 + $0x20] sm:$0xf] %v2343
  %2472 = vst [vmem:[%s4 + $0x24] sm:$0xf] %v2344
  %2473 = vst [vmem:[%s4 + $0x28] sm:$0xf] %v2345
  %2474 = vst [vmem:[%s4 + $0x2c] sm:$0xf] %v2346
  %2475 = vst [vmem:[%s4 + $0x30] sm:$0xf] %v2347
  %2476 = vst [vmem:[%s4 + $0x34] sm:$0xf] %v2348
  %2477 = vst [vmem:[%s4 + $0x38] sm:$0xf] %v2349
  %2478 = vst [vmem:[%s4 + $0x3c] sm:$0xf] %v2350
  %2479 = vst [vmem:[%s4 + $0x40] sm:$0xf] %v2351
  %2480 = vst [vmem:[%s4 + $0x44] sm:$0xf] %v2352
  %2481 = vst [vmem:[%s4 + $0x48] sm:$0xf] %v2353
  %2482 = vst [vmem:[%s4 + $0x4c] sm:$0xf] %v2354
  %2483 = vst [vmem:[%s4 + $0x50] sm:$0xf] %v2355
  %2484 = vst [vmem:[%s4 + $0x54] sm:$0xf] %v2356
  %2485 = vst [vmem:[%s4 + $0x58] sm:$0xf] %v2357
  %2486 = vst [vmem:[%s4 + $0x5c] sm:$0xf] %v2358
  %2487 = vst [vmem:[%s4 + $0x60] sm:$0xf] %v2359
  %2488 = vst [vmem:[%s4 + $0x64] sm:$0xf] %v2360
  %2489 = vst [vmem:[%s4 + $0x68] sm:$0xf] %v2361
  %2490 = vst [vmem:[%s4 + $0x6c] sm:$0xf] %v2362
  %2491 = vst [vmem:[%s4 + $0x70] sm:$0xf] %v2363
  %2492 = vst [vmem:[%s4 + $0x74] sm:$0xf] %v2364
  %2493 = vst [vmem:[%s4 + $0x78] sm:$0xf] %v2365
  %2494 = vst [vmem:[%s4 + $0x7c] sm:$0xf] %v2366
  %2495 = vst [vmem:[%s4 + $0x80] sm:$0xf] %v2367
  %2496 = vst [vmem:[%s4 + $0x84] sm:$0xf] %v2368
  %2497 = vst [vmem:[%s4 + $0x88] sm:$0xf] %v2369
  %2498 = vst [vmem:[%s4 + $0x8c] sm:$0xf] %v2370
  %2499 = vst [vmem:[%s4 + $0x90] sm:$0xf] %v2371
  %2500 = vst [vmem:[%s4 + $0x94] sm:$0xf] %v2372
  %2501 = vst [vmem:[%s4 + $0x98] sm:$0xf] %v2373
  %2502 = vst [vmem:[%s4 + $0x9c] sm:$0xf] %v2374
  %2503 = vst [vmem:[%s4 + $0xa0] sm:$0xf] %v2375
  %2504 = vst [vmem:[%s4 + $0xa4] sm:$0xf] %v2376
  %2505 = vst [vmem:[%s4 + $0xa8] sm:$0xf] %v2377
  %2506 = vst [vmem:[%s4 + $0xac] sm:$0xf] %v2378
  %2507 = vst [vmem:[%s4 + $0xb0] sm:$0xf] %v2379
  %2508 = vst [vmem:[%s4 + $0xb4] sm:$0xf] %v2380
  %2509 = vst [vmem:[%s4 + $0xb8] sm:$0xf] %v2381
  %2510 = vst [vmem:[%s4 + $0xbc] sm:$0xf] %v2382
  %2511 = vst [vmem:[%s4 + $0xc0] sm:$0xf] %v2383
  %2512 = vst [vmem:[%s4 + $0xc4] sm:$0xf] %v2384
  %2513 = vst [vmem:[%s4 + $0xc8] sm:$0xf] %v2385
  %2514 = vst [vmem:[%s4 + $0xcc] sm:$0xf] %v2386
  %2515 = vst [vmem:[%s4 + $0xd0] sm:$0xf] %v2387
  %2516 = vst [vmem:[%s4 + $0xd4] sm:$0xf] %v2388
  %2517 = vst [vmem:[%s4 + $0xd8] sm:$0xf] %v2389
  %2518 = vst [vmem:[%s4 + $0xdc] sm:$0xf] %v2390
  %2519 = vst [vmem:[%s4 + $0xe0] sm:$0xf] %v2391
  %2520 = vst [vmem:[%s4 + $0xe4] sm:$0xf] %v2392
  %2521 = vst [vmem:[%s4 + $0xe8] sm:$0xf] %v2393
  %2522 = vst [vmem:[%s4 + $0xec] sm:$0xf] %v2394
  %2523 = vst [vmem:[%s4 + $0xf0] sm:$0xf] %v2395
  %2524 = vst [vmem:[%s4 + $0xf4] sm:$0xf] %v2396
  %2525 = vst [vmem:[%s4 + $0xf8] sm:$0xf] %v2397
  %2526 = vst [vmem:[%s4 + $0xfc] sm:$0xf] %v2398
  // Predicated region
  $region18: #{residual_conv_block.7} parent=0 // pred_check
    _
  $region19: #{residual_conv_block.7} parent=0 // pred_check_branch
    %2528 = sbr.rel (0) target = $region21
  $region20: #{residual_conv_block.7} parent=0 // pred_region
    _
  $region21: #{residual_conv_block.7} parent=0 // pred_fallthru
    _
  // Predicated region
  $region22: #{residual_conv_block.7} parent=0 // pred_check
    _
  $region23: #{residual_conv_block.7} parent=0 // pred_check_branch
    %2530 = sbr.rel (0) target = $region25
  $region24: #{residual_conv_block.7} parent=0 // pred_region
    _
  $region25: #{residual_conv_block.7} parent=0 // pred_fallthru
    _

</llo_original>
